<compile_context>
chip_gen: v7x
topology: tpu7x:2x2x1
jax: 0.10.0
libtpu: 0.0.40
codegen_flags: <defaults>
</compile_context>

<pallas_src>
import functools

import jax
import jax.numpy as jnp
from jax.experimental import pallas as pl
from jax.experimental.pallas import tpu as pltpu


_VMEM_LIMIT = 32 * 1024 * 1024  # explicit scoped-VMEM budget (fits every gen)


def _compiler_params(n_axes=1):
    return pltpu.CompilerParams(
        dimension_semantics=("parallel",) * n_axes,
        vmem_limit_bytes=_VMEM_LIMIT)


# ----------------------------------------------------------------------------
# Pallas kernels
# ----------------------------------------------------------------------------

def _make_mm_kernel(act: str):
    """Single-shot matmul kernel: O = act(A @ B + bias); full-K, full-N block."""
    def kernel(a_ref, b_ref, bias_ref, o_ref):
        r = jnp.dot(a_ref[...], b_ref[...], preferred_element_type=jnp.float32)
        r = r + bias_ref[...]
        if act == "relu":
            r = jnp.maximum(r, 0.0)
        elif act == "sigmoid":
            r = jax.nn.sigmoid(r)
        o_ref[...] = r.astype(o_ref.dtype)
    return kernel


def matmul_bias_act(a, b, bias, act="none", out_dtype=jnp.bfloat16, tm=1024):
    """act(a @ b + bias); a:(M,K) bf16, b:(K,N) pre-cast bf16, bias:(1,N) f32.

    K and N are single full blocks (legal even when not multiples of 8/128),
    so no activation zero-padding and no k-grid loop.  M is tiled by `tm`
    (1024 per perf review); a partial last M block is safe (out-of-bounds
    output rows are discarded, nothing reduces across them).
    """
    M, K = a.shape
    _, N = b.shape
    a = a.astype(jnp.bfloat16)
    tm_eff = min(tm, M)
    return pl.pallas_call(
        _make_mm_kernel(act),
        out_shape=jax.ShapeDtypeStruct((M, N), out_dtype),
        grid_spec=pltpu.PrefetchScalarGridSpec(
            num_scalar_prefetch=0,
            grid=(pl.cdiv(M, tm_eff),),
            in_specs=[
                pl.BlockSpec((tm_eff, K), lambda i: (i, 0)),
                pl.BlockSpec((K, N), lambda i: (0, 0)),
                pl.BlockSpec((1, N), lambda i: (0, 0)),
            ],
            out_specs=pl.BlockSpec((tm_eff, N), lambda i: (i, 0)),
        ),
        compiler_params=_compiler_params(1),
    )(a, b, bias)


def _conv3x3_kernel(x_ref, w_ref, b_ref, o_ref):
    """3x3 / stride-1 conv on an already-padded image.

    In-kernel im2col: 9 shifted patches are lane-concatenated once and fed to
    a SINGLE K=9*Cin MXU dot (instead of 9 K=Cin dots); bias + ReLU fused.
    """
    _, Ho, Wo, Cout = o_ref.shape
    Cin = x_ref.shape[3]
    xv = x_ref[0]                                          # (Ho+2, Wo+2, Cin)
    patches = [xv[dh:dh + Ho, dw:dw + Wo, :]
               for dh in range(3) for dw in range(3)]
    cols = jnp.concatenate(patches, axis=-1)               # (Ho, Wo, 9*Cin)
    cols = cols.reshape(Ho * Wo, 9 * Cin)
    r = jnp.dot(cols, w_ref[...], preferred_element_type=jnp.float32)
    r = jnp.maximum(r + b_ref[...], 0.0)
    o_ref[...] = r.reshape(1, Ho, Wo, Cout).astype(o_ref.dtype)


def conv3x3_s1_padded(xp, w9, b):
    """Fused 3x3/stride-1 conv + bias + ReLU; `xp` is already spatially padded."""
    N, Hp, Wp, Cin = xp.shape
    Ho, Wo = Hp - 2, Wp - 2
    Cout = w9.shape[1]
    # TODO(synk): whole padded image per grid step; row-halo tiling needed for
    #             very large spatial sizes (v7x 64 MiB VMEM).
    return pl.pallas_call(
        _conv3x3_kernel,
        out_shape=jax.ShapeDtypeStruct((N, Ho, Wo, Cout), jnp.bfloat16),
        grid_spec=pltpu.PrefetchScalarGridSpec(
            num_scalar_prefetch=0,
            grid=(N,),
            in_specs=[
                pl.BlockSpec((1, Hp, Wp, Cin), lambda n: (n, 0, 0, 0)),
                pl.BlockSpec((9 * Cin, Cout), lambda n: (0, 0)),
                pl.BlockSpec((1, Cout), lambda n: (0, 0)),
            ],
            out_specs=pl.BlockSpec((1, Ho, Wo, Cout), lambda n: (n, 0, 0, 0)),
        ),
        compiler_params=_compiler_params(1),
    )(xp, w9, b)


def _focus_change_kernel(y1_ref, y2_ref, wa1_ref, wa2_ref, wa3_ref, ba_ref,
                         wb_ref, bb_ref, yc_ref, y1c_ref, y2c_ref):
    """Fused Focuser + ChangeDecoder: RM computed & consumed in-kernel.

    Only Y1*RM, Y2*RM and the (lane-padded) change map are stored; the
    unchanged branches are derived outside (y*(1-RM) == y - y*RM).  The bf16
    tensors produced for the stores are reused as the MXU dot operands.
    """
    y1 = y1_ref[...]
    y2 = y2_ref[...]
    d = y1.astype(jnp.float32) - y2.astype(jnp.float32)
    rm = jax.nn.sigmoid(jnp.mean(d * d, axis=-1, keepdims=True))    # (tm,1) f32
    y1c = (y1.astype(jnp.float32) * rm).astype(jnp.bfloat16)
    y2c = (y2.astype(jnp.float32) * rm).astype(jnp.bfloat16)
    y1c_ref[...] = y1c
    y2c_ref[...] = y2c
    ad = jnp.abs(d).astype(jnp.bfloat16)
    # change-decoder conv1x1 #1 over the virtual concat [Y1*RM, Y2*RM, |Y1-Y2|]
    h = jnp.dot(y1c, wa1_ref[...], preferred_element_type=jnp.float32)
    h = h + jnp.dot(y2c, wa2_ref[...], preferred_element_type=jnp.float32)
    h = h + jnp.dot(ad, wa3_ref[...], preferred_element_type=jnp.float32)
    h = jnp.maximum(h + ba_ref[...], 0.0)
    # change-decoder conv1x1 #2 (lane-padded to 128 outputs) + sigmoid
    out = jnp.dot(h.astype(jnp.bfloat16), wb_ref[...],
                  preferred_element_type=jnp.float32)
    yc_ref[...] = jax.nn.sigmoid(out + bb_ref[...])


def focus_and_change(cp, Y1, Y2, out_c, tm=1024):
    N, H, W, C = Y1.shape
    M = N * H * W
    wa1, wa2, wa3, ba, wb, bb = cp
    hid = wa1.shape[1]
    ncp = wb.shape[1]                        # lane-padded change-head width
    tm_eff = min(tm, M)
    feat_in = pl.BlockSpec((tm_eff, C), lambda i: (i, 0))
    yc, y1c, y2c = pl.pallas_call(
        _focus_change_kernel,
        out_shape=(jax.ShapeDtypeStruct((M, ncp), jnp.float32),
                   jax.ShapeDtypeStruct((M, C), jnp.bfloat16),
                   jax.ShapeDtypeStruct((M, C), jnp.bfloat16)),
        grid_spec=pltpu.PrefetchScalarGridSpec(
            num_scalar_prefetch=0,
            grid=(pl.cdiv(M, tm_eff),),
            in_specs=[
                feat_in, feat_in,
                pl.BlockSpec((C, hid), lambda i: (0, 0)),
                pl.BlockSpec((C, hid), lambda i: (0, 0)),
                pl.BlockSpec((C, hid), lambda i: (0, 0)),
                pl.BlockSpec((1, hid), lambda i: (0, 0)),
                pl.BlockSpec((hid, ncp), lambda i: (0, 0)),
                pl.BlockSpec((1, ncp), lambda i: (0, 0)),
            ],
            out_specs=(pl.BlockSpec((tm_eff, ncp), lambda i: (i, 0)),
                       pl.BlockSpec((tm_eff, C), lambda i: (i, 0)),
                       pl.BlockSpec((tm_eff, C), lambda i: (i, 0))),
        ),
        compiler_params=_compiler_params(1),
    )(Y1.reshape(M, C).astype(jnp.bfloat16),
      Y2.reshape(M, C).astype(jnp.bfloat16),
      wa1, wa2, wa3, ba, wb, bb)

    y_change = yc[:, :out_c].reshape(N, H, W, out_c)
    Y1c = y1c.reshape(N, H, W, C)
    Y2c = y2c.reshape(N, H, W, C)
    # y*(1-RM) == y - y*RM exactly: derived here as a trivial XLA fusion
    # instead of two extra full-resolution stores inside the kernel.
    Y1u = Y1.astype(jnp.bfloat16) - Y1c
    Y2u = Y2.astype(jnp.bfloat16) - Y2c
    return y_change, Y1c, Y2c, Y1u, Y2u


def _rm_kernel(y1_ref, y2_ref, rm_ref):
    y1 = y1_ref[...].astype(jnp.float32)
    y2 = y2_ref[...].astype(jnp.float32)
    d = jnp.mean((y1 - y2) ** 2, axis=-1, keepdims=True)
    rm_ref[...] = jax.nn.sigmoid(d)


def focuser_rm(Y1, Y2, tm=1024):
    """RM-only path (is_RM=True); cold path so the lane-1 store is acceptable."""
    N, H, W, C = Y1.shape
    M = N * H * W
    tm_eff = min(tm, M)
    rm = pl.pallas_call(
        _rm_kernel,
        out_shape=jax.ShapeDtypeStruct((M, 1), jnp.float32),
        grid_spec=pltpu.PrefetchScalarGridSpec(
            num_scalar_prefetch=0,
            grid=(pl.cdiv(M, tm_eff),),
            in_specs=[pl.BlockSpec((tm_eff, C), lambda i: (i, 0))] * 2,
            out_specs=pl.BlockSpec((tm_eff, 1), lambda i: (i, 0)),
        ),
        compiler_params=_compiler_params(1),
    )(Y1.reshape(M, C).astype(jnp.bfloat16), Y2.reshape(M, C).astype(jnp.bfloat16))
    return rm.reshape(N, H, W, 1)


# ----------------------------------------------------------------------------
# Convolution glue
# ----------------------------------------------------------------------------

def im2col_3x3(x, stride):
    N, H, W, C = x.shape
    xp = jnp.pad(x, ((0, 0), (1, 1), (1, 1), (0, 0)))
    Ho = (H + 2 - 3) // stride + 1
    Wo = (W + 2 - 3) // stride + 1
    cols = []
    for dh in range(3):
        for dw in range(3):
            patch = xp[:, dh:dh + (Ho - 1) * stride + 1:stride,
                       dw:dw + (Wo - 1) * stride + 1:stride, :]
            cols.append(patch)
    cols = jnp.concatenate(cols, axis=-1)
    return cols.reshape(N * Ho * Wo, 9 * C), (N, Ho, Wo)


def conv3x3_s2(x, w9, b):
    # w9: (9*Cin, Cout), im2col-ordered, pre-cast bf16.
    # TODO(synk): stride-2 encoder convs still use an XLA im2col (strided halo
    #             reads are not expressible with Blocked BlockSpecs without a
    #             manual-DMA kernel); accepted for robustness.
    cols, (N, Ho, Wo) = im2col_3x3(x, 2)
    y = matmul_bias_act(cols, w9, b, act="relu")
    return y.reshape(N, Ho, Wo, w9.shape[1])


def conv1x1(x, w, b, act="none"):
    N, H, W, C = x.shape
    y = matmul_bias_act(x.reshape(N * H * W, C), w, b, act=act)
    return y.reshape(N, H, W, w.shape[1])


def up2(x):
    return jnp.repeat(jnp.repeat(x, 2, axis=1), 2, axis=2)


# ----------------------------------------------------------------------------
# CFNet (siamese encoder, two content decoders, fused focuser+change decoder)
# ----------------------------------------------------------------------------

def init_params(key, in_c, out_c):
    """All weights pre-cast to bf16 and pre-reshaped/padded once."""
    ch = [in_c, 24, 40, 64, 128]
    keys = iter(jax.random.split(key, 32))

    def w3_mm(cin, cout):   # 3x3 conv, im2col matmul layout (9*Cin, Cout)
        w = jax.random.normal(next(keys), (3, 3, cin, cout), jnp.float32) * 0.1
        return w.reshape(9 * cin, cout).astype(jnp.bfloat16)

    def w1(cin, cout):
        w = jax.random.normal(next(keys), (cin, cout), jnp.float32) * 0.1
        return w.astype(jnp.bfloat16)

    def w1_lane_padded(cin, cout, cpad):
        w = jax.random.normal(next(keys), (cin, cout), jnp.float32) * 0.1
        w = jnp.pad(w, ((0, 0), (0, cpad - cout)))
        return w.astype(jnp.bfloat16)

    def bz(c):
        return jnp.zeros((1, c), jnp.float32)

    params = {"enc": [(w3_mm(ch[i], ch[i + 1]), bz(ch[i + 1])) for i in range(4)]}
    for name in ("dec1", "dec2"):
        params[name] = {
            "lat": [(w1(ch[4], ch[3]), bz(ch[3])),
                    (w1(ch[3], ch[2]), bz(ch[2])),
                    (w1(ch[2], ch[1]), bz(ch[1]))],
            "final": (w3_mm(ch[1], ch[1]), bz(ch[1])),
        }
    hid = 32
    ncp = ((out_c + 127) // 128) * 128   # lane-dense change-head output width
    # change head: first 1x1 conv over concat([Y1*RM, Y2*RM, |Y1-Y2|]) split
    # into three K-chunks so the concat never materializes; second 1x1 conv is
    # zero-padded to `ncp` output lanes (sliced in the wrapper).
    params["chg"] = (w1(ch[1], hid), w1(ch[1], hid), w1(ch[1], hid),
                     bz(hid), w1_lane_padded(hid, out_c, ncp), bz(ncp))
    params["out_c"] = out_c
    return params


def encode(enc_params, x):
    feats = []
    for (w, b) in enc_params:
        x = conv3x3_s2(x, w, b)
        feats.append(x)
    return feats


def content_decode(dp, feats):
    f1, f2, f3, f4 = feats
    x = f4
    for (w, b), skip in zip(dp["lat"], [f3, f2, f1]):
        # conv1x1 commutes exactly with nearest-neighbour up2: run it at the
        # small resolution (4x fewer matmul FLOPs / bytes), then upsample.
        x = conv1x1(x, w, b, act="none")
        x = up2(x)
        x = jnp.maximum(x + skip, 0.0)      # single XLA elementwise fusion
    # Final stage: nearest-neighbour up2 and pad-1 are one fused XLA copy
    # (single full-resolution HBM write); the 3x3 conv + bias + ReLU run in a
    # Pallas kernel with in-kernel im2col and one K=9*Cin MXU dot.
    xp = jnp.pad(up2(x), ((0, 0), (1, 1), (1, 1), (0, 0)))
    w9, bf = dp["final"]
    return conv3x3_s1_padded(xp, w9, bf)


def cfnet_forward(params, x1_nchw, x2_nchw, is_RM=False, is_content=False):
    # NCHW -> NHWC, bf16 (autocast-like)
    x1 = jnp.transpose(x1_nchw, (0, 2, 3, 1)).astype(jnp.bfloat16)
    x2 = jnp.transpose(x2_nchw, (0, 2, 3, 1)).astype(jnp.bfloat16)
    N = x1.shape[0]

    # Siamese encoder (shared weights): run once on the stacked batch.
    feats = encode(params["enc"], jnp.concatenate([x1, x2], axis=0))
    f1 = [f[:N] for f in feats]
    f2 = [f[N:] for f in feats]

    Y1 = content_decode(params["dec1"], f1)
    Y2 = content_decode(params["dec2"], f2)

    if is_content:
        return (Y1, Y2)
    if is_RM:
        return focuser_rm(Y1, Y2)

    # Default path: fused focuser + change decoder (RM never leaves VMEM).
    return focus_and_change(params["chg"], Y1, Y2, params["out_c"])


# ----------------------------------------------------------------------------

if __name__ == "__main__":
    key = jax.random.PRNGKey(0)
    kx1, kx2, kp = jax.random.split(key, 3)

    batch, in_channel, out_channel, spatial = 2, 4, 2, 16
    x1 = jax.random.normal(kx1, (batch, in_channel, spatial, spatial), jnp.float32)
    x2 = jax.random.normal(kx2, (batch, in_channel, spatial, spatial), jnp.float32)

    params = init_params(kp, in_channel, out_channel)

    fwd = jax.jit(functools.partial(cfnet_forward, params))
    y_change, y1c, y2c, y1u, y2u = fwd(x1, x2)
    jax.block_until_ready((y_change, y1c, y2c, y1u, y2u))

    assert y_change.shape == (batch, spatial, spatial, out_channel)
    assert y1c.shape == (batch, spatial, spatial, 24)
    assert y2u.shape == (batch, spatial, spatial, 24)
    print("KERNEL_OK")
</pallas_src>

<mosaic_0001>
module attributes {stable_mosaic.version = 11 : i64} {
  func.func @kernel(%arg0: i32, %arg1: memref<256x36xbf16, #tpu.memory_space<vmem>>, %arg2: memref<36x24xbf16, #tpu.memory_space<vmem>>, %arg3: memref<1x24xf32, #tpu.memory_space<vmem>>, %arg4: memref<256x24xbf16, #tpu.memory_space<vmem>>) attributes {dimension_semantics = [#tpu.dimension_semantics<parallel>], iteration_bounds = array<i64: 1>, scalar_prefetch = 0 : i64, scratch_operands = 0 : i64, tpu.core_type = #tpu.core_type<tc>, window_params = [{transform_indices = @transform_0, window_bounds = array<i64: 256, 36>}, {pipeline_mode = #tpu.pipeline_mode<synchronous>, transform_indices = @transform_1, window_bounds = array<i64: 36, 24>}, {pipeline_mode = #tpu.pipeline_mode<synchronous>, transform_indices = @transform_2, window_bounds = array<i64: 1, 24>}, {transform_indices = @transform_3, window_bounds = array<i64: 256, 24>}]} {
    %c0 = arith.constant 0 : index
    %c0_0 = arith.constant 0 : index
    %0 = vector.load %arg1[%c0, %c0_0] : memref<256x36xbf16, #tpu.memory_space<vmem>>, vector<256x36xbf16>
    %c0_1 = arith.constant 0 : index
    %c0_2 = arith.constant 0 : index
    %1 = vector.load %arg2[%c0_1, %c0_2] : memref<36x24xbf16, #tpu.memory_space<vmem>>, vector<36x24xbf16>
    %cst = arith.constant dense<0.000000e+00> : vector<256x24xf32>
    %2 = tpu.matmul %0, %1, %cst {dimension_numbers = #tpu.dot_dimension_numbers<[1], [0], [0], [1], [0, 0, 1, 1], [], []>} : vector<256x36xbf16>, vector<36x24xbf16>, vector<256x24xf32> -> vector<256x24xf32>
    %c0_3 = arith.constant 0 : index
    %c0_4 = arith.constant 0 : index
    %3 = vector.load %arg3[%c0_3, %c0_4] : memref<1x24xf32, #tpu.memory_space<vmem>>, vector<1x24xf32>
    %4 = vector.broadcast %3 : vector<1x24xf32> to vector<256x24xf32>
    %5 = arith.addf %2, %4 : vector<256x24xf32>
    %cst_5 = arith.constant 0.000000e+00 : f32
    %6 = vector.broadcast %cst_5 : f32 to vector<256x24xf32>
    %7 = arith.maximumf %5, %6 : vector<256x24xf32>
    %8 = arith.truncf %7 : vector<256x24xf32> to vector<256x24xbf16>
    %c0_6 = arith.constant 0 : index
    %c0_7 = arith.constant 0 : index
    %9 = vector.load %arg4[%c0_6, %c0_7] : memref<256x24xbf16, #tpu.memory_space<vmem>>, vector<256x24xbf16>
    tpu.vector_store %arg4[%c0_6, %c0_7], %8 {strides = array<i32>} : memref<256x24xbf16, #tpu.memory_space<vmem>>, vector<256x24xbf16>,
    return
  }
  func.func @transform_0(%arg0: i32) -> (i32, i32) {
    %c0_i32 = arith.constant 0 : i32
    %c0_i32_0 = arith.constant 0 : i32
    return %arg0, %c0_i32 : i32, i32
  }
  func.func @transform_1(%arg0: i32) -> (i32, i32) {
    %c0_i32 = arith.constant 0 : i32
    %c0_i32_0 = arith.constant 0 : i32
    %c0_i32_1 = arith.constant 0 : i32
    return %c0_i32, %c0_i32_0 : i32, i32
  }
  func.func @transform_2(%arg0: i32) -> (i32, i32) {
    %c0_i32 = arith.constant 0 : i32
    %c0_i32_0 = arith.constant 0 : i32
    %c0_i32_1 = arith.constant 0 : i32
    return %c0_i32, %c0_i32_0 : i32, i32
  }
  func.func @transform_3(%arg0: i32) -> (i32, i32) {
    %c0_i32 = arith.constant 0 : i32
    %c0_i32_0 = arith.constant 0 : i32
    return %arg0, %c0_i32 : i32, i32
  }
}

module attributes {stable_mosaic.version = 11 : i64} {
  func.func @kernel(%arg0: i32, %arg1: memref<64x216xbf16, #tpu.memory_space<vmem>>, %arg2: memref<216x40xbf16, #tpu.memory_space<vmem>>, %arg3: memref<1x40xf32, #tpu.memory_space<vmem>>, %arg4: memref<64x40xbf16, #tpu.memory_space<vmem>>) attributes {dimension_semantics = [#tpu.dimension_semantics<parallel>], iteration_bounds = array<i64: 1>, scalar_prefetch = 0 : i64, scratch_operands = 0 : i64, tpu.core_type = #tpu.core_type<tc>, window_params = [{transform_indices = @transform_0, window_bounds = array<i64: 64, 216>}, {pipeline_mode = #tpu.pipeline_mode<synchronous>, transform_indices = @transform_1, window_bounds = array<i64: 216, 40>}, {pipeline_mode = #tpu.pipeline_mode<synchronous>, transform_indices = @transform_2, window_bounds = array<i64: 1, 40>}, {transform_indices = @transform_3, window_bounds = array<i64: 64, 40>}]} {
    %c0 = arith.constant 0 : index
    %c0_0 = arith.constant 0 : index
    %0 = vector.load %arg1[%c0, %c0_0] : memref<64x216xbf16, #tpu.memory_space<vmem>>, vector<64x216xbf16>
    %c0_1 = arith.constant 0 : index
    %c0_2 = arith.constant 0 : index
    %1 = vector.load %arg2[%c0_1, %c0_2] : memref<216x40xbf16, #tpu.memory_space<vmem>>, vector<216x40xbf16>
    %cst = arith.constant dense<0.000000e+00> : vector<64x40xf32>
    %2 = tpu.matmul %0, %1, %cst {dimension_numbers = #tpu.dot_dimension_numbers<[1], [0], [0], [1], [0, 0, 1, 1], [], []>} : vector<64x216xbf16>, vector<216x40xbf16>, vector<64x40xf32> -> vector<64x40xf32>
    %c0_3 = arith.constant 0 : index
    %c0_4 = arith.constant 0 : index
    %3 = vector.load %arg3[%c0_3, %c0_4] : memref<1x40xf32, #tpu.memory_space<vmem>>, vector<1x40xf32>
    %4 = vector.broadcast %3 : vector<1x40xf32> to vector<64x40xf32>
    %5 = arith.addf %2, %4 : vector<64x40xf32>
    %cst_5 = arith.constant 0.000000e+00 : f32
    %6 = vector.broadcast %cst_5 : f32 to vector<64x40xf32>
    %7 = arith.maximumf %5, %6 : vector<64x40xf32>
    %8 = arith.truncf %7 : vector<64x40xf32> to vector<64x40xbf16>
    %c0_6 = arith.constant 0 : index
    %c0_7 = arith.constant 0 : index
    %9 = vector.load %arg4[%c0_6, %c0_7] : memref<64x40xbf16, #tpu.memory_space<vmem>>, vector<64x40xbf16>
    tpu.vector_store %arg4[%c0_6, %c0_7], %8 {strides = array<i32>} : memref<64x40xbf16, #tpu.memory_space<vmem>>, vector<64x40xbf16>,
    return
  }
  func.func @transform_0(%arg0: i32) -> (i32, i32) {
    %c0_i32 = arith.constant 0 : i32
    %c0_i32_0 = arith.constant 0 : i32
    return %arg0, %c0_i32 : i32, i32
  }
  func.func @transform_1(%arg0: i32) -> (i32, i32) {
    %c0_i32 = arith.constant 0 : i32
    %c0_i32_0 = arith.constant 0 : i32
    %c0_i32_1 = arith.constant 0 : i32
    return %c0_i32, %c0_i32_0 : i32, i32
  }
  func.func @transform_2(%arg0: i32) -> (i32, i32) {
    %c0_i32 = arith.constant 0 : i32
    %c0_i32_0 = arith.constant 0 : i32
    %c0_i32_1 = arith.constant 0 : i32
    return %c0_i32, %c0_i32_0 : i32, i32
  }
  func.func @transform_3(%arg0: i32) -> (i32, i32) {
    %c0_i32 = arith.constant 0 : i32
    %c0_i32_0 = arith.constant 0 : i32
    return %arg0, %c0_i32 : i32, i32
  }
}

module attributes {stable_mosaic.version = 11 : i64} {
  func.func @kernel(%arg0: i32, %arg1: memref<16x360xbf16, #tpu.memory_space<vmem>>, %arg2: memref<360x64xbf16, #tpu.memory_space<vmem>>, %arg3: memref<1x64xf32, #tpu.memory_space<vmem>>, %arg4: memref<16x64xbf16, #tpu.memory_space<vmem>>) attributes {dimension_semantics = [#tpu.dimension_semantics<parallel>], iteration_bounds = array<i64: 1>, scalar_prefetch = 0 : i64, scratch_operands = 0 : i64, tpu.core_type = #tpu.core_type<tc>, window_params = [{transform_indices = @transform_0, window_bounds = array<i64: 16, 360>}, {pipeline_mode = #tpu.pipeline_mode<synchronous>, transform_indices = @transform_1, window_bounds = array<i64: 360, 64>}, {pipeline_mode = #tpu.pipeline_mode<synchronous>, transform_indices = @transform_2, window_bounds = array<i64: 1, 64>}, {transform_indices = @transform_3, window_bounds = array<i64: 16, 64>}]} {
    %c0 = arith.constant 0 : index
    %c0_0 = arith.constant 0 : index
    %0 = vector.load %arg1[%c0, %c0_0] : memref<16x360xbf16, #tpu.memory_space<vmem>>, vector<16x360xbf16>
    %c0_1 = arith.constant 0 : index
    %c0_2 = arith.constant 0 : index
    %1 = vector.load %arg2[%c0_1, %c0_2] : memref<360x64xbf16, #tpu.memory_space<vmem>>, vector<360x64xbf16>
    %cst = arith.constant dense<0.000000e+00> : vector<16x64xf32>
    %2 = tpu.matmul %0, %1, %cst {dimension_numbers = #tpu.dot_dimension_numbers<[1], [0], [0], [1], [0, 0, 1, 1], [], []>} : vector<16x360xbf16>, vector<360x64xbf16>, vector<16x64xf32> -> vector<16x64xf32>
    %c0_3 = arith.constant 0 : index
    %c0_4 = arith.constant 0 : index
    %3 = vector.load %arg3[%c0_3, %c0_4] : memref<1x64xf32, #tpu.memory_space<vmem>>, vector<1x64xf32>
    %4 = vector.broadcast %3 : vector<1x64xf32> to vector<16x64xf32>
    %5 = arith.addf %2, %4 : vector<16x64xf32>
    %cst_5 = arith.constant 0.000000e+00 : f32
    %6 = vector.broadcast %cst_5 : f32 to vector<16x64xf32>
    %7 = arith.maximumf %5, %6 : vector<16x64xf32>
    %8 = arith.truncf %7 : vector<16x64xf32> to vector<16x64xbf16>
    %c0_6 = arith.constant 0 : index
    %c0_7 = arith.constant 0 : index
    %9 = vector.load %arg4[%c0_6, %c0_7] : memref<16x64xbf16, #tpu.memory_space<vmem>>, vector<16x64xbf16>
    tpu.vector_store %arg4[%c0_6, %c0_7], %8 {strides = array<i32>} : memref<16x64xbf16, #tpu.memory_space<vmem>>, vector<16x64xbf16>,
    return
  }
  func.func @transform_0(%arg0: i32) -> (i32, i32) {
    %c0_i32 = arith.constant 0 : i32
    %c0_i32_0 = arith.constant 0 : i32
    return %arg0, %c0_i32 : i32, i32
  }
  func.func @transform_1(%arg0: i32) -> (i32, i32) {
    %c0_i32 = arith.constant 0 : i32
    %c0_i32_0 = arith.constant 0 : i32
    %c0_i32_1 = arith.constant 0 : i32
    return %c0_i32, %c0_i32_0 : i32, i32
  }
  func.func @transform_2(%arg0: i32) -> (i32, i32) {
    %c0_i32 = arith.constant 0 : i32
    %c0_i32_0 = arith.constant 0 : i32
    %c0_i32_1 = arith.constant 0 : i32
    return %c0_i32, %c0_i32_0 : i32, i32
  }
  func.func @transform_3(%arg0: i32) -> (i32, i32) {
    %c0_i32 = arith.constant 0 : i32
    %c0_i32_0 = arith.constant 0 : i32
    return %arg0, %c0_i32 : i32, i32
  }
}

module attributes {stable_mosaic.version = 11 : i64} {
  func.func @kernel(%arg0: i32, %arg1: memref<4x576xbf16, #tpu.memory_space<vmem>>, %arg2: memref<576x128xbf16, #tpu.memory_space<vmem>>, %arg3: memref<1x128xf32, #tpu.memory_space<vmem>>, %arg4: memref<4x128xbf16, #tpu.memory_space<vmem>>) attributes {dimension_semantics = [#tpu.dimension_semantics<parallel>], iteration_bounds = array<i64: 1>, scalar_prefetch = 0 : i64, scratch_operands = 0 : i64, tpu.core_type = #tpu.core_type<tc>, window_params = [{transform_indices = @transform_0, window_bounds = array<i64: 4, 576>}, {pipeline_mode = #tpu.pipeline_mode<synchronous>, transform_indices = @transform_1, window_bounds = array<i64: 576, 128>}, {pipeline_mode = #tpu.pipeline_mode<synchronous>, transform_indices = @transform_2, window_bounds = array<i64: 1, 128>}, {transform_indices = @transform_3, window_bounds = array<i64: 4, 128>}]} {
    %c0 = arith.constant 0 : index
    %c0_0 = arith.constant 0 : index
    %0 = vector.load %arg1[%c0, %c0_0] : memref<4x576xbf16, #tpu.memory_space<vmem>>, vector<4x576xbf16>
    %c0_1 = arith.constant 0 : index
    %c0_2 = arith.constant 0 : index
    %1 = vector.load %arg2[%c0_1, %c0_2] : memref<576x128xbf16, #tpu.memory_space<vmem>>, vector<576x128xbf16>
    %cst = arith.constant dense<0.000000e+00> : vector<4x128xf32>
    %2 = tpu.matmul %0, %1, %cst {dimension_numbers = #tpu.dot_dimension_numbers<[1], [0], [0], [1], [0, 0, 1, 1], [], []>} : vector<4x576xbf16>, vector<576x128xbf16>, vector<4x128xf32> -> vector<4x128xf32>
    %c0_3 = arith.constant 0 : index
    %c0_4 = arith.constant 0 : index
    %3 = vector.load %arg3[%c0_3, %c0_4] : memref<1x128xf32, #tpu.memory_space<vmem>>, vector<1x128xf32>
    %4 = vector.broadcast %3 : vector<1x128xf32> to vector<4x128xf32>
    %5 = arith.addf %2, %4 : vector<4x128xf32>
    %cst_5 = arith.constant 0.000000e+00 : f32
    %6 = vector.broadcast %cst_5 : f32 to vector<4x128xf32>
    %7 = arith.maximumf %5, %6 : vector<4x128xf32>
    %8 = arith.truncf %7 : vector<4x128xf32> to vector<4x128xbf16>
    %c0_6 = arith.constant 0 : index
    %c0_7 = arith.constant 0 : index
    %9 = vector.load %arg4[%c0_6, %c0_7] : memref<4x128xbf16, #tpu.memory_space<vmem>>, vector<4x128xbf16>
    tpu.vector_store %arg4[%c0_6, %c0_7], %8 {strides = array<i32>} : memref<4x128xbf16, #tpu.memory_space<vmem>>, vector<4x128xbf16>,
    return
  }
  func.func @transform_0(%arg0: i32) -> (i32, i32) {
    %c0_i32 = arith.constant 0 : i32
    %c0_i32_0 = arith.constant 0 : i32
    return %arg0, %c0_i32 : i32, i32
  }
  func.func @transform_1(%arg0: i32) -> (i32, i32) {
    %c0_i32 = arith.constant 0 : i32
    %c0_i32_0 = arith.constant 0 : i32
    %c0_i32_1 = arith.constant 0 : i32
    return %c0_i32, %c0_i32_0 : i32, i32
  }
  func.func @transform_2(%arg0: i32) -> (i32, i32) {
    %c0_i32 = arith.constant 0 : i32
    %c0_i32_0 = arith.constant 0 : i32
    %c0_i32_1 = arith.constant 0 : i32
    return %c0_i32, %c0_i32_0 : i32, i32
  }
  func.func @transform_3(%arg0: i32) -> (i32, i32) {
    %c0_i32 = arith.constant 0 : i32
    %c0_i32_0 = arith.constant 0 : i32
    return %arg0, %c0_i32 : i32, i32
  }
}

module attributes {stable_mosaic.version = 11 : i64} {
  func.func @kernel(%arg0: i32, %arg1: memref<2x128xbf16, #tpu.memory_space<vmem>>, %arg2: memref<128x64xbf16, #tpu.memory_space<vmem>>, %arg3: memref<1x64xf32, #tpu.memory_space<vmem>>, %arg4: memref<2x64xbf16, #tpu.memory_space<vmem>>) attributes {dimension_semantics = [#tpu.dimension_semantics<parallel>], iteration_bounds = array<i64: 1>, scalar_prefetch = 0 : i64, scratch_operands = 0 : i64, tpu.core_type = #tpu.core_type<tc>, window_params = [{transform_indices = @transform_0, window_bounds = array<i64: 2, 128>}, {pipeline_mode = #tpu.pipeline_mode<synchronous>, transform_indices = @transform_1, window_bounds = array<i64: 128, 64>}, {pipeline_mode = #tpu.pipeline_mode<synchronous>, transform_indices = @transform_2, window_bounds = array<i64: 1, 64>}, {transform_indices = @transform_3, window_bounds = array<i64: 2, 64>}]} {
    %c0 = arith.constant 0 : index
    %c0_0 = arith.constant 0 : index
    %0 = vector.load %arg1[%c0, %c0_0] : memref<2x128xbf16, #tpu.memory_space<vmem>>, vector<2x128xbf16>
    %c0_1 = arith.constant 0 : index
    %c0_2 = arith.constant 0 : index
    %1 = vector.load %arg2[%c0_1, %c0_2] : memref<128x64xbf16, #tpu.memory_space<vmem>>, vector<128x64xbf16>
    %cst = arith.constant dense<0.000000e+00> : vector<2x64xf32>
    %2 = tpu.matmul %0, %1, %cst {dimension_numbers = #tpu.dot_dimension_numbers<[1], [0], [0], [1], [0, 0, 1, 1], [], []>} : vector<2x128xbf16>, vector<128x64xbf16>, vector<2x64xf32> -> vector<2x64xf32>
    %c0_3 = arith.constant 0 : index
    %c0_4 = arith.constant 0 : index
    %3 = vector.load %arg3[%c0_3, %c0_4] : memref<1x64xf32, #tpu.memory_space<vmem>>, vector<1x64xf32>
    %4 = vector.broadcast %3 : vector<1x64xf32> to vector<2x64xf32>
    %5 = arith.addf %2, %4 : vector<2x64xf32>
    %6 = arith.truncf %5 : vector<2x64xf32> to vector<2x64xbf16>
    %c0_5 = arith.constant 0 : index
    %c0_6 = arith.constant 0 : index
    %7 = vector.load %arg4[%c0_5, %c0_6] : memref<2x64xbf16, #tpu.memory_space<vmem>>, vector<2x64xbf16>
    tpu.vector_store %arg4[%c0_5, %c0_6], %6 {strides = array<i32>} : memref<2x64xbf16, #tpu.memory_space<vmem>>, vector<2x64xbf16>,
    return
  }
  func.func @transform_0(%arg0: i32) -> (i32, i32) {
    %c0_i32 = arith.constant 0 : i32
    %c0_i32_0 = arith.constant 0 : i32
    return %arg0, %c0_i32 : i32, i32
  }
  func.func @transform_1(%arg0: i32) -> (i32, i32) {
    %c0_i32 = arith.constant 0 : i32
    %c0_i32_0 = arith.constant 0 : i32
    %c0_i32_1 = arith.constant 0 : i32
    return %c0_i32, %c0_i32_0 : i32, i32
  }
  func.func @transform_2(%arg0: i32) -> (i32, i32) {
    %c0_i32 = arith.constant 0 : i32
    %c0_i32_0 = arith.constant 0 : i32
    %c0_i32_1 = arith.constant 0 : i32
    return %c0_i32, %c0_i32_0 : i32, i32
  }
  func.func @transform_3(%arg0: i32) -> (i32, i32) {
    %c0_i32 = arith.constant 0 : i32
    %c0_i32_0 = arith.constant 0 : i32
    return %arg0, %c0_i32 : i32, i32
  }
}

module attributes {stable_mosaic.version = 11 : i64} {
  func.func @kernel(%arg0: i32, %arg1: memref<8x64xbf16, #tpu.memory_space<vmem>>, %arg2: memref<64x40xbf16, #tpu.memory_space<vmem>>, %arg3: memref<1x40xf32, #tpu.memory_space<vmem>>, %arg4: memref<8x40xbf16, #tpu.memory_space<vmem>>) attributes {dimension_semantics = [#tpu.dimension_semantics<parallel>], iteration_bounds = array<i64: 1>, scalar_prefetch = 0 : i64, scratch_operands = 0 : i64, tpu.core_type = #tpu.core_type<tc>, window_params = [{transform_indices = @transform_0, window_bounds = array<i64: 8, 64>}, {pipeline_mode = #tpu.pipeline_mode<synchronous>, transform_indices = @transform_1, window_bounds = array<i64: 64, 40>}, {pipeline_mode = #tpu.pipeline_mode<synchronous>, transform_indices = @transform_2, window_bounds = array<i64: 1, 40>}, {transform_indices = @transform_3, window_bounds = array<i64: 8, 40>}]} {
    %c0 = arith.constant 0 : index
    %c0_0 = arith.constant 0 : index
    %0 = vector.load %arg1[%c0, %c0_0] : memref<8x64xbf16, #tpu.memory_space<vmem>>, vector<8x64xbf16>
    %c0_1 = arith.constant 0 : index
    %c0_2 = arith.constant 0 : index
    %1 = vector.load %arg2[%c0_1, %c0_2] : memref<64x40xbf16, #tpu.memory_space<vmem>>, vector<64x40xbf16>
    %cst = arith.constant dense<0.000000e+00> : vector<8x40xf32>
    %2 = tpu.matmul %0, %1, %cst {dimension_numbers = #tpu.dot_dimension_numbers<[1], [0], [0], [1], [0, 0, 1, 1], [], []>} : vector<8x64xbf16>, vector<64x40xbf16>, vector<8x40xf32> -> vector<8x40xf32>
    %c0_3 = arith.constant 0 : index
    %c0_4 = arith.constant 0 : index
    %3 = vector.load %arg3[%c0_3, %c0_4] : memref<1x40xf32, #tpu.memory_space<vmem>>, vector<1x40xf32>
    %4 = vector.broadcast %3 : vector<1x40xf32> to vector<8x40xf32>
    %5 = arith.addf %2, %4 : vector<8x40xf32>
    %6 = arith.truncf %5 : vector<8x40xf32> to vector<8x40xbf16>
    %c0_5 = arith.constant 0 : index
    %c0_6 = arith.constant 0 : index
    %7 = vector.load %arg4[%c0_5, %c0_6] : memref<8x40xbf16, #tpu.memory_space<vmem>>, vector<8x40xbf16>
    tpu.vector_store %arg4[%c0_5, %c0_6], %6 {strides = array<i32>} : memref<8x40xbf16, #tpu.memory_space<vmem>>, vector<8x40xbf16>,
    return
  }
  func.func @transform_0(%arg0: i32) -> (i32, i32) {
    %c0_i32 = arith.constant 0 : i32
    %c0_i32_0 = arith.constant 0 : i32
    return %arg0, %c0_i32 : i32, i32
  }
  func.func @transform_1(%arg0: i32) -> (i32, i32) {
    %c0_i32 = arith.constant 0 : i32
    %c0_i32_0 = arith.constant 0 : i32
    %c0_i32_1 = arith.constant 0 : i32
    return %c0_i32, %c0_i32_0 : i32, i32
  }
  func.func @transform_2(%arg0: i32) -> (i32, i32) {
    %c0_i32 = arith.constant 0 : i32
    %c0_i32_0 = arith.constant 0 : i32
    %c0_i32_1 = arith.constant 0 : i32
    return %c0_i32, %c0_i32_0 : i32, i32
  }
  func.func @transform_3(%arg0: i32) -> (i32, i32) {
    %c0_i32 = arith.constant 0 : i32
    %c0_i32_0 = arith.constant 0 : i32
    return %arg0, %c0_i32 : i32, i32
  }
}

module attributes {stable_mosaic.version = 11 : i64} {
  func.func @kernel(%arg0: i32, %arg1: memref<32x40xbf16, #tpu.memory_space<vmem>>, %arg2: memref<40x24xbf16, #tpu.memory_space<vmem>>, %arg3: memref<1x24xf32, #tpu.memory_space<vmem>>, %arg4: memref<32x24xbf16, #tpu.memory_space<vmem>>) attributes {dimension_semantics = [#tpu.dimension_semantics<parallel>], iteration_bounds = array<i64: 1>, scalar_prefetch = 0 : i64, scratch_operands = 0 : i64, tpu.core_type = #tpu.core_type<tc>, window_params = [{transform_indices = @transform_0, window_bounds = array<i64: 32, 40>}, {pipeline_mode = #tpu.pipeline_mode<synchronous>, transform_indices = @transform_1, window_bounds = array<i64: 40, 24>}, {pipeline_mode = #tpu.pipeline_mode<synchronous>, transform_indices = @transform_2, window_bounds = array<i64: 1, 24>}, {transform_indices = @transform_3, window_bounds = array<i64: 32, 24>}]} {
    %c0 = arith.constant 0 : index
    %c0_0 = arith.constant 0 : index
    %0 = vector.load %arg1[%c0, %c0_0] : memref<32x40xbf16, #tpu.memory_space<vmem>>, vector<32x40xbf16>
    %c0_1 = arith.constant 0 : index
    %c0_2 = arith.constant 0 : index
    %1 = vector.load %arg2[%c0_1, %c0_2] : memref<40x24xbf16, #tpu.memory_space<vmem>>, vector<40x24xbf16>
    %cst = arith.constant dense<0.000000e+00> : vector<32x24xf32>
    %2 = tpu.matmul %0, %1, %cst {dimension_numbers = #tpu.dot_dimension_numbers<[1], [0], [0], [1], [0, 0, 1, 1], [], []>} : vector<32x40xbf16>, vector<40x24xbf16>, vector<32x24xf32> -> vector<32x24xf32>
    %c0_3 = arith.constant 0 : index
    %c0_4 = arith.constant 0 : index
    %3 = vector.load %arg3[%c0_3, %c0_4] : memref<1x24xf32, #tpu.memory_space<vmem>>, vector<1x24xf32>
    %4 = vector.broadcast %3 : vector<1x24xf32> to vector<32x24xf32>
    %5 = arith.addf %2, %4 : vector<32x24xf32>
    %6 = arith.truncf %5 : vector<32x24xf32> to vector<32x24xbf16>
    %c0_5 = arith.constant 0 : index
    %c0_6 = arith.constant 0 : index
    %7 = vector.load %arg4[%c0_5, %c0_6] : memref<32x24xbf16, #tpu.memory_space<vmem>>, vector<32x24xbf16>
    tpu.vector_store %arg4[%c0_5, %c0_6], %6 {strides = array<i32>} : memref<32x24xbf16, #tpu.memory_space<vmem>>, vector<32x24xbf16>,
    return
  }
  func.func @transform_0(%arg0: i32) -> (i32, i32) {
    %c0_i32 = arith.constant 0 : i32
    %c0_i32_0 = arith.constant 0 : i32
    return %arg0, %c0_i32 : i32, i32
  }
  func.func @transform_1(%arg0: i32) -> (i32, i32) {
    %c0_i32 = arith.constant 0 : i32
    %c0_i32_0 = arith.constant 0 : i32
    %c0_i32_1 = arith.constant 0 : i32
    return %c0_i32, %c0_i32_0 : i32, i32
  }
  func.func @transform_2(%arg0: i32) -> (i32, i32) {
    %c0_i32 = arith.constant 0 : i32
    %c0_i32_0 = arith.constant 0 : i32
    %c0_i32_1 = arith.constant 0 : i32
    return %c0_i32, %c0_i32_0 : i32, i32
  }
  func.func @transform_3(%arg0: i32) -> (i32, i32) {
    %c0_i32 = arith.constant 0 : i32
    %c0_i32_0 = arith.constant 0 : i32
    return %arg0, %c0_i32 : i32, i32
  }
}

module attributes {stable_mosaic.version = 11 : i64} {
  func.func @_conv3x3_kernel(%arg0: i32, %arg1: memref<1x18x18x24xbf16, #tpu.memory_space<vmem>>, %arg2: memref<216x24xbf16, #tpu.memory_space<vmem>>, %arg3: memref<1x24xf32, #tpu.memory_space<vmem>>, %arg4: memref<1x16x16x24xbf16, #tpu.memory_space<vmem>>) attributes {dimension_semantics = [#tpu.dimension_semantics<parallel>], iteration_bounds = array<i64: 2>, scalar_prefetch = 0 : i64, scratch_operands = 0 : i64, tpu.core_type = #tpu.core_type<tc>, window_params = [{transform_indices = @transform_0, window_bounds = array<i64: 1, 18, 18, 24>}, {pipeline_mode = #tpu.pipeline_mode<synchronous>, transform_indices = @transform_1, window_bounds = array<i64: 216, 24>}, {pipeline_mode = #tpu.pipeline_mode<synchronous>, transform_indices = @transform_2, window_bounds = array<i64: 1, 24>}, {transform_indices = @transform_3, window_bounds = array<i64: 1, 16, 16, 24>}]} {
    %c0 = arith.constant 0 : index
    %c0_0 = arith.constant 0 : index
    %c0_1 = arith.constant 0 : index
    %c0_2 = arith.constant 0 : index
    %0 = vector.load %arg1[%c0, %c0_0, %c0_1, %c0_2] : memref<1x18x18x24xbf16, #tpu.memory_space<vmem>>, vector<1x18x18x24xbf16>
    %1 = vector.shape_cast %0 : vector<1x18x18x24xbf16> to vector<18x18x24xbf16>
    %2 = vector.extract_strided_slice %1 {offsets = [0, 0, 0], sizes = [16, 16, 24], strides = [1, 1, 1]} : vector<18x18x24xbf16> to vector<16x16x24xbf16>
    %3 = vector.extract_strided_slice %1 {offsets = [0, 1, 0], sizes = [16, 16, 24], strides = [1, 1, 1]} : vector<18x18x24xbf16> to vector<16x16x24xbf16>
    %4 = vector.extract_strided_slice %1 {offsets = [0, 2, 0], sizes = [16, 16, 24], strides = [1, 1, 1]} : vector<18x18x24xbf16> to vector<16x16x24xbf16>
    %5 = vector.extract_strided_slice %1 {offsets = [1, 0, 0], sizes = [16, 16, 24], strides = [1, 1, 1]} : vector<18x18x24xbf16> to vector<16x16x24xbf16>
    %6 = vector.extract_strided_slice %1 {offsets = [1, 1, 0], sizes = [16, 16, 24], strides = [1, 1, 1]} : vector<18x18x24xbf16> to vector<16x16x24xbf16>
    %7 = vector.extract_strided_slice %1 {offsets = [1, 2, 0], sizes = [16, 16, 24], strides = [1, 1, 1]} : vector<18x18x24xbf16> to vector<16x16x24xbf16>
    %8 = vector.extract_strided_slice %1 {offsets = [2, 0, 0], sizes = [16, 16, 24], strides = [1, 1, 1]} : vector<18x18x24xbf16> to vector<16x16x24xbf16>
    %9 = vector.extract_strided_slice %1 {offsets = [2, 1, 0], sizes = [16, 16, 24], strides = [1, 1, 1]} : vector<18x18x24xbf16> to vector<16x16x24xbf16>
    %10 = vector.extract_strided_slice %1 {offsets = [2, 2, 0], sizes = [16, 16, 24], strides = [1, 1, 1]} : vector<18x18x24xbf16> to vector<16x16x24xbf16>
    %11 = tpu.concatenate %2, %3, %4, %5, %6, %7, %8, %9, %10 in 2 : vector<16x16x24xbf16>, vector<16x16x24xbf16>, vector<16x16x24xbf16>, vector<16x16x24xbf16>, vector<16x16x24xbf16>, vector<16x16x24xbf16>, vector<16x16x24xbf16>, vector<16x16x24xbf16>, vector<16x16x24xbf16> -> vector<16x16x216xbf16>
    %12 = vector.shape_cast %11 : vector<16x16x216xbf16> to vector<256x216xbf16>
    %c0_3 = arith.constant 0 : index
    %c0_4 = arith.constant 0 : index
    %13 = vector.load %arg2[%c0_3, %c0_4] : memref<216x24xbf16, #tpu.memory_space<vmem>>, vector<216x24xbf16>
    %cst = arith.constant dense<0.000000e+00> : vector<256x24xf32>
    %14 = tpu.matmul %12, %13, %cst {dimension_numbers = #tpu.dot_dimension_numbers<[1], [0], [0], [1], [0, 0, 1, 1], [], []>} : vector<256x216xbf16>, vector<216x24xbf16>, vector<256x24xf32> -> vector<256x24xf32>
    %c0_5 = arith.constant 0 : index
    %c0_6 = arith.constant 0 : index
    %15 = vector.load %arg3[%c0_5, %c0_6] : memref<1x24xf32, #tpu.memory_space<vmem>>, vector<1x24xf32>
    %16 = vector.broadcast %15 : vector<1x24xf32> to vector<256x24xf32>
    %17 = arith.addf %14, %16 : vector<256x24xf32>
    %cst_7 = arith.constant 0.000000e+00 : f32
    %18 = vector.broadcast %cst_7 : f32 to vector<256x24xf32>
    %19 = arith.maximumf %17, %18 : vector<256x24xf32>
    %20 = vector.shape_cast %19 : vector<256x24xf32> to vector<1x16x16x24xf32>
    %21 = arith.truncf %20 : vector<1x16x16x24xf32> to vector<1x16x16x24xbf16>
    %c0_8 = arith.constant 0 : index
    %c0_9 = arith.constant 0 : index
    %c0_10 = arith.constant 0 : index
    %c0_11 = arith.constant 0 : index
    %22 = vector.load %arg4[%c0_8, %c0_9, %c0_10, %c0_11] : memref<1x16x16x24xbf16, #tpu.memory_space<vmem>>, vector<1x16x16x24xbf16>
    tpu.vector_store %arg4[%c0_8, %c0_9, %c0_10, %c0_11], %21 {strides = array<i32>} : memref<1x16x16x24xbf16, #tpu.memory_space<vmem>>, vector<1x16x16x24xbf16>,
    return
  }
  func.func @transform_0(%arg0: i32) -> (i32, i32, i32, i32) {
    %c0_i32 = arith.constant 0 : i32
    %c0_i32_0 = arith.constant 0 : i32
    %c0_i32_1 = arith.constant 0 : i32
    %c0_i32_2 = arith.constant 0 : i32
    return %arg0, %c0_i32, %c0_i32_0, %c0_i32_1 : i32, i32, i32, i32
  }
  func.func @transform_1(%arg0: i32) -> (i32, i32) {
    %c0_i32 = arith.constant 0 : i32
    %c0_i32_0 = arith.constant 0 : i32
    %c0_i32_1 = arith.constant 0 : i32
    return %c0_i32, %c0_i32_0 : i32, i32
  }
  func.func @transform_2(%arg0: i32) -> (i32, i32) {
    %c0_i32 = arith.constant 0 : i32
    %c0_i32_0 = arith.constant 0 : i32
    %c0_i32_1 = arith.constant 0 : i32
    return %c0_i32, %c0_i32_0 : i32, i32
  }
  func.func @transform_3(%arg0: i32) -> (i32, i32, i32, i32) {
    %c0_i32 = arith.constant 0 : i32
    %c0_i32_0 = arith.constant 0 : i32
    %c0_i32_1 = arith.constant 0 : i32
    %c0_i32_2 = arith.constant 0 : i32
    return %arg0, %c0_i32, %c0_i32_0, %c0_i32_1 : i32, i32, i32, i32
  }
}

module attributes {stable_mosaic.version = 11 : i64} {
  func.func @_focus_change_kernel(%arg0: i32, %arg1: memref<512x24xbf16, #tpu.memory_space<vmem>>, %arg2: memref<512x24xbf16, #tpu.memory_space<vmem>>, %arg3: memref<24x32xbf16, #tpu.memory_space<vmem>>, %arg4: memref<24x32xbf16, #tpu.memory_space<vmem>>, %arg5: memref<24x32xbf16, #tpu.memory_space<vmem>>, %arg6: memref<1x32xf32, #tpu.memory_space<vmem>>, %arg7: memref<32x128xbf16, #tpu.memory_space<vmem>>, %arg8: memref<1x128xf32, #tpu.memory_space<vmem>>, %arg9: memref<512x128xf32, #tpu.memory_space<vmem>>, %arg10: memref<512x24xbf16, #tpu.memory_space<vmem>>, %arg11: memref<512x24xbf16, #tpu.memory_space<vmem>>) attributes {dimension_semantics = [#tpu.dimension_semantics<parallel>], iteration_bounds = array<i64: 1>, scalar_prefetch = 0 : i64, scratch_operands = 0 : i64, tpu.core_type = #tpu.core_type<tc>, window_params = [{transform_indices = @transform_0, window_bounds = array<i64: 512, 24>}, {transform_indices = @transform_1, window_bounds = array<i64: 512, 24>}, {pipeline_mode = #tpu.pipeline_mode<synchronous>, transform_indices = @transform_2, window_bounds = array<i64: 24, 32>}, {pipeline_mode = #tpu.pipeline_mode<synchronous>, transform_indices = @transform_3, window_bounds = array<i64: 24, 32>}, {pipeline_mode = #tpu.pipeline_mode<synchronous>, transform_indices = @transform_4, window_bounds = array<i64: 24, 32>}, {pipeline_mode = #tpu.pipeline_mode<synchronous>, transform_indices = @transform_5, window_bounds = array<i64: 1, 32>}, {pipeline_mode = #tpu.pipeline_mode<synchronous>, transform_indices = @transform_6, window_bounds = array<i64: 32, 128>}, {pipeline_mode = #tpu.pipeline_mode<synchronous>, transform_indices = @transform_7, window_bounds = array<i64: 1, 128>}, {transform_indices = @transform_8, window_bounds = array<i64: 512, 128>}, {transform_indices = @transform_9, window_bounds = array<i64: 512, 24>}, {transform_indices = @transform_10, window_bounds = array<i64: 512, 24>}]} {
    %c0 = arith.constant 0 : index
    %c0_0 = arith.constant 0 : index
    %0 = vector.load %arg1[%c0, %c0_0] : memref<512x24xbf16, #tpu.memory_space<vmem>>, vector<512x24xbf16>
    %c0_1 = arith.constant 0 : index
    %c0_2 = arith.constant 0 : index
    %1 = vector.load %arg2[%c0_1, %c0_2] : memref<512x24xbf16, #tpu.memory_space<vmem>>, vector<512x24xbf16>
    %2 = arith.extf %0 : vector<512x24xbf16> to vector<512x24xf32>
    %3 = arith.extf %1 : vector<512x24xbf16> to vector<512x24xf32>
    %4 = arith.subf %2, %3 : vector<512x24xf32>
    %5 = arith.mulf %4, %4 : vector<512x24xf32>
    %cst = arith.constant dense<0.000000e+00> : vector<512xf32>
    %6 = vector.multi_reduction <add>, %5, %cst [1] : vector<512x24xf32> to vector<512xf32>
    %7 = vector.shape_cast %6 : vector<512xf32> to vector<512x1xf32>
    %cst_3 = arith.constant 2.400000e+01 : f32
    %8 = vector.broadcast %cst_3 : f32 to vector<512x1xf32>
    %9 = arith.divf %7, %8 : vector<512x1xf32>
    %10 = arith.negf %9 : vector<512x1xf32>
    %11 = math.exp %10 : vector<512x1xf32>
    %cst_4 = arith.constant 1.000000e+00 : f32
    %12 = vector.broadcast %cst_4 : f32 to vector<512x1xf32>
    %13 = arith.addf %12, %11 : vector<512x1xf32>
    %14 = arith.divf %12, %13 : vector<512x1xf32>
    %15 = arith.extf %0 : vector<512x24xbf16> to vector<512x24xf32>
    %16 = vector.broadcast %14 : vector<512x1xf32> to vector<512x24xf32>
    %17 = arith.mulf %15, %16 : vector<512x24xf32>
    %18 = arith.truncf %17 : vector<512x24xf32> to vector<512x24xbf16>
    %19 = arith.extf %1 : vector<512x24xbf16> to vector<512x24xf32>
    %20 = vector.broadcast %14 : vector<512x1xf32> to vector<512x24xf32>
    %21 = arith.mulf %19, %20 : vector<512x24xf32>
    %22 = arith.truncf %21 : vector<512x24xf32> to vector<512x24xbf16>
    %c0_5 = arith.constant 0 : index
    %c0_6 = arith.constant 0 : index
    %23 = vector.load %arg10[%c0_5, %c0_6] : memref<512x24xbf16, #tpu.memory_space<vmem>>, vector<512x24xbf16>
    tpu.vector_store %arg10[%c0_5, %c0_6], %18 {strides = array<i32>} : memref<512x24xbf16, #tpu.memory_space<vmem>>, vector<512x24xbf16>,
    %c0_7 = arith.constant 0 : index
    %c0_8 = arith.constant 0 : index
    %24 = vector.load %arg11[%c0_7, %c0_8] : memref<512x24xbf16, #tpu.memory_space<vmem>>, vector<512x24xbf16>
    tpu.vector_store %arg11[%c0_7, %c0_8], %22 {strides = array<i32>} : memref<512x24xbf16, #tpu.memory_space<vmem>>, vector<512x24xbf16>,
    %25 = math.absf %4 : vector<512x24xf32>
    %26 = arith.truncf %25 : vector<512x24xf32> to vector<512x24xbf16>
    %c0_9 = arith.constant 0 : index
    %c0_10 = arith.constant 0 : index
    %27 = vector.load %arg3[%c0_9, %c0_10] : memref<24x32xbf16, #tpu.memory_space<vmem>>, vector<24x32xbf16>
    %cst_11 = arith.constant dense<0.000000e+00> : vector<512x32xf32>
    %28 = tpu.matmul %18, %27, %cst_11 {dimension_numbers = #tpu.dot_dimension_numbers<[1], [0], [0], [1], [0, 0, 1, 1], [], []>} : vector<512x24xbf16>, vector<24x32xbf16>, vector<512x32xf32> -> vector<512x32xf32>
    %c0_12 = arith.constant 0 : index
    %c0_13 = arith.constant 0 : index
    %29 = vector.load %arg4[%c0_12, %c0_13] : memref<24x32xbf16, #tpu.memory_space<vmem>>, vector<24x32xbf16>
    %cst_14 = arith.constant dense<0.000000e+00> : vector<512x32xf32>
    %30 = tpu.matmul %22, %29, %cst_14 {dimension_numbers = #tpu.dot_dimension_numbers<[1], [0], [0], [1], [0, 0, 1, 1], [], []>} : vector<512x24xbf16>, vector<24x32xbf16>, vector<512x32xf32> -> vector<512x32xf32>
    %31 = arith.addf %28, %30 : vector<512x32xf32>
    %c0_15 = arith.constant 0 : index
    %c0_16 = arith.constant 0 : index
    %32 = vector.load %arg5[%c0_15, %c0_16] : memref<24x32xbf16, #tpu.memory_space<vmem>>, vector<24x32xbf16>
    %cst_17 = arith.constant dense<0.000000e+00> : vector<512x32xf32>
    %33 = tpu.matmul %26, %32, %cst_17 {dimension_numbers = #tpu.dot_dimension_numbers<[1], [0], [0], [1], [0, 0, 1, 1], [], []>} : vector<512x24xbf16>, vector<24x32xbf16>, vector<512x32xf32> -> vector<512x32xf32>
    %34 = arith.addf %31, %33 : vector<512x32xf32>
    %c0_18 = arith.constant 0 : index
    %c0_19 = arith.constant 0 : index
    %35 = vector.load %arg6[%c0_18, %c0_19] : memref<1x32xf32, #tpu.memory_space<vmem>>, vector<1x32xf32>
    %36 = vector.broadcast %35 : vector<1x32xf32> to vector<512x32xf32>
    %37 = arith.addf %34, %36 : vector<512x32xf32>
    %cst_20 = arith.constant 0.000000e+00 : f32
    %38 = vector.broadcast %cst_20 : f32 to vector<512x32xf32>
    %39 = arith.maximumf %37, %38 : vector<512x32xf32>
    %40 = arith.truncf %39 : vector<512x32xf32> to vector<512x32xbf16>
    %c0_21 = arith.constant 0 : index
    %c0_22 = arith.constant 0 : index
    %41 = vector.load %arg7[%c0_21, %c0_22] : memref<32x128xbf16, #tpu.memory_space<vmem>>, vector<32x128xbf16>
    %cst_23 = arith.constant dense<0.000000e+00> : vector<512x128xf32>
    %42 = tpu.matmul %40, %41, %cst_23 {dimension_numbers = #tpu.dot_dimension_numbers<[1], [0], [0], [1], [0, 0, 1, 1], [], []>} : vector<512x32xbf16>, vector<32x128xbf16>, vector<512x128xf32> -> vector<512x128xf32>
    %c0_24 = arith.constant 0 : index
    %c0_25 = arith.constant 0 : index
    %43 = vector.load %arg8[%c0_24, %c0_25] : memref<1x128xf32, #tpu.memory_space<vmem>>, vector<1x128xf32>
    %44 = vector.broadcast %43 : vector<1x128xf32> to vector<512x128xf32>
    %45 = arith.addf %42, %44 : vector<512x128xf32>
    %46 = arith.negf %45 : vector<512x128xf32>
    %47 = math.exp %46 : vector<512x128xf32>
    %cst_26 = arith.constant 1.000000e+00 : f32
    %48 = vector.broadcast %cst_26 : f32 to vector<512x128xf32>
    %49 = arith.addf %48, %47 : vector<512x128xf32>
    %50 = arith.divf %48, %49 : vector<512x128xf32>
    %c0_27 = arith.constant 0 : index
    %c0_28 = arith.constant 0 : index
    %51 = vector.load %arg9[%c0_27, %c0_28] : memref<512x128xf32, #tpu.memory_space<vmem>>, vector<512x128xf32>
    tpu.vector_store %arg9[%c0_27, %c0_28], %50 {strides = array<i32>} : memref<512x128xf32, #tpu.memory_space<vmem>>, vector<512x128xf32>,
    return
  }
  func.func @transform_0(%arg0: i32) -> (i32, i32) {
    %c0_i32 = arith.constant 0 : i32
    %c0_i32_0 = arith.constant 0 : i32
    return %arg0, %c0_i32 : i32, i32
  }
  func.func @transform_1(%arg0: i32) -> (i32, i32) {
    %c0_i32 = arith.constant 0 : i32
    %c0_i32_0 = arith.constant 0 : i32
    return %arg0, %c0_i32 : i32, i32
  }
  func.func @transform_2(%arg0: i32) -> (i32, i32) {
    %c0_i32 = arith.constant 0 : i32
    %c0_i32_0 = arith.constant 0 : i32
    %c0_i32_1 = arith.constant 0 : i32
    return %c0_i32, %c0_i32_0 : i32, i32
  }
  func.func @transform_3(%arg0: i32) -> (i32, i32) {
    %c0_i32 = arith.constant 0 : i32
    %c0_i32_0 = arith.constant 0 : i32
    %c0_i32_1 = arith.constant 0 : i32
    return %c0_i32, %c0_i32_0 : i32, i32
  }
  func.func @transform_4(%arg0: i32) -> (i32, i32) {
    %c0_i32 = arith.constant 0 : i32
    %c0_i32_0 = arith.constant 0 : i32
    %c0_i32_1 = arith.constant 0 : i32
    return %c0_i32, %c0_i32_0 : i32, i32
  }
  func.func @transform_5(%arg0: i32) -> (i32, i32) {
    %c0_i32 = arith.constant 0 : i32
    %c0_i32_0 = arith.constant 0 : i32
    %c0_i32_1 = arith.constant 0 : i32
    return %c0_i32, %c0_i32_0 : i32, i32
  }
  func.func @transform_6(%arg0: i32) -> (i32, i32) {
    %c0_i32 = arith.constant 0 : i32
    %c0_i32_0 = arith.constant 0 : i32
    %c0_i32_1 = arith.constant 0 : i32
    return %c0_i32, %c0_i32_0 : i32, i32
  }
  func.func @transform_7(%arg0: i32) -> (i32, i32) {
    %c0_i32 = arith.constant 0 : i32
    %c0_i32_0 = arith.constant 0 : i32
    %c0_i32_1 = arith.constant 0 : i32
    return %c0_i32, %c0_i32_0 : i32, i32
  }
  func.func @transform_8(%arg0: i32) -> (i32, i32) {
    %c0_i32 = arith.constant 0 : i32
    %c0_i32_0 = arith.constant 0 : i32
    return %arg0, %c0_i32 : i32, i32
  }
  func.func @transform_9(%arg0: i32) -> (i32, i32) {
    %c0_i32 = arith.constant 0 : i32
    %c0_i32_0 = arith.constant 0 : i32
    return %arg0, %c0_i32 : i32, i32
  }
  func.func @transform_10(%arg0: i32) -> (i32, i32) {
    %c0_i32 = arith.constant 0 : i32
    %c0_i32_0 = arith.constant 0 : i32
    return %arg0, %c0_i32 : i32, i32
  }
}

</mosaic_0001>

<llo_original>
// kernel: cfnet_forward.13
$region0: #{cfnet_forward.13}
  #allocation0 [shape = 'u32[]', space=smem, size = 0x4, offset = 0x4, fixed_abs, tag = 'smem constant byte address 0x4 - core index']
  #allocation1 [shape = 'u32[144,128]{1,0:T(1,128)}', space=vmem, size = 0x12000, scoped, tag = 'internal scratch']
  %s0 = inlined_call_operand.vmem [shape: bf16[256,36], index: 0, kind: input, shape index: {}]
  %s1 = inlined_call_operand.vmem [shape: bf16[36,24], index: 1, kind: input, shape index: {}]
  %s2 = inlined_call_operand.vmem [shape: f32[1,24], index: 2, kind: input, shape index: {}]
  %s3 = inlined_call_operand.vmem [shape: bf16[256,24], index: 3, kind: output, shape index: {}]
  %s4 = sld [smem:[#allocation0]]
  $region22: #{cfnet_forward.13} parent=0
    _
  %s6 = ssub.s32 1, %s4
  %s7 = scalar_select 0, %s6, %s4
  // Predicated region
  $region2: #{cfnet_forward.13} parent=0 // pred_check
    _
  $region3: #{cfnet_forward.13} parent=0 // pred_check_branch
    %9 = sbr.rel (0) target = $region5
  $region4: #{cfnet_forward.13} parent=0 // pred_region
    _
  $region5: #{cfnet_forward.13} parent=0 // pred_fallthru
    _
  // Predicated region
  $region6: #{cfnet_forward.13} parent=0 // pred_check
    _
  $region7: #{cfnet_forward.13} parent=0 // pred_check_branch
    %11 = sbr.rel (0) target = $region9
  $region8: #{cfnet_forward.13} parent=0 // pred_region
    _
  $region9: #{cfnet_forward.13} parent=0 // pred_fallthru
    _
  // Predicated region
  $region10: #{cfnet_forward.13} parent=0 // pred_check
    _
  $region11: #{cfnet_forward.13} parent=0 // pred_check_branch
    %13 = sbr.rel (0) target = $region13
  $region12: #{cfnet_forward.13} parent=0 // pred_region
    _
  $region13: #{cfnet_forward.13} parent=0 // pred_fallthru
    _
  %v15 = vld [vmem:[%s0] sm:$0xf]
  %v16 = vld [vmem:[%s0 + $0x4] sm:$0xf]
  %v17 = vld [vmem:[%s0 + $0x8] sm:$0xf]
  %v18 = vld [vmem:[%s0 + $0xc] sm:$0xf]
  %v19 = vld [vmem:[%s0 + $0x10] sm:$0xf]
  %v20 = vld [vmem:[%s0 + $0x14] sm:$0xf]
  %v21 = vld [vmem:[%s0 + $0x18] sm:$0xf]
  %v22 = vld [vmem:[%s0 + $0x1c] sm:$0xf]
  %v23 = vld [vmem:[%s0 + $0x20] sm:$0xf]
  %v24 = vld [vmem:[%s0 + $0x24] sm:$0xf]
  %v25 = vld [vmem:[%s0 + $0x28] sm:$0xf]
  %v26 = vld [vmem:[%s0 + $0x2c] sm:$0xf]
  %v27 = vld [vmem:[%s0 + $0x30] sm:$0xf]
  %v28 = vld [vmem:[%s0 + $0x34] sm:$0xf]
  %v29 = vld [vmem:[%s0 + $0x38] sm:$0xf]
  %v30 = vld [vmem:[%s0 + $0x3c] sm:$0xf]
  %v31 = vld [vmem:[%s0 + $0x40] sm:$0xf]
  %v32 = vld [vmem:[%s0 + $0x44] sm:$0xf]
  %v33 = vld [vmem:[%s0 + $0x48] sm:$0xf]
  %v34 = vld [vmem:[%s0 + $0x4c] sm:$0xf]
  %v35 = vld [vmem:[%s0 + $0x50] sm:$0xf]
  %v36 = vld [vmem:[%s0 + $0x54] sm:$0xf]
  %v37 = vld [vmem:[%s0 + $0x58] sm:$0xf]
  %v38 = vld [vmem:[%s0 + $0x5c] sm:$0xf]
  %v39 = vld [vmem:[%s0 + $0x60] sm:$0xf]
  %v40 = vld [vmem:[%s0 + $0x64] sm:$0xf]
  %v41 = vld [vmem:[%s0 + $0x68] sm:$0xf]
  %v42 = vld [vmem:[%s0 + $0x6c] sm:$0xf]
  %v43 = vld [vmem:[%s0 + $0x70] sm:$0xf]
  %v44 = vld [vmem:[%s0 + $0x74] sm:$0xf]
  %v45 = vld [vmem:[%s0 + $0x78] sm:$0xf]
  %v46 = vld [vmem:[%s0 + $0x7c] sm:$0xf]
  %v47 = vld [vmem:[%s1] sm:$0xf]
  %v48 = vld [vmem:[%s1 + $0x4] sm:$0xf]
  %v49 = vld [vmem:[%s1 + $0x8] sm:$0xf]
  %v50 = vld [vmem:[%s1 + $0xc] sm:$0xf]
  %v51 = vld [vmem:[%s1 + $0x10] sm:$0x3]
  %v52 = vld [vmem:[%s2] sm:$0x1]
  %v54 = vlaneseq
  %v55 = vshrl.u32 %v54, 7
  %v56 = vsub.s32 0, %v55
  %v57 = vrot.slane %v52, %v56
  %v91 = vunpack.c.l.b16 %v15
  %v92 = vunpack.c.l.b16 %v16
  %v93 = vunpack.c.l.b16 %v17
  %v94 = vunpack.c.l.b16 %v18
  %v95 = vunpack.c.l.b16 %v19
  %v96 = vunpack.c.l.b16 %v20
  %v97 = vunpack.c.l.b16 %v21
  %v98 = vunpack.c.l.b16 %v22
  %v99 = vunpack.c.l.b16 %v23
  %v100 = vunpack.c.l.b16 %v24
  %v101 = vunpack.c.l.b16 %v25
  %v102 = vunpack.c.l.b16 %v26
  %v103 = vunpack.c.l.b16 %v27
  %v104 = vunpack.c.l.b16 %v28
  %v105 = vunpack.c.l.b16 %v29
  %v106 = vunpack.c.l.b16 %v30
  %v107 = vunpack.c.l.b16 %v31
  %v108 = vunpack.c.l.b16 %v32
  %v109 = vunpack.c.l.b16 %v33
  %v110 = vunpack.c.l.b16 %v34
  %v111 = vunpack.c.l.b16 %v35
  %v112 = vunpack.c.l.b16 %v36
  %v113 = vunpack.c.l.b16 %v37
  %v114 = vunpack.c.l.b16 %v38
  %v115 = vunpack.c.l.b16 %v39
  %v116 = vunpack.c.l.b16 %v40
  %v117 = vunpack.c.l.b16 %v41
  %v118 = vunpack.c.l.b16 %v42
  %v119 = vunpack.c.l.b16 %v43
  %v120 = vunpack.c.l.b16 %v44
  %v121 = vunpack.c.l.b16 %v45
  %v122 = vunpack.c.l.b16 %v46
  %v123 = vpack.c.b16 %v92, %v91
  %v124 = vpack.c.b16 %v94, %v93
  %v125 = vpack.c.b16 %v96, %v95
  %v126 = vpack.c.b16 %v98, %v97
  %v127 = vpack.c.b16 %v100, %v99
  %v128 = vpack.c.b16 %v102, %v101
  %v129 = vpack.c.b16 %v104, %v103
  %v130 = vpack.c.b16 %v106, %v105
  %v131 = vpack.c.b16 %v108, %v107
  %v132 = vpack.c.b16 %v110, %v109
  %v133 = vpack.c.b16 %v112, %v111
  %v134 = vpack.c.b16 %v114, %v113
  %v135 = vpack.c.b16 %v116, %v115
  %v136 = vpack.c.b16 %v118, %v117
  %v137 = vpack.c.b16 %v120, %v119
  %v138 = vpack.c.b16 %v122, %v121
  %v144 = vunpack.c.l.b16 %v47
  %v145 = vunpack.c.l.b16 %v48
  %v146 = vunpack.c.l.b16 %v49
  %v147 = vunpack.c.l.b16 %v50
  %v148 = vunpack.c.l.b16 %v51
  %v149 = vpack.c.b16 %v145, %v144
  %v150 = vpack.c.b16 %v147, %v146
  %v151 = vpack.c.b16 %v148, %v148
  %vm154 = vcmask 293888
  %v156 = vsel %vm154, %v123, 0
  %v159 = vsel %vm154, %v124, 0
  %v162 = vsel %vm154, %v125, 0
  %v165 = vsel %vm154, %v126, 0
  %v168 = vsel %vm154, %v127, 0
  %v171 = vsel %vm154, %v128, 0
  %v174 = vsel %vm154, %v129, 0
  %v177 = vsel %vm154, %v130, 0
  %v180 = vsel %vm154, %v131, 0
  %v183 = vsel %vm154, %v132, 0
  %v186 = vsel %vm154, %v133, 0
  %v189 = vsel %vm154, %v134, 0
  %v192 = vsel %vm154, %v135, 0
  %v195 = vsel %vm154, %v136, 0
  %v198 = vsel %vm154, %v137, 0
  %v201 = vsel %vm154, %v138, 0
  %vm203 = vcmask 1041408
  %v205 = vsel %vm203, %v151, 0
  %207 = vmatprep.subr.bf16.mxu0 0
  %208 = vmatpush1.bf16.msra.mxu0 %v149
  %209 = vmatprep.subr.bf16.mxu0 0
  %210 = vmatpush1.bf16.msra.mxu0 %v150
  %211 = vmatprep.subr.bf16.mxu0 0
  %212 = vmatpush1.bf16.msra.mxu0 %v205
  %213 = vmatprep.subr.bf16.mxu0 0
  %214 = vmatpush1.bf16.msra.mxu0 0
  %215 = vmatprep.subr.bf16.mxu0 0
  %216 = vmatpush1.bf16.msra.mxu0 0
  %217 = vmatprep.subr.bf16.mxu0 0
  %218 = vmatpush1.bf16.msra.mxu0 0
  %219 = vmatprep.subr.bf16.mxu0 0
  %220 = vmatpush1.bf16.msra.mxu0 0
  %221 = vmatprep.subr.bf16.mxu0 0
  %222 = vmatpush1.bf16.msra.mxu0 0
  %223 = vmatprep.subr.bf16.mxu0 0
  %224 = vmatpush1.bf16.msra.mxu0 0
  %225 = vmatprep.subr.bf16.mxu0 0
  %226 = vmatpush1.bf16.msra.mxu0 0
  %227 = vmatprep.subr.bf16.mxu0 0
  %228 = vmatpush1.bf16.msra.mxu0 0
  %229 = vmatprep.subr.bf16.mxu0 0
  %230 = vmatpush1.bf16.msra.mxu0 0
  %231 = vmatprep.subr.bf16.mxu0 0
  %232 = vmatpush1.bf16.msra.mxu0 0
  %233 = vmatprep.subr.bf16.mxu0 0
  %234 = vmatpush1.bf16.msra.mxu0 0
  %235 = vmatprep.subr.bf16.mxu0 0
  %236 = vmatpush1.bf16.msra.mxu0 0
  %237 = vmatprep.subr.bf16.mxu0 0
  %238 = vmatpush1.bf16.msra.mxu0 0
  %239 = vmatprep.mubr.bf16.mxu0 0
  %240 = vmatmul.mubr.bf16.gmra.mrb[0].mxu0 %v156
  %v241 = vpop.f32.mrb[0].mxu0
  %v242 = vadd.f32 %v57, %v241
  %v243 = vpop.f32.mrb[0].mxu0
  %v244 = vpop.f32.mrb[0].mxu0
  %v245 = vadd.f32 %v57, %v244
  %v246 = vpop.f32.mrb[0].mxu0
  %247 = vmatprep.mubr.bf16.mxu0 0
  %248 = vmatmul.mubr.bf16.gmra.mrb[0].mxu0 %v159
  %v249 = vpop.f32.mrb[0].mxu0
  %v250 = vadd.f32 %v57, %v249
  %v251 = vpop.f32.mrb[0].mxu0
  %v252 = vpop.f32.mrb[0].mxu0
  %v253 = vadd.f32 %v57, %v252
  %v254 = vpop.f32.mrb[0].mxu0
  %255 = vmatprep.mubr.bf16.mxu0 0
  %256 = vmatmul.mubr.bf16.gmra.mrb[0].mxu0 %v162
  %v257 = vpop.f32.mrb[0].mxu0
  %v258 = vadd.f32 %v57, %v257
  %v259 = vpop.f32.mrb[0].mxu0
  %v260 = vpop.f32.mrb[0].mxu0
  %v261 = vadd.f32 %v57, %v260
  %v262 = vpop.f32.mrb[0].mxu0
  %263 = vmatprep.mubr.bf16.mxu0 0
  %264 = vmatmul.mubr.bf16.gmra.mrb[0].mxu0 %v165
  %v265 = vpop.f32.mrb[0].mxu0
  %v266 = vadd.f32 %v57, %v265
  %v267 = vpop.f32.mrb[0].mxu0
  %v268 = vpop.f32.mrb[0].mxu0
  %v269 = vadd.f32 %v57, %v268
  %v270 = vpop.f32.mrb[0].mxu0
  %271 = vmatprep.mubr.bf16.mxu0 0
  %272 = vmatmul.mubr.bf16.gmra.mrb[0].mxu0 %v168
  %v273 = vpop.f32.mrb[0].mxu0
  %v274 = vadd.f32 %v57, %v273
  %v275 = vpop.f32.mrb[0].mxu0
  %v276 = vpop.f32.mrb[0].mxu0
  %v277 = vadd.f32 %v57, %v276
  %v278 = vpop.f32.mrb[0].mxu0
  %279 = vmatprep.mubr.bf16.mxu0 0
  %280 = vmatmul.mubr.bf16.gmra.mrb[0].mxu0 %v171
  %v281 = vpop.f32.mrb[0].mxu0
  %v282 = vadd.f32 %v57, %v281
  %v283 = vpop.f32.mrb[0].mxu0
  %v284 = vpop.f32.mrb[0].mxu0
  %v285 = vadd.f32 %v57, %v284
  %v286 = vpop.f32.mrb[0].mxu0
  %287 = vmatprep.mubr.bf16.mxu0 0
  %288 = vmatmul.mubr.bf16.gmra.mrb[0].mxu0 %v174
  %v289 = vpop.f32.mrb[0].mxu0
  %v290 = vadd.f32 %v57, %v289
  %v291 = vpop.f32.mrb[0].mxu0
  %v292 = vpop.f32.mrb[0].mxu0
  %v293 = vadd.f32 %v57, %v292
  %v294 = vpop.f32.mrb[0].mxu0
  %295 = vmatprep.mubr.bf16.mxu0 0
  %296 = vmatmul.mubr.bf16.gmra.mrb[0].mxu0 %v177
  %v297 = vpop.f32.mrb[0].mxu0
  %v298 = vadd.f32 %v57, %v297
  %v299 = vpop.f32.mrb[0].mxu0
  %v300 = vpop.f32.mrb[0].mxu0
  %v301 = vadd.f32 %v57, %v300
  %v302 = vpop.f32.mrb[0].mxu0
  %303 = vmatprep.mubr.bf16.mxu0 0
  %304 = vmatmul.mubr.bf16.gmra.mrb[0].mxu0 %v180
  %v305 = vpop.f32.mrb[0].mxu0
  %v306 = vadd.f32 %v57, %v305
  %v307 = vpop.f32.mrb[0].mxu0
  %v308 = vpop.f32.mrb[0].mxu0
  %v309 = vadd.f32 %v57, %v308
  %v310 = vpop.f32.mrb[0].mxu0
  %311 = vmatprep.mubr.bf16.mxu0 0
  %312 = vmatmul.mubr.bf16.gmra.mrb[0].mxu0 %v183
  %v313 = vpop.f32.mrb[0].mxu0
  %v314 = vadd.f32 %v57, %v313
  %v315 = vpop.f32.mrb[0].mxu0
  %v316 = vpop.f32.mrb[0].mxu0
  %v317 = vadd.f32 %v57, %v316
  %v318 = vpop.f32.mrb[0].mxu0
  %319 = vmatprep.mubr.bf16.mxu0 0
  %320 = vmatmul.mubr.bf16.gmra.mrb[0].mxu0 %v186
  %v321 = vpop.f32.mrb[0].mxu0
  %v322 = vadd.f32 %v57, %v321
  %v323 = vpop.f32.mrb[0].mxu0
  %v324 = vpop.f32.mrb[0].mxu0
  %v325 = vadd.f32 %v57, %v324
  %v326 = vpop.f32.mrb[0].mxu0
  %327 = vmatprep.mubr.bf16.mxu0 0
  %328 = vmatmul.mubr.bf16.gmra.mrb[0].mxu0 %v189
  %v329 = vpop.f32.mrb[0].mxu0
  %v330 = vadd.f32 %v57, %v329
  %v331 = vpop.f32.mrb[0].mxu0
  %v332 = vpop.f32.mrb[0].mxu0
  %v333 = vadd.f32 %v57, %v332
  %v334 = vpop.f32.mrb[0].mxu0
  %335 = vmatprep.mubr.bf16.mxu0 0
  %336 = vmatmul.mubr.bf16.gmra.mrb[0].mxu0 %v192
  %v337 = vpop.f32.mrb[0].mxu0
  %v338 = vadd.f32 %v57, %v337
  %v339 = vpop.f32.mrb[0].mxu0
  %v340 = vpop.f32.mrb[0].mxu0
  %v341 = vadd.f32 %v57, %v340
  %v342 = vpop.f32.mrb[0].mxu0
  %343 = vmatprep.mubr.bf16.mxu0 0
  %344 = vmatmul.mubr.bf16.gmra.mrb[0].mxu0 %v195
  %v345 = vpop.f32.mrb[0].mxu0
  %v346 = vadd.f32 %v57, %v345
  %v347 = vpop.f32.mrb[0].mxu0
  %v348 = vpop.f32.mrb[0].mxu0
  %v349 = vadd.f32 %v57, %v348
  %v350 = vpop.f32.mrb[0].mxu0
  %351 = vmatprep.mubr.bf16.mxu0 0
  %352 = vmatmul.mubr.bf16.gmra.mrb[0].mxu0 %v198
  %v353 = vpop.f32.mrb[0].mxu0
  %v354 = vadd.f32 %v57, %v353
  %v355 = vpop.f32.mrb[0].mxu0
  %v356 = vpop.f32.mrb[0].mxu0
  %v357 = vadd.f32 %v57, %v356
  %v358 = vpop.f32.mrb[0].mxu0
  %359 = vmatprep.mubr.bf16.mxu0 0
  %360 = vmatmul.mubr.bf16.gmra.mrb[0].mxu0 %v201
  %v361 = vpop.f32.mrb[0].mxu0
  %v362 = vadd.f32 %v57, %v361
  %v363 = vpop.f32.mrb[0].mxu0
  %v364 = vpop.f32.mrb[0].mxu0
  %v365 = vadd.f32 %v57, %v364
  %v366 = vpop.f32.mrb[0].mxu0
  %367 = vdwg.mxu0
  %v368 = vmax.f32 %v242, 0.0
  %v369 = vmax.f32 %v245, 0.0
  %v370 = vmax.f32 %v250, 0.0
  %v371 = vmax.f32 %v253, 0.0
  %v372 = vmax.f32 %v258, 0.0
  %v373 = vmax.f32 %v261, 0.0
  %v374 = vmax.f32 %v266, 0.0
  %v375 = vmax.f32 %v269, 0.0
  %v376 = vmax.f32 %v274, 0.0
  %v377 = vmax.f32 %v277, 0.0
  %v378 = vmax.f32 %v282, 0.0
  %v379 = vmax.f32 %v285, 0.0
  %v380 = vmax.f32 %v290, 0.0
  %v381 = vmax.f32 %v293, 0.0
  %v382 = vmax.f32 %v298, 0.0
  %v383 = vmax.f32 %v301, 0.0
  %v384 = vmax.f32 %v306, 0.0
  %v385 = vmax.f32 %v309, 0.0
  %v386 = vmax.f32 %v314, 0.0
  %v387 = vmax.f32 %v317, 0.0
  %v388 = vmax.f32 %v322, 0.0
  %v389 = vmax.f32 %v325, 0.0
  %v390 = vmax.f32 %v330, 0.0
  %v391 = vmax.f32 %v333, 0.0
  %v392 = vmax.f32 %v338, 0.0
  %v393 = vmax.f32 %v341, 0.0
  %v394 = vmax.f32 %v346, 0.0
  %v395 = vmax.f32 %v349, 0.0
  %v396 = vmax.f32 %v354, 0.0
  %v397 = vmax.f32 %v357, 0.0
  %v398 = vmax.f32 %v362, 0.0
  %v399 = vmax.f32 %v365, 0.0
  %v400 = vpack.c.bf16 %v369, %v368
  %v401 = vpack.c.bf16 %v371, %v370
  %v402 = vpack.c.bf16 %v373, %v372
  %v403 = vpack.c.bf16 %v375, %v374
  %v404 = vpack.c.bf16 %v377, %v376
  %v405 = vpack.c.bf16 %v379, %v378
  %v406 = vpack.c.bf16 %v381, %v380
  %v407 = vpack.c.bf16 %v383, %v382
  %v408 = vpack.c.bf16 %v385, %v384
  %v409 = vpack.c.bf16 %v387, %v386
  %v410 = vpack.c.bf16 %v389, %v388
  %v411 = vpack.c.bf16 %v391, %v390
  %v412 = vpack.c.bf16 %v393, %v392
  %v413 = vpack.c.bf16 %v395, %v394
  %v414 = vpack.c.bf16 %v397, %v396
  %v415 = vpack.c.bf16 %v399, %v398
  %v432 = vunpack.c.l.b16 %v400
  %v433 = vunpack.c.h.b16 %v400
  %v434 = vunpack.c.l.b16 %v401
  %v435 = vunpack.c.h.b16 %v401
  %v436 = vunpack.c.l.b16 %v402
  %v437 = vunpack.c.h.b16 %v402
  %v438 = vunpack.c.l.b16 %v403
  %v439 = vunpack.c.h.b16 %v403
  %v440 = vunpack.c.l.b16 %v404
  %v441 = vunpack.c.h.b16 %v404
  %v442 = vunpack.c.l.b16 %v405
  %v443 = vunpack.c.h.b16 %v405
  %v444 = vunpack.c.l.b16 %v406
  %v445 = vunpack.c.h.b16 %v406
  %v446 = vunpack.c.l.b16 %v407
  %v447 = vunpack.c.h.b16 %v407
  %v448 = vunpack.c.l.b16 %v408
  %v449 = vunpack.c.h.b16 %v408
  %v450 = vunpack.c.l.b16 %v409
  %v451 = vunpack.c.h.b16 %v409
  %v452 = vunpack.c.l.b16 %v410
  %v453 = vunpack.c.h.b16 %v410
  %v454 = vunpack.c.l.b16 %v411
  %v455 = vunpack.c.h.b16 %v411
  %v456 = vunpack.c.l.b16 %v412
  %v457 = vunpack.c.h.b16 %v412
  %v458 = vunpack.c.l.b16 %v413
  %v459 = vunpack.c.h.b16 %v413
  %v460 = vunpack.c.l.b16 %v414
  %v461 = vunpack.c.h.b16 %v414
  %v462 = vunpack.c.l.b16 %v415
  %v463 = vunpack.c.h.b16 %v415
  %v464 = vpack.c.b16 %v432, %v432
  %v465 = vpack.c.b16 %v433, %v433
  %v466 = vpack.c.b16 %v434, %v434
  %v467 = vpack.c.b16 %v435, %v435
  %v468 = vpack.c.b16 %v436, %v436
  %v469 = vpack.c.b16 %v437, %v437
  %v470 = vpack.c.b16 %v438, %v438
  %v471 = vpack.c.b16 %v439, %v439
  %v472 = vpack.c.b16 %v440, %v440
  %v473 = vpack.c.b16 %v441, %v441
  %v474 = vpack.c.b16 %v442, %v442
  %v475 = vpack.c.b16 %v443, %v443
  %v476 = vpack.c.b16 %v444, %v444
  %v477 = vpack.c.b16 %v445, %v445
  %v478 = vpack.c.b16 %v446, %v446
  %v479 = vpack.c.b16 %v447, %v447
  %v480 = vpack.c.b16 %v448, %v448
  %v481 = vpack.c.b16 %v449, %v449
  %v482 = vpack.c.b16 %v450, %v450
  %v483 = vpack.c.b16 %v451, %v451
  %v484 = vpack.c.b16 %v452, %v452
  %v485 = vpack.c.b16 %v453, %v453
  %v486 = vpack.c.b16 %v454, %v454
  %v487 = vpack.c.b16 %v455, %v455
  %v488 = vpack.c.b16 %v456, %v456
  %v489 = vpack.c.b16 %v457, %v457
  %v490 = vpack.c.b16 %v458, %v458
  %v491 = vpack.c.b16 %v459, %v459
  %v492 = vpack.c.b16 %v460, %v460
  %v493 = vpack.c.b16 %v461, %v461
  %v494 = vpack.c.b16 %v462, %v462
  %v495 = vpack.c.b16 %v463, %v463
  %vm528 = vcmask 191488
  %529 = vst.msk [vmem:[%s3] sm:$0xf] %vm528, %v464
  %530 = vst.msk [vmem:[%s3 + $0x4] sm:$0xf] %vm528, %v465
  %531 = vst.msk [vmem:[%s3 + $0x8] sm:$0xf] %vm528, %v466
  %532 = vst.msk [vmem:[%s3 + $0xc] sm:$0xf] %vm528, %v467
  %533 = vst.msk [vmem:[%s3 + $0x10] sm:$0xf] %vm528, %v468
  %534 = vst.msk [vmem:[%s3 + $0x14] sm:$0xf] %vm528, %v469
  %535 = vst.msk [vmem:[%s3 + $0x18] sm:$0xf] %vm528, %v470
  %536 = vst.msk [vmem:[%s3 + $0x1c] sm:$0xf] %vm528, %v471
  %537 = vst.msk [vmem:[%s3 + $0x20] sm:$0xf] %vm528, %v472
  %538 = vst.msk [vmem:[%s3 + $0x24] sm:$0xf] %vm528, %v473
  %539 = vst.msk [vmem:[%s3 + $0x28] sm:$0xf] %vm528, %v474
  %540 = vst.msk [vmem:[%s3 + $0x2c] sm:$0xf] %vm528, %v475
  %541 = vst.msk [vmem:[%s3 + $0x30] sm:$0xf] %vm528, %v476
  %542 = vst.msk [vmem:[%s3 + $0x34] sm:$0xf] %vm528, %v477
  %543 = vst.msk [vmem:[%s3 + $0x38] sm:$0xf] %vm528, %v478
  %544 = vst.msk [vmem:[%s3 + $0x3c] sm:$0xf] %vm528, %v479
  %545 = vst.msk [vmem:[%s3 + $0x40] sm:$0xf] %vm528, %v480
  %546 = vst.msk [vmem:[%s3 + $0x44] sm:$0xf] %vm528, %v481
  %547 = vst.msk [vmem:[%s3 + $0x48] sm:$0xf] %vm528, %v482
  %548 = vst.msk [vmem:[%s3 + $0x4c] sm:$0xf] %vm528, %v483
  %549 = vst.msk [vmem:[%s3 + $0x50] sm:$0xf] %vm528, %v484
  %550 = vst.msk [vmem:[%s3 + $0x54] sm:$0xf] %vm528, %v485
  %551 = vst.msk [vmem:[%s3 + $0x58] sm:$0xf] %vm528, %v486
  %552 = vst.msk [vmem:[%s3 + $0x5c] sm:$0xf] %vm528, %v487
  %553 = vst.msk [vmem:[%s3 + $0x60] sm:$0xf] %vm528, %v488
  %554 = vst.msk [vmem:[%s3 + $0x64] sm:$0xf] %vm528, %v489
  %555 = vst.msk [vmem:[%s3 + $0x68] sm:$0xf] %vm528, %v490
  %556 = vst.msk [vmem:[%s3 + $0x6c] sm:$0xf] %vm528, %v491
  %557 = vst.msk [vmem:[%s3 + $0x70] sm:$0xf] %vm528, %v492
  %558 = vst.msk [vmem:[%s3 + $0x74] sm:$0xf] %vm528, %v493
  %559 = vst.msk [vmem:[%s3 + $0x78] sm:$0xf] %vm528, %v494
  %560 = vst.msk [vmem:[%s3 + $0x7c] sm:$0xf] %vm528, %v495
  // Predicated region
  $region14: #{cfnet_forward.13} parent=0 // pred_check
    _
  $region15: #{cfnet_forward.13} parent=0 // pred_check_branch
    %562 = sbr.rel (0) target = $region17
  $region16: #{cfnet_forward.13} parent=0 // pred_region
    _
  $region17: #{cfnet_forward.13} parent=0 // pred_fallthru
    _
  // Predicated region
  $region18: #{cfnet_forward.13} parent=0 // pred_check
    _
  $region19: #{cfnet_forward.13} parent=0 // pred_check_branch
    %564 = sbr.rel (0) target = $region21
  $region20: #{cfnet_forward.13} parent=0 // pred_region
    _
  $region21: #{cfnet_forward.13} parent=0 // pred_fallthru
    _

// kernel: cfnet_forward.14
$region0: #{cfnet_forward.14}
  #allocation0 [shape = 'u32[]', space=smem, size = 0x4, offset = 0x4, fixed_abs, tag = 'smem constant byte address 0x4 - core index']
  #allocation1 [shape = 'u32[144,128]{1,0:T(1,128)}', space=vmem, size = 0x12000, scoped, tag = 'internal scratch']
  %s0 = inlined_call_operand.vmem [shape: bf16[64,216], index: 0, kind: input, shape index: {}]
  %s1 = inlined_call_operand.vmem [shape: bf16[216,40], index: 1, kind: input, shape index: {}]
  %s2 = inlined_call_operand.vmem [shape: f32[1,40], index: 2, kind: input, shape index: {}]
  %s3 = inlined_call_operand.vmem [shape: bf16[64,40], index: 3, kind: output, shape index: {}]
  %s4 = sld [smem:[#allocation0]]
  $region22: #{cfnet_forward.14} parent=0
    _
  %s6 = ssub.s32 1, %s4
  %s7 = scalar_select 0, %s6, %s4
  // Predicated region
  $region2: #{cfnet_forward.14} parent=0 // pred_check
    _
  $region3: #{cfnet_forward.14} parent=0 // pred_check_branch
    %9 = sbr.rel (0) target = $region5
  $region4: #{cfnet_forward.14} parent=0 // pred_region
    _
  $region5: #{cfnet_forward.14} parent=0 // pred_fallthru
    _
  // Predicated region
  $region6: #{cfnet_forward.14} parent=0 // pred_check
    _
  $region7: #{cfnet_forward.14} parent=0 // pred_check_branch
    %11 = sbr.rel (0) target = $region9
  $region8: #{cfnet_forward.14} parent=0 // pred_region
    _
  $region9: #{cfnet_forward.14} parent=0 // pred_fallthru
    _
  // Predicated region
  $region10: #{cfnet_forward.14} parent=0 // pred_check
    _
  $region11: #{cfnet_forward.14} parent=0 // pred_check_branch
    %13 = sbr.rel (0) target = $region13
  $region12: #{cfnet_forward.14} parent=0 // pred_region
    _
  $region13: #{cfnet_forward.14} parent=0 // pred_fallthru
    _
  %v15 = vld [vmem:[%s0] sm:$0xff]
  %v16 = vld [vmem:[%s0 + $0x8] sm:$0xff]
  %v17 = vld [vmem:[%s0 + $0x10] sm:$0xff]
  %v18 = vld [vmem:[%s0 + $0x18] sm:$0xff]
  %v19 = vld [vmem:[%s0 + $0x20] sm:$0xff]
  %v20 = vld [vmem:[%s0 + $0x28] sm:$0xff]
  %v21 = vld [vmem:[%s0 + $0x30] sm:$0xff]
  %v22 = vld [vmem:[%s0 + $0x38] sm:$0xff]
  %v23 = vld [vmem:[%s1] sm:$0xf]
  %v24 = vld [vmem:[%s1 + $0x4] sm:$0xf]
  %v25 = vld [vmem:[%s1 + $0x8] sm:$0xf]
  %v26 = vld [vmem:[%s1 + $0xc] sm:$0xf]
  %v27 = vld [vmem:[%s1 + $0x10] sm:$0xf]
  %v28 = vld [vmem:[%s1 + $0x14] sm:$0xf]
  %v29 = vld [vmem:[%s1 + $0x18] sm:$0xf]
  %v30 = vld [vmem:[%s1 + $0x1c] sm:$0xf]
  %v31 = vld [vmem:[%s1 + $0x20] sm:$0xf]
  %v32 = vld [vmem:[%s1 + $0x24] sm:$0xf]
  %v33 = vld [vmem:[%s1 + $0x28] sm:$0xf]
  %v34 = vld [vmem:[%s1 + $0x2c] sm:$0xf]
  %v35 = vld [vmem:[%s1 + $0x30] sm:$0xf]
  %v36 = vld [vmem:[%s1 + $0x34] sm:$0xf]
  %v37 = vld [vmem:[%s1 + $0x38] sm:$0xf]
  %v38 = vld [vmem:[%s1 + $0x3c] sm:$0xf]
  %v39 = vld [vmem:[%s1 + $0x40] sm:$0xf]
  %v40 = vld [vmem:[%s1 + $0x44] sm:$0xf]
  %v41 = vld [vmem:[%s1 + $0x48] sm:$0xf]
  %v42 = vld [vmem:[%s1 + $0x4c] sm:$0xf]
  %v43 = vld [vmem:[%s1 + $0x50] sm:$0xf]
  %v44 = vld [vmem:[%s1 + $0x54] sm:$0xf]
  %v45 = vld [vmem:[%s1 + $0x58] sm:$0xf]
  %v46 = vld [vmem:[%s1 + $0x5c] sm:$0xf]
  %v47 = vld [vmem:[%s1 + $0x60] sm:$0xf]
  %v48 = vld [vmem:[%s1 + $0x64] sm:$0xf]
  %v49 = vld [vmem:[%s1 + $0x68] sm:$0xf]
  %v50 = vld [vmem:[%s2] sm:$0x1]
  %v52 = vlaneseq
  %v53 = vshrl.u32 %v52, 7
  %v54 = vsub.s32 0, %v53
  %v55 = vrot.slane %v50, %v54
  %v65 = vunpack.c.l.b16 %v15
  %v66 = vunpack.c.h.b16 %v15
  %v67 = vunpack.c.l.b16 %v16
  %v68 = vunpack.c.h.b16 %v16
  %v69 = vunpack.c.l.b16 %v17
  %v70 = vunpack.c.h.b16 %v17
  %v71 = vunpack.c.l.b16 %v18
  %v72 = vunpack.c.h.b16 %v18
  %v73 = vunpack.c.l.b16 %v19
  %v74 = vunpack.c.h.b16 %v19
  %v75 = vunpack.c.l.b16 %v20
  %v76 = vunpack.c.h.b16 %v20
  %v77 = vunpack.c.l.b16 %v21
  %v78 = vunpack.c.h.b16 %v21
  %v79 = vunpack.c.l.b16 %v22
  %v80 = vunpack.c.h.b16 %v22
  %v81 = vpack.c.b16 %v67, %v65
  %v82 = vpack.c.b16 %v68, %v66
  %v83 = vpack.c.b16 %v71, %v69
  %v84 = vpack.c.b16 %v72, %v70
  %v85 = vpack.c.b16 %v75, %v73
  %v86 = vpack.c.b16 %v76, %v74
  %v87 = vpack.c.b16 %v79, %v77
  %v88 = vpack.c.b16 %v80, %v78
  %v120 = vunpack.c.l.b16 %v23
  %v121 = vunpack.c.l.b16 %v24
  %v122 = vunpack.c.l.b16 %v25
  %v123 = vunpack.c.l.b16 %v26
  %v124 = vunpack.c.l.b16 %v27
  %v125 = vunpack.c.l.b16 %v28
  %v126 = vunpack.c.l.b16 %v29
  %v127 = vunpack.c.l.b16 %v30
  %v128 = vunpack.c.l.b16 %v31
  %v129 = vunpack.c.l.b16 %v32
  %v130 = vunpack.c.l.b16 %v33
  %v131 = vunpack.c.l.b16 %v34
  %v132 = vunpack.c.l.b16 %v35
  %v133 = vunpack.c.l.b16 %v36
  %v134 = vunpack.c.l.b16 %v37
  %v135 = vunpack.c.l.b16 %v38
  %v136 = vunpack.c.l.b16 %v39
  %v137 = vunpack.c.l.b16 %v40
  %v138 = vunpack.c.l.b16 %v41
  %v139 = vunpack.c.l.b16 %v42
  %v140 = vunpack.c.l.b16 %v43
  %v141 = vunpack.c.l.b16 %v44
  %v142 = vunpack.c.l.b16 %v45
  %v143 = vunpack.c.l.b16 %v46
  %v144 = vunpack.c.l.b16 %v47
  %v145 = vunpack.c.l.b16 %v48
  %v146 = vunpack.c.l.b16 %v49
  %v147 = vpack.c.b16 %v121, %v120
  %v148 = vpack.c.b16 %v123, %v122
  %v149 = vpack.c.b16 %v125, %v124
  %v150 = vpack.c.b16 %v127, %v126
  %v151 = vpack.c.b16 %v129, %v128
  %v152 = vpack.c.b16 %v131, %v130
  %v153 = vpack.c.b16 %v133, %v132
  %v154 = vpack.c.b16 %v135, %v134
  %v155 = vpack.c.b16 %v137, %v136
  %v156 = vpack.c.b16 %v139, %v138
  %v157 = vpack.c.b16 %v141, %v140
  %v158 = vpack.c.b16 %v143, %v142
  %v159 = vpack.c.b16 %v145, %v144
  %v160 = vpack.c.b16 %v146, %v146
  %vm174 = vcmask 719872
  %v176 = vsel %vm174, %v82, 0
  %v179 = vsel %vm174, %v84, 0
  %v182 = vsel %vm174, %v86, 0
  %v185 = vsel %vm174, %v88, 0
  %vm187 = vcmask 1043456
  %v189 = vsel %vm187, %v160, 0
  %191 = vmatprep.subr.bf16.mxu0 0
  %192 = vmatpush1.bf16.msra.mxu0 %v147
  %193 = vmatprep.subr.bf16.mxu0 0
  %194 = vmatpush1.bf16.msra.mxu0 %v148
  %195 = vmatprep.subr.bf16.mxu0 0
  %196 = vmatpush1.bf16.msra.mxu0 %v149
  %197 = vmatprep.subr.bf16.mxu0 0
  %198 = vmatpush1.bf16.msra.mxu0 %v150
  %199 = vmatprep.subr.bf16.mxu0 0
  %200 = vmatpush1.bf16.msra.mxu0 %v151
  %201 = vmatprep.subr.bf16.mxu0 0
  %202 = vmatpush1.bf16.msra.mxu0 %v152
  %203 = vmatprep.subr.bf16.mxu0 0
  %204 = vmatpush1.bf16.msra.mxu0 %v153
  %205 = vmatprep.subr.bf16.mxu0 0
  %206 = vmatpush1.bf16.msra.mxu0 %v154
  %207 = vmatprep.subr.bf16.mxu0 0
  %208 = vmatpush1.bf16.msra.mxu0 %v155
  %209 = vmatprep.subr.bf16.mxu0 0
  %210 = vmatpush1.bf16.msra.mxu0 %v156
  %211 = vmatprep.subr.bf16.mxu0 0
  %212 = vmatpush1.bf16.msra.mxu0 %v157
  %213 = vmatprep.subr.bf16.mxu0 0
  %214 = vmatpush1.bf16.msra.mxu0 %v158
  %215 = vmatprep.subr.bf16.mxu0 0
  %216 = vmatpush1.bf16.msra.mxu0 %v159
  %217 = vmatprep.subr.bf16.mxu0 0
  %218 = vmatpush1.bf16.msra.mxu0 %v189
  %219 = vmatprep.subr.bf16.mxu0 0
  %220 = vmatpush1.bf16.msra.mxu0 0
  %221 = vmatprep.subr.bf16.mxu0 0
  %222 = vmatpush1.bf16.msra.mxu0 0
  %223 = vmatprep.mubr.bf16.mxu0 %v176
  %224 = vmatmul.mubr.bf16.gmra.mrb[0].mxu0 %v81
  %v225 = vpop.f32.mrb[0].mxu0
  %v226 = vadd.f32 %v55, %v225
  %v227 = vpop.f32.mrb[0].mxu0
  %v228 = vpop.f32.mrb[0].mxu0
  %v229 = vadd.f32 %v55, %v228
  %v230 = vpop.f32.mrb[0].mxu0
  %231 = vmatprep.mubr.bf16.mxu0 %v179
  %232 = vmatmul.mubr.bf16.gmra.mrb[0].mxu0 %v83
  %v233 = vpop.f32.mrb[0].mxu0
  %v234 = vadd.f32 %v55, %v233
  %v235 = vpop.f32.mrb[0].mxu0
  %v236 = vpop.f32.mrb[0].mxu0
  %v237 = vadd.f32 %v55, %v236
  %v238 = vpop.f32.mrb[0].mxu0
  %239 = vmatprep.mubr.bf16.mxu0 %v182
  %240 = vmatmul.mubr.bf16.gmra.mrb[0].mxu0 %v85
  %v241 = vpop.f32.mrb[0].mxu0
  %v242 = vadd.f32 %v55, %v241
  %v243 = vpop.f32.mrb[0].mxu0
  %v244 = vpop.f32.mrb[0].mxu0
  %v245 = vadd.f32 %v55, %v244
  %v246 = vpop.f32.mrb[0].mxu0
  %247 = vmatprep.mubr.bf16.mxu0 %v185
  %248 = vmatmul.mubr.bf16.gmra.mrb[0].mxu0 %v87
  %v249 = vpop.f32.mrb[0].mxu0
  %v250 = vadd.f32 %v55, %v249
  %v251 = vpop.f32.mrb[0].mxu0
  %v252 = vpop.f32.mrb[0].mxu0
  %v253 = vadd.f32 %v55, %v252
  %v254 = vpop.f32.mrb[0].mxu0
  %255 = vdwg.mxu0
  %v256 = vmax.f32 %v226, 0.0
  %v257 = vmax.f32 %v229, 0.0
  %v258 = vmax.f32 %v234, 0.0
  %v259 = vmax.f32 %v237, 0.0
  %v260 = vmax.f32 %v242, 0.0
  %v261 = vmax.f32 %v245, 0.0
  %v262 = vmax.f32 %v250, 0.0
  %v263 = vmax.f32 %v253, 0.0
  %v264 = vpack.c.bf16 %v257, %v256
  %v265 = vpack.c.bf16 %v259, %v258
  %v266 = vpack.c.bf16 %v261, %v260
  %v267 = vpack.c.bf16 %v263, %v262
  %v272 = vunpack.c.l.b16 %v264
  %v273 = vunpack.c.h.b16 %v264
  %v274 = vunpack.c.l.b16 %v265
  %v275 = vunpack.c.h.b16 %v265
  %v276 = vunpack.c.l.b16 %v266
  %v277 = vunpack.c.h.b16 %v266
  %v278 = vunpack.c.l.b16 %v267
  %v279 = vunpack.c.h.b16 %v267
  %v280 = vpack.c.b16 %v272, %v272
  %v281 = vpack.c.b16 %v273, %v273
  %v282 = vpack.c.b16 %v274, %v274
  %v283 = vpack.c.b16 %v275, %v275
  %v284 = vpack.c.b16 %v276, %v276
  %v285 = vpack.c.b16 %v277, %v277
  %v286 = vpack.c.b16 %v278, %v278
  %v287 = vpack.c.b16 %v279, %v279
  %vm296 = vcmask 322560
  %297 = vst.msk [vmem:[%s3] sm:$0xf] %vm296, %v280
  %298 = vst.msk [vmem:[%s3 + $0x4] sm:$0xf] %vm296, %v281
  %299 = vst.msk [vmem:[%s3 + $0x8] sm:$0xf] %vm296, %v282
  %300 = vst.msk [vmem:[%s3 + $0xc] sm:$0xf] %vm296, %v283
  %301 = vst.msk [vmem:[%s3 + $0x10] sm:$0xf] %vm296, %v284
  %302 = vst.msk [vmem:[%s3 + $0x14] sm:$0xf] %vm296, %v285
  %303 = vst.msk [vmem:[%s3 + $0x18] sm:$0xf] %vm296, %v286
  %304 = vst.msk [vmem:[%s3 + $0x1c] sm:$0xf] %vm296, %v287
  // Predicated region
  $region14: #{cfnet_forward.14} parent=0 // pred_check
    _
  $region15: #{cfnet_forward.14} parent=0 // pred_check_branch
    %306 = sbr.rel (0) target = $region17
  $region16: #{cfnet_forward.14} parent=0 // pred_region
    _
  $region17: #{cfnet_forward.14} parent=0 // pred_fallthru
    _
  // Predicated region
  $region18: #{cfnet_forward.14} parent=0 // pred_check
    _
  $region19: #{cfnet_forward.14} parent=0 // pred_check_branch
    %308 = sbr.rel (0) target = $region21
  $region20: #{cfnet_forward.14} parent=0 // pred_region
    _
  $region21: #{cfnet_forward.14} parent=0 // pred_fallthru
    _

// kernel: cfnet_forward.15
$region0: #{cfnet_forward.15}
  #allocation0 [shape = 'u32[]', space=smem, size = 0x4, offset = 0x4, fixed_abs, tag = 'smem constant byte address 0x4 - core index']
  #allocation1 [shape = 'u32[144,128]{1,0:T(1,128)}', space=vmem, size = 0x12000, scoped, tag = 'internal scratch']
  %s0 = inlined_call_operand.vmem [shape: bf16[16,360], index: 0, kind: input, shape index: {}]
  %s1 = inlined_call_operand.vmem [shape: bf16[360,64], index: 1, kind: input, shape index: {}]
  %s2 = inlined_call_operand.vmem [shape: f32[1,64], index: 2, kind: input, shape index: {}]
  %s3 = inlined_call_operand.vmem [shape: bf16[16,64], index: 3, kind: output, shape index: {}]
  %s4 = sld [smem:[#allocation0]]
  $region22: #{cfnet_forward.15} parent=0
    _
  %s6 = ssub.s32 1, %s4
  %s7 = scalar_select 0, %s6, %s4
  // Predicated region
  $region2: #{cfnet_forward.15} parent=0 // pred_check
    _
  $region3: #{cfnet_forward.15} parent=0 // pred_check_branch
    %9 = sbr.rel (0) target = $region5
  $region4: #{cfnet_forward.15} parent=0 // pred_region
    _
  $region5: #{cfnet_forward.15} parent=0 // pred_fallthru
    _
  // Predicated region
  $region6: #{cfnet_forward.15} parent=0 // pred_check
    _
  $region7: #{cfnet_forward.15} parent=0 // pred_check_branch
    %11 = sbr.rel (0) target = $region9
  $region8: #{cfnet_forward.15} parent=0 // pred_region
    _
  $region9: #{cfnet_forward.15} parent=0 // pred_fallthru
    _
  // Predicated region
  $region10: #{cfnet_forward.15} parent=0 // pred_check
    _
  $region11: #{cfnet_forward.15} parent=0 // pred_check_branch
    %13 = sbr.rel (0) target = $region13
  $region12: #{cfnet_forward.15} parent=0 // pred_region
    _
  $region13: #{cfnet_forward.15} parent=0 // pred_fallthru
    _
  %v15 = vld [vmem:[%s0] sm:$0xff]
  %v16 = vld [vmem:[%s0 + $0x8] sm:$0xf]
  %v17 = vld [vmem:[%s0 + $0xc] sm:$0xff]
  %v18 = vld [vmem:[%s0 + $0x14] sm:$0xf]
  %v19 = vld [vmem:[%s1] sm:$0xf]
  %v20 = vld [vmem:[%s1 + $0x4] sm:$0xf]
  %v21 = vld [vmem:[%s1 + $0x8] sm:$0xf]
  %v22 = vld [vmem:[%s1 + $0xc] sm:$0xf]
  %v23 = vld [vmem:[%s1 + $0x10] sm:$0xf]
  %v24 = vld [vmem:[%s1 + $0x14] sm:$0xf]
  %v25 = vld [vmem:[%s1 + $0x18] sm:$0xf]
  %v26 = vld [vmem:[%s1 + $0x1c] sm:$0xf]
  %v27 = vld [vmem:[%s1 + $0x20] sm:$0xf]
  %v28 = vld [vmem:[%s1 + $0x24] sm:$0xf]
  %v29 = vld [vmem:[%s1 + $0x28] sm:$0xf]
  %v30 = vld [vmem:[%s1 + $0x2c] sm:$0xf]
  %v31 = vld [vmem:[%s1 + $0x30] sm:$0xf]
  %v32 = vld [vmem:[%s1 + $0x34] sm:$0xf]
  %v33 = vld [vmem:[%s1 + $0x38] sm:$0xf]
  %v34 = vld [vmem:[%s1 + $0x3c] sm:$0xf]
  %v35 = vld [vmem:[%s1 + $0x40] sm:$0xf]
  %v36 = vld [vmem:[%s1 + $0x44] sm:$0xf]
  %v37 = vld [vmem:[%s1 + $0x48] sm:$0xf]
  %v38 = vld [vmem:[%s1 + $0x4c] sm:$0xf]
  %v39 = vld [vmem:[%s1 + $0x50] sm:$0xf]
  %v40 = vld [vmem:[%s1 + $0x54] sm:$0xf]
  %v41 = vld [vmem:[%s1 + $0x58] sm:$0xf]
  %v42 = vld [vmem:[%s1 + $0x5c] sm:$0xf]
  %v43 = vld [vmem:[%s1 + $0x60] sm:$0xf]
  %v44 = vld [vmem:[%s1 + $0x64] sm:$0xf]
  %v45 = vld [vmem:[%s1 + $0x68] sm:$0xf]
  %v46 = vld [vmem:[%s1 + $0x6c] sm:$0xf]
  %v47 = vld [vmem:[%s1 + $0x70] sm:$0xf]
  %v48 = vld [vmem:[%s1 + $0x74] sm:$0xf]
  %v49 = vld [vmem:[%s1 + $0x78] sm:$0xf]
  %v50 = vld [vmem:[%s1 + $0x7c] sm:$0xf]
  %v51 = vld [vmem:[%s1 + $0x80] sm:$0xf]
  %v52 = vld [vmem:[%s1 + $0x84] sm:$0xf]
  %v53 = vld [vmem:[%s1 + $0x88] sm:$0xf]
  %v54 = vld [vmem:[%s1 + $0x8c] sm:$0xf]
  %v55 = vld [vmem:[%s1 + $0x90] sm:$0xf]
  %v56 = vld [vmem:[%s1 + $0x94] sm:$0xf]
  %v57 = vld [vmem:[%s1 + $0x98] sm:$0xf]
  %v58 = vld [vmem:[%s1 + $0x9c] sm:$0xf]
  %v59 = vld [vmem:[%s1 + $0xa0] sm:$0xf]
  %v60 = vld [vmem:[%s1 + $0xa4] sm:$0xf]
  %v61 = vld [vmem:[%s1 + $0xa8] sm:$0xf]
  %v62 = vld [vmem:[%s1 + $0xac] sm:$0xf]
  %v63 = vld [vmem:[%s1 + $0xb0] sm:$0xf]
  %v64 = vld [vmem:[%s2] sm:$0x1]
  %v66 = vlaneseq
  %v67 = vshrl.u32 %v66, 7
  %v68 = vsub.s32 0, %v67
  %v69 = vrot.slane %v64, %v68
  %v75 = vunpack.c.l.b16 %v15
  %v76 = vunpack.c.h.b16 %v15
  %v77 = vunpack.c.l.b16 %v16
  %v78 = vunpack.c.l.b16 %v17
  %v79 = vunpack.c.h.b16 %v17
  %v80 = vunpack.c.l.b16 %v18
  %v81 = vpack.c.b16 %v78, %v75
  %v82 = vpack.c.b16 %v79, %v76
  %v83 = vpack.c.b16 %v80, %v77
  %v131 = vunpack.c.l.b16 %v19
  %v132 = vunpack.c.l.b16 %v20
  %v133 = vunpack.c.l.b16 %v21
  %v134 = vunpack.c.l.b16 %v22
  %v135 = vunpack.c.l.b16 %v23
  %v136 = vunpack.c.l.b16 %v24
  %v137 = vunpack.c.l.b16 %v25
  %v138 = vunpack.c.l.b16 %v26
  %v139 = vunpack.c.l.b16 %v27
  %v140 = vunpack.c.l.b16 %v28
  %v141 = vunpack.c.l.b16 %v29
  %v142 = vunpack.c.l.b16 %v30
  %v143 = vunpack.c.l.b16 %v31
  %v144 = vunpack.c.l.b16 %v32
  %v145 = vunpack.c.l.b16 %v33
  %v146 = vunpack.c.l.b16 %v34
  %v147 = vunpack.c.l.b16 %v35
  %v148 = vunpack.c.l.b16 %v36
  %v149 = vunpack.c.l.b16 %v37
  %v150 = vunpack.c.l.b16 %v38
  %v151 = vunpack.c.l.b16 %v39
  %v152 = vunpack.c.l.b16 %v40
  %v153 = vunpack.c.l.b16 %v41
  %v154 = vunpack.c.l.b16 %v42
  %v155 = vunpack.c.l.b16 %v43
  %v156 = vunpack.c.l.b16 %v44
  %v157 = vunpack.c.l.b16 %v45
  %v158 = vunpack.c.l.b16 %v46
  %v159 = vunpack.c.l.b16 %v47
  %v160 = vunpack.c.l.b16 %v48
  %v161 = vunpack.c.l.b16 %v49
  %v162 = vunpack.c.l.b16 %v50
  %v163 = vunpack.c.l.b16 %v51
  %v164 = vunpack.c.l.b16 %v52
  %v165 = vunpack.c.l.b16 %v53
  %v166 = vunpack.c.l.b16 %v54
  %v167 = vunpack.c.l.b16 %v55
  %v168 = vunpack.c.l.b16 %v56
  %v169 = vunpack.c.l.b16 %v57
  %v170 = vunpack.c.l.b16 %v58
  %v171 = vunpack.c.l.b16 %v59
  %v172 = vunpack.c.l.b16 %v60
  %v173 = vunpack.c.l.b16 %v61
  %v174 = vunpack.c.l.b16 %v62
  %v175 = vunpack.c.l.b16 %v63
  %v176 = vpack.c.b16 %v132, %v131
  %v177 = vpack.c.b16 %v134, %v133
  %v178 = vpack.c.b16 %v136, %v135
  %v179 = vpack.c.b16 %v138, %v137
  %v180 = vpack.c.b16 %v140, %v139
  %v181 = vpack.c.b16 %v142, %v141
  %v182 = vpack.c.b16 %v144, %v143
  %v183 = vpack.c.b16 %v146, %v145
  %v184 = vpack.c.b16 %v148, %v147
  %v185 = vpack.c.b16 %v150, %v149
  %v186 = vpack.c.b16 %v152, %v151
  %v187 = vpack.c.b16 %v154, %v153
  %v188 = vpack.c.b16 %v156, %v155
  %v189 = vpack.c.b16 %v158, %v157
  %v190 = vpack.c.b16 %v160, %v159
  %v191 = vpack.c.b16 %v162, %v161
  %v192 = vpack.c.b16 %v164, %v163
  %v193 = vpack.c.b16 %v166, %v165
  %v194 = vpack.c.b16 %v168, %v167
  %v195 = vpack.c.b16 %v170, %v169
  %v196 = vpack.c.b16 %v172, %v171
  %v197 = vpack.c.b16 %v174, %v173
  %v198 = vpack.c.b16 %v175, %v175
  %vm221 = vcmask 850944
  %v223 = vsel %vm221, %v83, 0
  %vm225 = vcmask 1043456
  %v227 = vsel %vm225, %v198, 0
  %229 = vmatprep.subr.bf16.mxu0 0
  %230 = vmatpush1.bf16.msra.mxu0 %v176
  %231 = vmatprep.subr.bf16.mxu0 0
  %232 = vmatpush1.bf16.msra.mxu0 %v177
  %233 = vmatprep.subr.bf16.mxu0 0
  %234 = vmatpush1.bf16.msra.mxu0 %v178
  %235 = vmatprep.subr.bf16.mxu0 0
  %236 = vmatpush1.bf16.msra.mxu0 %v179
  %237 = vmatprep.subr.bf16.mxu0 0
  %238 = vmatpush1.bf16.msra.mxu0 %v180
  %239 = vmatprep.subr.bf16.mxu0 0
  %240 = vmatpush1.bf16.msra.mxu0 %v181
  %241 = vmatprep.subr.bf16.mxu0 0
  %242 = vmatpush1.bf16.msra.mxu0 %v182
  %243 = vmatprep.subr.bf16.mxu0 0
  %244 = vmatpush1.bf16.msra.mxu0 %v183
  %245 = vmatprep.subr.bf16.mxu0 0
  %246 = vmatpush1.bf16.msra.mxu0 %v184
  %247 = vmatprep.subr.bf16.mxu0 0
  %248 = vmatpush1.bf16.msra.mxu0 %v185
  %249 = vmatprep.subr.bf16.mxu0 0
  %250 = vmatpush1.bf16.msra.mxu0 %v186
  %251 = vmatprep.subr.bf16.mxu0 0
  %252 = vmatpush1.bf16.msra.mxu0 %v187
  %253 = vmatprep.subr.bf16.mxu0 0
  %254 = vmatpush1.bf16.msra.mxu0 %v188
  %255 = vmatprep.subr.bf16.mxu0 0
  %256 = vmatpush1.bf16.msra.mxu0 %v189
  %257 = vmatprep.subr.bf16.mxu0 0
  %258 = vmatpush1.bf16.msra.mxu0 %v190
  %259 = vmatprep.subr.bf16.mxu0 0
  %260 = vmatpush1.bf16.msra.mxu0 %v191
  %261 = vmatprep.mubr.bf16.mxu0 %v82
  %262 = vmatmul.mubr.bf16.gmra.mrb[0].mxu0 %v81
  %v263 = vpop.f32.mrb[0].mxu0
  %v264 = vadd.f32 %v69, %v263
  %v265 = vpop.f32.mrb[0].mxu0
  %v266 = vpop.f32.mrb[0].mxu0
  %v267 = vadd.f32 %v69, %v266
  %v268 = vpop.f32.mrb[0].mxu0
  %269 = vdwg.mxu0
  %270 = vmatprep.subr.bf16.mxu0 0
  %271 = vmatpush1.bf16.msra.mxu0 %v192
  %272 = vmatprep.subr.bf16.mxu0 0
  %273 = vmatpush1.bf16.msra.mxu0 %v193
  %274 = vmatprep.subr.bf16.mxu0 0
  %275 = vmatpush1.bf16.msra.mxu0 %v194
  %276 = vmatprep.subr.bf16.mxu0 0
  %277 = vmatpush1.bf16.msra.mxu0 %v195
  %278 = vmatprep.subr.bf16.mxu0 0
  %279 = vmatpush1.bf16.msra.mxu0 %v196
  %280 = vmatprep.subr.bf16.mxu0 0
  %281 = vmatpush1.bf16.msra.mxu0 %v197
  %282 = vmatprep.subr.bf16.mxu0 0
  %283 = vmatpush1.bf16.msra.mxu0 %v227
  %284 = vmatprep.subr.bf16.mxu0 0
  %285 = vmatpush1.bf16.msra.mxu0 0
  %286 = vmatprep.subr.bf16.mxu0 0
  %287 = vmatpush1.bf16.msra.mxu0 0
  %288 = vmatprep.subr.bf16.mxu0 0
  %289 = vmatpush1.bf16.msra.mxu0 0
  %290 = vmatprep.subr.bf16.mxu0 0
  %291 = vmatpush1.bf16.msra.mxu0 0
  %292 = vmatprep.subr.bf16.mxu0 0
  %293 = vmatpush1.bf16.msra.mxu0 0
  %294 = vmatprep.subr.bf16.mxu0 0
  %295 = vmatpush1.bf16.msra.mxu0 0
  %296 = vmatprep.subr.bf16.mxu0 0
  %297 = vmatpush1.bf16.msra.mxu0 0
  %298 = vmatprep.subr.bf16.mxu0 0
  %299 = vmatpush1.bf16.msra.mxu0 0
  %300 = vmatprep.subr.bf16.mxu0 0
  %301 = vmatpush1.bf16.msra.mxu0 0
  %302 = vmatprep.mubr.bf16.mxu0 0
  %303 = vmatmul.mubr.bf16.gmra.mrb[0].mxu0 %v223
  %v304 = vpop.f32.mrb[0].mxu0
  %v305 = vadd.f32 %v264, %v304
  %v306 = vpop.f32.mrb[0].mxu0
  %v307 = vpop.f32.mrb[0].mxu0
  %v308 = vadd.f32 %v267, %v307
  %v309 = vpop.f32.mrb[0].mxu0
  %310 = vdwg.mxu0
  %v311 = vmax.f32 %v305, 0.0
  %v312 = vmax.f32 %v308, 0.0
  %v313 = vpack.c.bf16 %v312, %v311
  %v315 = vunpack.c.l.b16 %v313
  %v316 = vunpack.c.h.b16 %v313
  %v317 = vpack.c.b16 %v315, %v315
  %v318 = vpack.c.b16 %v316, %v316
  %vm321 = vcmask 519168
  %322 = vst.msk [vmem:[%s3] sm:$0xf] %vm321, %v317
  %323 = vst.msk [vmem:[%s3 + $0x4] sm:$0xf] %vm321, %v318
  // Predicated region
  $region14: #{cfnet_forward.15} parent=0 // pred_check
    _
  $region15: #{cfnet_forward.15} parent=0 // pred_check_branch
    %325 = sbr.rel (0) target = $region17
  $region16: #{cfnet_forward.15} parent=0 // pred_region
    _
  $region17: #{cfnet_forward.15} parent=0 // pred_fallthru
    _
  // Predicated region
  $region18: #{cfnet_forward.15} parent=0 // pred_check
    _
  $region19: #{cfnet_forward.15} parent=0 // pred_check_branch
    %327 = sbr.rel (0) target = $region21
  $region20: #{cfnet_forward.15} parent=0 // pred_region
    _
  $region21: #{cfnet_forward.15} parent=0 // pred_fallthru
    _

// kernel: cfnet_forward.21
$region0: #{cfnet_forward.21}
  #allocation0 [shape = 'u32[]', space=smem, size = 0x4, offset = 0x4, fixed_abs, tag = 'smem constant byte address 0x4 - core index']
  #allocation1 [shape = 'u32[144,128]{1,0:T(1,128)}', space=vmem, size = 0x12000, scoped, tag = 'internal scratch']
  %s0 = inlined_call_operand.vmem [shape: bf16[2,128], index: 0, kind: input, shape index: {}]
  %s1 = inlined_call_operand.vmem [shape: bf16[128,64], index: 1, kind: input, shape index: {}]
  %s2 = inlined_call_operand.vmem [shape: f32[1,64], index: 2, kind: input, shape index: {}]
  %s3 = inlined_call_operand.vmem [shape: bf16[2,64], index: 3, kind: output, shape index: {}]
  %s4 = sld [smem:[#allocation0]]
  $region22: #{cfnet_forward.21} parent=0
    _
  %s6 = ssub.s32 1, %s4
  %s7 = scalar_select 0, %s6, %s4
  // Predicated region
  $region2: #{cfnet_forward.21} parent=0 // pred_check
    _
  $region3: #{cfnet_forward.21} parent=0 // pred_check_branch
    %9 = sbr.rel (0) target = $region5
  $region4: #{cfnet_forward.21} parent=0 // pred_region
    _
  $region5: #{cfnet_forward.21} parent=0 // pred_fallthru
    _
  // Predicated region
  $region6: #{cfnet_forward.21} parent=0 // pred_check
    _
  $region7: #{cfnet_forward.21} parent=0 // pred_check_branch
    %11 = sbr.rel (0) target = $region9
  $region8: #{cfnet_forward.21} parent=0 // pred_region
    _
  $region9: #{cfnet_forward.21} parent=0 // pred_fallthru
    _
  // Predicated region
  $region10: #{cfnet_forward.21} parent=0 // pred_check
    _
  $region11: #{cfnet_forward.21} parent=0 // pred_check_branch
    %13 = sbr.rel (0) target = $region13
  $region12: #{cfnet_forward.21} parent=0 // pred_region
    _
  $region13: #{cfnet_forward.21} parent=0 // pred_fallthru
    _
  %v15 = vld [vmem:[%s0] sm:$0x1]
  %v16 = vld [vmem:[%s1] sm:$0xf]
  %v17 = vld [vmem:[%s1 + $0x4] sm:$0xf]
  %v18 = vld [vmem:[%s1 + $0x8] sm:$0xf]
  %v19 = vld [vmem:[%s1 + $0xc] sm:$0xf]
  %v20 = vld [vmem:[%s1 + $0x10] sm:$0xf]
  %v21 = vld [vmem:[%s1 + $0x14] sm:$0xf]
  %v22 = vld [vmem:[%s1 + $0x18] sm:$0xf]
  %v23 = vld [vmem:[%s1 + $0x1c] sm:$0xf]
  %v24 = vld [vmem:[%s1 + $0x20] sm:$0xf]
  %v25 = vld [vmem:[%s1 + $0x24] sm:$0xf]
  %v26 = vld [vmem:[%s1 + $0x28] sm:$0xf]
  %v27 = vld [vmem:[%s1 + $0x2c] sm:$0xf]
  %v28 = vld [vmem:[%s1 + $0x30] sm:$0xf]
  %v29 = vld [vmem:[%s1 + $0x34] sm:$0xf]
  %v30 = vld [vmem:[%s1 + $0x38] sm:$0xf]
  %v31 = vld [vmem:[%s1 + $0x3c] sm:$0xf]
  %v32 = vld [vmem:[%s2] sm:$0x1]
  %v34 = vlaneseq
  %v35 = vshrl.u32 %v34, 7
  %v36 = vsub.s32 0, %v35
  %v37 = vrot.slane %v32, %v36
  %v55 = vunpack.c.l.b16 %v16
  %v56 = vunpack.c.l.b16 %v17
  %v57 = vunpack.c.l.b16 %v18
  %v58 = vunpack.c.l.b16 %v19
  %v59 = vunpack.c.l.b16 %v20
  %v60 = vunpack.c.l.b16 %v21
  %v61 = vunpack.c.l.b16 %v22
  %v62 = vunpack.c.l.b16 %v23
  %v63 = vunpack.c.l.b16 %v24
  %v64 = vunpack.c.l.b16 %v25
  %v65 = vunpack.c.l.b16 %v26
  %v66 = vunpack.c.l.b16 %v27
  %v67 = vunpack.c.l.b16 %v28
  %v68 = vunpack.c.l.b16 %v29
  %v69 = vunpack.c.l.b16 %v30
  %v70 = vunpack.c.l.b16 %v31
  %v71 = vpack.c.b16 %v56, %v55
  %v72 = vpack.c.b16 %v58, %v57
  %v73 = vpack.c.b16 %v60, %v59
  %v74 = vpack.c.b16 %v62, %v61
  %v75 = vpack.c.b16 %v64, %v63
  %v76 = vpack.c.b16 %v66, %v65
  %v77 = vpack.c.b16 %v68, %v67
  %v78 = vpack.c.b16 %v70, %v69
  %87 = vmatprep.subr.bf16.mxu0 0
  %88 = vmatpush1.bf16.msra.mxu0 %v71
  %89 = vmatprep.subr.bf16.mxu0 0
  %90 = vmatpush1.bf16.msra.mxu0 %v72
  %91 = vmatprep.subr.bf16.mxu0 0
  %92 = vmatpush1.bf16.msra.mxu0 %v73
  %93 = vmatprep.subr.bf16.mxu0 0
  %94 = vmatpush1.bf16.msra.mxu0 %v74
  %95 = vmatprep.subr.bf16.mxu0 0
  %96 = vmatpush1.bf16.msra.mxu0 %v75
  %97 = vmatprep.subr.bf16.mxu0 0
  %98 = vmatpush1.bf16.msra.mxu0 %v76
  %99 = vmatprep.subr.bf16.mxu0 0
  %100 = vmatpush1.bf16.msra.mxu0 %v77
  %101 = vmatprep.subr.bf16.mxu0 0
  %102 = vmatpush1.bf16.msra.mxu0 %v78
  %103 = vmatprep.subr.bf16.mxu0 0
  %104 = vmatpush1.bf16.msra.mxu0 0
  %105 = vmatprep.subr.bf16.mxu0 0
  %106 = vmatpush1.bf16.msra.mxu0 0
  %107 = vmatprep.subr.bf16.mxu0 0
  %108 = vmatpush1.bf16.msra.mxu0 0
  %109 = vmatprep.subr.bf16.mxu0 0
  %110 = vmatpush1.bf16.msra.mxu0 0
  %111 = vmatprep.subr.bf16.mxu0 0
  %112 = vmatpush1.bf16.msra.mxu0 0
  %113 = vmatprep.subr.bf16.mxu0 0
  %114 = vmatpush1.bf16.msra.mxu0 0
  %115 = vmatprep.subr.bf16.mxu0 0
  %116 = vmatpush1.bf16.msra.mxu0 0
  %117 = vmatprep.subr.bf16.mxu0 0
  %118 = vmatpush1.bf16.msra.mxu0 0
  %119 = vmatprep.mubr.bf16.mxu0 0
  %120 = vmatmul.mubr.bf16.gmra.mrb[0].mxu0 %v15
  %v121 = vpop.f32.mrb[0].mxu0
  %v122 = vadd.f32 %v37, %v121
  %v123 = vpop.f32.mrb[0].mxu0
  %v124 = vpop.f32.mrb[0].mxu0
  %v125 = vpop.f32.mrb[0].mxu0
  %126 = vdwg.mxu0
  %v127 = vpack.c.bf16 %v122, %v122
  %vm128 = vcmask 516096
  %129 = vst.msk [vmem:[%s3] sm:$0x1] %vm128, %v127
  // Predicated region
  $region14: #{cfnet_forward.21} parent=0 // pred_check
    _
  $region15: #{cfnet_forward.21} parent=0 // pred_check_branch
    %131 = sbr.rel (0) target = $region17
  $region16: #{cfnet_forward.21} parent=0 // pred_region
    _
  $region17: #{cfnet_forward.21} parent=0 // pred_fallthru
    _
  // Predicated region
  $region18: #{cfnet_forward.21} parent=0 // pred_check
    _
  $region19: #{cfnet_forward.21} parent=0 // pred_check_branch
    %133 = sbr.rel (0) target = $region21
  $region20: #{cfnet_forward.21} parent=0 // pred_region
    _
  $region21: #{cfnet_forward.21} parent=0 // pred_fallthru
    _

// kernel: cfnet_forward.16
$region0: #{cfnet_forward.16}
  #allocation0 [shape = 'u32[]', space=smem, size = 0x4, offset = 0x4, fixed_abs, tag = 'smem constant byte address 0x4 - core index']
  #allocation1 [shape = 'u32[144,128]{1,0:T(1,128)}', space=vmem, size = 0x12000, scoped, tag = 'internal scratch']
  %s0 = inlined_call_operand.vmem [shape: bf16[4,576], index: 0, kind: input, shape index: {}]
  %s1 = inlined_call_operand.vmem [shape: bf16[576,128], index: 1, kind: input, shape index: {}]
  %s2 = inlined_call_operand.vmem [shape: f32[1,128], index: 2, kind: input, shape index: {}]
  %s3 = inlined_call_operand.vmem [shape: bf16[4,128], index: 3, kind: output, shape index: {}]
  %s4 = sld [smem:[#allocation0]]
  $region22: #{cfnet_forward.16} parent=0
    _
  %s6 = ssub.s32 1, %s4
  %s7 = scalar_select 0, %s6, %s4
  // Predicated region
  $region2: #{cfnet_forward.16} parent=0 // pred_check
    _
  $region3: #{cfnet_forward.16} parent=0 // pred_check_branch
    %9 = sbr.rel (0) target = $region5
  $region4: #{cfnet_forward.16} parent=0 // pred_region
    _
  $region5: #{cfnet_forward.16} parent=0 // pred_fallthru
    _
  // Predicated region
  $region6: #{cfnet_forward.16} parent=0 // pred_check
    _
  $region7: #{cfnet_forward.16} parent=0 // pred_check_branch
    %11 = sbr.rel (0) target = $region9
  $region8: #{cfnet_forward.16} parent=0 // pred_region
    _
  $region9: #{cfnet_forward.16} parent=0 // pred_fallthru
    _
  // Predicated region
  $region10: #{cfnet_forward.16} parent=0 // pred_check
    _
  $region11: #{cfnet_forward.16} parent=0 // pred_check_branch
    %13 = sbr.rel (0) target = $region13
  $region12: #{cfnet_forward.16} parent=0 // pred_region
    _
  $region13: #{cfnet_forward.16} parent=0 // pred_fallthru
    _
  %v15 = vld [vmem:[%s0] sm:$0xff]
  %v16 = vld [vmem:[%s0 + $0x8] sm:$0x3]
  %v17 = vld [vmem:[%s1] sm:$0xf]
  %v18 = vld [vmem:[%s1 + $0x4] sm:$0xf]
  %v19 = vld [vmem:[%s1 + $0x8] sm:$0xf]
  %v20 = vld [vmem:[%s1 + $0xc] sm:$0xf]
  %v21 = vld [vmem:[%s1 + $0x10] sm:$0xf]
  %v22 = vld [vmem:[%s1 + $0x14] sm:$0xf]
  %v23 = vld [vmem:[%s1 + $0x18] sm:$0xf]
  %v24 = vld [vmem:[%s1 + $0x1c] sm:$0xf]
  %v25 = vld [vmem:[%s1 + $0x20] sm:$0xf]
  %v26 = vld [vmem:[%s1 + $0x24] sm:$0xf]
  %v27 = vld [vmem:[%s1 + $0x28] sm:$0xf]
  %v28 = vld [vmem:[%s1 + $0x2c] sm:$0xf]
  %v29 = vld [vmem:[%s1 + $0x30] sm:$0xf]
  %v30 = vld [vmem:[%s1 + $0x34] sm:$0xf]
  %v31 = vld [vmem:[%s1 + $0x38] sm:$0xf]
  %v32 = vld [vmem:[%s1 + $0x3c] sm:$0xf]
  %v33 = vld [vmem:[%s1 + $0x40] sm:$0xf]
  %v34 = vld [vmem:[%s1 + $0x44] sm:$0xf]
  %v35 = vld [vmem:[%s1 + $0x48] sm:$0xf]
  %v36 = vld [vmem:[%s1 + $0x4c] sm:$0xf]
  %v37 = vld [vmem:[%s1 + $0x50] sm:$0xf]
  %v38 = vld [vmem:[%s1 + $0x54] sm:$0xf]
  %v39 = vld [vmem:[%s1 + $0x58] sm:$0xf]
  %v40 = vld [vmem:[%s1 + $0x5c] sm:$0xf]
  %v41 = vld [vmem:[%s1 + $0x60] sm:$0xf]
  %v42 = vld [vmem:[%s1 + $0x64] sm:$0xf]
  %v43 = vld [vmem:[%s1 + $0x68] sm:$0xf]
  %v44 = vld [vmem:[%s1 + $0x6c] sm:$0xf]
  %v45 = vld [vmem:[%s1 + $0x70] sm:$0xf]
  %v46 = vld [vmem:[%s1 + $0x74] sm:$0xf]
  %v47 = vld [vmem:[%s1 + $0x78] sm:$0xf]
  %v48 = vld [vmem:[%s1 + $0x7c] sm:$0xf]
  %v49 = vld [vmem:[%s1 + $0x80] sm:$0xf]
  %v50 = vld [vmem:[%s1 + $0x84] sm:$0xf]
  %v51 = vld [vmem:[%s1 + $0x88] sm:$0xf]
  %v52 = vld [vmem:[%s1 + $0x8c] sm:$0xf]
  %v53 = vld [vmem:[%s1 + $0x90] sm:$0xf]
  %v54 = vld [vmem:[%s1 + $0x94] sm:$0xf]
  %v55 = vld [vmem:[%s1 + $0x98] sm:$0xf]
  %v56 = vld [vmem:[%s1 + $0x9c] sm:$0xf]
  %v57 = vld [vmem:[%s1 + $0xa0] sm:$0xf]
  %v58 = vld [vmem:[%s1 + $0xa4] sm:$0xf]
  %v59 = vld [vmem:[%s1 + $0xa8] sm:$0xf]
  %v60 = vld [vmem:[%s1 + $0xac] sm:$0xf]
  %v61 = vld [vmem:[%s1 + $0xb0] sm:$0xf]
  %v62 = vld [vmem:[%s1 + $0xb4] sm:$0xf]
  %v63 = vld [vmem:[%s1 + $0xb8] sm:$0xf]
  %v64 = vld [vmem:[%s1 + $0xbc] sm:$0xf]
  %v65 = vld [vmem:[%s1 + $0xc0] sm:$0xf]
  %v66 = vld [vmem:[%s1 + $0xc4] sm:$0xf]
  %v67 = vld [vmem:[%s1 + $0xc8] sm:$0xf]
  %v68 = vld [vmem:[%s1 + $0xcc] sm:$0xf]
  %v69 = vld [vmem:[%s1 + $0xd0] sm:$0xf]
  %v70 = vld [vmem:[%s1 + $0xd4] sm:$0xf]
  %v71 = vld [vmem:[%s1 + $0xd8] sm:$0xf]
  %v72 = vld [vmem:[%s1 + $0xdc] sm:$0xf]
  %v73 = vld [vmem:[%s1 + $0xe0] sm:$0xf]
  %v74 = vld [vmem:[%s1 + $0xe4] sm:$0xf]
  %v75 = vld [vmem:[%s1 + $0xe8] sm:$0xf]
  %v76 = vld [vmem:[%s1 + $0xec] sm:$0xf]
  %v77 = vld [vmem:[%s1 + $0xf0] sm:$0xf]
  %v78 = vld [vmem:[%s1 + $0xf4] sm:$0xf]
  %v79 = vld [vmem:[%s1 + $0xf8] sm:$0xf]
  %v80 = vld [vmem:[%s1 + $0xfc] sm:$0xf]
  %v81 = vld [vmem:[%s1 + $0x100] sm:$0xf]
  %v82 = vld [vmem:[%s1 + $0x104] sm:$0xf]
  %v83 = vld [vmem:[%s1 + $0x108] sm:$0xf]
  %v84 = vld [vmem:[%s1 + $0x10c] sm:$0xf]
  %v85 = vld [vmem:[%s1 + $0x110] sm:$0xf]
  %v86 = vld [vmem:[%s1 + $0x114] sm:$0xf]
  %v87 = vld [vmem:[%s1 + $0x118] sm:$0xf]
  %v88 = vld [vmem:[%s1 + $0x11c] sm:$0xf]
  %v89 = vld [vmem:[%s2] sm:$0x1]
  %v91 = vlaneseq
  %v92 = vshrl.u32 %v91, 7
  %v93 = vsub.s32 0, %v92
  %v94 = vrot.slane %v89, %v93
  %v98 = vcombine.high %v15, %v15
  %v100 = vunpack.c.l.s4 1983009808
  %v101 = vunpack.c.0.s8 %v100
  %v102 = vlaneseq
  %v103 = vshrl.u32 %v102, 7
  %v104 = vsub.s32 %v101, %v103
  %v105 = vrot.slane %v15, %v104
  %v107 = vunpack.c.l.s4 1983009808
  %v108 = vunpack.c.0.s8 %v107
  %v109 = vlaneseq
  %v110 = vshrl.u32 %v109, 7
  %v111 = vsub.s32 %v108, %v110
  %v112 = vrot.slane %v98, %v111
  %v113 = vcombine.high %v105, %v105
  %v114 = vcombine.high %v112, %v112
  %v116 = vunpack.c.l.s4 1983009808
  %v117 = vunpack.c.0.s8 %v116
  %v118 = vlaneseq
  %v119 = vshrl.u32 %v118, 7
  %v120 = vsub.s32 %v117, %v119
  %v121 = vrot.slane %v16, %v120
  %v198 = vunpack.c.l.b16 %v17
  %v199 = vunpack.c.l.b16 %v18
  %v200 = vunpack.c.l.b16 %v19
  %v201 = vunpack.c.l.b16 %v20
  %v202 = vunpack.c.l.b16 %v21
  %v203 = vunpack.c.l.b16 %v22
  %v204 = vunpack.c.l.b16 %v23
  %v205 = vunpack.c.l.b16 %v24
  %v206 = vunpack.c.l.b16 %v25
  %v207 = vunpack.c.l.b16 %v26
  %v208 = vunpack.c.l.b16 %v27
  %v209 = vunpack.c.l.b16 %v28
  %v210 = vunpack.c.l.b16 %v29
  %v211 = vunpack.c.l.b16 %v30
  %v212 = vunpack.c.l.b16 %v31
  %v213 = vunpack.c.l.b16 %v32
  %v214 = vunpack.c.l.b16 %v33
  %v215 = vunpack.c.l.b16 %v34
  %v216 = vunpack.c.l.b16 %v35
  %v217 = vunpack.c.l.b16 %v36
  %v218 = vunpack.c.l.b16 %v37
  %v219 = vunpack.c.l.b16 %v38
  %v220 = vunpack.c.l.b16 %v39
  %v221 = vunpack.c.l.b16 %v40
  %v222 = vunpack.c.l.b16 %v41
  %v223 = vunpack.c.l.b16 %v42
  %v224 = vunpack.c.l.b16 %v43
  %v225 = vunpack.c.l.b16 %v44
  %v226 = vunpack.c.l.b16 %v45
  %v227 = vunpack.c.l.b16 %v46
  %v228 = vunpack.c.l.b16 %v47
  %v229 = vunpack.c.l.b16 %v48
  %v230 = vunpack.c.l.b16 %v49
  %v231 = vunpack.c.l.b16 %v50
  %v232 = vunpack.c.l.b16 %v51
  %v233 = vunpack.c.l.b16 %v52
  %v234 = vunpack.c.l.b16 %v53
  %v235 = vunpack.c.l.b16 %v54
  %v236 = vunpack.c.l.b16 %v55
  %v237 = vunpack.c.l.b16 %v56
  %v238 = vunpack.c.l.b16 %v57
  %v239 = vunpack.c.l.b16 %v58
  %v240 = vunpack.c.l.b16 %v59
  %v241 = vunpack.c.l.b16 %v60
  %v242 = vunpack.c.l.b16 %v61
  %v243 = vunpack.c.l.b16 %v62
  %v244 = vunpack.c.l.b16 %v63
  %v245 = vunpack.c.l.b16 %v64
  %v246 = vunpack.c.l.b16 %v65
  %v247 = vunpack.c.l.b16 %v66
  %v248 = vunpack.c.l.b16 %v67
  %v249 = vunpack.c.l.b16 %v68
  %v250 = vunpack.c.l.b16 %v69
  %v251 = vunpack.c.l.b16 %v70
  %v252 = vunpack.c.l.b16 %v71
  %v253 = vunpack.c.l.b16 %v72
  %v254 = vunpack.c.l.b16 %v73
  %v255 = vunpack.c.l.b16 %v74
  %v256 = vunpack.c.l.b16 %v75
  %v257 = vunpack.c.l.b16 %v76
  %v258 = vunpack.c.l.b16 %v77
  %v259 = vunpack.c.l.b16 %v78
  %v260 = vunpack.c.l.b16 %v79
  %v261 = vunpack.c.l.b16 %v80
  %v262 = vunpack.c.l.b16 %v81
  %v263 = vunpack.c.l.b16 %v82
  %v264 = vunpack.c.l.b16 %v83
  %v265 = vunpack.c.l.b16 %v84
  %v266 = vunpack.c.l.b16 %v85
  %v267 = vunpack.c.l.b16 %v86
  %v268 = vunpack.c.l.b16 %v87
  %v269 = vunpack.c.l.b16 %v88
  %v270 = vpack.c.b16 %v199, %v198
  %v271 = vpack.c.b16 %v201, %v200
  %v272 = vpack.c.b16 %v203, %v202
  %v273 = vpack.c.b16 %v205, %v204
  %v274 = vpack.c.b16 %v207, %v206
  %v275 = vpack.c.b16 %v209, %v208
  %v276 = vpack.c.b16 %v211, %v210
  %v277 = vpack.c.b16 %v213, %v212
  %v278 = vpack.c.b16 %v215, %v214
  %v279 = vpack.c.b16 %v217, %v216
  %v280 = vpack.c.b16 %v219, %v218
  %v281 = vpack.c.b16 %v221, %v220
  %v282 = vpack.c.b16 %v223, %v222
  %v283 = vpack.c.b16 %v225, %v224
  %v284 = vpack.c.b16 %v227, %v226
  %v285 = vpack.c.b16 %v229, %v228
  %v286 = vpack.c.b16 %v231, %v230
  %v287 = vpack.c.b16 %v233, %v232
  %v288 = vpack.c.b16 %v235, %v234
  %v289 = vpack.c.b16 %v237, %v236
  %v290 = vpack.c.b16 %v239, %v238
  %v291 = vpack.c.b16 %v241, %v240
  %v292 = vpack.c.b16 %v243, %v242
  %v293 = vpack.c.b16 %v245, %v244
  %v294 = vpack.c.b16 %v247, %v246
  %v295 = vpack.c.b16 %v249, %v248
  %v296 = vpack.c.b16 %v251, %v250
  %v297 = vpack.c.b16 %v253, %v252
  %v298 = vpack.c.b16 %v255, %v254
  %v299 = vpack.c.b16 %v257, %v256
  %v300 = vpack.c.b16 %v259, %v258
  %v301 = vpack.c.b16 %v261, %v260
  %v302 = vpack.c.b16 %v263, %v262
  %v303 = vpack.c.b16 %v265, %v264
  %v304 = vpack.c.b16 %v267, %v266
  %v305 = vpack.c.b16 %v269, %v268
  %vm342 = vcmask 523264
  %v344 = vsel %vm342, %v121, 0
  %346 = vmatprep.subr.bf16.mxu0 0
  %347 = vmatpush1.bf16.msra.mxu0 %v270
  %348 = vmatprep.subr.bf16.mxu0 0
  %349 = vmatpush1.bf16.msra.mxu0 %v271
  %350 = vmatprep.subr.bf16.mxu0 0
  %351 = vmatpush1.bf16.msra.mxu0 %v272
  %352 = vmatprep.subr.bf16.mxu0 0
  %353 = vmatpush1.bf16.msra.mxu0 %v273
  %354 = vmatprep.subr.bf16.mxu0 0
  %355 = vmatpush1.bf16.msra.mxu0 %v274
  %356 = vmatprep.subr.bf16.mxu0 0
  %357 = vmatpush1.bf16.msra.mxu0 %v275
  %358 = vmatprep.subr.bf16.mxu0 0
  %359 = vmatpush1.bf16.msra.mxu0 %v276
  %360 = vmatprep.subr.bf16.mxu0 0
  %361 = vmatpush1.bf16.msra.mxu0 %v277
  %362 = vmatprep.subr.bf16.mxu0 0
  %363 = vmatpush1.bf16.msra.mxu0 %v278
  %364 = vmatprep.subr.bf16.mxu0 0
  %365 = vmatpush1.bf16.msra.mxu0 %v279
  %366 = vmatprep.subr.bf16.mxu0 0
  %367 = vmatpush1.bf16.msra.mxu0 %v280
  %368 = vmatprep.subr.bf16.mxu0 0
  %369 = vmatpush1.bf16.msra.mxu0 %v281
  %370 = vmatprep.subr.bf16.mxu0 0
  %371 = vmatpush1.bf16.msra.mxu0 %v282
  %372 = vmatprep.subr.bf16.mxu0 0
  %373 = vmatpush1.bf16.msra.mxu0 %v283
  %374 = vmatprep.subr.bf16.mxu0 0
  %375 = vmatpush1.bf16.msra.mxu0 %v284
  %376 = vmatprep.subr.bf16.mxu0 0
  %377 = vmatpush1.bf16.msra.mxu0 %v285
  %378 = vmatprep.mubr.bf16.mxu0 %v113
  %379 = vmatmul.mubr.bf16.gmra.mrb[0].mxu0 %v105
  %v380 = vpop.f32.mrb[0].mxu0
  %v381 = vadd.f32 %v94, %v380
  %v382 = vpop.f32.mrb[0].mxu0
  %v383 = vpop.f32.mrb[0].mxu0
  %v384 = vpop.f32.mrb[0].mxu0
  %385 = vdwg.mxu0
  %386 = vmatprep.subr.bf16.mxu0 0
  %387 = vmatpush1.bf16.msra.mxu0 %v286
  %388 = vmatprep.subr.bf16.mxu0 0
  %389 = vmatpush1.bf16.msra.mxu0 %v287
  %390 = vmatprep.subr.bf16.mxu0 0
  %391 = vmatpush1.bf16.msra.mxu0 %v288
  %392 = vmatprep.subr.bf16.mxu0 0
  %393 = vmatpush1.bf16.msra.mxu0 %v289
  %394 = vmatprep.subr.bf16.mxu0 0
  %395 = vmatpush1.bf16.msra.mxu0 %v290
  %396 = vmatprep.subr.bf16.mxu0 0
  %397 = vmatpush1.bf16.msra.mxu0 %v291
  %398 = vmatprep.subr.bf16.mxu0 0
  %399 = vmatpush1.bf16.msra.mxu0 %v292
  %400 = vmatprep.subr.bf16.mxu0 0
  %401 = vmatpush1.bf16.msra.mxu0 %v293
  %402 = vmatprep.subr.bf16.mxu0 0
  %403 = vmatpush1.bf16.msra.mxu0 %v294
  %404 = vmatprep.subr.bf16.mxu0 0
  %405 = vmatpush1.bf16.msra.mxu0 %v295
  %406 = vmatprep.subr.bf16.mxu0 0
  %407 = vmatpush1.bf16.msra.mxu0 %v296
  %408 = vmatprep.subr.bf16.mxu0 0
  %409 = vmatpush1.bf16.msra.mxu0 %v297
  %410 = vmatprep.subr.bf16.mxu0 0
  %411 = vmatpush1.bf16.msra.mxu0 %v298
  %412 = vmatprep.subr.bf16.mxu0 0
  %413 = vmatpush1.bf16.msra.mxu0 %v299
  %414 = vmatprep.subr.bf16.mxu0 0
  %415 = vmatpush1.bf16.msra.mxu0 %v300
  %416 = vmatprep.subr.bf16.mxu0 0
  %417 = vmatpush1.bf16.msra.mxu0 %v301
  %418 = vmatprep.mubr.bf16.mxu0 %v114
  %419 = vmatmul.mubr.bf16.gmra.mrb[0].mxu0 %v112
  %v420 = vpop.f32.mrb[0].mxu0
  %v421 = vadd.f32 %v381, %v420
  %v422 = vpop.f32.mrb[0].mxu0
  %v423 = vpop.f32.mrb[0].mxu0
  %v424 = vpop.f32.mrb[0].mxu0
  %425 = vdwg.mxu0
  %426 = vmatprep.subr.bf16.mxu0 0
  %427 = vmatpush1.bf16.msra.mxu0 %v302
  %428 = vmatprep.subr.bf16.mxu0 0
  %429 = vmatpush1.bf16.msra.mxu0 %v303
  %430 = vmatprep.subr.bf16.mxu0 0
  %431 = vmatpush1.bf16.msra.mxu0 %v304
  %432 = vmatprep.subr.bf16.mxu0 0
  %433 = vmatpush1.bf16.msra.mxu0 %v305
  %434 = vmatprep.subr.bf16.mxu0 0
  %435 = vmatpush1.bf16.msra.mxu0 0
  %436 = vmatprep.subr.bf16.mxu0 0
  %437 = vmatpush1.bf16.msra.mxu0 0
  %438 = vmatprep.subr.bf16.mxu0 0
  %439 = vmatpush1.bf16.msra.mxu0 0
  %440 = vmatprep.subr.bf16.mxu0 0
  %441 = vmatpush1.bf16.msra.mxu0 0
  %442 = vmatprep.subr.bf16.mxu0 0
  %443 = vmatpush1.bf16.msra.mxu0 0
  %444 = vmatprep.subr.bf16.mxu0 0
  %445 = vmatpush1.bf16.msra.mxu0 0
  %446 = vmatprep.subr.bf16.mxu0 0
  %447 = vmatpush1.bf16.msra.mxu0 0
  %448 = vmatprep.subr.bf16.mxu0 0
  %449 = vmatpush1.bf16.msra.mxu0 0
  %450 = vmatprep.subr.bf16.mxu0 0
  %451 = vmatpush1.bf16.msra.mxu0 0
  %452 = vmatprep.subr.bf16.mxu0 0
  %453 = vmatpush1.bf16.msra.mxu0 0
  %454 = vmatprep.subr.bf16.mxu0 0
  %455 = vmatpush1.bf16.msra.mxu0 0
  %456 = vmatprep.subr.bf16.mxu0 0
  %457 = vmatpush1.bf16.msra.mxu0 0
  %458 = vmatprep.mubr.bf16.mxu0 0
  %459 = vmatmul.mubr.bf16.gmra.mrb[0].mxu0 %v344
  %v460 = vpop.f32.mrb[0].mxu0
  %v461 = vadd.f32 %v421, %v460
  %v462 = vpop.f32.mrb[0].mxu0
  %v463 = vpop.f32.mrb[0].mxu0
  %v464 = vpop.f32.mrb[0].mxu0
  %465 = vdwg.mxu0
  %v466 = vmax.f32 %v461, 0.0
  %v467 = vpack.c.bf16 %v466, %v466
  %468 = vst [vmem:[%s3] sm:$0x3] %v467
  // Predicated region
  $region14: #{cfnet_forward.16} parent=0 // pred_check
    _
  $region15: #{cfnet_forward.16} parent=0 // pred_check_branch
    %470 = sbr.rel (0) target = $region17
  $region16: #{cfnet_forward.16} parent=0 // pred_region
    _
  $region17: #{cfnet_forward.16} parent=0 // pred_fallthru
    _
  // Predicated region
  $region18: #{cfnet_forward.16} parent=0 // pred_check
    _
  $region19: #{cfnet_forward.16} parent=0 // pred_check_branch
    %472 = sbr.rel (0) target = $region21
  $region20: #{cfnet_forward.16} parent=0 // pred_region
    _
  $region21: #{cfnet_forward.16} parent=0 // pred_fallthru
    _

// kernel: cfnet_forward.18
$region0: #{cfnet_forward.18}
  #allocation0 [shape = 'u32[]', space=smem, size = 0x4, offset = 0x4, fixed_abs, tag = 'smem constant byte address 0x4 - core index']
  #allocation1 [shape = 'u32[144,128]{1,0:T(1,128)}', space=vmem, size = 0x12000, scoped, tag = 'internal scratch']
  %s0 = inlined_call_operand.vmem [shape: bf16[8,64], index: 0, kind: input, shape index: {}]
  %s1 = inlined_call_operand.vmem [shape: bf16[64,40], index: 1, kind: input, shape index: {}]
  %s2 = inlined_call_operand.vmem [shape: f32[1,40], index: 2, kind: input, shape index: {}]
  %s3 = inlined_call_operand.vmem [shape: bf16[8,40], index: 3, kind: output, shape index: {}]
  %s4 = sld [smem:[#allocation0]]
  $region22: #{cfnet_forward.18} parent=0
    _
  %s6 = ssub.s32 1, %s4
  %s7 = scalar_select 0, %s6, %s4
  // Predicated region
  $region2: #{cfnet_forward.18} parent=0 // pred_check
    _
  $region3: #{cfnet_forward.18} parent=0 // pred_check_branch
    %9 = sbr.rel (0) target = $region5
  $region4: #{cfnet_forward.18} parent=0 // pred_region
    _
  $region5: #{cfnet_forward.18} parent=0 // pred_fallthru
    _
  // Predicated region
  $region6: #{cfnet_forward.18} parent=0 // pred_check
    _
  $region7: #{cfnet_forward.18} parent=0 // pred_check_branch
    %11 = sbr.rel (0) target = $region9
  $region8: #{cfnet_forward.18} parent=0 // pred_region
    _
  $region9: #{cfnet_forward.18} parent=0 // pred_fallthru
    _
  // Predicated region
  $region10: #{cfnet_forward.18} parent=0 // pred_check
    _
  $region11: #{cfnet_forward.18} parent=0 // pred_check_branch
    %13 = sbr.rel (0) target = $region13
  $region12: #{cfnet_forward.18} parent=0 // pred_region
    _
  $region13: #{cfnet_forward.18} parent=0 // pred_fallthru
    _
  %v15 = vld [vmem:[%s0] sm:$0xf]
  %v16 = vld [vmem:[%s1] sm:$0xf]
  %v17 = vld [vmem:[%s1 + $0x4] sm:$0xf]
  %v18 = vld [vmem:[%s1 + $0x8] sm:$0xf]
  %v19 = vld [vmem:[%s1 + $0xc] sm:$0xf]
  %v20 = vld [vmem:[%s1 + $0x10] sm:$0xf]
  %v21 = vld [vmem:[%s1 + $0x14] sm:$0xf]
  %v22 = vld [vmem:[%s1 + $0x18] sm:$0xf]
  %v23 = vld [vmem:[%s1 + $0x1c] sm:$0xf]
  %v24 = vld [vmem:[%s2] sm:$0x1]
  %v26 = vlaneseq
  %v27 = vshrl.u32 %v26, 7
  %v28 = vsub.s32 0, %v27
  %v29 = vrot.slane %v24, %v28
  %v39 = vunpack.c.l.b16 %v16
  %v40 = vunpack.c.l.b16 %v17
  %v41 = vunpack.c.l.b16 %v18
  %v42 = vunpack.c.l.b16 %v19
  %v43 = vunpack.c.l.b16 %v20
  %v44 = vunpack.c.l.b16 %v21
  %v45 = vunpack.c.l.b16 %v22
  %v46 = vunpack.c.l.b16 %v23
  %v47 = vpack.c.b16 %v40, %v39
  %v48 = vpack.c.b16 %v42, %v41
  %v49 = vpack.c.b16 %v44, %v43
  %v50 = vpack.c.b16 %v46, %v45
  %vm55 = vcmask 523264
  %v57 = vsel %vm55, %v15, 0
  %59 = vmatprep.subr.bf16.mxu0 0
  %60 = vmatpush1.bf16.msra.mxu0 %v47
  %61 = vmatprep.subr.bf16.mxu0 0
  %62 = vmatpush1.bf16.msra.mxu0 %v48
  %63 = vmatprep.subr.bf16.mxu0 0
  %64 = vmatpush1.bf16.msra.mxu0 %v49
  %65 = vmatprep.subr.bf16.mxu0 0
  %66 = vmatpush1.bf16.msra.mxu0 %v50
  %67 = vmatprep.subr.bf16.mxu0 0
  %68 = vmatpush1.bf16.msra.mxu0 0
  %69 = vmatprep.subr.bf16.mxu0 0
  %70 = vmatpush1.bf16.msra.mxu0 0
  %71 = vmatprep.subr.bf16.mxu0 0
  %72 = vmatpush1.bf16.msra.mxu0 0
  %73 = vmatprep.subr.bf16.mxu0 0
  %74 = vmatpush1.bf16.msra.mxu0 0
  %75 = vmatprep.subr.bf16.mxu0 0
  %76 = vmatpush1.bf16.msra.mxu0 0
  %77 = vmatprep.subr.bf16.mxu0 0
  %78 = vmatpush1.bf16.msra.mxu0 0
  %79 = vmatprep.subr.bf16.mxu0 0
  %80 = vmatpush1.bf16.msra.mxu0 0
  %81 = vmatprep.subr.bf16.mxu0 0
  %82 = vmatpush1.bf16.msra.mxu0 0
  %83 = vmatprep.subr.bf16.mxu0 0
  %84 = vmatpush1.bf16.msra.mxu0 0
  %85 = vmatprep.subr.bf16.mxu0 0
  %86 = vmatpush1.bf16.msra.mxu0 0
  %87 = vmatprep.subr.bf16.mxu0 0
  %88 = vmatpush1.bf16.msra.mxu0 0
  %89 = vmatprep.subr.bf16.mxu0 0
  %90 = vmatpush1.bf16.msra.mxu0 0
  %91 = vmatprep.mubr.bf16.mxu0 0
  %92 = vmatmul.mubr.bf16.gmra.mrb[0].mxu0 %v57
  %v93 = vpop.f32.mrb[0].mxu0
  %v94 = vadd.f32 %v29, %v93
  %v95 = vpop.f32.mrb[0].mxu0
  %v96 = vpop.f32.mrb[0].mxu0
  %v97 = vpop.f32.mrb[0].mxu0
  %98 = vdwg.mxu0
  %v99 = vpack.c.bf16 %v94, %v94
  %vm100 = vcmask 322560
  %101 = vst.msk [vmem:[%s3] sm:$0xf] %vm100, %v99
  // Predicated region
  $region14: #{cfnet_forward.18} parent=0 // pred_check
    _
  $region15: #{cfnet_forward.18} parent=0 // pred_check_branch
    %103 = sbr.rel (0) target = $region17
  $region16: #{cfnet_forward.18} parent=0 // pred_region
    _
  $region17: #{cfnet_forward.18} parent=0 // pred_fallthru
    _
  // Predicated region
  $region18: #{cfnet_forward.18} parent=0 // pred_check
    _
  $region19: #{cfnet_forward.18} parent=0 // pred_check_branch
    %105 = sbr.rel (0) target = $region21
  $region20: #{cfnet_forward.18} parent=0 // pred_region
    _
  $region21: #{cfnet_forward.18} parent=0 // pred_fallthru
    _

// kernel: cfnet_forward.19
$region0: #{cfnet_forward.19}
  #allocation0 [shape = 'u32[]', space=smem, size = 0x4, offset = 0x4, fixed_abs, tag = 'smem constant byte address 0x4 - core index']
  #allocation1 [shape = 'u32[144,128]{1,0:T(1,128)}', space=vmem, size = 0x12000, scoped, tag = 'internal scratch']
  %s0 = inlined_call_operand.vmem [shape: bf16[32,40], index: 0, kind: input, shape index: {}]
  %s1 = inlined_call_operand.vmem [shape: bf16[40,24], index: 1, kind: input, shape index: {}]
  %s2 = inlined_call_operand.vmem [shape: f32[1,24], index: 2, kind: input, shape index: {}]
  %s3 = inlined_call_operand.vmem [shape: bf16[32,24], index: 3, kind: output, shape index: {}]
  %s4 = sld [smem:[#allocation0]]
  $region22: #{cfnet_forward.19} parent=0
    _
  %s6 = ssub.s32 1, %s4
  %s7 = scalar_select 0, %s6, %s4
  // Predicated region
  $region2: #{cfnet_forward.19} parent=0 // pred_check
    _
  $region3: #{cfnet_forward.19} parent=0 // pred_check_branch
    %9 = sbr.rel (0) target = $region5
  $region4: #{cfnet_forward.19} parent=0 // pred_region
    _
  $region5: #{cfnet_forward.19} parent=0 // pred_fallthru
    _
  // Predicated region
  $region6: #{cfnet_forward.19} parent=0 // pred_check
    _
  $region7: #{cfnet_forward.19} parent=0 // pred_check_branch
    %11 = sbr.rel (0) target = $region9
  $region8: #{cfnet_forward.19} parent=0 // pred_region
    _
  $region9: #{cfnet_forward.19} parent=0 // pred_fallthru
    _
  // Predicated region
  $region10: #{cfnet_forward.19} parent=0 // pred_check
    _
  $region11: #{cfnet_forward.19} parent=0 // pred_check_branch
    %13 = sbr.rel (0) target = $region13
  $region12: #{cfnet_forward.19} parent=0 // pred_region
    _
  $region13: #{cfnet_forward.19} parent=0 // pred_fallthru
    _
  %v15 = vld [vmem:[%s0] sm:$0xf]
  %v16 = vld [vmem:[%s0 + $0x4] sm:$0xf]
  %v17 = vld [vmem:[%s0 + $0x8] sm:$0xf]
  %v18 = vld [vmem:[%s0 + $0xc] sm:$0xf]
  %v19 = vld [vmem:[%s1] sm:$0xf]
  %v20 = vld [vmem:[%s1 + $0x4] sm:$0xf]
  %v21 = vld [vmem:[%s1 + $0x8] sm:$0xf]
  %v22 = vld [vmem:[%s1 + $0xc] sm:$0xf]
  %v23 = vld [vmem:[%s1 + $0x10] sm:$0xf]
  %v24 = vld [vmem:[%s2] sm:$0x1]
  %v26 = vlaneseq
  %v27 = vshrl.u32 %v26, 7
  %v28 = vsub.s32 0, %v27
  %v29 = vrot.slane %v24, %v28
  %v35 = vunpack.c.l.b16 %v15
  %v36 = vunpack.c.l.b16 %v16
  %v37 = vunpack.c.l.b16 %v17
  %v38 = vunpack.c.l.b16 %v18
  %v39 = vpack.c.b16 %v36, %v35
  %v40 = vpack.c.b16 %v38, %v37
  %v46 = vunpack.c.l.b16 %v19
  %v47 = vunpack.c.l.b16 %v20
  %v48 = vunpack.c.l.b16 %v21
  %v49 = vunpack.c.l.b16 %v22
  %v50 = vunpack.c.l.b16 %v23
  %v51 = vpack.c.b16 %v47, %v46
  %v52 = vpack.c.b16 %v49, %v48
  %v53 = vpack.c.b16 %v50, %v50
  %vm56 = vcmask 326656
  %v58 = vsel %vm56, %v39, 0
  %v61 = vsel %vm56, %v40, 0
  %vm63 = vcmask 1043456
  %v65 = vsel %vm63, %v53, 0
  %67 = vmatprep.subr.bf16.mxu0 0
  %68 = vmatpush1.bf16.msra.mxu0 %v51
  %69 = vmatprep.subr.bf16.mxu0 0
  %70 = vmatpush1.bf16.msra.mxu0 %v52
  %71 = vmatprep.subr.bf16.mxu0 0
  %72 = vmatpush1.bf16.msra.mxu0 %v65
  %73 = vmatprep.subr.bf16.mxu0 0
  %74 = vmatpush1.bf16.msra.mxu0 0
  %75 = vmatprep.subr.bf16.mxu0 0
  %76 = vmatpush1.bf16.msra.mxu0 0
  %77 = vmatprep.subr.bf16.mxu0 0
  %78 = vmatpush1.bf16.msra.mxu0 0
  %79 = vmatprep.subr.bf16.mxu0 0
  %80 = vmatpush1.bf16.msra.mxu0 0
  %81 = vmatprep.subr.bf16.mxu0 0
  %82 = vmatpush1.bf16.msra.mxu0 0
  %83 = vmatprep.subr.bf16.mxu0 0
  %84 = vmatpush1.bf16.msra.mxu0 0
  %85 = vmatprep.subr.bf16.mxu0 0
  %86 = vmatpush1.bf16.msra.mxu0 0
  %87 = vmatprep.subr.bf16.mxu0 0
  %88 = vmatpush1.bf16.msra.mxu0 0
  %89 = vmatprep.subr.bf16.mxu0 0
  %90 = vmatpush1.bf16.msra.mxu0 0
  %91 = vmatprep.subr.bf16.mxu0 0
  %92 = vmatpush1.bf16.msra.mxu0 0
  %93 = vmatprep.subr.bf16.mxu0 0
  %94 = vmatpush1.bf16.msra.mxu0 0
  %95 = vmatprep.subr.bf16.mxu0 0
  %96 = vmatpush1.bf16.msra.mxu0 0
  %97 = vmatprep.subr.bf16.mxu0 0
  %98 = vmatpush1.bf16.msra.mxu0 0
  %99 = vmatprep.mubr.bf16.mxu0 0
  %100 = vmatmul.mubr.bf16.gmra.mrb[0].mxu0 %v58
  %v101 = vpop.f32.mrb[0].mxu0
  %v102 = vadd.f32 %v29, %v101
  %v103 = vpop.f32.mrb[0].mxu0
  %v104 = vpop.f32.mrb[0].mxu0
  %v105 = vadd.f32 %v29, %v104
  %v106 = vpop.f32.mrb[0].mxu0
  %107 = vmatprep.mubr.bf16.mxu0 0
  %108 = vmatmul.mubr.bf16.gmra.mrb[0].mxu0 %v61
  %v109 = vpop.f32.mrb[0].mxu0
  %v110 = vadd.f32 %v29, %v109
  %v111 = vpop.f32.mrb[0].mxu0
  %v112 = vpop.f32.mrb[0].mxu0
  %v113 = vadd.f32 %v29, %v112
  %v114 = vpop.f32.mrb[0].mxu0
  %115 = vdwg.mxu0
  %v116 = vpack.c.bf16 %v105, %v102
  %v117 = vpack.c.bf16 %v113, %v110
  %v120 = vunpack.c.l.b16 %v116
  %v121 = vunpack.c.h.b16 %v116
  %v122 = vunpack.c.l.b16 %v117
  %v123 = vunpack.c.h.b16 %v117
  %v124 = vpack.c.b16 %v120, %v120
  %v125 = vpack.c.b16 %v121, %v121
  %v126 = vpack.c.b16 %v122, %v122
  %v127 = vpack.c.b16 %v123, %v123
  %vm132 = vcmask 191488
  %133 = vst.msk [vmem:[%s3] sm:$0xf] %vm132, %v124
  %134 = vst.msk [vmem:[%s3 + $0x4] sm:$0xf] %vm132, %v125
  %135 = vst.msk [vmem:[%s3 + $0x8] sm:$0xf] %vm132, %v126
  %136 = vst.msk [vmem:[%s3 + $0xc] sm:$0xf] %vm132, %v127
  // Predicated region
  $region14: #{cfnet_forward.19} parent=0 // pred_check
    _
  $region15: #{cfnet_forward.19} parent=0 // pred_check_branch
    %138 = sbr.rel (0) target = $region17
  $region16: #{cfnet_forward.19} parent=0 // pred_region
    _
  $region17: #{cfnet_forward.19} parent=0 // pred_fallthru
    _
  // Predicated region
  $region18: #{cfnet_forward.19} parent=0 // pred_check
    _
  $region19: #{cfnet_forward.19} parent=0 // pred_check_branch
    %140 = sbr.rel (0) target = $region21
  $region20: #{cfnet_forward.19} parent=0 // pred_region
    _
  $region21: #{cfnet_forward.19} parent=0 // pred_fallthru
    _

// kernel: sub.3
$region0: #{sub.3}
  #allocation2 [shape = 's32[1]{0}', space=sflag, size = 0x4, scoped, tag = 'scoped memory for sub.3']
  %s0 = inlined_call_operand.vmem [shape: bf16[2,16,16,24], index: 0, kind: input, shape index: {}]
  %s1 = inlined_call_operand.vmem [shape: bf16[2,16,16,24], index: 1, kind: input, shape index: {}]
  %s2 = inlined_call_operand.hbm [shape: bf16[2,16,16,24], index: 2, kind: output, shape index: {}]
  $region1: #{sub.3} parent=0
    #allocation0 [shape = 'u8[131072]{0}', space=vmem, size = 0x20000, scoped, tag = 'operand span for operand 2']
    #allocation1 [shape = 's32[1]{0}', space=sflag, size = 0x4, scoped, tag = 'scoped memory for sub.3']
    %3 = vsyncpa [#allocation1], 0
    %v4 = vld [vmem:[%s0] sm:$0xf]
    %v5 = vunpack.c.l.bf16 %v4
    %v6 = vunpack.c.h.bf16 %v4
    %v7 = vld [vmem:[%s1] sm:$0xf]
    %v8 = vunpack.c.l.bf16 %v7
    %v9 = vunpack.c.h.bf16 %v7
    %10 = xla_tuple %v5, %v8
    %11 = xla_tuple %10
    %v12 = vsub.f32 %v5, %v8
    %13 = xla_tuple %v12
    %v14 = vpack.c.bf16 0.0, %v12
    %15 = vst [vmem:[#allocation0] sm:$0xf] %v14
    %s16 = scalar_lea.vmem %s0, 128
    %v17 = vld [vmem:[%s16] sm:$0xf]
    %v18 = vunpack.c.l.bf16 %v17
    %v19 = vunpack.c.h.bf16 %v17
    %s20 = scalar_lea.vmem %s1, 128
    %v21 = vld [vmem:[%s20] sm:$0xf]
    %v22 = vunpack.c.l.bf16 %v21
    %v23 = vunpack.c.h.bf16 %v21
    %24 = xla_tuple %v18, %v22
    %25 = xla_tuple %24
    %v26 = vsub.f32 %v18, %v22
    %27 = xla_tuple %v26
    %s28 = scalar_lea.vmem [#allocation0], 128
    %v29 = vpack.c.bf16 0.0, %v26
    %30 = vst [vmem:[%s28] sm:$0xf] %v29
    %s31 = scalar_lea.vmem %s0, 8
    %v32 = vld [vmem:[%s31] sm:$0xf]
    %v33 = vunpack.c.l.bf16 %v32
    %v34 = vunpack.c.h.bf16 %v32
    %s35 = scalar_lea.vmem %s1, 8
    %v36 = vld [vmem:[%s35] sm:$0xf]
    %v37 = vunpack.c.l.bf16 %v36
    %v38 = vunpack.c.h.bf16 %v36
    %39 = xla_tuple %v33, %v37
    %40 = xla_tuple %39
    %v41 = vsub.f32 %v33, %v37
    %42 = xla_tuple %v41
    %s43 = scalar_lea.vmem [#allocation0], 8
    %v44 = vpack.c.bf16 0.0, %v41
    %45 = vst [vmem:[%s43] sm:$0xf] %v44
    %s46 = scalar_lea.vmem %s0, 136
    %v47 = vld [vmem:[%s46] sm:$0xf]
    %v48 = vunpack.c.l.bf16 %v47
    %v49 = vunpack.c.h.bf16 %v47
    %s50 = scalar_lea.vmem %s1, 136
    %v51 = vld [vmem:[%s50] sm:$0xf]
    %v52 = vunpack.c.l.bf16 %v51
    %v53 = vunpack.c.h.bf16 %v51
    %54 = xla_tuple %v48, %v52
    %55 = xla_tuple %54
    %v56 = vsub.f32 %v48, %v52
    %57 = xla_tuple %v56
    %s58 = scalar_lea.vmem [#allocation0], 136
    %v59 = vpack.c.bf16 0.0, %v56
    %60 = vst [vmem:[%s58] sm:$0xf] %v59
    %s61 = scalar_lea.vmem %s0, 16
    %v62 = vld [vmem:[%s61] sm:$0xf]
    %v63 = vunpack.c.l.bf16 %v62
    %v64 = vunpack.c.h.bf16 %v62
    %s65 = scalar_lea.vmem %s1, 16
    %v66 = vld [vmem:[%s65] sm:$0xf]
    %v67 = vunpack.c.l.bf16 %v66
    %v68 = vunpack.c.h.bf16 %v66
    %69 = xla_tuple %v63, %v67
    %70 = xla_tuple %69
    %v71 = vsub.f32 %v63, %v67
    %72 = xla_tuple %v71
    %s73 = scalar_lea.vmem [#allocation0], 16
    %v74 = vpack.c.bf16 0.0, %v71
    %75 = vst [vmem:[%s73] sm:$0xf] %v74
    %s76 = scalar_lea.vmem %s0, 144
    %v77 = vld [vmem:[%s76] sm:$0xf]
    %v78 = vunpack.c.l.bf16 %v77
    %v79 = vunpack.c.h.bf16 %v77
    %s80 = scalar_lea.vmem %s1, 144
    %v81 = vld [vmem:[%s80] sm:$0xf]
    %v82 = vunpack.c.l.bf16 %v81
    %v83 = vunpack.c.h.bf16 %v81
    %84 = xla_tuple %v78, %v82
    %85 = xla_tuple %84
    %v86 = vsub.f32 %v78, %v82
    %87 = xla_tuple %v86
    %s88 = scalar_lea.vmem [#allocation0], 144
    %v89 = vpack.c.bf16 0.0, %v86
    %90 = vst [vmem:[%s88] sm:$0xf] %v89
    %s91 = scalar_lea.vmem %s0, 24
    %v92 = vld [vmem:[%s91] sm:$0xf]
    %v93 = vunpack.c.l.bf16 %v92
    %v94 = vunpack.c.h.bf16 %v92
    %s95 = scalar_lea.vmem %s1, 24
    %v96 = vld [vmem:[%s95] sm:$0xf]
    %v97 = vunpack.c.l.bf16 %v96
    %v98 = vunpack.c.h.bf16 %v96
    %99 = xla_tuple %v93, %v97
    %100 = xla_tuple %99
    %v101 = vsub.f32 %v93, %v97
    %102 = xla_tuple %v101
    %s103 = scalar_lea.vmem [#allocation0], 24
    %v104 = vpack.c.bf16 0.0, %v101
    %105 = vst [vmem:[%s103] sm:$0xf] %v104
    %s106 = scalar_lea.vmem %s0, 152
    %v107 = vld [vmem:[%s106] sm:$0xf]
    %v108 = vunpack.c.l.bf16 %v107
    %v109 = vunpack.c.h.bf16 %v107
    %s110 = scalar_lea.vmem %s1, 152
    %v111 = vld [vmem:[%s110] sm:$0xf]
    %v112 = vunpack.c.l.bf16 %v111
    %v113 = vunpack.c.h.bf16 %v111
    %114 = xla_tuple %v108, %v112
    %115 = xla_tuple %114
    %v116 = vsub.f32 %v108, %v112
    %117 = xla_tuple %v116
    %s118 = scalar_lea.vmem [#allocation0], 152
    %v119 = vpack.c.bf16 0.0, %v116
    %120 = vst [vmem:[%s118] sm:$0xf] %v119
    %s121 = scalar_lea.vmem %s0, 32
    %v122 = vld [vmem:[%s121] sm:$0xf]
    %v123 = vunpack.c.l.bf16 %v122
    %v124 = vunpack.c.h.bf16 %v122
    %s125 = scalar_lea.vmem %s1, 32
    %v126 = vld [vmem:[%s125] sm:$0xf]
    %v127 = vunpack.c.l.bf16 %v126
    %v128 = vunpack.c.h.bf16 %v126
    %129 = xla_tuple %v123, %v127
    %130 = xla_tuple %129
    %v131 = vsub.f32 %v123, %v127
    %132 = xla_tuple %v131
    %s133 = scalar_lea.vmem [#allocation0], 32
    %v134 = vpack.c.bf16 0.0, %v131
    %135 = vst [vmem:[%s133] sm:$0xf] %v134
    %s136 = scalar_lea.vmem %s0, 160
    %v137 = vld [vmem:[%s136] sm:$0xf]
    %v138 = vunpack.c.l.bf16 %v137
    %v139 = vunpack.c.h.bf16 %v137
    %s140 = scalar_lea.vmem %s1, 160
    %v141 = vld [vmem:[%s140] sm:$0xf]
    %v142 = vunpack.c.l.bf16 %v141
    %v143 = vunpack.c.h.bf16 %v141
    %144 = xla_tuple %v138, %v142
    %145 = xla_tuple %144
    %v146 = vsub.f32 %v138, %v142
    %147 = xla_tuple %v146
    %s148 = scalar_lea.vmem [#allocation0], 160
    %v149 = vpack.c.bf16 0.0, %v146
    %150 = vst [vmem:[%s148] sm:$0xf] %v149
    %s151 = scalar_lea.vmem %s0, 40
    %v152 = vld [vmem:[%s151] sm:$0xf]
    %v153 = vunpack.c.l.bf16 %v152
    %v154 = vunpack.c.h.bf16 %v152
    %s155 = scalar_lea.vmem %s1, 40
    %v156 = vld [vmem:[%s155] sm:$0xf]
    %v157 = vunpack.c.l.bf16 %v156
    %v158 = vunpack.c.h.bf16 %v156
    %159 = xla_tuple %v153, %v157
    %160 = xla_tuple %159
    %v161 = vsub.f32 %v153, %v157
    %162 = xla_tuple %v161
    %s163 = scalar_lea.vmem [#allocation0], 40
    %v164 = vpack.c.bf16 0.0, %v161
    %165 = vst [vmem:[%s163] sm:$0xf] %v164
    %s166 = scalar_lea.vmem %s0, 168
    %v167 = vld [vmem:[%s166] sm:$0xf]
    %v168 = vunpack.c.l.bf16 %v167
    %v169 = vunpack.c.h.bf16 %v167
    %s170 = scalar_lea.vmem %s1, 168
    %v171 = vld [vmem:[%s170] sm:$0xf]
    %v172 = vunpack.c.l.bf16 %v171
    %v173 = vunpack.c.h.bf16 %v171
    %174 = xla_tuple %v168, %v172
    %175 = xla_tuple %174
    %v176 = vsub.f32 %v168, %v172
    %177 = xla_tuple %v176
    %s178 = scalar_lea.vmem [#allocation0], 168
    %v179 = vpack.c.bf16 0.0, %v176
    %180 = vst [vmem:[%s178] sm:$0xf] %v179
    %s181 = scalar_lea.vmem %s0, 48
    %v182 = vld [vmem:[%s181] sm:$0xf]
    %v183 = vunpack.c.l.bf16 %v182
    %v184 = vunpack.c.h.bf16 %v182
    %s185 = scalar_lea.vmem %s1, 48
    %v186 = vld [vmem:[%s185] sm:$0xf]
    %v187 = vunpack.c.l.bf16 %v186
    %v188 = vunpack.c.h.bf16 %v186
    %189 = xla_tuple %v183, %v187
    %190 = xla_tuple %189
    %v191 = vsub.f32 %v183, %v187
    %192 = xla_tuple %v191
    %s193 = scalar_lea.vmem [#allocation0], 48
    %v194 = vpack.c.bf16 0.0, %v191
    %195 = vst [vmem:[%s193] sm:$0xf] %v194
    %s196 = scalar_lea.vmem %s0, 176
    %v197 = vld [vmem:[%s196] sm:$0xf]
    %v198 = vunpack.c.l.bf16 %v197
    %v199 = vunpack.c.h.bf16 %v197
    %s200 = scalar_lea.vmem %s1, 176
    %v201 = vld [vmem:[%s200] sm:$0xf]
    %v202 = vunpack.c.l.bf16 %v201
    %v203 = vunpack.c.h.bf16 %v201
    %204 = xla_tuple %v198, %v202
    %205 = xla_tuple %204
    %v206 = vsub.f32 %v198, %v202
    %207 = xla_tuple %v206
    %s208 = scalar_lea.vmem [#allocation0], 176
    %v209 = vpack.c.bf16 0.0, %v206
    %210 = vst [vmem:[%s208] sm:$0xf] %v209
    %s211 = scalar_lea.vmem %s0, 56
    %v212 = vld [vmem:[%s211] sm:$0xf]
    %v213 = vunpack.c.l.bf16 %v212
    %v214 = vunpack.c.h.bf16 %v212
    %s215 = scalar_lea.vmem %s1, 56
    %v216 = vld [vmem:[%s215] sm:$0xf]
    %v217 = vunpack.c.l.bf16 %v216
    %v218 = vunpack.c.h.bf16 %v216
    %219 = xla_tuple %v213, %v217
    %220 = xla_tuple %219
    %v221 = vsub.f32 %v213, %v217
    %222 = xla_tuple %v221
    %s223 = scalar_lea.vmem [#allocation0], 56
    %v224 = vpack.c.bf16 0.0, %v221
    %225 = vst [vmem:[%s223] sm:$0xf] %v224
    %s226 = scalar_lea.vmem %s0, 184
    %v227 = vld [vmem:[%s226] sm:$0xf]
    %v228 = vunpack.c.l.bf16 %v227
    %v229 = vunpack.c.h.bf16 %v227
    %s230 = scalar_lea.vmem %s1, 184
    %v231 = vld [vmem:[%s230] sm:$0xf]
    %v232 = vunpack.c.l.bf16 %v231
    %v233 = vunpack.c.h.bf16 %v231
    %234 = xla_tuple %v228, %v232
    %235 = xla_tuple %234
    %v236 = vsub.f32 %v228, %v232
    %237 = xla_tuple %v236
    %s238 = scalar_lea.vmem [#allocation0], 184
    %v239 = vpack.c.bf16 0.0, %v236
    %240 = vst [vmem:[%s238] sm:$0xf] %v239
    %s241 = scalar_lea.vmem %s0, 64
    %v242 = vld [vmem:[%s241] sm:$0xf]
    %v243 = vunpack.c.l.bf16 %v242
    %v244 = vunpack.c.h.bf16 %v242
    %s245 = scalar_lea.vmem %s1, 64
    %v246 = vld [vmem:[%s245] sm:$0xf]
    %v247 = vunpack.c.l.bf16 %v246
    %v248 = vunpack.c.h.bf16 %v246
    %249 = xla_tuple %v243, %v247
    %250 = xla_tuple %249
    %v251 = vsub.f32 %v243, %v247
    %252 = xla_tuple %v251
    %s253 = scalar_lea.vmem [#allocation0], 64
    %v254 = vpack.c.bf16 0.0, %v251
    %255 = vst [vmem:[%s253] sm:$0xf] %v254
    %s256 = scalar_lea.vmem %s0, 192
    %v257 = vld [vmem:[%s256] sm:$0xf]
    %v258 = vunpack.c.l.bf16 %v257
    %v259 = vunpack.c.h.bf16 %v257
    %s260 = scalar_lea.vmem %s1, 192
    %v261 = vld [vmem:[%s260] sm:$0xf]
    %v262 = vunpack.c.l.bf16 %v261
    %v263 = vunpack.c.h.bf16 %v261
    %264 = xla_tuple %v258, %v262
    %265 = xla_tuple %264
    %v266 = vsub.f32 %v258, %v262
    %267 = xla_tuple %v266
    %s268 = scalar_lea.vmem [#allocation0], 192
    %v269 = vpack.c.bf16 0.0, %v266
    %270 = vst [vmem:[%s268] sm:$0xf] %v269
    %s271 = scalar_lea.vmem %s0, 72
    %v272 = vld [vmem:[%s271] sm:$0xf]
    %v273 = vunpack.c.l.bf16 %v272
    %v274 = vunpack.c.h.bf16 %v272
    %s275 = scalar_lea.vmem %s1, 72
    %v276 = vld [vmem:[%s275] sm:$0xf]
    %v277 = vunpack.c.l.bf16 %v276
    %v278 = vunpack.c.h.bf16 %v276
    %279 = xla_tuple %v273, %v277
    %280 = xla_tuple %279
    %v281 = vsub.f32 %v273, %v277
    %282 = xla_tuple %v281
    %s283 = scalar_lea.vmem [#allocation0], 72
    %v284 = vpack.c.bf16 0.0, %v281
    %285 = vst [vmem:[%s283] sm:$0xf] %v284
    %s286 = scalar_lea.vmem %s0, 200
    %v287 = vld [vmem:[%s286] sm:$0xf]
    %v288 = vunpack.c.l.bf16 %v287
    %v289 = vunpack.c.h.bf16 %v287
    %s290 = scalar_lea.vmem %s1, 200
    %v291 = vld [vmem:[%s290] sm:$0xf]
    %v292 = vunpack.c.l.bf16 %v291
    %v293 = vunpack.c.h.bf16 %v291
    %294 = xla_tuple %v288, %v292
    %295 = xla_tuple %294
    %v296 = vsub.f32 %v288, %v292
    %297 = xla_tuple %v296
    %s298 = scalar_lea.vmem [#allocation0], 200
    %v299 = vpack.c.bf16 0.0, %v296
    %300 = vst [vmem:[%s298] sm:$0xf] %v299
    %s301 = scalar_lea.vmem %s0, 80
    %v302 = vld [vmem:[%s301] sm:$0xf]
    %v303 = vunpack.c.l.bf16 %v302
    %v304 = vunpack.c.h.bf16 %v302
    %s305 = scalar_lea.vmem %s1, 80
    %v306 = vld [vmem:[%s305] sm:$0xf]
    %v307 = vunpack.c.l.bf16 %v306
    %v308 = vunpack.c.h.bf16 %v306
    %309 = xla_tuple %v303, %v307
    %310 = xla_tuple %309
    %v311 = vsub.f32 %v303, %v307
    %312 = xla_tuple %v311
    %s313 = scalar_lea.vmem [#allocation0], 80
    %v314 = vpack.c.bf16 0.0, %v311
    %315 = vst [vmem:[%s313] sm:$0xf] %v314
    %s316 = scalar_lea.vmem %s0, 208
    %v317 = vld [vmem:[%s316] sm:$0xf]
    %v318 = vunpack.c.l.bf16 %v317
    %v319 = vunpack.c.h.bf16 %v317
    %s320 = scalar_lea.vmem %s1, 208
    %v321 = vld [vmem:[%s320] sm:$0xf]
    %v322 = vunpack.c.l.bf16 %v321
    %v323 = vunpack.c.h.bf16 %v321
    %324 = xla_tuple %v318, %v322
    %325 = xla_tuple %324
    %v326 = vsub.f32 %v318, %v322
    %327 = xla_tuple %v326
    %s328 = scalar_lea.vmem [#allocation0], 208
    %v329 = vpack.c.bf16 0.0, %v326
    %330 = vst [vmem:[%s328] sm:$0xf] %v329
    %s331 = scalar_lea.vmem %s0, 88
    %v332 = vld [vmem:[%s331] sm:$0xf]
    %v333 = vunpack.c.l.bf16 %v332
    %v334 = vunpack.c.h.bf16 %v332
    %s335 = scalar_lea.vmem %s1, 88
    %v336 = vld [vmem:[%s335] sm:$0xf]
    %v337 = vunpack.c.l.bf16 %v336
    %v338 = vunpack.c.h.bf16 %v336
    %339 = xla_tuple %v333, %v337
    %340 = xla_tuple %339
    %v341 = vsub.f32 %v333, %v337
    %342 = xla_tuple %v341
    %s343 = scalar_lea.vmem [#allocation0], 88
    %v344 = vpack.c.bf16 0.0, %v341
    %345 = vst [vmem:[%s343] sm:$0xf] %v344
    %s346 = scalar_lea.vmem %s0, 216
    %v347 = vld [vmem:[%s346] sm:$0xf]
    %v348 = vunpack.c.l.bf16 %v347
    %v349 = vunpack.c.h.bf16 %v347
    %s350 = scalar_lea.vmem %s1, 216
    %v351 = vld [vmem:[%s350] sm:$0xf]
    %v352 = vunpack.c.l.bf16 %v351
    %v353 = vunpack.c.h.bf16 %v351
    %354 = xla_tuple %v348, %v352
    %355 = xla_tuple %354
    %v356 = vsub.f32 %v348, %v352
    %357 = xla_tuple %v356
    %s358 = scalar_lea.vmem [#allocation0], 216
    %v359 = vpack.c.bf16 0.0, %v356
    %360 = vst [vmem:[%s358] sm:$0xf] %v359
    %s361 = scalar_lea.vmem %s0, 96
    %v362 = vld [vmem:[%s361] sm:$0xf]
    %v363 = vunpack.c.l.bf16 %v362
    %v364 = vunpack.c.h.bf16 %v362
    %s365 = scalar_lea.vmem %s1, 96
    %v366 = vld [vmem:[%s365] sm:$0xf]
    %v367 = vunpack.c.l.bf16 %v366
    %v368 = vunpack.c.h.bf16 %v366
    %369 = xla_tuple %v363, %v367
    %370 = xla_tuple %369
    %v371 = vsub.f32 %v363, %v367
    %372 = xla_tuple %v371
    %s373 = scalar_lea.vmem [#allocation0], 96
    %v374 = vpack.c.bf16 0.0, %v371
    %375 = vst [vmem:[%s373] sm:$0xf] %v374
    %s376 = scalar_lea.vmem %s0, 224
    %v377 = vld [vmem:[%s376] sm:$0xf]
    %v378 = vunpack.c.l.bf16 %v377
    %v379 = vunpack.c.h.bf16 %v377
    %s380 = scalar_lea.vmem %s1, 224
    %v381 = vld [vmem:[%s380] sm:$0xf]
    %v382 = vunpack.c.l.bf16 %v381
    %v383 = vunpack.c.h.bf16 %v381
    %384 = xla_tuple %v378, %v382
    %385 = xla_tuple %384
    %v386 = vsub.f32 %v378, %v382
    %387 = xla_tuple %v386
    %s388 = scalar_lea.vmem [#allocation0], 224
    %v389 = vpack.c.bf16 0.0, %v386
    %390 = vst [vmem:[%s388] sm:$0xf] %v389
    %s391 = scalar_lea.vmem %s0, 104
    %v392 = vld [vmem:[%s391] sm:$0xf]
    %v393 = vunpack.c.l.bf16 %v392
    %v394 = vunpack.c.h.bf16 %v392
    %s395 = scalar_lea.vmem %s1, 104
    %v396 = vld [vmem:[%s395] sm:$0xf]
    %v397 = vunpack.c.l.bf16 %v396
    %v398 = vunpack.c.h.bf16 %v396
    %399 = xla_tuple %v393, %v397
    %400 = xla_tuple %399
    %v401 = vsub.f32 %v393, %v397
    %402 = xla_tuple %v401
    %s403 = scalar_lea.vmem [#allocation0], 104
    %v404 = vpack.c.bf16 0.0, %v401
    %405 = vst [vmem:[%s403] sm:$0xf] %v404
    %s406 = scalar_lea.vmem %s0, 232
    %v407 = vld [vmem:[%s406] sm:$0xf]
    %v408 = vunpack.c.l.bf16 %v407
    %v409 = vunpack.c.h.bf16 %v407
    %s410 = scalar_lea.vmem %s1, 232
    %v411 = vld [vmem:[%s410] sm:$0xf]
    %v412 = vunpack.c.l.bf16 %v411
    %v413 = vunpack.c.h.bf16 %v411
    %414 = xla_tuple %v408, %v412
    %415 = xla_tuple %414
    %v416 = vsub.f32 %v408, %v412
    %417 = xla_tuple %v416
    %s418 = scalar_lea.vmem [#allocation0], 232
    %v419 = vpack.c.bf16 0.0, %v416
    %420 = vst [vmem:[%s418] sm:$0xf] %v419
    %s421 = scalar_lea.vmem %s0, 112
    %v422 = vld [vmem:[%s421] sm:$0xf]
    %v423 = vunpack.c.l.bf16 %v422
    %v424 = vunpack.c.h.bf16 %v422
    %s425 = scalar_lea.vmem %s1, 112
    %v426 = vld [vmem:[%s425] sm:$0xf]
    %v427 = vunpack.c.l.bf16 %v426
    %v428 = vunpack.c.h.bf16 %v426
    %429 = xla_tuple %v423, %v427
    %430 = xla_tuple %429
    %v431 = vsub.f32 %v423, %v427
    %432 = xla_tuple %v431
    %s433 = scalar_lea.vmem [#allocation0], 112
    %v434 = vpack.c.bf16 0.0, %v431
    %435 = vst [vmem:[%s433] sm:$0xf] %v434
    %s436 = scalar_lea.vmem %s0, 240
    %v437 = vld [vmem:[%s436] sm:$0xf]
    %v438 = vunpack.c.l.bf16 %v437
    %v439 = vunpack.c.h.bf16 %v437
    %s440 = scalar_lea.vmem %s1, 240
    %v441 = vld [vmem:[%s440] sm:$0xf]
    %v442 = vunpack.c.l.bf16 %v441
    %v443 = vunpack.c.h.bf16 %v441
    %444 = xla_tuple %v438, %v442
    %445 = xla_tuple %444
    %v446 = vsub.f32 %v438, %v442
    %447 = xla_tuple %v446
    %s448 = scalar_lea.vmem [#allocation0], 240
    %v449 = vpack.c.bf16 0.0, %v446
    %450 = vst [vmem:[%s448] sm:$0xf] %v449
    %s451 = scalar_lea.vmem %s0, 120
    %v452 = vld [vmem:[%s451] sm:$0xf]
    %v453 = vunpack.c.l.bf16 %v452
    %v454 = vunpack.c.h.bf16 %v452
    %s455 = scalar_lea.vmem %s1, 120
    %v456 = vld [vmem:[%s455] sm:$0xf]
    %v457 = vunpack.c.l.bf16 %v456
    %v458 = vunpack.c.h.bf16 %v456
    %459 = xla_tuple %v453, %v457
    %460 = xla_tuple %459
    %v461 = vsub.f32 %v453, %v457
    %462 = xla_tuple %v461
    %s463 = scalar_lea.vmem [#allocation0], 120
    %v464 = vpack.c.bf16 0.0, %v461
    %465 = vst [vmem:[%s463] sm:$0xf] %v464
    %s466 = scalar_lea.vmem %s0, 248
    %v467 = vld [vmem:[%s466] sm:$0xf]
    %v468 = vunpack.c.l.bf16 %v467
    %v469 = vunpack.c.h.bf16 %v467
    %s470 = scalar_lea.vmem %s1, 248
    %v471 = vld [vmem:[%s470] sm:$0xf]
    %v472 = vunpack.c.l.bf16 %v471
    %v473 = vunpack.c.h.bf16 %v471
    %474 = xla_tuple %v468, %v472
    %475 = xla_tuple %474
    %v476 = vsub.f32 %v468, %v472
    %477 = xla_tuple %v476
    %s478 = scalar_lea.vmem [#allocation0], 248
    %v479 = vpack.c.bf16 0.0, %v476
    %480 = vst [vmem:[%s478] sm:$0xf] %v479
    %s481 = scalar_lea.vmem %s0, 4
    %v482 = vld [vmem:[%s481] sm:$0xf]
    %v483 = vunpack.c.l.bf16 %v482
    %v484 = vunpack.c.h.bf16 %v482
    %s485 = scalar_lea.vmem %s1, 4
    %v486 = vld [vmem:[%s485] sm:$0xf]
    %v487 = vunpack.c.l.bf16 %v486
    %v488 = vunpack.c.h.bf16 %v486
    %489 = xla_tuple %v483, %v487
    %490 = xla_tuple %489
    %v491 = vsub.f32 %v483, %v487
    %492 = xla_tuple %v491
    %s493 = scalar_lea.vmem [#allocation0], 4
    %v494 = vpack.c.bf16 0.0, %v491
    %495 = vst [vmem:[%s493] sm:$0xf] %v494
    %s496 = scalar_lea.vmem %s0, 132
    %v497 = vld [vmem:[%s496] sm:$0xf]
    %v498 = vunpack.c.l.bf16 %v497
    %v499 = vunpack.c.h.bf16 %v497
    %s500 = scalar_lea.vmem %s1, 132
    %v501 = vld [vmem:[%s500] sm:$0xf]
    %v502 = vunpack.c.l.bf16 %v501
    %v503 = vunpack.c.h.bf16 %v501
    %504 = xla_tuple %v498, %v502
    %505 = xla_tuple %504
    %v506 = vsub.f32 %v498, %v502
    %507 = xla_tuple %v506
    %s508 = scalar_lea.vmem [#allocation0], 132
    %v509 = vpack.c.bf16 0.0, %v506
    %510 = vst [vmem:[%s508] sm:$0xf] %v509
    %s511 = scalar_lea.vmem %s0, 12
    %v512 = vld [vmem:[%s511] sm:$0xf]
    %v513 = vunpack.c.l.bf16 %v512
    %v514 = vunpack.c.h.bf16 %v512
    %s515 = scalar_lea.vmem %s1, 12
    %v516 = vld [vmem:[%s515] sm:$0xf]
    %v517 = vunpack.c.l.bf16 %v516
    %v518 = vunpack.c.h.bf16 %v516
    %519 = xla_tuple %v513, %v517
    %520 = xla_tuple %519
    %v521 = vsub.f32 %v513, %v517
    %522 = xla_tuple %v521
    %s523 = scalar_lea.vmem [#allocation0], 12
    %v524 = vpack.c.bf16 0.0, %v521
    %525 = vst [vmem:[%s523] sm:$0xf] %v524
    %s526 = scalar_lea.vmem %s0, 140
    %v527 = vld [vmem:[%s526] sm:$0xf]
    %v528 = vunpack.c.l.bf16 %v527
    %v529 = vunpack.c.h.bf16 %v527
    %s530 = scalar_lea.vmem %s1, 140
    %v531 = vld [vmem:[%s530] sm:$0xf]
    %v532 = vunpack.c.l.bf16 %v531
    %v533 = vunpack.c.h.bf16 %v531
    %534 = xla_tuple %v528, %v532
    %535 = xla_tuple %534
    %v536 = vsub.f32 %v528, %v532
    %537 = xla_tuple %v536
    %s538 = scalar_lea.vmem [#allocation0], 140
    %v539 = vpack.c.bf16 0.0, %v536
    %540 = vst [vmem:[%s538] sm:$0xf] %v539
    %s541 = scalar_lea.vmem %s0, 20
    %v542 = vld [vmem:[%s541] sm:$0xf]
    %v543 = vunpack.c.l.bf16 %v542
    %v544 = vunpack.c.h.bf16 %v542
    %s545 = scalar_lea.vmem %s1, 20
    %v546 = vld [vmem:[%s545] sm:$0xf]
    %v547 = vunpack.c.l.bf16 %v546
    %v548 = vunpack.c.h.bf16 %v546
    %549 = xla_tuple %v543, %v547
    %550 = xla_tuple %549
    %v551 = vsub.f32 %v543, %v547
    %552 = xla_tuple %v551
    %s553 = scalar_lea.vmem [#allocation0], 20
    %v554 = vpack.c.bf16 0.0, %v551
    %555 = vst [vmem:[%s553] sm:$0xf] %v554
    %s556 = scalar_lea.vmem %s0, 148
    %v557 = vld [vmem:[%s556] sm:$0xf]
    %v558 = vunpack.c.l.bf16 %v557
    %v559 = vunpack.c.h.bf16 %v557
    %s560 = scalar_lea.vmem %s1, 148
    %v561 = vld [vmem:[%s560] sm:$0xf]
    %v562 = vunpack.c.l.bf16 %v561
    %v563 = vunpack.c.h.bf16 %v561
    %564 = xla_tuple %v558, %v562
    %565 = xla_tuple %564
    %v566 = vsub.f32 %v558, %v562
    %567 = xla_tuple %v566
    %s568 = scalar_lea.vmem [#allocation0], 148
    %v569 = vpack.c.bf16 0.0, %v566
    %570 = vst [vmem:[%s568] sm:$0xf] %v569
    %s571 = scalar_lea.vmem %s0, 28
    %v572 = vld [vmem:[%s571] sm:$0xf]
    %v573 = vunpack.c.l.bf16 %v572
    %v574 = vunpack.c.h.bf16 %v572
    %s575 = scalar_lea.vmem %s1, 28
    %v576 = vld [vmem:[%s575] sm:$0xf]
    %v577 = vunpack.c.l.bf16 %v576
    %v578 = vunpack.c.h.bf16 %v576
    %579 = xla_tuple %v573, %v577
    %580 = xla_tuple %579
    %v581 = vsub.f32 %v573, %v577
    %582 = xla_tuple %v581
    %s583 = scalar_lea.vmem [#allocation0], 28
    %v584 = vpack.c.bf16 0.0, %v581
    %585 = vst [vmem:[%s583] sm:$0xf] %v584
    %s586 = scalar_lea.vmem %s0, 156
    %v587 = vld [vmem:[%s586] sm:$0xf]
    %v588 = vunpack.c.l.bf16 %v587
    %v589 = vunpack.c.h.bf16 %v587
    %s590 = scalar_lea.vmem %s1, 156
    %v591 = vld [vmem:[%s590] sm:$0xf]
    %v592 = vunpack.c.l.bf16 %v591
    %v593 = vunpack.c.h.bf16 %v591
    %594 = xla_tuple %v588, %v592
    %595 = xla_tuple %594
    %v596 = vsub.f32 %v588, %v592
    %597 = xla_tuple %v596
    %s598 = scalar_lea.vmem [#allocation0], 156
    %v599 = vpack.c.bf16 0.0, %v596
    %600 = vst [vmem:[%s598] sm:$0xf] %v599
    %s601 = scalar_lea.vmem %s0, 36
    %v602 = vld [vmem:[%s601] sm:$0xf]
    %v603 = vunpack.c.l.bf16 %v602
    %v604 = vunpack.c.h.bf16 %v602
    %s605 = scalar_lea.vmem %s1, 36
    %v606 = vld [vmem:[%s605] sm:$0xf]
    %v607 = vunpack.c.l.bf16 %v606
    %v608 = vunpack.c.h.bf16 %v606
    %609 = xla_tuple %v603, %v607
    %610 = xla_tuple %609
    %v611 = vsub.f32 %v603, %v607
    %612 = xla_tuple %v611
    %s613 = scalar_lea.vmem [#allocation0], 36
    %v614 = vpack.c.bf16 0.0, %v611
    %615 = vst [vmem:[%s613] sm:$0xf] %v614
    %s616 = scalar_lea.vmem %s0, 164
    %v617 = vld [vmem:[%s616] sm:$0xf]
    %v618 = vunpack.c.l.bf16 %v617
    %v619 = vunpack.c.h.bf16 %v617
    %s620 = scalar_lea.vmem %s1, 164
    %v621 = vld [vmem:[%s620] sm:$0xf]
    %v622 = vunpack.c.l.bf16 %v621
    %v623 = vunpack.c.h.bf16 %v621
    %624 = xla_tuple %v618, %v622
    %625 = xla_tuple %624
    %v626 = vsub.f32 %v618, %v622
    %627 = xla_tuple %v626
    %s628 = scalar_lea.vmem [#allocation0], 164
    %v629 = vpack.c.bf16 0.0, %v626
    %630 = vst [vmem:[%s628] sm:$0xf] %v629
    %s631 = scalar_lea.vmem %s0, 44
    %v632 = vld [vmem:[%s631] sm:$0xf]
    %v633 = vunpack.c.l.bf16 %v632
    %v634 = vunpack.c.h.bf16 %v632
    %s635 = scalar_lea.vmem %s1, 44
    %v636 = vld [vmem:[%s635] sm:$0xf]
    %v637 = vunpack.c.l.bf16 %v636
    %v638 = vunpack.c.h.bf16 %v636
    %639 = xla_tuple %v633, %v637
    %640 = xla_tuple %639
    %v641 = vsub.f32 %v633, %v637
    %642 = xla_tuple %v641
    %s643 = scalar_lea.vmem [#allocation0], 44
    %v644 = vpack.c.bf16 0.0, %v641
    %645 = vst [vmem:[%s643] sm:$0xf] %v644
    %s646 = scalar_lea.vmem %s0, 172
    %v647 = vld [vmem:[%s646] sm:$0xf]
    %v648 = vunpack.c.l.bf16 %v647
    %v649 = vunpack.c.h.bf16 %v647
    %s650 = scalar_lea.vmem %s1, 172
    %v651 = vld [vmem:[%s650] sm:$0xf]
    %v652 = vunpack.c.l.bf16 %v651
    %v653 = vunpack.c.h.bf16 %v651
    %654 = xla_tuple %v648, %v652
    %655 = xla_tuple %654
    %v656 = vsub.f32 %v648, %v652
    %657 = xla_tuple %v656
    %s658 = scalar_lea.vmem [#allocation0], 172
    %v659 = vpack.c.bf16 0.0, %v656
    %660 = vst [vmem:[%s658] sm:$0xf] %v659
    %s661 = scalar_lea.vmem %s0, 52
    %v662 = vld [vmem:[%s661] sm:$0xf]
    %v663 = vunpack.c.l.bf16 %v662
    %v664 = vunpack.c.h.bf16 %v662
    %s665 = scalar_lea.vmem %s1, 52
    %v666 = vld [vmem:[%s665] sm:$0xf]
    %v667 = vunpack.c.l.bf16 %v666
    %v668 = vunpack.c.h.bf16 %v666
    %669 = xla_tuple %v663, %v667
    %670 = xla_tuple %669
    %v671 = vsub.f32 %v663, %v667
    %672 = xla_tuple %v671
    %s673 = scalar_lea.vmem [#allocation0], 52
    %v674 = vpack.c.bf16 0.0, %v671
    %675 = vst [vmem:[%s673] sm:$0xf] %v674
    %s676 = scalar_lea.vmem %s0, 180
    %v677 = vld [vmem:[%s676] sm:$0xf]
    %v678 = vunpack.c.l.bf16 %v677
    %v679 = vunpack.c.h.bf16 %v677
    %s680 = scalar_lea.vmem %s1, 180
    %v681 = vld [vmem:[%s680] sm:$0xf]
    %v682 = vunpack.c.l.bf16 %v681
    %v683 = vunpack.c.h.bf16 %v681
    %684 = xla_tuple %v678, %v682
    %685 = xla_tuple %684
    %v686 = vsub.f32 %v678, %v682
    %687 = xla_tuple %v686
    %s688 = scalar_lea.vmem [#allocation0], 180
    %v689 = vpack.c.bf16 0.0, %v686
    %690 = vst [vmem:[%s688] sm:$0xf] %v689
    %s691 = scalar_lea.vmem %s0, 60
    %v692 = vld [vmem:[%s691] sm:$0xf]
    %v693 = vunpack.c.l.bf16 %v692
    %v694 = vunpack.c.h.bf16 %v692
    %s695 = scalar_lea.vmem %s1, 60
    %v696 = vld [vmem:[%s695] sm:$0xf]
    %v697 = vunpack.c.l.bf16 %v696
    %v698 = vunpack.c.h.bf16 %v696
    %699 = xla_tuple %v693, %v697
    %700 = xla_tuple %699
    %v701 = vsub.f32 %v693, %v697
    %702 = xla_tuple %v701
    %s703 = scalar_lea.vmem [#allocation0], 60
    %v704 = vpack.c.bf16 0.0, %v701
    %705 = vst [vmem:[%s703] sm:$0xf] %v704
    %s706 = scalar_lea.vmem %s0, 188
    %v707 = vld [vmem:[%s706] sm:$0xf]
    %v708 = vunpack.c.l.bf16 %v707
    %v709 = vunpack.c.h.bf16 %v707
    %s710 = scalar_lea.vmem %s1, 188
    %v711 = vld [vmem:[%s710] sm:$0xf]
    %v712 = vunpack.c.l.bf16 %v711
    %v713 = vunpack.c.h.bf16 %v711
    %714 = xla_tuple %v708, %v712
    %715 = xla_tuple %714
    %v716 = vsub.f32 %v708, %v712
    %717 = xla_tuple %v716
    %s718 = scalar_lea.vmem [#allocation0], 188
    %v719 = vpack.c.bf16 0.0, %v716
    %720 = vst [vmem:[%s718] sm:$0xf] %v719
    %s721 = scalar_lea.vmem %s0, 68
    %v722 = vld [vmem:[%s721] sm:$0xf]
    %v723 = vunpack.c.l.bf16 %v722
    %v724 = vunpack.c.h.bf16 %v722
    %s725 = scalar_lea.vmem %s1, 68
    %v726 = vld [vmem:[%s725] sm:$0xf]
    %v727 = vunpack.c.l.bf16 %v726
    %v728 = vunpack.c.h.bf16 %v726
    %729 = xla_tuple %v723, %v727
    %730 = xla_tuple %729
    %v731 = vsub.f32 %v723, %v727
    %732 = xla_tuple %v731
    %s733 = scalar_lea.vmem [#allocation0], 68
    %v734 = vpack.c.bf16 0.0, %v731
    %735 = vst [vmem:[%s733] sm:$0xf] %v734
    %s736 = scalar_lea.vmem %s0, 196
    %v737 = vld [vmem:[%s736] sm:$0xf]
    %v738 = vunpack.c.l.bf16 %v737
    %v739 = vunpack.c.h.bf16 %v737
    %s740 = scalar_lea.vmem %s1, 196
    %v741 = vld [vmem:[%s740] sm:$0xf]
    %v742 = vunpack.c.l.bf16 %v741
    %v743 = vunpack.c.h.bf16 %v741
    %744 = xla_tuple %v738, %v742
    %745 = xla_tuple %744
    %v746 = vsub.f32 %v738, %v742
    %747 = xla_tuple %v746
    %s748 = scalar_lea.vmem [#allocation0], 196
    %v749 = vpack.c.bf16 0.0, %v746
    %750 = vst [vmem:[%s748] sm:$0xf] %v749
    %s751 = scalar_lea.vmem %s0, 76
    %v752 = vld [vmem:[%s751] sm:$0xf]
    %v753 = vunpack.c.l.bf16 %v752
    %v754 = vunpack.c.h.bf16 %v752
    %s755 = scalar_lea.vmem %s1, 76
    %v756 = vld [vmem:[%s755] sm:$0xf]
    %v757 = vunpack.c.l.bf16 %v756
    %v758 = vunpack.c.h.bf16 %v756
    %759 = xla_tuple %v753, %v757
    %760 = xla_tuple %759
    %v761 = vsub.f32 %v753, %v757
    %762 = xla_tuple %v761
    %s763 = scalar_lea.vmem [#allocation0], 76
    %v764 = vpack.c.bf16 0.0, %v761
    %765 = vst [vmem:[%s763] sm:$0xf] %v764
    %s766 = scalar_lea.vmem %s0, 204
    %v767 = vld [vmem:[%s766] sm:$0xf]
    %v768 = vunpack.c.l.bf16 %v767
    %v769 = vunpack.c.h.bf16 %v767
    %s770 = scalar_lea.vmem %s1, 204
    %v771 = vld [vmem:[%s770] sm:$0xf]
    %v772 = vunpack.c.l.bf16 %v771
    %v773 = vunpack.c.h.bf16 %v771
    %774 = xla_tuple %v768, %v772
    %775 = xla_tuple %774
    %v776 = vsub.f32 %v768, %v772
    %777 = xla_tuple %v776
    %s778 = scalar_lea.vmem [#allocation0], 204
    %v779 = vpack.c.bf16 0.0, %v776
    %780 = vst [vmem:[%s778] sm:$0xf] %v779
    %s781 = scalar_lea.vmem %s0, 84
    %v782 = vld [vmem:[%s781] sm:$0xf]
    %v783 = vunpack.c.l.bf16 %v782
    %v784 = vunpack.c.h.bf16 %v782
    %s785 = scalar_lea.vmem %s1, 84
    %v786 = vld [vmem:[%s785] sm:$0xf]
    %v787 = vunpack.c.l.bf16 %v786
    %v788 = vunpack.c.h.bf16 %v786
    %789 = xla_tuple %v783, %v787
    %790 = xla_tuple %789
    %v791 = vsub.f32 %v783, %v787
    %792 = xla_tuple %v791
    %s793 = scalar_lea.vmem [#allocation0], 84
    %v794 = vpack.c.bf16 0.0, %v791
    %795 = vst [vmem:[%s793] sm:$0xf] %v794
    %s796 = scalar_lea.vmem %s0, 212
    %v797 = vld [vmem:[%s796] sm:$0xf]
    %v798 = vunpack.c.l.bf16 %v797
    %v799 = vunpack.c.h.bf16 %v797
    %s800 = scalar_lea.vmem %s1, 212
    %v801 = vld [vmem:[%s800] sm:$0xf]
    %v802 = vunpack.c.l.bf16 %v801
    %v803 = vunpack.c.h.bf16 %v801
    %804 = xla_tuple %v798, %v802
    %805 = xla_tuple %804
    %v806 = vsub.f32 %v798, %v802
    %807 = xla_tuple %v806
    %s808 = scalar_lea.vmem [#allocation0], 212
    %v809 = vpack.c.bf16 0.0, %v806
    %810 = vst [vmem:[%s808] sm:$0xf] %v809
    %s811 = scalar_lea.vmem %s0, 92
    %v812 = vld [vmem:[%s811] sm:$0xf]
    %v813 = vunpack.c.l.bf16 %v812
    %v814 = vunpack.c.h.bf16 %v812
    %s815 = scalar_lea.vmem %s1, 92
    %v816 = vld [vmem:[%s815] sm:$0xf]
    %v817 = vunpack.c.l.bf16 %v816
    %v818 = vunpack.c.h.bf16 %v816
    %819 = xla_tuple %v813, %v817
    %820 = xla_tuple %819
    %v821 = vsub.f32 %v813, %v817
    %822 = xla_tuple %v821
    %s823 = scalar_lea.vmem [#allocation0], 92
    %v824 = vpack.c.bf16 0.0, %v821
    %825 = vst [vmem:[%s823] sm:$0xf] %v824
    %s826 = scalar_lea.vmem %s0, 220
    %v827 = vld [vmem:[%s826] sm:$0xf]
    %v828 = vunpack.c.l.bf16 %v827
    %v829 = vunpack.c.h.bf16 %v827
    %s830 = scalar_lea.vmem %s1, 220
    %v831 = vld [vmem:[%s830] sm:$0xf]
    %v832 = vunpack.c.l.bf16 %v831
    %v833 = vunpack.c.h.bf16 %v831
    %834 = xla_tuple %v828, %v832
    %835 = xla_tuple %834
    %v836 = vsub.f32 %v828, %v832
    %837 = xla_tuple %v836
    %s838 = scalar_lea.vmem [#allocation0], 220
    %v839 = vpack.c.bf16 0.0, %v836
    %840 = vst [vmem:[%s838] sm:$0xf] %v839
    %s841 = scalar_lea.vmem %s0, 100
    %v842 = vld [vmem:[%s841] sm:$0xf]
    %v843 = vunpack.c.l.bf16 %v842
    %v844 = vunpack.c.h.bf16 %v842
    %s845 = scalar_lea.vmem %s1, 100
    %v846 = vld [vmem:[%s845] sm:$0xf]
    %v847 = vunpack.c.l.bf16 %v846
    %v848 = vunpack.c.h.bf16 %v846
    %849 = xla_tuple %v843, %v847
    %850 = xla_tuple %849
    %v851 = vsub.f32 %v843, %v847
    %852 = xla_tuple %v851
    %s853 = scalar_lea.vmem [#allocation0], 100
    %v854 = vpack.c.bf16 0.0, %v851
    %855 = vst [vmem:[%s853] sm:$0xf] %v854
    %s856 = scalar_lea.vmem %s0, 228
    %v857 = vld [vmem:[%s856] sm:$0xf]
    %v858 = vunpack.c.l.bf16 %v857
    %v859 = vunpack.c.h.bf16 %v857
    %s860 = scalar_lea.vmem %s1, 228
    %v861 = vld [vmem:[%s860] sm:$0xf]
    %v862 = vunpack.c.l.bf16 %v861
    %v863 = vunpack.c.h.bf16 %v861
    %864 = xla_tuple %v858, %v862
    %865 = xla_tuple %864
    %v866 = vsub.f32 %v858, %v862
    %867 = xla_tuple %v866
    %s868 = scalar_lea.vmem [#allocation0], 228
    %v869 = vpack.c.bf16 0.0, %v866
    %870 = vst [vmem:[%s868] sm:$0xf] %v869
    %s871 = scalar_lea.vmem %s0, 108
    %v872 = vld [vmem:[%s871] sm:$0xf]
    %v873 = vunpack.c.l.bf16 %v872
    %v874 = vunpack.c.h.bf16 %v872
    %s875 = scalar_lea.vmem %s1, 108
    %v876 = vld [vmem:[%s875] sm:$0xf]
    %v877 = vunpack.c.l.bf16 %v876
    %v878 = vunpack.c.h.bf16 %v876
    %879 = xla_tuple %v873, %v877
    %880 = xla_tuple %879
    %v881 = vsub.f32 %v873, %v877
    %882 = xla_tuple %v881
    %s883 = scalar_lea.vmem [#allocation0], 108
    %v884 = vpack.c.bf16 0.0, %v881
    %885 = vst [vmem:[%s883] sm:$0xf] %v884
    %s886 = scalar_lea.vmem %s0, 236
    %v887 = vld [vmem:[%s886] sm:$0xf]
    %v888 = vunpack.c.l.bf16 %v887
    %v889 = vunpack.c.h.bf16 %v887
    %s890 = scalar_lea.vmem %s1, 236
    %v891 = vld [vmem:[%s890] sm:$0xf]
    %v892 = vunpack.c.l.bf16 %v891
    %v893 = vunpack.c.h.bf16 %v891
    %894 = xla_tuple %v888, %v892
    %895 = xla_tuple %894
    %v896 = vsub.f32 %v888, %v892
    %897 = xla_tuple %v896
    %s898 = scalar_lea.vmem [#allocation0], 236
    %v899 = vpack.c.bf16 0.0, %v896
    %900 = vst [vmem:[%s898] sm:$0xf] %v899
    %s901 = scalar_lea.vmem %s0, 116
    %v902 = vld [vmem:[%s901] sm:$0xf]
    %v903 = vunpack.c.l.bf16 %v902
    %v904 = vunpack.c.h.bf16 %v902
    %s905 = scalar_lea.vmem %s1, 116
    %v906 = vld [vmem:[%s905] sm:$0xf]
    %v907 = vunpack.c.l.bf16 %v906
    %v908 = vunpack.c.h.bf16 %v906
    %909 = xla_tuple %v903, %v907
    %910 = xla_tuple %909
    %v911 = vsub.f32 %v903, %v907
    %912 = xla_tuple %v911
    %s913 = scalar_lea.vmem [#allocation0], 116
    %v914 = vpack.c.bf16 0.0, %v911
    %915 = vst [vmem:[%s913] sm:$0xf] %v914
    %s916 = scalar_lea.vmem %s0, 244
    %v917 = vld [vmem:[%s916] sm:$0xf]
    %v918 = vunpack.c.l.bf16 %v917
    %v919 = vunpack.c.h.bf16 %v917
    %s920 = scalar_lea.vmem %s1, 244
    %v921 = vld [vmem:[%s920] sm:$0xf]
    %v922 = vunpack.c.l.bf16 %v921
    %v923 = vunpack.c.h.bf16 %v921
    %924 = xla_tuple %v918, %v922
    %925 = xla_tuple %924
    %v926 = vsub.f32 %v918, %v922
    %927 = xla_tuple %v926
    %s928 = scalar_lea.vmem [#allocation0], 244
    %v929 = vpack.c.bf16 0.0, %v926
    %930 = vst [vmem:[%s928] sm:$0xf] %v929
    %s931 = scalar_lea.vmem %s0, 124
    %v932 = vld [vmem:[%s931] sm:$0xf]
    %v933 = vunpack.c.l.bf16 %v932
    %v934 = vunpack.c.h.bf16 %v932
    %s935 = scalar_lea.vmem %s1, 124
    %v936 = vld [vmem:[%s935] sm:$0xf]
    %v937 = vunpack.c.l.bf16 %v936
    %v938 = vunpack.c.h.bf16 %v936
    %939 = xla_tuple %v933, %v937
    %940 = xla_tuple %939
    %v941 = vsub.f32 %v933, %v937
    %942 = xla_tuple %v941
    %s943 = scalar_lea.vmem [#allocation0], 124
    %v944 = vpack.c.bf16 0.0, %v941
    %945 = vst [vmem:[%s943] sm:$0xf] %v944
    %s946 = scalar_lea.vmem %s0, 252
    %v947 = vld [vmem:[%s946] sm:$0xf]
    %v948 = vunpack.c.l.bf16 %v947
    %v949 = vunpack.c.h.bf16 %v947
    %s950 = scalar_lea.vmem %s1, 252
    %v951 = vld [vmem:[%s950] sm:$0xf]
    %v952 = vunpack.c.l.bf16 %v951
    %v953 = vunpack.c.h.bf16 %v951
    %954 = xla_tuple %v948, %v952
    %955 = xla_tuple %954
    %v956 = vsub.f32 %v948, %v952
    %957 = xla_tuple %v956
    %s958 = scalar_lea.vmem [#allocation0], 252
    %v959 = vpack.c.bf16 0.0, %v956
    %960 = vst [vmem:[%s958] sm:$0xf] %v959
    %s962 = ssub.s32 4096, 4096
    %963 = vsyncadd [#allocation1], %s962
    %s964 = sshll.u32 [#allocation0], 4
    %s965 = int_to_ptr.vmem [resolvable:$true] %s964
    %970 = dma.vmem_to_hbm [thread:$0]  %s965, 4096, %s2, [#allocation1], 64, 64, 4
    %971 = dma.done [#allocation1], 4096
    %972 = vsyncpa [#allocation1], 1

// kernel: cfnet_forward.24
$region0: #{cfnet_forward.24}
  #allocation0 [shape = 'u32[]', space=smem, size = 0x4, offset = 0x4, fixed_abs, tag = 'smem constant byte address 0x4 - core index']
  #allocation1 [shape = 'u32[144,128]{1,0:T(1,128)}', space=vmem, size = 0x12000, scoped, tag = 'internal scratch']
  %s0 = inlined_call_operand.vmem [shape: bf16[2,18,18,24], index: 0, kind: input, shape index: {}]
  %s1 = inlined_call_operand.vmem [shape: bf16[216,24], index: 1, kind: input, shape index: {}]
  %s2 = inlined_call_operand.vmem [shape: f32[1,24], index: 2, kind: input, shape index: {}]
  %s3 = inlined_call_operand.vmem [shape: bf16[2,16,16,24], index: 3, kind: output, shape index: {}]
  %s4 = sld [smem:[#allocation0]]
  $region45: #{cfnet_forward.24} parent=0
    _
  %s6 = ssub.s32 1, %s4
  %s7 = scalar_select 0, %s6, %s4
  loop: start=0, step=1, limit=4
  $region2: #{cfnet_forward.24} parent=0 // loop_pre_header
    _
  $region3: #{cfnet_forward.24} parent=0 // loop_header
    %s9 = sphi 0, %s13
    %p10 = scmp.ge.s32.totalorder %s9, 4
    %s19 = sphi 0, %s21
    %s22 = sphi 0, %s19
    %s23 = sphi 0, %s22
    %s39 = sphi 0, %s23
    %s43 = sphi 0, %s43
    %s45 = sphi 0, %s43
    %s46 = sphi 0, %s45
    %s60 = sphi 0, %s46
    %s64 = sphi 0, %s64
    %s66 = sphi 0, %s64
    %s67 = sphi 0, %s66
    %s81 = sphi 0, %s67
    %s87 = sphi 0, %s89
    %s90 = sphi 0, %s87
    %s91 = sphi 0, %s90
    %s107 = sphi 0, %s91
  $region4: #{cfnet_forward.24} parent=0 // loop_header_branch
    %12 = sbr.rel (%p10) target = $region8
  $region5: #{cfnet_forward.24} parent=0 // loop_body
    %s14 = ssub.s32 %s9, 1
    %s15 = ssub.s32 %s9, 2
    %s16 = sadd.s32 %s9, 1
    %s17 = ssub.s32 %s9, %s16
    %p18 = scmp.eq.s32.totalorder %s17, 0
    %s20 = sadd.s32 %s19, 1
    %s21 = scalar_select %p18, %s19, %s20
    %p24 = pneg %p18
    %p25 = scmp.eq.s32.totalorder %s9, 1
    %p26 = por %p24, %p25
    %p27 = scmp.ne.s32.totalorder %s19, %s22
    %p28 = scmp.eq.s32.totalorder %s9, 0
    %p29 = por %p27, %p28
    %p30 = scmp.ne.s32.totalorder %s19, %s22
    %p31 = scmp.eq.s32.totalorder %s14, 1
    %p32 = por %p30, %p31
    %p33 = scmp.ne.s32.totalorder %s22, %s23
    %p34 = scmp.eq.s32.totalorder %s14, 0
    %p35 = por %p33, %p34
    %p36 = scmp.ne.s32.totalorder %s22, %s23
    %p37 = scmp.eq.s32.totalorder %s15, 1
    %p38 = por %p36, %p37
    %p40 = scmp.ne.s32.totalorder %s23, %s39
    %p41 = scmp.eq.s32.totalorder %s15, 0
    %p42 = por %p40, %p41
    %s44 = sadd.s32 %s43, 1
    %p47 = scmp.eq.s32.totalorder %s9, 1
    %p48 = scmp.ne.s32.totalorder %s43, %s45
    %p49 = scmp.eq.s32.totalorder %s9, 0
    %p50 = por %p48, %p49
    %p51 = scmp.ne.s32.totalorder %s43, %s45
    %p52 = scmp.eq.s32.totalorder %s14, 1
    %p53 = por %p51, %p52
    %p54 = scmp.ne.s32.totalorder %s45, %s46
    %p55 = scmp.eq.s32.totalorder %s14, 0
    %p56 = por %p54, %p55
    %p57 = scmp.ne.s32.totalorder %s45, %s46
    %p58 = scmp.eq.s32.totalorder %s15, 1
    %p59 = por %p57, %p58
    %p61 = scmp.ne.s32.totalorder %s46, %s60
    %p62 = scmp.eq.s32.totalorder %s15, 0
    %p63 = por %p61, %p62
    %s65 = sadd.s32 %s64, 1
    %p68 = scmp.eq.s32.totalorder %s9, 1
    %p69 = scmp.ne.s32.totalorder %s64, %s66
    %p70 = scmp.eq.s32.totalorder %s9, 0
    %p71 = por %p69, %p70
    %p72 = scmp.ne.s32.totalorder %s64, %s66
    %p73 = scmp.eq.s32.totalorder %s14, 1
    %p74 = por %p72, %p73
    %p75 = scmp.ne.s32.totalorder %s66, %s67
    %p76 = scmp.eq.s32.totalorder %s14, 0
    %p77 = por %p75, %p76
    %p78 = scmp.ne.s32.totalorder %s66, %s67
    %p79 = scmp.eq.s32.totalorder %s15, 1
    %p80 = por %p78, %p79
    %p82 = scmp.ne.s32.totalorder %s67, %s81
    %p83 = scmp.eq.s32.totalorder %s15, 0
    %p84 = por %p82, %p83
    %s85 = ssub.s32 %s9, %s16
    %p86 = scmp.eq.s32.totalorder %s85, 0
    %s88 = sadd.s32 %s87, 1
    %s89 = scalar_select %p86, %s87, %s88
    %p92 = pneg %p86
    %p93 = scmp.eq.s32.totalorder %s9, 1
    %p94 = por %p92, %p93
    %p95 = scmp.ne.s32.totalorder %s87, %s90
    %p96 = scmp.eq.s32.totalorder %s9, 0
    %p97 = por %p95, %p96
    %p98 = scmp.ne.s32.totalorder %s87, %s90
    %p99 = scmp.eq.s32.totalorder %s14, 1
    %p100 = por %p98, %p99
    %p101 = scmp.ne.s32.totalorder %s90, %s91
    %p102 = scmp.eq.s32.totalorder %s14, 0
    %p103 = por %p101, %p102
    %p104 = scmp.ne.s32.totalorder %s90, %s91
    %p105 = scmp.eq.s32.totalorder %s15, 1
    %p106 = por %p104, %p105
    %p108 = scmp.ne.s32.totalorder %s91, %s107
    %p109 = scmp.eq.s32.totalorder %s15, 0
    %p110 = por %p108, %p109
    %p111 = scmp.le.s32.totalorder 1, %s9
    %p112 = scmp.lt.s32.totalorder %s9, 3
    %p113 = pnand %p111, %p112
    %p114 = pneg %p113
    // Predicated region
    $region9: #{cfnet_forward.24} parent=5 // pred_check
      _
    $region10: #{cfnet_forward.24} parent=5 // pred_check_branch
      %116 = sbr.rel (%p113) target = $region12
    $region11: #{cfnet_forward.24} parent=5 // pred_region
      %s117 = ssub.s32 %s9, 1
      // Predicated region
      $region13: #{cfnet_forward.24} parent=11 // pred_check
        %p118 = pneg %p56
      $region14: #{cfnet_forward.24} parent=11 // pred_check_branch
        %120 = sbr.rel (%p118) target = $region16
      $region15: #{cfnet_forward.24} parent=11 // pred_region
        _
      $region16: #{cfnet_forward.24} parent=11 // pred_fallthru
        _
      // Predicated region
      $region17: #{cfnet_forward.24} parent=11 // pred_check
        %p121 = pneg %p77
      $region18: #{cfnet_forward.24} parent=11 // pred_check_branch
        %123 = sbr.rel (%p121) target = $region20
      $region19: #{cfnet_forward.24} parent=11 // pred_region
        _
      $region20: #{cfnet_forward.24} parent=11 // pred_fallthru
        _
    $region12: #{cfnet_forward.24} parent=5 // pred_fallthru
      _
    %p124 = scmp.lt.s32.totalorder %s9, 2
    // Predicated region
    $region21: #{cfnet_forward.24} parent=5 // pred_check
      %p125 = pneg %p124
    $region22: #{cfnet_forward.24} parent=5 // pred_check_branch
      %127 = sbr.rel (%p125) target = $region24
    $region23: #{cfnet_forward.24} parent=5 // pred_region
      // Predicated region
      $region25: #{cfnet_forward.24} parent=23 // pred_check
        %p128 = pneg %p29
      $region26: #{cfnet_forward.24} parent=23 // pred_check_branch
        %130 = sbr.rel (%p128) target = $region28
      $region27: #{cfnet_forward.24} parent=23 // pred_region
        %p131 = scmp.lt.s32.totalorder %s9, 1
        %s132 = scalar_select %p131, %s9, 1
        %s133 = smul.addr %s132, 54
        %s134 = smul.addr %s133, 4
        %s135 = scalar_lea.vmem %s0, %s134
      $region28: #{cfnet_forward.24} parent=23 // pred_fallthru
        _
    $region24: #{cfnet_forward.24} parent=5 // pred_fallthru
      _
    %p136 = scmp.le.s32.totalorder 1, %s9
    %p137 = scmp.lt.s32.totalorder %s9, 3
    %p138 = pnand %p136, %p137
    %p139 = pneg %p138
    // Predicated region
    $region29: #{cfnet_forward.24} parent=5 // pred_check
      _
    $region30: #{cfnet_forward.24} parent=5 // pred_check_branch
      %141 = sbr.rel (%p138) target = $region32
    $region31: #{cfnet_forward.24} parent=5 // pred_region
      %s142 = ssub.s32 %s9, 1
      %p143 = scmp.lt.s32.totalorder %s14, 1
      %s144 = scalar_select %p143, %s14, 1
      %s145 = smul.addr %s144, 54
      %s146 = smul.addr %s145, 4
      %s147 = scalar_lea.vmem %s0, %s146
      %p148 = pneg %p35
      %p149 = pneg %p32
      %p150 = pneg %p56
      %p151 = pneg %p53
      %p152 = pneg %p77
      %p153 = pneg %p74
      %p154 = pneg %p103
      %p155 = pneg %p100
      %p156 = scmp.lt.s32.totalorder %s14, 1
      %s157 = scalar_select %p156, %s14, 1
      %s158 = smul.addr %s157, 32
      %s159 = smul.addr %s158, 4
      %s160 = scalar_lea.vmem %s3, %s159
      %p161 = scmp.lt.s32.totalorder %s14, 1
      %s162 = scalar_select %p161, %s14, 1
      %s163 = smul.addr %s162, 54
      %s164 = smul.addr %s163, 4
      %s165 = scalar_lea.vmem %s0, %s164
      %p166 = scmp.lt.s32.totalorder %s14, 1
      %s167 = scalar_select %p166, %s14, 1
      %s168 = smul.addr %s167, 32
      %s169 = smul.addr %s168, 4
      %s170 = scalar_lea.vmem %s3, %s169
      %v172 = vld [vmem:[%s165] sm:$0xf]
      %v173 = vld [vmem:[%s165 + $0x4] sm:$0xf]
      %v174 = vld [vmem:[%s165 + $0x8] sm:$0x1]
      %v175 = vld [vmem:[%s165 + $0xc] sm:$0xf]
      %v176 = vld [vmem:[%s165 + $0x10] sm:$0xf]
      %v177 = vld [vmem:[%s165 + $0x14] sm:$0x1]
      %v178 = vld [vmem:[%s165 + $0x18] sm:$0xf]
      %v179 = vld [vmem:[%s165 + $0x1c] sm:$0xf]
      %v180 = vld [vmem:[%s165 + $0x20] sm:$0x1]
      %v181 = vld [vmem:[%s165 + $0x24] sm:$0xf]
      %v182 = vld [vmem:[%s165 + $0x28] sm:$0xf]
      %v183 = vld [vmem:[%s165 + $0x2c] sm:$0x1]
      %v184 = vld [vmem:[%s165 + $0x30] sm:$0xf]
      %v185 = vld [vmem:[%s165 + $0x34] sm:$0xf]
      %v186 = vld [vmem:[%s165 + $0x38] sm:$0x1]
      %v187 = vld [vmem:[%s165 + $0x3c] sm:$0xf]
      %v188 = vld [vmem:[%s165 + $0x40] sm:$0xf]
      %v189 = vld [vmem:[%s165 + $0x44] sm:$0x1]
      %v190 = vld [vmem:[%s165 + $0x48] sm:$0xf]
      %v191 = vld [vmem:[%s165 + $0x4c] sm:$0xf]
      %v192 = vld [vmem:[%s165 + $0x50] sm:$0x1]
      %v193 = vld [vmem:[%s165 + $0x54] sm:$0xf]
      %v194 = vld [vmem:[%s165 + $0x58] sm:$0xf]
      %v195 = vld [vmem:[%s165 + $0x5c] sm:$0x1]
      %v196 = vld [vmem:[%s165 + $0x60] sm:$0xf]
      %v197 = vld [vmem:[%s165 + $0x64] sm:$0xf]
      %v198 = vld [vmem:[%s165 + $0x68] sm:$0x1]
      %v199 = vld [vmem:[%s165 + $0x6c] sm:$0xf]
      %v200 = vld [vmem:[%s165 + $0x70] sm:$0xf]
      %v201 = vld [vmem:[%s165 + $0x74] sm:$0x1]
      %v202 = vld [vmem:[%s165 + $0x78] sm:$0xf]
      %v203 = vld [vmem:[%s165 + $0x7c] sm:$0xf]
      %v204 = vld [vmem:[%s165 + $0x80] sm:$0x1]
      %v205 = vld [vmem:[%s165 + $0x84] sm:$0xf]
      %v206 = vld [vmem:[%s165 + $0x88] sm:$0xf]
      %v207 = vld [vmem:[%s165 + $0x8c] sm:$0x1]
      %v208 = vld [vmem:[%s165 + $0x90] sm:$0xf]
      %v209 = vld [vmem:[%s165 + $0x94] sm:$0xf]
      %v210 = vld [vmem:[%s165 + $0x98] sm:$0x1]
      %v211 = vld [vmem:[%s165 + $0x9c] sm:$0xf]
      %v212 = vld [vmem:[%s165 + $0xa0] sm:$0xf]
      %v213 = vld [vmem:[%s165 + $0xa4] sm:$0x1]
      %v214 = vld [vmem:[%s165 + $0xa8] sm:$0xf]
      %v215 = vld [vmem:[%s165 + $0xac] sm:$0xf]
      %v216 = vld [vmem:[%s165 + $0xb0] sm:$0x1]
      %v217 = vld [vmem:[%s165 + $0xb4] sm:$0xf]
      %v218 = vld [vmem:[%s165 + $0xb8] sm:$0xf]
      %v219 = vld [vmem:[%s165 + $0xbc] sm:$0x1]
      %v220 = vld [vmem:[%s165 + $0xc0] sm:$0xf]
      %v221 = vld [vmem:[%s165 + $0xc4] sm:$0xf]
      %v222 = vld [vmem:[%s165 + $0xc8] sm:$0x1]
      %v223 = vld [vmem:[%s165 + $0xcc] sm:$0xf]
      %v224 = vld [vmem:[%s165 + $0xd0] sm:$0xf]
      %v225 = vld [vmem:[%s165 + $0xd4] sm:$0x1]
      %v258 = vunpack.c.l.b16 %v172
      %v259 = vunpack.c.l.b16 %v173
      %v260 = vunpack.c.l.b16 %v175
      %v261 = vunpack.c.l.b16 %v176
      %v262 = vunpack.c.l.b16 %v178
      %v263 = vunpack.c.l.b16 %v179
      %v264 = vunpack.c.l.b16 %v181
      %v265 = vunpack.c.l.b16 %v182
      %v266 = vunpack.c.l.b16 %v184
      %v267 = vunpack.c.l.b16 %v185
      %v268 = vunpack.c.l.b16 %v187
      %v269 = vunpack.c.l.b16 %v188
      %v270 = vunpack.c.l.b16 %v190
      %v271 = vunpack.c.l.b16 %v191
      %v272 = vunpack.c.l.b16 %v193
      %v273 = vunpack.c.l.b16 %v194
      %v274 = vunpack.c.l.b16 %v196
      %v275 = vunpack.c.l.b16 %v197
      %v276 = vunpack.c.l.b16 %v199
      %v277 = vunpack.c.l.b16 %v200
      %v278 = vunpack.c.l.b16 %v202
      %v279 = vunpack.c.l.b16 %v203
      %v280 = vunpack.c.l.b16 %v205
      %v281 = vunpack.c.l.b16 %v206
      %v282 = vunpack.c.l.b16 %v208
      %v283 = vunpack.c.l.b16 %v209
      %v284 = vunpack.c.l.b16 %v211
      %v285 = vunpack.c.l.b16 %v212
      %v286 = vunpack.c.l.b16 %v214
      %v287 = vunpack.c.l.b16 %v215
      %v288 = vunpack.c.l.b16 %v217
      %v289 = vunpack.c.l.b16 %v218
      %v290 = vpack.c.b16 %v259, %v258
      %v291 = vpack.c.b16 %v261, %v260
      %v292 = vpack.c.b16 %v263, %v262
      %v293 = vpack.c.b16 %v265, %v264
      %v294 = vpack.c.b16 %v267, %v266
      %v295 = vpack.c.b16 %v269, %v268
      %v296 = vpack.c.b16 %v271, %v270
      %v297 = vpack.c.b16 %v273, %v272
      %v298 = vpack.c.b16 %v275, %v274
      %v299 = vpack.c.b16 %v277, %v276
      %v300 = vpack.c.b16 %v279, %v278
      %v301 = vpack.c.b16 %v281, %v280
      %v302 = vpack.c.b16 %v283, %v282
      %v303 = vpack.c.b16 %v285, %v284
      %v304 = vpack.c.b16 %v287, %v286
      %v305 = vpack.c.b16 %v289, %v288
      %v322 = vunpack.c.l.b16 %v174
      %v323 = vunpack.c.l.b16 %v177
      %v324 = vunpack.c.l.b16 %v180
      %v325 = vunpack.c.l.b16 %v183
      %v326 = vunpack.c.l.b16 %v186
      %v327 = vunpack.c.l.b16 %v189
      %v328 = vunpack.c.l.b16 %v192
      %v329 = vunpack.c.l.b16 %v195
      %v330 = vunpack.c.l.b16 %v198
      %v331 = vunpack.c.l.b16 %v201
      %v332 = vunpack.c.l.b16 %v204
      %v333 = vunpack.c.l.b16 %v207
      %v334 = vunpack.c.l.b16 %v210
      %v335 = vunpack.c.l.b16 %v213
      %v336 = vunpack.c.l.b16 %v216
      %v337 = vunpack.c.l.b16 %v219
      %v338 = vpack.c.b16 %v322, %v322
      %v339 = vpack.c.b16 %v323, %v323
      %v340 = vpack.c.b16 %v324, %v324
      %v341 = vpack.c.b16 %v325, %v325
      %v342 = vpack.c.b16 %v326, %v326
      %v343 = vpack.c.b16 %v327, %v327
      %v344 = vpack.c.b16 %v328, %v328
      %v345 = vpack.c.b16 %v329, %v329
      %v346 = vpack.c.b16 %v330, %v330
      %v347 = vpack.c.b16 %v331, %v331
      %v348 = vpack.c.b16 %v332, %v332
      %v349 = vpack.c.b16 %v333, %v333
      %v350 = vpack.c.b16 %v334, %v334
      %v351 = vpack.c.b16 %v335, %v335
      %v352 = vpack.c.b16 %v336, %v336
      %v353 = vpack.c.b16 %v337, %v337
      %vm354 = vsmask.f32 7424
      %v356 = vshrl.u32 %v290, 16
      %v358 = vshll.u32 %v290, 16
      %v360 = vrot.slane %v358, 1
      %v361 = vor.u32 %v356, %v360
      %v363 = vshll.u32 %v338, 16
      %v365 = vrot.slane %v363, 1
      %v366 = vsel %vm354, %v361, %v365
      %v368 = vshrl.u32 %v291, 16
      %v370 = vshll.u32 %v291, 16
      %v372 = vrot.slane %v370, 1
      %v373 = vor.u32 %v368, %v372
      %v375 = vshll.u32 %v339, 16
      %v377 = vrot.slane %v375, 1
      %v378 = vsel %vm354, %v373, %v377
      %v380 = vshrl.u32 %v292, 16
      %v382 = vshll.u32 %v292, 16
      %v384 = vrot.slane %v382, 1
      %v385 = vor.u32 %v380, %v384
      %v387 = vshll.u32 %v340, 16
      %v389 = vrot.slane %v387, 1
      %v390 = vsel %vm354, %v385, %v389
      %v392 = vshrl.u32 %v293, 16
      %v394 = vshll.u32 %v293, 16
      %v396 = vrot.slane %v394, 1
      %v397 = vor.u32 %v392, %v396
      %v399 = vshll.u32 %v341, 16
      %v401 = vrot.slane %v399, 1
      %v402 = vsel %vm354, %v397, %v401
      %v404 = vshrl.u32 %v294, 16
      %v406 = vshll.u32 %v294, 16
      %v408 = vrot.slane %v406, 1
      %v409 = vor.u32 %v404, %v408
      %v411 = vshll.u32 %v342, 16
      %v413 = vrot.slane %v411, 1
      %v414 = vsel %vm354, %v409, %v413
      %v416 = vshrl.u32 %v295, 16
      %v418 = vshll.u32 %v295, 16
      %v420 = vrot.slane %v418, 1
      %v421 = vor.u32 %v416, %v420
      %v423 = vshll.u32 %v343, 16
      %v425 = vrot.slane %v423, 1
      %v426 = vsel %vm354, %v421, %v425
      %v428 = vshrl.u32 %v296, 16
      %v430 = vshll.u32 %v296, 16
      %v432 = vrot.slane %v430, 1
      %v433 = vor.u32 %v428, %v432
      %v435 = vshll.u32 %v344, 16
      %v437 = vrot.slane %v435, 1
      %v438 = vsel %vm354, %v433, %v437
      %v440 = vshrl.u32 %v297, 16
      %v442 = vshll.u32 %v297, 16
      %v444 = vrot.slane %v442, 1
      %v445 = vor.u32 %v440, %v444
      %v447 = vshll.u32 %v345, 16
      %v449 = vrot.slane %v447, 1
      %v450 = vsel %vm354, %v445, %v449
      %v452 = vshrl.u32 %v298, 16
      %v454 = vshll.u32 %v298, 16
      %v456 = vrot.slane %v454, 1
      %v457 = vor.u32 %v452, %v456
      %v459 = vshll.u32 %v346, 16
      %v461 = vrot.slane %v459, 1
      %v462 = vsel %vm354, %v457, %v461
      %v464 = vshrl.u32 %v299, 16
      %v466 = vshll.u32 %v299, 16
      %v468 = vrot.slane %v466, 1
      %v469 = vor.u32 %v464, %v468
      %v471 = vshll.u32 %v347, 16
      %v473 = vrot.slane %v471, 1
      %v474 = vsel %vm354, %v469, %v473
      %v476 = vshrl.u32 %v300, 16
      %v478 = vshll.u32 %v300, 16
      %v480 = vrot.slane %v478, 1
      %v481 = vor.u32 %v476, %v480
      %v483 = vshll.u32 %v348, 16
      %v485 = vrot.slane %v483, 1
      %v486 = vsel %vm354, %v481, %v485
      %v488 = vshrl.u32 %v301, 16
      %v490 = vshll.u32 %v301, 16
      %v492 = vrot.slane %v490, 1
      %v493 = vor.u32 %v488, %v492
      %v495 = vshll.u32 %v349, 16
      %v497 = vrot.slane %v495, 1
      %v498 = vsel %vm354, %v493, %v497
      %v500 = vshrl.u32 %v302, 16
      %v502 = vshll.u32 %v302, 16
      %v504 = vrot.slane %v502, 1
      %v505 = vor.u32 %v500, %v504
      %v507 = vshll.u32 %v350, 16
      %v509 = vrot.slane %v507, 1
      %v510 = vsel %vm354, %v505, %v509
      %v512 = vshrl.u32 %v303, 16
      %v514 = vshll.u32 %v303, 16
      %v516 = vrot.slane %v514, 1
      %v517 = vor.u32 %v512, %v516
      %v519 = vshll.u32 %v351, 16
      %v521 = vrot.slane %v519, 1
      %v522 = vsel %vm354, %v517, %v521
      %v524 = vshrl.u32 %v304, 16
      %v526 = vshll.u32 %v304, 16
      %v528 = vrot.slane %v526, 1
      %v529 = vor.u32 %v524, %v528
      %v531 = vshll.u32 %v352, 16
      %v533 = vrot.slane %v531, 1
      %v534 = vsel %vm354, %v529, %v533
      %v536 = vshrl.u32 %v305, 16
      %v538 = vshll.u32 %v305, 16
      %v540 = vrot.slane %v538, 1
      %v541 = vor.u32 %v536, %v540
      %v543 = vshll.u32 %v353, 16
      %v545 = vrot.slane %v543, 1
      %v546 = vsel %vm354, %v541, %v545
      %547 = vrot.lane.b32.xlu0 %v366, 24
      %v548 = vpop.permute.xlu0 %547
      %549 = vrot.lane.b32.xlu0 %v378, 24
      %v550 = vpop.permute.xlu0 %549
      %551 = vrot.lane.b32.xlu0 %v390, 24
      %v552 = vpop.permute.xlu0 %551
      %553 = vrot.lane.b32.xlu0 %v402, 24
      %v554 = vpop.permute.xlu0 %553
      %555 = vrot.lane.b32.xlu0 %v414, 24
      %v556 = vpop.permute.xlu0 %555
      %557 = vrot.lane.b32.xlu0 %v426, 24
      %v558 = vpop.permute.xlu0 %557
      %559 = vrot.lane.b32.xlu0 %v438, 24
      %v560 = vpop.permute.xlu0 %559
      %561 = vrot.lane.b32.xlu0 %v450, 24
      %v562 = vpop.permute.xlu0 %561
      %563 = vrot.lane.b32.xlu0 %v462, 24
      %v564 = vpop.permute.xlu0 %563
      %565 = vrot.lane.b32.xlu0 %v474, 24
      %v566 = vpop.permute.xlu0 %565
      %567 = vrot.lane.b32.xlu0 %v486, 24
      %v568 = vpop.permute.xlu0 %567
      %569 = vrot.lane.b32.xlu0 %v498, 24
      %v570 = vpop.permute.xlu0 %569
      %571 = vrot.lane.b32.xlu0 %v510, 24
      %v572 = vpop.permute.xlu0 %571
      %573 = vrot.lane.b32.xlu0 %v522, 24
      %v574 = vpop.permute.xlu0 %573
      %575 = vrot.lane.b32.xlu0 %v534, 24
      %v576 = vpop.permute.xlu0 %575
      %577 = vrot.lane.b32.xlu0 %v546, 24
      %v578 = vpop.permute.xlu0 %577
      %vm579 = vcmask 1046528
      %v580 = vrot.slane %v290, 1
      %v581 = vrot.slane %v338, 1
      %v582 = vsel %vm579, %v580, %v581
      %v583 = vrot.slane %v291, 1
      %v584 = vrot.slane %v339, 1
      %v585 = vsel %vm579, %v583, %v584
      %v586 = vrot.slane %v292, 1
      %v587 = vrot.slane %v340, 1
      %v588 = vsel %vm579, %v586, %v587
      %v589 = vrot.slane %v293, 1
      %v590 = vrot.slane %v341, 1
      %v591 = vsel %vm579, %v589, %v590
      %v592 = vrot.slane %v294, 1
      %v593 = vrot.slane %v342, 1
      %v594 = vsel %vm579, %v592, %v593
      %v595 = vrot.slane %v295, 1
      %v596 = vrot.slane %v343, 1
      %v597 = vsel %vm579, %v595, %v596
      %v598 = vrot.slane %v296, 1
      %v599 = vrot.slane %v344, 1
      %v600 = vsel %vm579, %v598, %v599
      %v601 = vrot.slane %v297, 1
      %v602 = vrot.slane %v345, 1
      %v603 = vsel %vm579, %v601, %v602
      %v604 = vrot.slane %v298, 1
      %v605 = vrot.slane %v346, 1
      %v606 = vsel %vm579, %v604, %v605
      %v607 = vrot.slane %v299, 1
      %v608 = vrot.slane %v347, 1
      %v609 = vsel %vm579, %v607, %v608
      %v610 = vrot.slane %v300, 1
      %v611 = vrot.slane %v348, 1
      %v612 = vsel %vm579, %v610, %v611
      %v613 = vrot.slane %v301, 1
      %v614 = vrot.slane %v349, 1
      %v615 = vsel %vm579, %v613, %v614
      %v616 = vrot.slane %v302, 1
      %v617 = vrot.slane %v350, 1
      %v618 = vsel %vm579, %v616, %v617
      %v619 = vrot.slane %v303, 1
      %v620 = vrot.slane %v351, 1
      %v621 = vsel %vm579, %v619, %v620
      %v622 = vrot.slane %v304, 1
      %v623 = vrot.slane %v352, 1
      %v624 = vsel %vm579, %v622, %v623
      %v625 = vrot.slane %v305, 1
      %v626 = vrot.slane %v353, 1
      %v627 = vsel %vm579, %v625, %v626
      %628 = vrot.lane.b32.xlu0 %v582, 48
      %v629 = vpop.permute.xlu0 %628
      %630 = vrot.lane.b32.xlu0 %v585, 48
      %v631 = vpop.permute.xlu0 %630
      %632 = vrot.lane.b32.xlu0 %v588, 48
      %v633 = vpop.permute.xlu0 %632
      %634 = vrot.lane.b32.xlu0 %v591, 48
      %v635 = vpop.permute.xlu0 %634
      %636 = vrot.lane.b32.xlu0 %v594, 48
      %v637 = vpop.permute.xlu0 %636
      %638 = vrot.lane.b32.xlu0 %v597, 48
      %v639 = vpop.permute.xlu0 %638
      %640 = vrot.lane.b32.xlu0 %v600, 48
      %v641 = vpop.permute.xlu0 %640
      %642 = vrot.lane.b32.xlu0 %v603, 48
      %v643 = vpop.permute.xlu0 %642
      %644 = vrot.lane.b32.xlu0 %v606, 48
      %v645 = vpop.permute.xlu0 %644
      %646 = vrot.lane.b32.xlu0 %v609, 48
      %v647 = vpop.permute.xlu0 %646
      %648 = vrot.lane.b32.xlu0 %v612, 48
      %v649 = vpop.permute.xlu0 %648
      %650 = vrot.lane.b32.xlu0 %v615, 48
      %v651 = vpop.permute.xlu0 %650
      %652 = vrot.lane.b32.xlu0 %v618, 48
      %v653 = vpop.permute.xlu0 %652
      %654 = vrot.lane.b32.xlu0 %v621, 48
      %v655 = vpop.permute.xlu0 %654
      %656 = vrot.lane.b32.xlu0 %v624, 48
      %v657 = vpop.permute.xlu0 %656
      %658 = vrot.lane.b32.xlu0 %v627, 48
      %v659 = vpop.permute.xlu0 %658
      %v662 = vunpack.c.l.b16 %v220
      %v663 = vunpack.c.l.b16 %v221
      %v664 = vpack.c.b16 %v663, %v662
      %665 = vrot.lane.b32.xlu0 %v291, 72
      %v666 = vpop.permute.xlu0 %665
      %667 = vrot.lane.b32.xlu0 %v292, 72
      %v668 = vpop.permute.xlu0 %667
      %669 = vrot.lane.b32.xlu0 %v293, 72
      %v670 = vpop.permute.xlu0 %669
      %671 = vrot.lane.b32.xlu0 %v294, 72
      %v672 = vpop.permute.xlu0 %671
      %673 = vrot.lane.b32.xlu0 %v295, 72
      %v674 = vpop.permute.xlu0 %673
      %675 = vrot.lane.b32.xlu0 %v296, 72
      %v676 = vpop.permute.xlu0 %675
      %677 = vrot.lane.b32.xlu0 %v297, 72
      %v678 = vpop.permute.xlu0 %677
      %679 = vrot.lane.b32.xlu0 %v298, 72
      %v680 = vpop.permute.xlu0 %679
      %681 = vrot.lane.b32.xlu0 %v299, 72
      %v682 = vpop.permute.xlu0 %681
      %683 = vrot.lane.b32.xlu0 %v300, 72
      %v684 = vpop.permute.xlu0 %683
      %685 = vrot.lane.b32.xlu0 %v301, 72
      %v686 = vpop.permute.xlu0 %685
      %687 = vrot.lane.b32.xlu0 %v302, 72
      %v688 = vpop.permute.xlu0 %687
      %689 = vrot.lane.b32.xlu0 %v303, 72
      %v690 = vpop.permute.xlu0 %689
      %691 = vrot.lane.b32.xlu0 %v304, 72
      %v692 = vpop.permute.xlu0 %691
      %693 = vrot.lane.b32.xlu0 %v305, 72
      %v694 = vpop.permute.xlu0 %693
      %695 = vrot.lane.b32.xlu0 %v664, 72
      %v696 = vpop.permute.xlu0 %695
      %v698 = vunpack.c.l.b16 %v222
      %v699 = vpack.c.b16 %v698, %v698
      %v701 = vshrl.u32 %v664, 16
      %v703 = vshll.u32 %v664, 16
      %v705 = vrot.slane %v703, 1
      %v706 = vor.u32 %v701, %v705
      %v708 = vshll.u32 %v699, 16
      %v710 = vrot.slane %v708, 1
      %v711 = vsel %vm354, %v706, %v710
      %712 = vrot.lane.b32.xlu0 %v378, 96
      %v713 = vpop.permute.xlu0 %712
      %714 = vrot.lane.b32.xlu0 %v390, 96
      %v715 = vpop.permute.xlu0 %714
      %716 = vrot.lane.b32.xlu0 %v402, 96
      %v717 = vpop.permute.xlu0 %716
      %718 = vrot.lane.b32.xlu0 %v414, 96
      %v719 = vpop.permute.xlu0 %718
      %720 = vrot.lane.b32.xlu0 %v426, 96
      %v721 = vpop.permute.xlu0 %720
      %722 = vrot.lane.b32.xlu0 %v438, 96
      %v723 = vpop.permute.xlu0 %722
      %724 = vrot.lane.b32.xlu0 %v450, 96
      %v725 = vpop.permute.xlu0 %724
      %726 = vrot.lane.b32.xlu0 %v462, 96
      %v727 = vpop.permute.xlu0 %726
      %728 = vrot.lane.b32.xlu0 %v474, 96
      %v729 = vpop.permute.xlu0 %728
      %730 = vrot.lane.b32.xlu0 %v486, 96
      %v731 = vpop.permute.xlu0 %730
      %732 = vrot.lane.b32.xlu0 %v498, 96
      %v733 = vpop.permute.xlu0 %732
      %734 = vrot.lane.b32.xlu0 %v510, 96
      %v735 = vpop.permute.xlu0 %734
      %736 = vrot.lane.b32.xlu0 %v522, 96
      %v737 = vpop.permute.xlu0 %736
      %738 = vrot.lane.b32.xlu0 %v534, 96
      %v739 = vpop.permute.xlu0 %738
      %740 = vrot.lane.b32.xlu0 %v546, 96
      %v741 = vpop.permute.xlu0 %740
      %742 = vrot.lane.b32.xlu0 %v711, 96
      %v743 = vpop.permute.xlu0 %742
      %v744 = vrot.slane %v664, 1
      %v745 = vrot.slane %v699, 1
      %v746 = vsel %vm579, %v744, %v745
      %747 = vrot.lane.b32.xlu0 %v585, 120
      %v748 = vpop.permute.xlu0 %747
      %749 = vrot.lane.b32.xlu0 %v588, 120
      %v750 = vpop.permute.xlu0 %749
      %751 = vrot.lane.b32.xlu0 %v591, 120
      %v752 = vpop.permute.xlu0 %751
      %753 = vrot.lane.b32.xlu0 %v594, 120
      %v754 = vpop.permute.xlu0 %753
      %755 = vrot.lane.b32.xlu0 %v597, 120
      %v756 = vpop.permute.xlu0 %755
      %757 = vrot.lane.b32.xlu0 %v600, 120
      %v758 = vpop.permute.xlu0 %757
      %759 = vrot.lane.b32.xlu0 %v603, 120
      %v760 = vpop.permute.xlu0 %759
      %761 = vrot.lane.b32.xlu0 %v606, 120
      %v762 = vpop.permute.xlu0 %761
      %763 = vrot.lane.b32.xlu0 %v609, 120
      %v764 = vpop.permute.xlu0 %763
      %765 = vrot.lane.b32.xlu0 %v612, 120
      %v766 = vpop.permute.xlu0 %765
      %767 = vrot.lane.b32.xlu0 %v615, 120
      %v768 = vpop.permute.xlu0 %767
      %769 = vrot.lane.b32.xlu0 %v618, 120
      %v770 = vpop.permute.xlu0 %769
      %771 = vrot.lane.b32.xlu0 %v621, 120
      %v772 = vpop.permute.xlu0 %771
      %773 = vrot.lane.b32.xlu0 %v624, 120
      %v774 = vpop.permute.xlu0 %773
      %775 = vrot.lane.b32.xlu0 %v627, 120
      %v776 = vpop.permute.xlu0 %775
      %777 = vrot.lane.b32.xlu0 %v746, 120
      %v778 = vpop.permute.xlu0 %777
      %v781 = vunpack.c.l.b16 %v223
      %v782 = vunpack.c.l.b16 %v224
      %v783 = vpack.c.b16 %v782, %v781
      %784 = vrot.lane.b32.xlu0 %v292, 16
      %v785 = vpop.permute.xlu0 %784
      %786 = vrot.lane.b32.xlu0 %v293, 16
      %v787 = vpop.permute.xlu0 %786
      %788 = vrot.lane.b32.xlu0 %v294, 16
      %v789 = vpop.permute.xlu0 %788
      %790 = vrot.lane.b32.xlu0 %v295, 16
      %v791 = vpop.permute.xlu0 %790
      %792 = vrot.lane.b32.xlu0 %v296, 16
      %v793 = vpop.permute.xlu0 %792
      %794 = vrot.lane.b32.xlu0 %v297, 16
      %v795 = vpop.permute.xlu0 %794
      %796 = vrot.lane.b32.xlu0 %v298, 16
      %v797 = vpop.permute.xlu0 %796
      %798 = vrot.lane.b32.xlu0 %v299, 16
      %v799 = vpop.permute.xlu0 %798
      %800 = vrot.lane.b32.xlu0 %v300, 16
      %v801 = vpop.permute.xlu0 %800
      %802 = vrot.lane.b32.xlu0 %v301, 16
      %v803 = vpop.permute.xlu0 %802
      %804 = vrot.lane.b32.xlu0 %v302, 16
      %v805 = vpop.permute.xlu0 %804
      %806 = vrot.lane.b32.xlu0 %v303, 16
      %v807 = vpop.permute.xlu0 %806
      %808 = vrot.lane.b32.xlu0 %v304, 16
      %v809 = vpop.permute.xlu0 %808
      %810 = vrot.lane.b32.xlu0 %v305, 16
      %v811 = vpop.permute.xlu0 %810
      %812 = vrot.lane.b32.xlu0 %v664, 16
      %v813 = vpop.permute.xlu0 %812
      %814 = vrot.lane.b32.xlu0 %v783, 16
      %v815 = vpop.permute.xlu0 %814
      %v817 = vunpack.c.l.b16 %v225
      %v818 = vpack.c.b16 %v817, %v817
      %v820 = vshrl.u32 %v783, 16
      %v822 = vshll.u32 %v783, 16
      %v824 = vrot.slane %v822, 1
      %v825 = vor.u32 %v820, %v824
      %v827 = vshll.u32 %v818, 16
      %v829 = vrot.slane %v827, 1
      %v830 = vsel %vm354, %v825, %v829
      %831 = vrot.lane.b32.xlu0 %v390, 40
      %v832 = vpop.permute.xlu0 %831
      %833 = vrot.lane.b32.xlu0 %v402, 40
      %v834 = vpop.permute.xlu0 %833
      %835 = vrot.lane.b32.xlu0 %v414, 40
      %v836 = vpop.permute.xlu0 %835
      %837 = vrot.lane.b32.xlu0 %v426, 40
      %v838 = vpop.permute.xlu0 %837
      %839 = vrot.lane.b32.xlu0 %v438, 40
      %v840 = vpop.permute.xlu0 %839
      %841 = vrot.lane.b32.xlu0 %v450, 40
      %v842 = vpop.permute.xlu0 %841
      %843 = vrot.lane.b32.xlu0 %v462, 40
      %v844 = vpop.permute.xlu0 %843
      %845 = vrot.lane.b32.xlu0 %v474, 40
      %v846 = vpop.permute.xlu0 %845
      %847 = vrot.lane.b32.xlu0 %v486, 40
      %v848 = vpop.permute.xlu0 %847
      %849 = vrot.lane.b32.xlu0 %v498, 40
      %v850 = vpop.permute.xlu0 %849
      %851 = vrot.lane.b32.xlu0 %v510, 40
      %v852 = vpop.permute.xlu0 %851
      %853 = vrot.lane.b32.xlu0 %v522, 40
      %v854 = vpop.permute.xlu0 %853
      %855 = vrot.lane.b32.xlu0 %v534, 40
      %v856 = vpop.permute.xlu0 %855
      %857 = vrot.lane.b32.xlu0 %v546, 40
      %v858 = vpop.permute.xlu0 %857
      %859 = vrot.lane.b32.xlu0 %v711, 40
      %v860 = vpop.permute.xlu0 %859
      %861 = vrot.lane.b32.xlu0 %v830, 40
      %v862 = vpop.permute.xlu0 %861
      %v863 = vrot.slane %v783, 1
      %v864 = vrot.slane %v818, 1
      %v865 = vsel %vm579, %v863, %v864
      %866 = vrot.lane.b32.xlu0 %v588, 64
      %v867 = vpop.permute.xlu0 %866
      %868 = vrot.lane.b32.xlu0 %v591, 64
      %v869 = vpop.permute.xlu0 %868
      %870 = vrot.lane.b32.xlu0 %v594, 64
      %v871 = vpop.permute.xlu0 %870
      %872 = vrot.lane.b32.xlu0 %v597, 64
      %v873 = vpop.permute.xlu0 %872
      %874 = vrot.lane.b32.xlu0 %v600, 64
      %v875 = vpop.permute.xlu0 %874
      %876 = vrot.lane.b32.xlu0 %v603, 64
      %v877 = vpop.permute.xlu0 %876
      %878 = vrot.lane.b32.xlu0 %v606, 64
      %v879 = vpop.permute.xlu0 %878
      %880 = vrot.lane.b32.xlu0 %v609, 64
      %v881 = vpop.permute.xlu0 %880
      %882 = vrot.lane.b32.xlu0 %v612, 64
      %v883 = vpop.permute.xlu0 %882
      %884 = vrot.lane.b32.xlu0 %v615, 64
      %v885 = vpop.permute.xlu0 %884
      %886 = vrot.lane.b32.xlu0 %v618, 64
      %v887 = vpop.permute.xlu0 %886
      %888 = vrot.lane.b32.xlu0 %v621, 64
      %v889 = vpop.permute.xlu0 %888
      %890 = vrot.lane.b32.xlu0 %v624, 64
      %v891 = vpop.permute.xlu0 %890
      %892 = vrot.lane.b32.xlu0 %v627, 64
      %v893 = vpop.permute.xlu0 %892
      %894 = vrot.lane.b32.xlu0 %v746, 64
      %v895 = vpop.permute.xlu0 %894
      %896 = vrot.lane.b32.xlu0 %v865, 64
      %v897 = vpop.permute.xlu0 %896
      %vm898 = vcmask 195584
      %v900 = vsel %vm898, %v290, %v548
      %v902 = vsel %vm898, %v291, %v550
      %v904 = vsel %vm898, %v292, %v552
      %v906 = vsel %vm898, %v293, %v554
      %v908 = vsel %vm898, %v294, %v556
      %v910 = vsel %vm898, %v295, %v558
      %v912 = vsel %vm898, %v296, %v560
      %v914 = vsel %vm898, %v297, %v562
      %v916 = vsel %vm898, %v298, %v564
      %v918 = vsel %vm898, %v299, %v566
      %v920 = vsel %vm898, %v300, %v568
      %v922 = vsel %vm898, %v301, %v570
      %v924 = vsel %vm898, %v302, %v572
      %v926 = vsel %vm898, %v303, %v574
      %v928 = vsel %vm898, %v304, %v576
      %v930 = vsel %vm898, %v305, %v578
      %vm931 = vcmask 392192
      %v933 = vsel %vm931, %v900, %v629
      %v935 = vsel %vm931, %v902, %v631
      %v937 = vsel %vm931, %v904, %v633
      %v939 = vsel %vm931, %v906, %v635
      %v941 = vsel %vm931, %v908, %v637
      %v943 = vsel %vm931, %v910, %v639
      %v945 = vsel %vm931, %v912, %v641
      %v947 = vsel %vm931, %v914, %v643
      %v949 = vsel %vm931, %v916, %v645
      %v951 = vsel %vm931, %v918, %v647
      %v953 = vsel %vm931, %v920, %v649
      %v955 = vsel %vm931, %v922, %v651
      %v957 = vsel %vm931, %v924, %v653
      %v959 = vsel %vm931, %v926, %v655
      %v961 = vsel %vm931, %v928, %v657
      %v963 = vsel %vm931, %v930, %v659
      %vm964 = vcmask 588800
      %v966 = vsel %vm964, %v933, %v666
      %v968 = vsel %vm964, %v935, %v668
      %v970 = vsel %vm964, %v937, %v670
      %v972 = vsel %vm964, %v939, %v672
      %v974 = vsel %vm964, %v941, %v674
      %v976 = vsel %vm964, %v943, %v676
      %v978 = vsel %vm964, %v945, %v678
      %v980 = vsel %vm964, %v947, %v680
      %v982 = vsel %vm964, %v949, %v682
      %v984 = vsel %vm964, %v951, %v684
      %v986 = vsel %vm964, %v953, %v686
      %v988 = vsel %vm964, %v955, %v688
      %v990 = vsel %vm964, %v957, %v690
      %v992 = vsel %vm964, %v959, %v692
      %v994 = vsel %vm964, %v961, %v694
      %v996 = vsel %vm964, %v963, %v696
      %vm997 = vcmask 785408
      %v999 = vsel %vm997, %v966, %v713
      %v1001 = vsel %vm997, %v968, %v715
      %v1003 = vsel %vm997, %v970, %v717
      %v1005 = vsel %vm997, %v972, %v719
      %v1007 = vsel %vm997, %v974, %v721
      %v1009 = vsel %vm997, %v976, %v723
      %v1011 = vsel %vm997, %v978, %v725
      %v1013 = vsel %vm997, %v980, %v727
      %v1015 = vsel %vm997, %v982, %v729
      %v1017 = vsel %vm997, %v984, %v731
      %v1019 = vsel %vm997, %v986, %v733
      %v1021 = vsel %vm997, %v988, %v735
      %v1023 = vsel %vm997, %v990, %v737
      %v1025 = vsel %vm997, %v992, %v739
      %v1027 = vsel %vm997, %v994, %v741
      %v1029 = vsel %vm997, %v996, %v743
      %vm1030 = vcmask 982016
      %v1032 = vsel %vm1030, %v999, %v748
      %v1035 = vsel %vm1030, %v1001, %v750
      %v1038 = vsel %vm1030, %v1003, %v752
      %v1041 = vsel %vm1030, %v1005, %v754
      %v1044 = vsel %vm1030, %v1007, %v756
      %v1047 = vsel %vm1030, %v1009, %v758
      %v1050 = vsel %vm1030, %v1011, %v760
      %v1053 = vsel %vm1030, %v1013, %v762
      %v1056 = vsel %vm1030, %v1015, %v764
      %v1059 = vsel %vm1030, %v1017, %v766
      %v1062 = vsel %vm1030, %v1019, %v768
      %v1065 = vsel %vm1030, %v1021, %v770
      %v1068 = vsel %vm1030, %v1023, %v772
      %v1071 = vsel %vm1030, %v1025, %v774
      %v1074 = vsel %vm1030, %v1027, %v776
      %v1077 = vsel %vm1030, %v1029, %v778
      %vm1079 = vcmask 130048
      %v1081 = vsel %vm1079, %v748, %v785
      %v1083 = vsel %vm1079, %v750, %v787
      %v1085 = vsel %vm1079, %v752, %v789
      %v1087 = vsel %vm1079, %v754, %v791
      %v1089 = vsel %vm1079, %v756, %v793
      %v1091 = vsel %vm1079, %v758, %v795
      %v1093 = vsel %vm1079, %v760, %v797
      %v1095 = vsel %vm1079, %v762, %v799
      %v1097 = vsel %vm1079, %v764, %v801
      %v1099 = vsel %vm1079, %v766, %v803
      %v1101 = vsel %vm1079, %v768, %v805
      %v1103 = vsel %vm1079, %v770, %v807
      %v1105 = vsel %vm1079, %v772, %v809
      %v1107 = vsel %vm1079, %v774, %v811
      %v1109 = vsel %vm1079, %v776, %v813
      %v1111 = vsel %vm1079, %v778, %v815
      %vm1112 = vcmask 326656
      %v1114 = vsel %vm1112, %v1081, %v832
      %v1116 = vsel %vm1112, %v1083, %v834
      %v1118 = vsel %vm1112, %v1085, %v836
      %v1120 = vsel %vm1112, %v1087, %v838
      %v1122 = vsel %vm1112, %v1089, %v840
      %v1124 = vsel %vm1112, %v1091, %v842
      %v1126 = vsel %vm1112, %v1093, %v844
      %v1128 = vsel %vm1112, %v1095, %v846
      %v1130 = vsel %vm1112, %v1097, %v848
      %v1132 = vsel %vm1112, %v1099, %v850
      %v1134 = vsel %vm1112, %v1101, %v852
      %v1136 = vsel %vm1112, %v1103, %v854
      %v1138 = vsel %vm1112, %v1105, %v856
      %v1140 = vsel %vm1112, %v1107, %v858
      %v1142 = vsel %vm1112, %v1109, %v860
      %v1144 = vsel %vm1112, %v1111, %v862
      %vm1145 = vcmask 523264
      %v1147 = vsel %vm1145, %v1114, %v867
      %v1149 = vsel %vm1145, %v1116, %v869
      %v1151 = vsel %vm1145, %v1118, %v871
      %v1153 = vsel %vm1145, %v1120, %v873
      %v1155 = vsel %vm1145, %v1122, %v875
      %v1157 = vsel %vm1145, %v1124, %v877
      %v1159 = vsel %vm1145, %v1126, %v879
      %v1161 = vsel %vm1145, %v1128, %v881
      %v1163 = vsel %vm1145, %v1130, %v883
      %v1165 = vsel %vm1145, %v1132, %v885
      %v1167 = vsel %vm1145, %v1134, %v887
      %v1169 = vsel %vm1145, %v1136, %v889
      %v1171 = vsel %vm1145, %v1138, %v891
      %v1173 = vsel %vm1145, %v1140, %v893
      %v1175 = vsel %vm1145, %v1142, %v895
      %v1177 = vsel %vm1145, %v1144, %v897
      %v1178 = vld [vmem:[%s1] sm:$0xf]
      %v1179 = vld [vmem:[%s1 + $0x4] sm:$0xf]
      %v1180 = vld [vmem:[%s1 + $0x8] sm:$0xf]
      %v1181 = vld [vmem:[%s1 + $0xc] sm:$0xf]
      %v1182 = vld [vmem:[%s1 + $0x10] sm:$0xf]
      %v1183 = vld [vmem:[%s1 + $0x14] sm:$0xf]
      %v1184 = vld [vmem:[%s1 + $0x18] sm:$0xf]
      %v1185 = vld [vmem:[%s1 + $0x1c] sm:$0xf]
      %v1186 = vld [vmem:[%s1 + $0x20] sm:$0xf]
      %v1187 = vld [vmem:[%s1 + $0x24] sm:$0xf]
      %v1188 = vld [vmem:[%s1 + $0x28] sm:$0xf]
      %v1189 = vld [vmem:[%s1 + $0x2c] sm:$0xf]
      %v1190 = vld [vmem:[%s1 + $0x30] sm:$0xf]
      %v1191 = vld [vmem:[%s1 + $0x34] sm:$0xf]
      %v1192 = vld [vmem:[%s1 + $0x38] sm:$0xf]
      %v1193 = vld [vmem:[%s1 + $0x3c] sm:$0xf]
      %v1194 = vld [vmem:[%s1 + $0x40] sm:$0xf]
      %v1195 = vld [vmem:[%s1 + $0x44] sm:$0xf]
      %v1196 = vld [vmem:[%s1 + $0x48] sm:$0xf]
      %v1197 = vld [vmem:[%s1 + $0x4c] sm:$0xf]
      %v1198 = vld [vmem:[%s1 + $0x50] sm:$0xf]
      %v1199 = vld [vmem:[%s1 + $0x54] sm:$0xf]
      %v1200 = vld [vmem:[%s1 + $0x58] sm:$0xf]
      %v1201 = vld [vmem:[%s1 + $0x5c] sm:$0xf]
      %v1202 = vld [vmem:[%s1 + $0x60] sm:$0xf]
      %v1203 = vld [vmem:[%s1 + $0x64] sm:$0xf]
      %v1204 = vld [vmem:[%s1 + $0x68] sm:$0xf]
      %v1205 = vld [vmem:[%s2] sm:$0x1]
      %v1207 = vlaneseq
      %v1208 = vshrl.u32 %v1207, 7
      %v1209 = vsub.s32 0, %v1208
      %v1210 = vrot.slane %v1205, %v1209
      %v1239 = vunpack.c.l.b16 %v1178
      %v1240 = vunpack.c.l.b16 %v1179
      %v1241 = vunpack.c.l.b16 %v1180
      %v1242 = vunpack.c.l.b16 %v1181
      %v1243 = vunpack.c.l.b16 %v1182
      %v1244 = vunpack.c.l.b16 %v1183
      %v1245 = vunpack.c.l.b16 %v1184
      %v1246 = vunpack.c.l.b16 %v1185
      %v1247 = vunpack.c.l.b16 %v1186
      %v1248 = vunpack.c.l.b16 %v1187
      %v1249 = vunpack.c.l.b16 %v1188
      %v1250 = vunpack.c.l.b16 %v1189
      %v1251 = vunpack.c.l.b16 %v1190
      %v1252 = vunpack.c.l.b16 %v1191
      %v1253 = vunpack.c.l.b16 %v1192
      %v1254 = vunpack.c.l.b16 %v1193
      %v1255 = vunpack.c.l.b16 %v1194
      %v1256 = vunpack.c.l.b16 %v1195
      %v1257 = vunpack.c.l.b16 %v1196
      %v1258 = vunpack.c.l.b16 %v1197
      %v1259 = vunpack.c.l.b16 %v1198
      %v1260 = vunpack.c.l.b16 %v1199
      %v1261 = vunpack.c.l.b16 %v1200
      %v1262 = vunpack.c.l.b16 %v1201
      %v1263 = vunpack.c.l.b16 %v1202
      %v1264 = vunpack.c.l.b16 %v1203
      %v1265 = vunpack.c.l.b16 %v1204
      %v1266 = vpack.c.b16 %v1240, %v1239
      %v1267 = vpack.c.b16 %v1242, %v1241
      %v1268 = vpack.c.b16 %v1244, %v1243
      %v1269 = vpack.c.b16 %v1246, %v1245
      %v1270 = vpack.c.b16 %v1248, %v1247
      %v1271 = vpack.c.b16 %v1250, %v1249
      %v1272 = vpack.c.b16 %v1252, %v1251
      %v1273 = vpack.c.b16 %v1254, %v1253
      %v1274 = vpack.c.b16 %v1256, %v1255
      %v1275 = vpack.c.b16 %v1258, %v1257
      %v1276 = vpack.c.b16 %v1260, %v1259
      %v1277 = vpack.c.b16 %v1262, %v1261
      %v1278 = vpack.c.b16 %v1264, %v1263
      %v1279 = vpack.c.b16 %v1265, %v1265
      %vm1293 = vcmask 719872
      %v1294 = vsel %vm1293, %v1147, 0
      %v1296 = vsel %vm1293, %v1149, 0
      %v1298 = vsel %vm1293, %v1151, 0
      %v1300 = vsel %vm1293, %v1153, 0
      %v1302 = vsel %vm1293, %v1155, 0
      %v1304 = vsel %vm1293, %v1157, 0
      %v1306 = vsel %vm1293, %v1159, 0
      %v1308 = vsel %vm1293, %v1161, 0
      %v1310 = vsel %vm1293, %v1163, 0
      %v1312 = vsel %vm1293, %v1165, 0
      %v1314 = vsel %vm1293, %v1167, 0
      %v1316 = vsel %vm1293, %v1169, 0
      %v1318 = vsel %vm1293, %v1171, 0
      %v1320 = vsel %vm1293, %v1173, 0
      %v1322 = vsel %vm1293, %v1175, 0
      %v1324 = vsel %vm1293, %v1177, 0
      %vm1326 = vcmask 1043456
      %v1328 = vsel %vm1326, %v1279, 0
      %1330 = vmatprep.subr.bf16.mxu0 0
      %1331 = vmatpush1.bf16.msra.mxu0 %v1266
      %1332 = vmatprep.subr.bf16.mxu0 0
      %1333 = vmatpush1.bf16.msra.mxu0 %v1267
      %1334 = vmatprep.subr.bf16.mxu0 0
      %1335 = vmatpush1.bf16.msra.mxu0 %v1268
      %1336 = vmatprep.subr.bf16.mxu0 0
      %1337 = vmatpush1.bf16.msra.mxu0 %v1269
      %1338 = vmatprep.subr.bf16.mxu0 0
      %1339 = vmatpush1.bf16.msra.mxu0 %v1270
      %1340 = vmatprep.subr.bf16.mxu0 0
      %1341 = vmatpush1.bf16.msra.mxu0 %v1271
      %1342 = vmatprep.subr.bf16.mxu0 0
      %1343 = vmatpush1.bf16.msra.mxu0 %v1272
      %1344 = vmatprep.subr.bf16.mxu0 0
      %1345 = vmatpush1.bf16.msra.mxu0 %v1273
      %1346 = vmatprep.subr.bf16.mxu0 0
      %1347 = vmatpush1.bf16.msra.mxu0 %v1274
      %1348 = vmatprep.subr.bf16.mxu0 0
      %1349 = vmatpush1.bf16.msra.mxu0 %v1275
      %1350 = vmatprep.subr.bf16.mxu0 0
      %1351 = vmatpush1.bf16.msra.mxu0 %v1276
      %1352 = vmatprep.subr.bf16.mxu0 0
      %1353 = vmatpush1.bf16.msra.mxu0 %v1277
      %1354 = vmatprep.subr.bf16.mxu0 0
      %1355 = vmatpush1.bf16.msra.mxu0 %v1278
      %1356 = vmatprep.subr.bf16.mxu0 0
      %1357 = vmatpush1.bf16.msra.mxu0 %v1328
      %1358 = vmatprep.subr.bf16.mxu0 0
      %1359 = vmatpush1.bf16.msra.mxu0 0
      %1360 = vmatprep.subr.bf16.mxu0 0
      %1361 = vmatpush1.bf16.msra.mxu0 0
      %1362 = vmatprep.mubr.bf16.mxu0 %v1294
      %1363 = vmatmul.mubr.bf16.gmra.mrb[0].mxu0 %v1032
      %v1364 = vpop.f32.mrb[0].mxu0
      %v1365 = vadd.f32 %v1210, %v1364
      %v1366 = vpop.f32.mrb[0].mxu0
      %v1367 = vpop.f32.mrb[0].mxu0
      %v1368 = vadd.f32 %v1210, %v1367
      %v1369 = vpop.f32.mrb[0].mxu0
      %1370 = vmatprep.mubr.bf16.mxu0 %v1296
      %1371 = vmatmul.mubr.bf16.gmra.mrb[0].mxu0 %v1035
      %v1372 = vpop.f32.mrb[0].mxu0
      %v1373 = vadd.f32 %v1210, %v1372
      %v1374 = vpop.f32.mrb[0].mxu0
      %v1375 = vpop.f32.mrb[0].mxu0
      %v1376 = vadd.f32 %v1210, %v1375
      %v1377 = vpop.f32.mrb[0].mxu0
      %1378 = vmatprep.mubr.bf16.mxu0 %v1298
      %1379 = vmatmul.mubr.bf16.gmra.mrb[0].mxu0 %v1038
      %v1380 = vpop.f32.mrb[0].mxu0
      %v1381 = vadd.f32 %v1210, %v1380
      %v1382 = vpop.f32.mrb[0].mxu0
      %v1383 = vpop.f32.mrb[0].mxu0
      %v1384 = vadd.f32 %v1210, %v1383
      %v1385 = vpop.f32.mrb[0].mxu0
      %1386 = vmatprep.mubr.bf16.mxu0 %v1300
      %1387 = vmatmul.mubr.bf16.gmra.mrb[0].mxu0 %v1041
      %v1388 = vpop.f32.mrb[0].mxu0
      %v1389 = vadd.f32 %v1210, %v1388
      %v1390 = vpop.f32.mrb[0].mxu0
      %v1391 = vpop.f32.mrb[0].mxu0
      %v1392 = vadd.f32 %v1210, %v1391
      %v1393 = vpop.f32.mrb[0].mxu0
      %1394 = vmatprep.mubr.bf16.mxu0 %v1302
      %1395 = vmatmul.mubr.bf16.gmra.mrb[0].mxu0 %v1044
      %v1396 = vpop.f32.mrb[0].mxu0
      %v1397 = vadd.f32 %v1210, %v1396
      %v1398 = vpop.f32.mrb[0].mxu0
      %v1399 = vpop.f32.mrb[0].mxu0
      %v1400 = vadd.f32 %v1210, %v1399
      %v1401 = vpop.f32.mrb[0].mxu0
      %1402 = vmatprep.mubr.bf16.mxu0 %v1304
      %1403 = vmatmul.mubr.bf16.gmra.mrb[0].mxu0 %v1047
      %v1404 = vpop.f32.mrb[0].mxu0
      %v1405 = vadd.f32 %v1210, %v1404
      %v1406 = vpop.f32.mrb[0].mxu0
      %v1407 = vpop.f32.mrb[0].mxu0
      %v1408 = vadd.f32 %v1210, %v1407
      %v1409 = vpop.f32.mrb[0].mxu0
      %1410 = vmatprep.mubr.bf16.mxu0 %v1306
      %1411 = vmatmul.mubr.bf16.gmra.mrb[0].mxu0 %v1050
      %v1412 = vpop.f32.mrb[0].mxu0
      %v1413 = vadd.f32 %v1210, %v1412
      %v1414 = vpop.f32.mrb[0].mxu0
      %v1415 = vpop.f32.mrb[0].mxu0
      %v1416 = vadd.f32 %v1210, %v1415
      %v1417 = vpop.f32.mrb[0].mxu0
      %1418 = vmatprep.mubr.bf16.mxu0 %v1308
      %1419 = vmatmul.mubr.bf16.gmra.mrb[0].mxu0 %v1053
      %v1420 = vpop.f32.mrb[0].mxu0
      %v1421 = vadd.f32 %v1210, %v1420
      %v1422 = vpop.f32.mrb[0].mxu0
      %v1423 = vpop.f32.mrb[0].mxu0
      %v1424 = vadd.f32 %v1210, %v1423
      %v1425 = vpop.f32.mrb[0].mxu0
      %1426 = vmatprep.mubr.bf16.mxu0 %v1310
      %1427 = vmatmul.mubr.bf16.gmra.mrb[0].mxu0 %v1056
      %v1428 = vpop.f32.mrb[0].mxu0
      %v1429 = vadd.f32 %v1210, %v1428
      %v1430 = vpop.f32.mrb[0].mxu0
      %v1431 = vpop.f32.mrb[0].mxu0
      %v1432 = vadd.f32 %v1210, %v1431
      %v1433 = vpop.f32.mrb[0].mxu0
      %1434 = vmatprep.mubr.bf16.mxu0 %v1312
      %1435 = vmatmul.mubr.bf16.gmra.mrb[0].mxu0 %v1059
      %v1436 = vpop.f32.mrb[0].mxu0
      %v1437 = vadd.f32 %v1210, %v1436
      %v1438 = vpop.f32.mrb[0].mxu0
      %v1439 = vpop.f32.mrb[0].mxu0
      %v1440 = vadd.f32 %v1210, %v1439
      %v1441 = vpop.f32.mrb[0].mxu0
      %1442 = vmatprep.mubr.bf16.mxu0 %v1314
      %1443 = vmatmul.mubr.bf16.gmra.mrb[0].mxu0 %v1062
      %v1444 = vpop.f32.mrb[0].mxu0
      %v1445 = vadd.f32 %v1210, %v1444
      %v1446 = vpop.f32.mrb[0].mxu0
      %v1447 = vpop.f32.mrb[0].mxu0
      %v1448 = vadd.f32 %v1210, %v1447
      %v1449 = vpop.f32.mrb[0].mxu0
      %1450 = vmatprep.mubr.bf16.mxu0 %v1316
      %1451 = vmatmul.mubr.bf16.gmra.mrb[0].mxu0 %v1065
      %v1452 = vpop.f32.mrb[0].mxu0
      %v1453 = vadd.f32 %v1210, %v1452
      %v1454 = vpop.f32.mrb[0].mxu0
      %v1455 = vpop.f32.mrb[0].mxu0
      %v1456 = vadd.f32 %v1210, %v1455
      %v1457 = vpop.f32.mrb[0].mxu0
      %1458 = vmatprep.mubr.bf16.mxu0 %v1318
      %1459 = vmatmul.mubr.bf16.gmra.mrb[0].mxu0 %v1068
      %v1460 = vpop.f32.mrb[0].mxu0
      %v1461 = vadd.f32 %v1210, %v1460
      %v1462 = vpop.f32.mrb[0].mxu0
      %v1463 = vpop.f32.mrb[0].mxu0
      %v1464 = vadd.f32 %v1210, %v1463
      %v1465 = vpop.f32.mrb[0].mxu0
      %1466 = vmatprep.mubr.bf16.mxu0 %v1320
      %1467 = vmatmul.mubr.bf16.gmra.mrb[0].mxu0 %v1071
      %v1468 = vpop.f32.mrb[0].mxu0
      %v1469 = vadd.f32 %v1210, %v1468
      %v1470 = vpop.f32.mrb[0].mxu0
      %v1471 = vpop.f32.mrb[0].mxu0
      %v1472 = vadd.f32 %v1210, %v1471
      %v1473 = vpop.f32.mrb[0].mxu0
      %1474 = vmatprep.mubr.bf16.mxu0 %v1322
      %1475 = vmatmul.mubr.bf16.gmra.mrb[0].mxu0 %v1074
      %v1476 = vpop.f32.mrb[0].mxu0
      %v1477 = vadd.f32 %v1210, %v1476
      %v1478 = vpop.f32.mrb[0].mxu0
      %v1479 = vpop.f32.mrb[0].mxu0
      %v1480 = vadd.f32 %v1210, %v1479
      %v1481 = vpop.f32.mrb[0].mxu0
      %1482 = vmatprep.mubr.bf16.mxu0 %v1324
      %1483 = vmatmul.mubr.bf16.gmra.mrb[0].mxu0 %v1077
      %v1484 = vpop.f32.mrb[0].mxu0
      %v1485 = vadd.f32 %v1210, %v1484
      %v1486 = vpop.f32.mrb[0].mxu0
      %v1487 = vpop.f32.mrb[0].mxu0
      %v1488 = vadd.f32 %v1210, %v1487
      %v1489 = vpop.f32.mrb[0].mxu0
      %1490 = vdwg.mxu0
      %v1491 = vmax.f32 %v1365, 0.0
      %v1492 = vmax.f32 %v1368, 0.0
      %v1493 = vmax.f32 %v1373, 0.0
      %v1494 = vmax.f32 %v1376, 0.0
      %v1495 = vmax.f32 %v1381, 0.0
      %v1496 = vmax.f32 %v1384, 0.0
      %v1497 = vmax.f32 %v1389, 0.0
      %v1498 = vmax.f32 %v1392, 0.0
      %v1499 = vmax.f32 %v1397, 0.0
      %v1500 = vmax.f32 %v1400, 0.0
      %v1501 = vmax.f32 %v1405, 0.0
      %v1502 = vmax.f32 %v1408, 0.0
      %v1503 = vmax.f32 %v1413, 0.0
      %v1504 = vmax.f32 %v1416, 0.0
      %v1505 = vmax.f32 %v1421, 0.0
      %v1506 = vmax.f32 %v1424, 0.0
      %v1507 = vmax.f32 %v1429, 0.0
      %v1508 = vmax.f32 %v1432, 0.0
      %v1509 = vmax.f32 %v1437, 0.0
      %v1510 = vmax.f32 %v1440, 0.0
      %v1511 = vmax.f32 %v1445, 0.0
      %v1512 = vmax.f32 %v1448, 0.0
      %v1513 = vmax.f32 %v1453, 0.0
      %v1514 = vmax.f32 %v1456, 0.0
      %v1515 = vmax.f32 %v1461, 0.0
      %v1516 = vmax.f32 %v1464, 0.0
      %v1517 = vmax.f32 %v1469, 0.0
      %v1518 = vmax.f32 %v1472, 0.0
      %v1519 = vmax.f32 %v1477, 0.0
      %v1520 = vmax.f32 %v1480, 0.0
      %v1521 = vmax.f32 %v1485, 0.0
      %v1522 = vmax.f32 %v1488, 0.0
      %v1523 = vpack.c.bf16 %v1492, %v1491
      %v1524 = vpack.c.bf16 %v1494, %v1493
      %v1525 = vpack.c.bf16 %v1496, %v1495
      %v1526 = vpack.c.bf16 %v1498, %v1497
      %v1527 = vpack.c.bf16 %v1500, %v1499
      %v1528 = vpack.c.bf16 %v1502, %v1501
      %v1529 = vpack.c.bf16 %v1504, %v1503
      %v1530 = vpack.c.bf16 %v1506, %v1505
      %v1531 = vpack.c.bf16 %v1508, %v1507
      %v1532 = vpack.c.bf16 %v1510, %v1509
      %v1533 = vpack.c.bf16 %v1512, %v1511
      %v1534 = vpack.c.bf16 %v1514, %v1513
      %v1535 = vpack.c.bf16 %v1516, %v1515
      %v1536 = vpack.c.bf16 %v1518, %v1517
      %v1537 = vpack.c.bf16 %v1520, %v1519
      %v1538 = vpack.c.bf16 %v1522, %v1521
      %v1555 = vunpack.c.l.b16 %v1523
      %v1556 = vunpack.c.h.b16 %v1523
      %v1557 = vunpack.c.l.b16 %v1524
      %v1558 = vunpack.c.h.b16 %v1524
      %v1559 = vunpack.c.l.b16 %v1525
      %v1560 = vunpack.c.h.b16 %v1525
      %v1561 = vunpack.c.l.b16 %v1526
      %v1562 = vunpack.c.h.b16 %v1526
      %v1563 = vunpack.c.l.b16 %v1527
      %v1564 = vunpack.c.h.b16 %v1527
      %v1565 = vunpack.c.l.b16 %v1528
      %v1566 = vunpack.c.h.b16 %v1528
      %v1567 = vunpack.c.l.b16 %v1529
      %v1568 = vunpack.c.h.b16 %v1529
      %v1569 = vunpack.c.l.b16 %v1530
      %v1570 = vunpack.c.h.b16 %v1530
      %v1571 = vunpack.c.l.b16 %v1531
      %v1572 = vunpack.c.h.b16 %v1531
      %v1573 = vunpack.c.l.b16 %v1532
      %v1574 = vunpack.c.h.b16 %v1532
      %v1575 = vunpack.c.l.b16 %v1533
      %v1576 = vunpack.c.h.b16 %v1533
      %v1577 = vunpack.c.l.b16 %v1534
      %v1578 = vunpack.c.h.b16 %v1534
      %v1579 = vunpack.c.l.b16 %v1535
      %v1580 = vunpack.c.h.b16 %v1535
      %v1581 = vunpack.c.l.b16 %v1536
      %v1582 = vunpack.c.h.b16 %v1536
      %v1583 = vunpack.c.l.b16 %v1537
      %v1584 = vunpack.c.h.b16 %v1537
      %v1585 = vunpack.c.l.b16 %v1538
      %v1586 = vunpack.c.h.b16 %v1538
      %v1587 = vpack.c.b16 %v1555, %v1555
      %v1588 = vpack.c.b16 %v1556, %v1556
      %v1589 = vpack.c.b16 %v1557, %v1557
      %v1590 = vpack.c.b16 %v1558, %v1558
      %v1591 = vpack.c.b16 %v1559, %v1559
      %v1592 = vpack.c.b16 %v1560, %v1560
      %v1593 = vpack.c.b16 %v1561, %v1561
      %v1594 = vpack.c.b16 %v1562, %v1562
      %v1595 = vpack.c.b16 %v1563, %v1563
      %v1596 = vpack.c.b16 %v1564, %v1564
      %v1597 = vpack.c.b16 %v1565, %v1565
      %v1598 = vpack.c.b16 %v1566, %v1566
      %v1599 = vpack.c.b16 %v1567, %v1567
      %v1600 = vpack.c.b16 %v1568, %v1568
      %v1601 = vpack.c.b16 %v1569, %v1569
      %v1602 = vpack.c.b16 %v1570, %v1570
      %v1603 = vpack.c.b16 %v1571, %v1571
      %v1604 = vpack.c.b16 %v1572, %v1572
      %v1605 = vpack.c.b16 %v1573, %v1573
      %v1606 = vpack.c.b16 %v1574, %v1574
      %v1607 = vpack.c.b16 %v1575, %v1575
      %v1608 = vpack.c.b16 %v1576, %v1576
      %v1609 = vpack.c.b16 %v1577, %v1577
      %v1610 = vpack.c.b16 %v1578, %v1578
      %v1611 = vpack.c.b16 %v1579, %v1579
      %v1612 = vpack.c.b16 %v1580, %v1580
      %v1613 = vpack.c.b16 %v1581, %v1581
      %v1614 = vpack.c.b16 %v1582, %v1582
      %v1615 = vpack.c.b16 %v1583, %v1583
      %v1616 = vpack.c.b16 %v1584, %v1584
      %v1617 = vpack.c.b16 %v1585, %v1585
      %v1618 = vpack.c.b16 %v1586, %v1586
      %vm1651 = vcmask 191488
      %1652 = vst.msk [vmem:[%s170] sm:$0xf] %vm1651, %v1587
      %1653 = vst.msk [vmem:[%s170 + $0x4] sm:$0xf] %vm1651, %v1588
      %1654 = vst.msk [vmem:[%s170 + $0x8] sm:$0xf] %vm1651, %v1589
      %1655 = vst.msk [vmem:[%s170 + $0xc] sm:$0xf] %vm1651, %v1590
      %1656 = vst.msk [vmem:[%s170 + $0x10] sm:$0xf] %vm1651, %v1591
      %1657 = vst.msk [vmem:[%s170 + $0x14] sm:$0xf] %vm1651, %v1592
      %1658 = vst.msk [vmem:[%s170 + $0x18] sm:$0xf] %vm1651, %v1593
      %1659 = vst.msk [vmem:[%s170 + $0x1c] sm:$0xf] %vm1651, %v1594
      %1660 = vst.msk [vmem:[%s170 + $0x20] sm:$0xf] %vm1651, %v1595
      %1661 = vst.msk [vmem:[%s170 + $0x24] sm:$0xf] %vm1651, %v1596
      %1662 = vst.msk [vmem:[%s170 + $0x28] sm:$0xf] %vm1651, %v1597
      %1663 = vst.msk [vmem:[%s170 + $0x2c] sm:$0xf] %vm1651, %v1598
      %1664 = vst.msk [vmem:[%s170 + $0x30] sm:$0xf] %vm1651, %v1599
      %1665 = vst.msk [vmem:[%s170 + $0x34] sm:$0xf] %vm1651, %v1600
      %1666 = vst.msk [vmem:[%s170 + $0x38] sm:$0xf] %vm1651, %v1601
      %1667 = vst.msk [vmem:[%s170 + $0x3c] sm:$0xf] %vm1651, %v1602
      %1668 = vst.msk [vmem:[%s170 + $0x40] sm:$0xf] %vm1651, %v1603
      %1669 = vst.msk [vmem:[%s170 + $0x44] sm:$0xf] %vm1651, %v1604
      %1670 = vst.msk [vmem:[%s170 + $0x48] sm:$0xf] %vm1651, %v1605
      %1671 = vst.msk [vmem:[%s170 + $0x4c] sm:$0xf] %vm1651, %v1606
      %1672 = vst.msk [vmem:[%s170 + $0x50] sm:$0xf] %vm1651, %v1607
      %1673 = vst.msk [vmem:[%s170 + $0x54] sm:$0xf] %vm1651, %v1608
      %1674 = vst.msk [vmem:[%s170 + $0x58] sm:$0xf] %vm1651, %v1609
      %1675 = vst.msk [vmem:[%s170 + $0x5c] sm:$0xf] %vm1651, %v1610
      %1676 = vst.msk [vmem:[%s170 + $0x60] sm:$0xf] %vm1651, %v1611
      %1677 = vst.msk [vmem:[%s170 + $0x64] sm:$0xf] %vm1651, %v1612
      %1678 = vst.msk [vmem:[%s170 + $0x68] sm:$0xf] %vm1651, %v1613
      %1679 = vst.msk [vmem:[%s170 + $0x6c] sm:$0xf] %vm1651, %v1614
      %1680 = vst.msk [vmem:[%s170 + $0x70] sm:$0xf] %vm1651, %v1615
      %1681 = vst.msk [vmem:[%s170 + $0x74] sm:$0xf] %vm1651, %v1616
      %1682 = vst.msk [vmem:[%s170 + $0x78] sm:$0xf] %vm1651, %v1617
      %1683 = vst.msk [vmem:[%s170 + $0x7c] sm:$0xf] %vm1651, %v1618
      %p1684 = scmp.lt.s32.totalorder %s14, 1
      %s1685 = scalar_select %p1684, %s14, 1
      %s1686 = smul.addr %s1685, 32
      %s1687 = smul.addr %s1686, 4
      %s1688 = scalar_lea.vmem %s3, %s1687
      // Predicated region
      $region33: #{cfnet_forward.24} parent=31 // pred_check
        %p1689 = pneg %p100
      $region34: #{cfnet_forward.24} parent=31 // pred_check_branch
        %1691 = sbr.rel (%p1689) target = $region36
      $region35: #{cfnet_forward.24} parent=31 // pred_region
        _
      $region36: #{cfnet_forward.24} parent=31 // pred_fallthru
        _
    $region32: #{cfnet_forward.24} parent=5 // pred_fallthru
      _
    %p1692 = scmp.le.s32.totalorder 2, %s9
    // Predicated region
    $region37: #{cfnet_forward.24} parent=5 // pred_check
      %p1693 = pneg %p1692
    $region38: #{cfnet_forward.24} parent=5 // pred_check_branch
      %1695 = sbr.rel (%p1693) target = $region40
    $region39: #{cfnet_forward.24} parent=5 // pred_region
      %s1696 = ssub.s32 %s9, 2
      // Predicated region
      $region41: #{cfnet_forward.24} parent=39 // pred_check
        %p1697 = pneg %p106
      $region42: #{cfnet_forward.24} parent=39 // pred_check_branch
        %1699 = sbr.rel (%p1697) target = $region44
      $region43: #{cfnet_forward.24} parent=39 // pred_region
        %p1700 = scmp.lt.s32.totalorder %s15, 1
        %s1701 = scalar_select %p1700, %s15, 1
        %s1702 = smul.addr %s1701, 32
        %s1703 = smul.addr %s1702, 4
        %s1704 = scalar_lea.vmem %s3, %s1703
      $region44: #{cfnet_forward.24} parent=39 // pred_fallthru
        _
    $region40: #{cfnet_forward.24} parent=5 // pred_fallthru
      _
  $region6: #{cfnet_forward.24} parent=0 // loop_footer
    %s13 = sadd.s32 1, %s9
  $region7: #{cfnet_forward.24} parent=0 // loop_footer_branch
    %8 = sbr.rel target = $region3
  $region8: #{cfnet_forward.24} parent=0 // loop_exit
    _

// kernel: cfnet_forward.25
$region0: #{cfnet_forward.25}
  #allocation0 [shape = 'u32[]', space=smem, size = 0x4, offset = 0x4, fixed_abs, tag = 'smem constant byte address 0x4 - core index']
  #allocation1 [shape = 'u32[144,128]{1,0:T(1,128)}', space=vmem, size = 0x12000, scoped, tag = 'internal scratch']
  %s0 = inlined_call_operand.vmem [shape: bf16[512,24], index: 0, kind: input, shape index: {}]
  %s1 = inlined_call_operand.vmem [shape: bf16[512,24], index: 1, kind: input, shape index: {}]
  %s2 = inlined_call_operand.vmem [shape: bf16[24,32], index: 2, kind: input, shape index: {}]
  %s3 = inlined_call_operand.vmem [shape: bf16[24,32], index: 3, kind: input, shape index: {}]
  %s4 = inlined_call_operand.vmem [shape: bf16[24,32], index: 4, kind: input, shape index: {}]
  %s5 = inlined_call_operand.vmem [shape: f32[1,32], index: 5, kind: input, shape index: {}]
  %s6 = inlined_call_operand.vmem [shape: bf16[32,128], index: 6, kind: input, shape index: {}]
  %s7 = inlined_call_operand.vmem [shape: f32[1,128], index: 7, kind: input, shape index: {}]
  %s8 = inlined_call_operand.vmem [shape: f32[512,128], index: 8, kind: output, shape index: {0}]
  %s9 = inlined_call_operand.vmem [shape: bf16[512,24], index: 9, kind: output, shape index: {1}]
  %s10 = inlined_call_operand.vmem [shape: bf16[512,24], index: 10, kind: output, shape index: {2}]
  %11 = xla_tuple %s8, %s9, %s10
  %s12 = sld [smem:[#allocation0]]
  $region58: #{cfnet_forward.25} parent=0
    _
  %s14 = ssub.s32 1, %s12
  %s15 = scalar_select 0, %s14, %s12
  // Predicated region
  $region2: #{cfnet_forward.25} parent=0 // pred_check
    _
  $region3: #{cfnet_forward.25} parent=0 // pred_check_branch
    %17 = sbr.rel (0) target = $region5
  $region4: #{cfnet_forward.25} parent=0 // pred_region
    _
  $region5: #{cfnet_forward.25} parent=0 // pred_fallthru
    _
  // Predicated region
  $region6: #{cfnet_forward.25} parent=0 // pred_check
    _
  $region7: #{cfnet_forward.25} parent=0 // pred_check_branch
    %19 = sbr.rel (0) target = $region9
  $region8: #{cfnet_forward.25} parent=0 // pred_region
    _
  $region9: #{cfnet_forward.25} parent=0 // pred_fallthru
    _
  // Predicated region
  $region10: #{cfnet_forward.25} parent=0 // pred_check
    _
  $region11: #{cfnet_forward.25} parent=0 // pred_check_branch
    %21 = sbr.rel (0) target = $region13
  $region12: #{cfnet_forward.25} parent=0 // pred_region
    _
  $region13: #{cfnet_forward.25} parent=0 // pred_fallthru
    _
  // Predicated region
  $region14: #{cfnet_forward.25} parent=0 // pred_check
    _
  $region15: #{cfnet_forward.25} parent=0 // pred_check_branch
    %23 = sbr.rel (0) target = $region17
  $region16: #{cfnet_forward.25} parent=0 // pred_region
    _
  $region17: #{cfnet_forward.25} parent=0 // pred_fallthru
    _
  // Predicated region
  $region18: #{cfnet_forward.25} parent=0 // pred_check
    _
  $region19: #{cfnet_forward.25} parent=0 // pred_check_branch
    %25 = sbr.rel (0) target = $region21
  $region20: #{cfnet_forward.25} parent=0 // pred_region
    _
  $region21: #{cfnet_forward.25} parent=0 // pred_fallthru
    _
  // Predicated region
  $region22: #{cfnet_forward.25} parent=0 // pred_check
    _
  $region23: #{cfnet_forward.25} parent=0 // pred_check_branch
    %27 = sbr.rel (0) target = $region25
  $region24: #{cfnet_forward.25} parent=0 // pred_region
    _
  $region25: #{cfnet_forward.25} parent=0 // pred_fallthru
    _
  // Predicated region
  $region26: #{cfnet_forward.25} parent=0 // pred_check
    _
  $region27: #{cfnet_forward.25} parent=0 // pred_check_branch
    %29 = sbr.rel (0) target = $region29
  $region28: #{cfnet_forward.25} parent=0 // pred_region
    _
  $region29: #{cfnet_forward.25} parent=0 // pred_fallthru
    _
  // Predicated region
  $region30: #{cfnet_forward.25} parent=0 // pred_check
    _
  $region31: #{cfnet_forward.25} parent=0 // pred_check_branch
    %31 = sbr.rel (0) target = $region33
  $region32: #{cfnet_forward.25} parent=0 // pred_region
    _
  $region33: #{cfnet_forward.25} parent=0 // pred_fallthru
    _
  %v33 = vld [vmem:[%s0] sm:$0xf]
  %v34 = vld [vmem:[%s0 + $0x4] sm:$0xf]
  %v35 = vld [vmem:[%s0 + $0x8] sm:$0xf]
  %v36 = vld [vmem:[%s0 + $0xc] sm:$0xf]
  %v37 = vld [vmem:[%s0 + $0x10] sm:$0xf]
  %v38 = vld [vmem:[%s0 + $0x14] sm:$0xf]
  %v39 = vld [vmem:[%s0 + $0x18] sm:$0xf]
  %v40 = vld [vmem:[%s0 + $0x1c] sm:$0xf]
  %v41 = vld [vmem:[%s0 + $0x20] sm:$0xf]
  %v42 = vld [vmem:[%s0 + $0x24] sm:$0xf]
  %v43 = vld [vmem:[%s0 + $0x28] sm:$0xf]
  %v44 = vld [vmem:[%s0 + $0x2c] sm:$0xf]
  %v45 = vld [vmem:[%s0 + $0x30] sm:$0xf]
  %v46 = vld [vmem:[%s0 + $0x34] sm:$0xf]
  %v47 = vld [vmem:[%s0 + $0x38] sm:$0xf]
  %v48 = vld [vmem:[%s0 + $0x3c] sm:$0xf]
  %v49 = vld [vmem:[%s0 + $0x40] sm:$0xf]
  %v50 = vld [vmem:[%s0 + $0x44] sm:$0xf]
  %v51 = vld [vmem:[%s0 + $0x48] sm:$0xf]
  %v52 = vld [vmem:[%s0 + $0x4c] sm:$0xf]
  %v53 = vld [vmem:[%s0 + $0x50] sm:$0xf]
  %v54 = vld [vmem:[%s0 + $0x54] sm:$0xf]
  %v55 = vld [vmem:[%s0 + $0x58] sm:$0xf]
  %v56 = vld [vmem:[%s0 + $0x5c] sm:$0xf]
  %v57 = vld [vmem:[%s0 + $0x60] sm:$0xf]
  %v58 = vld [vmem:[%s0 + $0x64] sm:$0xf]
  %v59 = vld [vmem:[%s0 + $0x68] sm:$0xf]
  %v60 = vld [vmem:[%s0 + $0x6c] sm:$0xf]
  %v61 = vld [vmem:[%s0 + $0x70] sm:$0xf]
  %v62 = vld [vmem:[%s0 + $0x74] sm:$0xf]
  %v63 = vld [vmem:[%s0 + $0x78] sm:$0xf]
  %v64 = vld [vmem:[%s0 + $0x7c] sm:$0xf]
  %v65 = vld [vmem:[%s0 + $0x80] sm:$0xf]
  %v66 = vld [vmem:[%s0 + $0x84] sm:$0xf]
  %v67 = vld [vmem:[%s0 + $0x88] sm:$0xf]
  %v68 = vld [vmem:[%s0 + $0x8c] sm:$0xf]
  %v69 = vld [vmem:[%s0 + $0x90] sm:$0xf]
  %v70 = vld [vmem:[%s0 + $0x94] sm:$0xf]
  %v71 = vld [vmem:[%s0 + $0x98] sm:$0xf]
  %v72 = vld [vmem:[%s0 + $0x9c] sm:$0xf]
  %v73 = vld [vmem:[%s0 + $0xa0] sm:$0xf]
  %v74 = vld [vmem:[%s0 + $0xa4] sm:$0xf]
  %v75 = vld [vmem:[%s0 + $0xa8] sm:$0xf]
  %v76 = vld [vmem:[%s0 + $0xac] sm:$0xf]
  %v77 = vld [vmem:[%s0 + $0xb0] sm:$0xf]
  %v78 = vld [vmem:[%s0 + $0xb4] sm:$0xf]
  %v79 = vld [vmem:[%s0 + $0xb8] sm:$0xf]
  %v80 = vld [vmem:[%s0 + $0xbc] sm:$0xf]
  %v81 = vld [vmem:[%s0 + $0xc0] sm:$0xf]
  %v82 = vld [vmem:[%s0 + $0xc4] sm:$0xf]
  %v83 = vld [vmem:[%s0 + $0xc8] sm:$0xf]
  %v84 = vld [vmem:[%s0 + $0xcc] sm:$0xf]
  %v85 = vld [vmem:[%s0 + $0xd0] sm:$0xf]
  %v86 = vld [vmem:[%s0 + $0xd4] sm:$0xf]
  %v87 = vld [vmem:[%s0 + $0xd8] sm:$0xf]
  %v88 = vld [vmem:[%s0 + $0xdc] sm:$0xf]
  %v89 = vld [vmem:[%s0 + $0xe0] sm:$0xf]
  %v90 = vld [vmem:[%s0 + $0xe4] sm:$0xf]
  %v91 = vld [vmem:[%s0 + $0xe8] sm:$0xf]
  %v92 = vld [vmem:[%s0 + $0xec] sm:$0xf]
  %v93 = vld [vmem:[%s0 + $0xf0] sm:$0xf]
  %v94 = vld [vmem:[%s0 + $0xf4] sm:$0xf]
  %v95 = vld [vmem:[%s0 + $0xf8] sm:$0xf]
  %v96 = vld [vmem:[%s0 + $0xfc] sm:$0xf]
  %v97 = vld [vmem:[%s1] sm:$0xf]
  %v98 = vld [vmem:[%s1 + $0x4] sm:$0xf]
  %v99 = vld [vmem:[%s1 + $0x8] sm:$0xf]
  %v100 = vld [vmem:[%s1 + $0xc] sm:$0xf]
  %v101 = vld [vmem:[%s1 + $0x10] sm:$0xf]
  %v102 = vld [vmem:[%s1 + $0x14] sm:$0xf]
  %v103 = vld [vmem:[%s1 + $0x18] sm:$0xf]
  %v104 = vld [vmem:[%s1 + $0x1c] sm:$0xf]
  %v105 = vld [vmem:[%s1 + $0x20] sm:$0xf]
  %v106 = vld [vmem:[%s1 + $0x24] sm:$0xf]
  %v107 = vld [vmem:[%s1 + $0x28] sm:$0xf]
  %v108 = vld [vmem:[%s1 + $0x2c] sm:$0xf]
  %v109 = vld [vmem:[%s1 + $0x30] sm:$0xf]
  %v110 = vld [vmem:[%s1 + $0x34] sm:$0xf]
  %v111 = vld [vmem:[%s1 + $0x38] sm:$0xf]
  %v112 = vld [vmem:[%s1 + $0x3c] sm:$0xf]
  %v113 = vld [vmem:[%s1 + $0x40] sm:$0xf]
  %v114 = vld [vmem:[%s1 + $0x44] sm:$0xf]
  %v115 = vld [vmem:[%s1 + $0x48] sm:$0xf]
  %v116 = vld [vmem:[%s1 + $0x4c] sm:$0xf]
  %v117 = vld [vmem:[%s1 + $0x50] sm:$0xf]
  %v118 = vld [vmem:[%s1 + $0x54] sm:$0xf]
  %v119 = vld [vmem:[%s1 + $0x58] sm:$0xf]
  %v120 = vld [vmem:[%s1 + $0x5c] sm:$0xf]
  %v121 = vld [vmem:[%s1 + $0x60] sm:$0xf]
  %v122 = vld [vmem:[%s1 + $0x64] sm:$0xf]
  %v123 = vld [vmem:[%s1 + $0x68] sm:$0xf]
  %v124 = vld [vmem:[%s1 + $0x6c] sm:$0xf]
  %v125 = vld [vmem:[%s1 + $0x70] sm:$0xf]
  %v126 = vld [vmem:[%s1 + $0x74] sm:$0xf]
  %v127 = vld [vmem:[%s1 + $0x78] sm:$0xf]
  %v128 = vld [vmem:[%s1 + $0x7c] sm:$0xf]
  %v129 = vld [vmem:[%s1 + $0x80] sm:$0xf]
  %v130 = vld [vmem:[%s1 + $0x84] sm:$0xf]
  %v131 = vld [vmem:[%s1 + $0x88] sm:$0xf]
  %v132 = vld [vmem:[%s1 + $0x8c] sm:$0xf]
  %v133 = vld [vmem:[%s1 + $0x90] sm:$0xf]
  %v134 = vld [vmem:[%s1 + $0x94] sm:$0xf]
  %v135 = vld [vmem:[%s1 + $0x98] sm:$0xf]
  %v136 = vld [vmem:[%s1 + $0x9c] sm:$0xf]
  %v137 = vld [vmem:[%s1 + $0xa0] sm:$0xf]
  %v138 = vld [vmem:[%s1 + $0xa4] sm:$0xf]
  %v139 = vld [vmem:[%s1 + $0xa8] sm:$0xf]
  %v140 = vld [vmem:[%s1 + $0xac] sm:$0xf]
  %v141 = vld [vmem:[%s1 + $0xb0] sm:$0xf]
  %v142 = vld [vmem:[%s1 + $0xb4] sm:$0xf]
  %v143 = vld [vmem:[%s1 + $0xb8] sm:$0xf]
  %v144 = vld [vmem:[%s1 + $0xbc] sm:$0xf]
  %v145 = vld [vmem:[%s1 + $0xc0] sm:$0xf]
  %v146 = vld [vmem:[%s1 + $0xc4] sm:$0xf]
  %v147 = vld [vmem:[%s1 + $0xc8] sm:$0xf]
  %v148 = vld [vmem:[%s1 + $0xcc] sm:$0xf]
  %v149 = vld [vmem:[%s1 + $0xd0] sm:$0xf]
  %v150 = vld [vmem:[%s1 + $0xd4] sm:$0xf]
  %v151 = vld [vmem:[%s1 + $0xd8] sm:$0xf]
  %v152 = vld [vmem:[%s1 + $0xdc] sm:$0xf]
  %v153 = vld [vmem:[%s1 + $0xe0] sm:$0xf]
  %v154 = vld [vmem:[%s1 + $0xe4] sm:$0xf]
  %v155 = vld [vmem:[%s1 + $0xe8] sm:$0xf]
  %v156 = vld [vmem:[%s1 + $0xec] sm:$0xf]
  %v157 = vld [vmem:[%s1 + $0xf0] sm:$0xf]
  %v158 = vld [vmem:[%s1 + $0xf4] sm:$0xf]
  %v159 = vld [vmem:[%s1 + $0xf8] sm:$0xf]
  %v160 = vld [vmem:[%s1 + $0xfc] sm:$0xf]
  %v161 = vunpack.c.l.bf16 %v33
  %v162 = vunpack.c.l.bf16 %v34
  %v163 = vunpack.c.l.bf16 %v35
  %v164 = vunpack.c.l.bf16 %v36
  %v165 = vunpack.c.l.bf16 %v37
  %v166 = vunpack.c.l.bf16 %v38
  %v167 = vunpack.c.l.bf16 %v39
  %v168 = vunpack.c.l.bf16 %v40
  %v169 = vunpack.c.l.bf16 %v41
  %v170 = vunpack.c.l.bf16 %v42
  %v171 = vunpack.c.l.bf16 %v43
  %v172 = vunpack.c.l.bf16 %v44
  %v173 = vunpack.c.l.bf16 %v45
  %v174 = vunpack.c.l.bf16 %v46
  %v175 = vunpack.c.l.bf16 %v47
  %v176 = vunpack.c.l.bf16 %v48
  %v177 = vunpack.c.l.bf16 %v49
  %v178 = vunpack.c.l.bf16 %v50
  %v179 = vunpack.c.l.bf16 %v51
  %v180 = vunpack.c.l.bf16 %v52
  %v181 = vunpack.c.l.bf16 %v53
  %v182 = vunpack.c.l.bf16 %v54
  %v183 = vunpack.c.l.bf16 %v55
  %v184 = vunpack.c.l.bf16 %v56
  %v185 = vunpack.c.l.bf16 %v57
  %v186 = vunpack.c.l.bf16 %v58
  %v187 = vunpack.c.l.bf16 %v59
  %v188 = vunpack.c.l.bf16 %v60
  %v189 = vunpack.c.l.bf16 %v61
  %v190 = vunpack.c.l.bf16 %v62
  %v191 = vunpack.c.l.bf16 %v63
  %v192 = vunpack.c.l.bf16 %v64
  %v193 = vunpack.c.l.bf16 %v65
  %v194 = vunpack.c.l.bf16 %v66
  %v195 = vunpack.c.l.bf16 %v67
  %v196 = vunpack.c.l.bf16 %v68
  %v197 = vunpack.c.l.bf16 %v69
  %v198 = vunpack.c.l.bf16 %v70
  %v199 = vunpack.c.l.bf16 %v71
  %v200 = vunpack.c.l.bf16 %v72
  %v201 = vunpack.c.l.bf16 %v73
  %v202 = vunpack.c.l.bf16 %v74
  %v203 = vunpack.c.l.bf16 %v75
  %v204 = vunpack.c.l.bf16 %v76
  %v205 = vunpack.c.l.bf16 %v77
  %v206 = vunpack.c.l.bf16 %v78
  %v207 = vunpack.c.l.bf16 %v79
  %v208 = vunpack.c.l.bf16 %v80
  %v209 = vunpack.c.l.bf16 %v81
  %v210 = vunpack.c.l.bf16 %v82
  %v211 = vunpack.c.l.bf16 %v83
  %v212 = vunpack.c.l.bf16 %v84
  %v213 = vunpack.c.l.bf16 %v85
  %v214 = vunpack.c.l.bf16 %v86
  %v215 = vunpack.c.l.bf16 %v87
  %v216 = vunpack.c.l.bf16 %v88
  %v217 = vunpack.c.l.bf16 %v89
  %v218 = vunpack.c.l.bf16 %v90
  %v219 = vunpack.c.l.bf16 %v91
  %v220 = vunpack.c.l.bf16 %v92
  %v221 = vunpack.c.l.bf16 %v93
  %v222 = vunpack.c.l.bf16 %v94
  %v223 = vunpack.c.l.bf16 %v95
  %v224 = vunpack.c.l.bf16 %v96
  %v225 = vunpack.c.l.bf16 %v97
  %v226 = vunpack.c.l.bf16 %v98
  %v227 = vunpack.c.l.bf16 %v99
  %v228 = vunpack.c.l.bf16 %v100
  %v229 = vunpack.c.l.bf16 %v101
  %v230 = vunpack.c.l.bf16 %v102
  %v231 = vunpack.c.l.bf16 %v103
  %v232 = vunpack.c.l.bf16 %v104
  %v233 = vunpack.c.l.bf16 %v105
  %v234 = vunpack.c.l.bf16 %v106
  %v235 = vunpack.c.l.bf16 %v107
  %v236 = vunpack.c.l.bf16 %v108
  %v237 = vunpack.c.l.bf16 %v109
  %v238 = vunpack.c.l.bf16 %v110
  %v239 = vunpack.c.l.bf16 %v111
  %v240 = vunpack.c.l.bf16 %v112
  %v241 = vunpack.c.l.bf16 %v113
  %v242 = vunpack.c.l.bf16 %v114
  %v243 = vunpack.c.l.bf16 %v115
  %v244 = vunpack.c.l.bf16 %v116
  %v245 = vunpack.c.l.bf16 %v117
  %v246 = vunpack.c.l.bf16 %v118
  %v247 = vunpack.c.l.bf16 %v119
  %v248 = vunpack.c.l.bf16 %v120
  %v249 = vunpack.c.l.bf16 %v121
  %v250 = vunpack.c.l.bf16 %v122
  %v251 = vunpack.c.l.bf16 %v123
  %v252 = vunpack.c.l.bf16 %v124
  %v253 = vunpack.c.l.bf16 %v125
  %v254 = vunpack.c.l.bf16 %v126
  %v255 = vunpack.c.l.bf16 %v127
  %v256 = vunpack.c.l.bf16 %v128
  %v257 = vunpack.c.l.bf16 %v129
  %v258 = vunpack.c.l.bf16 %v130
  %v259 = vunpack.c.l.bf16 %v131
  %v260 = vunpack.c.l.bf16 %v132
  %v261 = vunpack.c.l.bf16 %v133
  %v262 = vunpack.c.l.bf16 %v134
  %v263 = vunpack.c.l.bf16 %v135
  %v264 = vunpack.c.l.bf16 %v136
  %v265 = vunpack.c.l.bf16 %v137
  %v266 = vunpack.c.l.bf16 %v138
  %v267 = vunpack.c.l.bf16 %v139
  %v268 = vunpack.c.l.bf16 %v140
  %v269 = vunpack.c.l.bf16 %v141
  %v270 = vunpack.c.l.bf16 %v142
  %v271 = vunpack.c.l.bf16 %v143
  %v272 = vunpack.c.l.bf16 %v144
  %v273 = vunpack.c.l.bf16 %v145
  %v274 = vunpack.c.l.bf16 %v146
  %v275 = vunpack.c.l.bf16 %v147
  %v276 = vunpack.c.l.bf16 %v148
  %v277 = vunpack.c.l.bf16 %v149
  %v278 = vunpack.c.l.bf16 %v150
  %v279 = vunpack.c.l.bf16 %v151
  %v280 = vunpack.c.l.bf16 %v152
  %v281 = vunpack.c.l.bf16 %v153
  %v282 = vunpack.c.l.bf16 %v154
  %v283 = vunpack.c.l.bf16 %v155
  %v284 = vunpack.c.l.bf16 %v156
  %v285 = vunpack.c.l.bf16 %v157
  %v286 = vunpack.c.l.bf16 %v158
  %v287 = vunpack.c.l.bf16 %v159
  %v288 = vunpack.c.l.bf16 %v160
  %v289 = vsub.f32 %v161, %v225
  %v290 = vsub.f32 %v162, %v226
  %v291 = vsub.f32 %v163, %v227
  %v292 = vsub.f32 %v164, %v228
  %v293 = vsub.f32 %v165, %v229
  %v294 = vsub.f32 %v166, %v230
  %v295 = vsub.f32 %v167, %v231
  %v296 = vsub.f32 %v168, %v232
  %v297 = vsub.f32 %v169, %v233
  %v298 = vsub.f32 %v170, %v234
  %v299 = vsub.f32 %v171, %v235
  %v300 = vsub.f32 %v172, %v236
  %v301 = vsub.f32 %v173, %v237
  %v302 = vsub.f32 %v174, %v238
  %v303 = vsub.f32 %v175, %v239
  %v304 = vsub.f32 %v176, %v240
  %v305 = vsub.f32 %v177, %v241
  %v306 = vsub.f32 %v178, %v242
  %v307 = vsub.f32 %v179, %v243
  %v308 = vsub.f32 %v180, %v244
  %v309 = vsub.f32 %v181, %v245
  %v310 = vsub.f32 %v182, %v246
  %v311 = vsub.f32 %v183, %v247
  %v312 = vsub.f32 %v184, %v248
  %v313 = vsub.f32 %v185, %v249
  %v314 = vsub.f32 %v186, %v250
  %v315 = vsub.f32 %v187, %v251
  %v316 = vsub.f32 %v188, %v252
  %v317 = vsub.f32 %v189, %v253
  %v318 = vsub.f32 %v190, %v254
  %v319 = vsub.f32 %v191, %v255
  %v320 = vsub.f32 %v192, %v256
  %v321 = vsub.f32 %v193, %v257
  %v322 = vsub.f32 %v194, %v258
  %v323 = vsub.f32 %v195, %v259
  %v324 = vsub.f32 %v196, %v260
  %v325 = vsub.f32 %v197, %v261
  %v326 = vsub.f32 %v198, %v262
  %v327 = vsub.f32 %v199, %v263
  %v328 = vsub.f32 %v200, %v264
  %v329 = vsub.f32 %v201, %v265
  %v330 = vsub.f32 %v202, %v266
  %v331 = vsub.f32 %v203, %v267
  %v332 = vsub.f32 %v204, %v268
  %v333 = vsub.f32 %v205, %v269
  %v334 = vsub.f32 %v206, %v270
  %v335 = vsub.f32 %v207, %v271
  %v336 = vsub.f32 %v208, %v272
  %v337 = vsub.f32 %v209, %v273
  %v338 = vsub.f32 %v210, %v274
  %v339 = vsub.f32 %v211, %v275
  %v340 = vsub.f32 %v212, %v276
  %v341 = vsub.f32 %v213, %v277
  %v342 = vsub.f32 %v214, %v278
  %v343 = vsub.f32 %v215, %v279
  %v344 = vsub.f32 %v216, %v280
  %v345 = vsub.f32 %v217, %v281
  %v346 = vsub.f32 %v218, %v282
  %v347 = vsub.f32 %v219, %v283
  %v348 = vsub.f32 %v220, %v284
  %v349 = vsub.f32 %v221, %v285
  %v350 = vsub.f32 %v222, %v286
  %v351 = vsub.f32 %v223, %v287
  %v352 = vsub.f32 %v224, %v288
  %v353 = vmul.f32 %v289, %v289
  %v354 = vmul.f32 %v290, %v290
  %v355 = vmul.f32 %v291, %v291
  %v356 = vmul.f32 %v292, %v292
  %v357 = vmul.f32 %v293, %v293
  %v358 = vmul.f32 %v294, %v294
  %v359 = vmul.f32 %v295, %v295
  %v360 = vmul.f32 %v296, %v296
  %v361 = vmul.f32 %v297, %v297
  %v362 = vmul.f32 %v298, %v298
  %v363 = vmul.f32 %v299, %v299
  %v364 = vmul.f32 %v300, %v300
  %v365 = vmul.f32 %v301, %v301
  %v366 = vmul.f32 %v302, %v302
  %v367 = vmul.f32 %v303, %v303
  %v368 = vmul.f32 %v304, %v304
  %v369 = vmul.f32 %v305, %v305
  %v370 = vmul.f32 %v306, %v306
  %v371 = vmul.f32 %v307, %v307
  %v372 = vmul.f32 %v308, %v308
  %v373 = vmul.f32 %v309, %v309
  %v374 = vmul.f32 %v310, %v310
  %v375 = vmul.f32 %v311, %v311
  %v376 = vmul.f32 %v312, %v312
  %v377 = vmul.f32 %v313, %v313
  %v378 = vmul.f32 %v314, %v314
  %v379 = vmul.f32 %v315, %v315
  %v380 = vmul.f32 %v316, %v316
  %v381 = vmul.f32 %v317, %v317
  %v382 = vmul.f32 %v318, %v318
  %v383 = vmul.f32 %v319, %v319
  %v384 = vmul.f32 %v320, %v320
  %v385 = vmul.f32 %v321, %v321
  %v386 = vmul.f32 %v322, %v322
  %v387 = vmul.f32 %v323, %v323
  %v388 = vmul.f32 %v324, %v324
  %v389 = vmul.f32 %v325, %v325
  %v390 = vmul.f32 %v326, %v326
  %v391 = vmul.f32 %v327, %v327
  %v392 = vmul.f32 %v328, %v328
  %v393 = vmul.f32 %v329, %v329
  %v394 = vmul.f32 %v330, %v330
  %v395 = vmul.f32 %v331, %v331
  %v396 = vmul.f32 %v332, %v332
  %v397 = vmul.f32 %v333, %v333
  %v398 = vmul.f32 %v334, %v334
  %v399 = vmul.f32 %v335, %v335
  %v400 = vmul.f32 %v336, %v336
  %v401 = vmul.f32 %v337, %v337
  %v402 = vmul.f32 %v338, %v338
  %v403 = vmul.f32 %v339, %v339
  %v404 = vmul.f32 %v340, %v340
  %v405 = vmul.f32 %v341, %v341
  %v406 = vmul.f32 %v342, %v342
  %v407 = vmul.f32 %v343, %v343
  %v408 = vmul.f32 %v344, %v344
  %v409 = vmul.f32 %v345, %v345
  %v410 = vmul.f32 %v346, %v346
  %v411 = vmul.f32 %v347, %v347
  %v412 = vmul.f32 %v348, %v348
  %v413 = vmul.f32 %v349, %v349
  %v414 = vmul.f32 %v350, %v350
  %v415 = vmul.f32 %v351, %v351
  %v416 = vmul.f32 %v352, %v352
  %vm417 = vcmask 195584
  %v418 = vsel %vm417, %v353, 0.0
  %419 = vadd.xlane.f32.xlu0 %v418
  %v420 = vpop.xlane.xlu0 %419
  %v421 = vsel %vm417, %v354, 0.0
  %422 = vadd.xlane.f32.xlu0 %v421
  %v423 = vpop.xlane.xlu0 %422
  %v424 = vsel %vm417, %v355, 0.0
  %425 = vadd.xlane.f32.xlu0 %v424
  %v426 = vpop.xlane.xlu0 %425
  %v427 = vsel %vm417, %v356, 0.0
  %428 = vadd.xlane.f32.xlu0 %v427
  %v429 = vpop.xlane.xlu0 %428
  %v430 = vsel %vm417, %v357, 0.0
  %431 = vadd.xlane.f32.xlu0 %v430
  %v432 = vpop.xlane.xlu0 %431
  %v433 = vsel %vm417, %v358, 0.0
  %434 = vadd.xlane.f32.xlu0 %v433
  %v435 = vpop.xlane.xlu0 %434
  %v436 = vsel %vm417, %v359, 0.0
  %437 = vadd.xlane.f32.xlu0 %v436
  %v438 = vpop.xlane.xlu0 %437
  %v439 = vsel %vm417, %v360, 0.0
  %440 = vadd.xlane.f32.xlu0 %v439
  %v441 = vpop.xlane.xlu0 %440
  %v442 = vsel %vm417, %v361, 0.0
  %443 = vadd.xlane.f32.xlu0 %v442
  %v444 = vpop.xlane.xlu0 %443
  %v445 = vsel %vm417, %v362, 0.0
  %446 = vadd.xlane.f32.xlu0 %v445
  %v447 = vpop.xlane.xlu0 %446
  %v448 = vsel %vm417, %v363, 0.0
  %449 = vadd.xlane.f32.xlu0 %v448
  %v450 = vpop.xlane.xlu0 %449
  %v451 = vsel %vm417, %v364, 0.0
  %452 = vadd.xlane.f32.xlu0 %v451
  %v453 = vpop.xlane.xlu0 %452
  %v454 = vsel %vm417, %v365, 0.0
  %455 = vadd.xlane.f32.xlu0 %v454
  %v456 = vpop.xlane.xlu0 %455
  %v457 = vsel %vm417, %v366, 0.0
  %458 = vadd.xlane.f32.xlu0 %v457
  %v459 = vpop.xlane.xlu0 %458
  %v460 = vsel %vm417, %v367, 0.0
  %461 = vadd.xlane.f32.xlu0 %v460
  %v462 = vpop.xlane.xlu0 %461
  %v463 = vsel %vm417, %v368, 0.0
  %464 = vadd.xlane.f32.xlu0 %v463
  %v465 = vpop.xlane.xlu0 %464
  %v466 = vsel %vm417, %v369, 0.0
  %467 = vadd.xlane.f32.xlu0 %v466
  %v468 = vpop.xlane.xlu0 %467
  %v469 = vsel %vm417, %v370, 0.0
  %470 = vadd.xlane.f32.xlu0 %v469
  %v471 = vpop.xlane.xlu0 %470
  %v472 = vsel %vm417, %v371, 0.0
  %473 = vadd.xlane.f32.xlu0 %v472
  %v474 = vpop.xlane.xlu0 %473
  %v475 = vsel %vm417, %v372, 0.0
  %476 = vadd.xlane.f32.xlu0 %v475
  %v477 = vpop.xlane.xlu0 %476
  %v478 = vsel %vm417, %v373, 0.0
  %479 = vadd.xlane.f32.xlu0 %v478
  %v480 = vpop.xlane.xlu0 %479
  %v481 = vsel %vm417, %v374, 0.0
  %482 = vadd.xlane.f32.xlu0 %v481
  %v483 = vpop.xlane.xlu0 %482
  %v484 = vsel %vm417, %v375, 0.0
  %485 = vadd.xlane.f32.xlu0 %v484
  %v486 = vpop.xlane.xlu0 %485
  %v487 = vsel %vm417, %v376, 0.0
  %488 = vadd.xlane.f32.xlu0 %v487
  %v489 = vpop.xlane.xlu0 %488
  %v490 = vsel %vm417, %v377, 0.0
  %491 = vadd.xlane.f32.xlu0 %v490
  %v492 = vpop.xlane.xlu0 %491
  %v493 = vsel %vm417, %v378, 0.0
  %494 = vadd.xlane.f32.xlu0 %v493
  %v495 = vpop.xlane.xlu0 %494
  %v496 = vsel %vm417, %v379, 0.0
  %497 = vadd.xlane.f32.xlu0 %v496
  %v498 = vpop.xlane.xlu0 %497
  %v499 = vsel %vm417, %v380, 0.0
  %500 = vadd.xlane.f32.xlu0 %v499
  %v501 = vpop.xlane.xlu0 %500
  %v502 = vsel %vm417, %v381, 0.0
  %503 = vadd.xlane.f32.xlu0 %v502
  %v504 = vpop.xlane.xlu0 %503
  %v505 = vsel %vm417, %v382, 0.0
  %506 = vadd.xlane.f32.xlu0 %v505
  %v507 = vpop.xlane.xlu0 %506
  %v508 = vsel %vm417, %v383, 0.0
  %509 = vadd.xlane.f32.xlu0 %v508
  %v510 = vpop.xlane.xlu0 %509
  %v511 = vsel %vm417, %v384, 0.0
  %512 = vadd.xlane.f32.xlu0 %v511
  %v513 = vpop.xlane.xlu0 %512
  %v514 = vsel %vm417, %v385, 0.0
  %515 = vadd.xlane.f32.xlu0 %v514
  %v516 = vpop.xlane.xlu0 %515
  %v517 = vsel %vm417, %v386, 0.0
  %518 = vadd.xlane.f32.xlu0 %v517
  %v519 = vpop.xlane.xlu0 %518
  %v520 = vsel %vm417, %v387, 0.0
  %521 = vadd.xlane.f32.xlu0 %v520
  %v522 = vpop.xlane.xlu0 %521
  %v523 = vsel %vm417, %v388, 0.0
  %524 = vadd.xlane.f32.xlu0 %v523
  %v525 = vpop.xlane.xlu0 %524
  %v526 = vsel %vm417, %v389, 0.0
  %527 = vadd.xlane.f32.xlu0 %v526
  %v528 = vpop.xlane.xlu0 %527
  %v529 = vsel %vm417, %v390, 0.0
  %530 = vadd.xlane.f32.xlu0 %v529
  %v531 = vpop.xlane.xlu0 %530
  %v532 = vsel %vm417, %v391, 0.0
  %533 = vadd.xlane.f32.xlu0 %v532
  %v534 = vpop.xlane.xlu0 %533
  %v535 = vsel %vm417, %v392, 0.0
  %536 = vadd.xlane.f32.xlu0 %v535
  %v537 = vpop.xlane.xlu0 %536
  %v538 = vsel %vm417, %v393, 0.0
  %539 = vadd.xlane.f32.xlu0 %v538
  %v540 = vpop.xlane.xlu0 %539
  %v541 = vsel %vm417, %v394, 0.0
  %542 = vadd.xlane.f32.xlu0 %v541
  %v543 = vpop.xlane.xlu0 %542
  %v544 = vsel %vm417, %v395, 0.0
  %545 = vadd.xlane.f32.xlu0 %v544
  %v546 = vpop.xlane.xlu0 %545
  %v547 = vsel %vm417, %v396, 0.0
  %548 = vadd.xlane.f32.xlu0 %v547
  %v549 = vpop.xlane.xlu0 %548
  %v550 = vsel %vm417, %v397, 0.0
  %551 = vadd.xlane.f32.xlu0 %v550
  %v552 = vpop.xlane.xlu0 %551
  %v553 = vsel %vm417, %v398, 0.0
  %554 = vadd.xlane.f32.xlu0 %v553
  %v555 = vpop.xlane.xlu0 %554
  %v556 = vsel %vm417, %v399, 0.0
  %557 = vadd.xlane.f32.xlu0 %v556
  %v558 = vpop.xlane.xlu0 %557
  %v559 = vsel %vm417, %v400, 0.0
  %560 = vadd.xlane.f32.xlu0 %v559
  %v561 = vpop.xlane.xlu0 %560
  %v562 = vsel %vm417, %v401, 0.0
  %563 = vadd.xlane.f32.xlu0 %v562
  %v564 = vpop.xlane.xlu0 %563
  %v565 = vsel %vm417, %v402, 0.0
  %566 = vadd.xlane.f32.xlu0 %v565
  %v567 = vpop.xlane.xlu0 %566
  %v568 = vsel %vm417, %v403, 0.0
  %569 = vadd.xlane.f32.xlu0 %v568
  %v570 = vpop.xlane.xlu0 %569
  %v571 = vsel %vm417, %v404, 0.0
  %572 = vadd.xlane.f32.xlu0 %v571
  %v573 = vpop.xlane.xlu0 %572
  %v574 = vsel %vm417, %v405, 0.0
  %575 = vadd.xlane.f32.xlu0 %v574
  %v576 = vpop.xlane.xlu0 %575
  %v577 = vsel %vm417, %v406, 0.0
  %578 = vadd.xlane.f32.xlu0 %v577
  %v579 = vpop.xlane.xlu0 %578
  %v580 = vsel %vm417, %v407, 0.0
  %581 = vadd.xlane.f32.xlu0 %v580
  %v582 = vpop.xlane.xlu0 %581
  %v583 = vsel %vm417, %v408, 0.0
  %584 = vadd.xlane.f32.xlu0 %v583
  %v585 = vpop.xlane.xlu0 %584
  %v586 = vsel %vm417, %v409, 0.0
  %587 = vadd.xlane.f32.xlu0 %v586
  %v588 = vpop.xlane.xlu0 %587
  %v589 = vsel %vm417, %v410, 0.0
  %590 = vadd.xlane.f32.xlu0 %v589
  %v591 = vpop.xlane.xlu0 %590
  %v592 = vsel %vm417, %v411, 0.0
  %593 = vadd.xlane.f32.xlu0 %v592
  %v594 = vpop.xlane.xlu0 %593
  %v595 = vsel %vm417, %v412, 0.0
  %596 = vadd.xlane.f32.xlu0 %v595
  %v597 = vpop.xlane.xlu0 %596
  %v598 = vsel %vm417, %v413, 0.0
  %599 = vadd.xlane.f32.xlu0 %v598
  %v600 = vpop.xlane.xlu0 %599
  %v601 = vsel %vm417, %v414, 0.0
  %602 = vadd.xlane.f32.xlu0 %v601
  %v603 = vpop.xlane.xlu0 %602
  %v604 = vsel %vm417, %v415, 0.0
  %605 = vadd.xlane.f32.xlu0 %v604
  %v606 = vpop.xlane.xlu0 %605
  %v607 = vsel %vm417, %v416, 0.0
  %608 = vadd.xlane.f32.xlu0 %v607
  %v609 = vpop.xlane.xlu0 %608
  %v610 = vrcp.pop 24.0
  %v611 = vmul.f32 %v420, %v610
  %v612 = vmul.f32 %v423, %v610
  %v613 = vmul.f32 %v426, %v610
  %v614 = vmul.f32 %v429, %v610
  %v615 = vmul.f32 %v432, %v610
  %v616 = vmul.f32 %v435, %v610
  %v617 = vmul.f32 %v438, %v610
  %v618 = vmul.f32 %v441, %v610
  %v619 = vmul.f32 %v444, %v610
  %v620 = vmul.f32 %v447, %v610
  %v621 = vmul.f32 %v450, %v610
  %v622 = vmul.f32 %v453, %v610
  %v623 = vmul.f32 %v456, %v610
  %v624 = vmul.f32 %v459, %v610
  %v625 = vmul.f32 %v462, %v610
  %v626 = vmul.f32 %v465, %v610
  %v627 = vmul.f32 %v468, %v610
  %v628 = vmul.f32 %v471, %v610
  %v629 = vmul.f32 %v474, %v610
  %v630 = vmul.f32 %v477, %v610
  %v631 = vmul.f32 %v480, %v610
  %v632 = vmul.f32 %v483, %v610
  %v633 = vmul.f32 %v486, %v610
  %v634 = vmul.f32 %v489, %v610
  %v635 = vmul.f32 %v492, %v610
  %v636 = vmul.f32 %v495, %v610
  %v637 = vmul.f32 %v498, %v610
  %v638 = vmul.f32 %v501, %v610
  %v639 = vmul.f32 %v504, %v610
  %v640 = vmul.f32 %v507, %v610
  %v641 = vmul.f32 %v510, %v610
  %v642 = vmul.f32 %v513, %v610
  %v643 = vmul.f32 %v516, %v610
  %v644 = vmul.f32 %v519, %v610
  %v645 = vmul.f32 %v522, %v610
  %v646 = vmul.f32 %v525, %v610
  %v647 = vmul.f32 %v528, %v610
  %v648 = vmul.f32 %v531, %v610
  %v649 = vmul.f32 %v534, %v610
  %v650 = vmul.f32 %v537, %v610
  %v651 = vmul.f32 %v540, %v610
  %v652 = vmul.f32 %v543, %v610
  %v653 = vmul.f32 %v546, %v610
  %v654 = vmul.f32 %v549, %v610
  %v655 = vmul.f32 %v552, %v610
  %v656 = vmul.f32 %v555, %v610
  %v657 = vmul.f32 %v558, %v610
  %v658 = vmul.f32 %v561, %v610
  %v659 = vmul.f32 %v564, %v610
  %v660 = vmul.f32 %v567, %v610
  %v661 = vmul.f32 %v570, %v610
  %v662 = vmul.f32 %v573, %v610
  %v663 = vmul.f32 %v576, %v610
  %v664 = vmul.f32 %v579, %v610
  %v665 = vmul.f32 %v582, %v610
  %v666 = vmul.f32 %v585, %v610
  %v667 = vmul.f32 %v588, %v610
  %v668 = vmul.f32 %v591, %v610
  %v669 = vmul.f32 %v594, %v610
  %v670 = vmul.f32 %v597, %v610
  %v671 = vmul.f32 %v600, %v610
  %v672 = vmul.f32 %v603, %v610
  %v673 = vmul.f32 %v606, %v610
  %v674 = vmul.f32 %v609, %v610
  %v675 = vxor.u32 %v611, 2147483648
  %v676 = vxor.u32 %v612, 2147483648
  %v677 = vxor.u32 %v613, 2147483648
  %v678 = vxor.u32 %v614, 2147483648
  %v679 = vxor.u32 %v615, 2147483648
  %v680 = vxor.u32 %v616, 2147483648
  %v681 = vxor.u32 %v617, 2147483648
  %v682 = vxor.u32 %v618, 2147483648
  %v683 = vxor.u32 %v619, 2147483648
  %v684 = vxor.u32 %v620, 2147483648
  %v685 = vxor.u32 %v621, 2147483648
  %v686 = vxor.u32 %v622, 2147483648
  %v687 = vxor.u32 %v623, 2147483648
  %v688 = vxor.u32 %v624, 2147483648
  %v689 = vxor.u32 %v625, 2147483648
  %v690 = vxor.u32 %v626, 2147483648
  %v691 = vxor.u32 %v627, 2147483648
  %v692 = vxor.u32 %v628, 2147483648
  %v693 = vxor.u32 %v629, 2147483648
  %v694 = vxor.u32 %v630, 2147483648
  %v695 = vxor.u32 %v631, 2147483648
  %v696 = vxor.u32 %v632, 2147483648
  %v697 = vxor.u32 %v633, 2147483648
  %v698 = vxor.u32 %v634, 2147483648
  %v699 = vxor.u32 %v635, 2147483648
  %v700 = vxor.u32 %v636, 2147483648
  %v701 = vxor.u32 %v637, 2147483648
  %v702 = vxor.u32 %v638, 2147483648
  %v703 = vxor.u32 %v639, 2147483648
  %v704 = vxor.u32 %v640, 2147483648
  %v705 = vxor.u32 %v641, 2147483648
  %v706 = vxor.u32 %v642, 2147483648
  %v707 = vxor.u32 %v643, 2147483648
  %v708 = vxor.u32 %v644, 2147483648
  %v709 = vxor.u32 %v645, 2147483648
  %v710 = vxor.u32 %v646, 2147483648
  %v711 = vxor.u32 %v647, 2147483648
  %v712 = vxor.u32 %v648, 2147483648
  %v713 = vxor.u32 %v649, 2147483648
  %v714 = vxor.u32 %v650, 2147483648
  %v715 = vxor.u32 %v651, 2147483648
  %v716 = vxor.u32 %v652, 2147483648
  %v717 = vxor.u32 %v653, 2147483648
  %v718 = vxor.u32 %v654, 2147483648
  %v719 = vxor.u32 %v655, 2147483648
  %v720 = vxor.u32 %v656, 2147483648
  %v721 = vxor.u32 %v657, 2147483648
  %v722 = vxor.u32 %v658, 2147483648
  %v723 = vxor.u32 %v659, 2147483648
  %v724 = vxor.u32 %v660, 2147483648
  %v725 = vxor.u32 %v661, 2147483648
  %v726 = vxor.u32 %v662, 2147483648
  %v727 = vxor.u32 %v663, 2147483648
  %v728 = vxor.u32 %v664, 2147483648
  %v729 = vxor.u32 %v665, 2147483648
  %v730 = vxor.u32 %v666, 2147483648
  %v731 = vxor.u32 %v667, 2147483648
  %v732 = vxor.u32 %v668, 2147483648
  %v733 = vxor.u32 %v669, 2147483648
  %v734 = vxor.u32 %v670, 2147483648
  %v735 = vxor.u32 %v671, 2147483648
  %v736 = vxor.u32 %v672, 2147483648
  %v737 = vxor.u32 %v673, 2147483648
  %v738 = vxor.u32 %v674, 2147483648
  %v739 = vmul.f32 %v675, 1.442695
  %v740 = vpow.pop %v739
  %v741 = vmul.f32 %v676, 1.442695
  %v742 = vpow.pop %v741
  %v743 = vmul.f32 %v677, 1.442695
  %v744 = vpow.pop %v743
  %v745 = vmul.f32 %v678, 1.442695
  %v746 = vpow.pop %v745
  %v747 = vmul.f32 %v679, 1.442695
  %v748 = vpow.pop %v747
  %v749 = vmul.f32 %v680, 1.442695
  %v750 = vpow.pop %v749
  %v751 = vmul.f32 %v681, 1.442695
  %v752 = vpow.pop %v751
  %v753 = vmul.f32 %v682, 1.442695
  %v754 = vpow.pop %v753
  %v755 = vmul.f32 %v683, 1.442695
  %v756 = vpow.pop %v755
  %v757 = vmul.f32 %v684, 1.442695
  %v758 = vpow.pop %v757
  %v759 = vmul.f32 %v685, 1.442695
  %v760 = vpow.pop %v759
  %v761 = vmul.f32 %v686, 1.442695
  %v762 = vpow.pop %v761
  %v763 = vmul.f32 %v687, 1.442695
  %v764 = vpow.pop %v763
  %v765 = vmul.f32 %v688, 1.442695
  %v766 = vpow.pop %v765
  %v767 = vmul.f32 %v689, 1.442695
  %v768 = vpow.pop %v767
  %v769 = vmul.f32 %v690, 1.442695
  %v770 = vpow.pop %v769
  %v771 = vmul.f32 %v691, 1.442695
  %v772 = vpow.pop %v771
  %v773 = vmul.f32 %v692, 1.442695
  %v774 = vpow.pop %v773
  %v775 = vmul.f32 %v693, 1.442695
  %v776 = vpow.pop %v775
  %v777 = vmul.f32 %v694, 1.442695
  %v778 = vpow.pop %v777
  %v779 = vmul.f32 %v695, 1.442695
  %v780 = vpow.pop %v779
  %v781 = vmul.f32 %v696, 1.442695
  %v782 = vpow.pop %v781
  %v783 = vmul.f32 %v697, 1.442695
  %v784 = vpow.pop %v783
  %v785 = vmul.f32 %v698, 1.442695
  %v786 = vpow.pop %v785
  %v787 = vmul.f32 %v699, 1.442695
  %v788 = vpow.pop %v787
  %v789 = vmul.f32 %v700, 1.442695
  %v790 = vpow.pop %v789
  %v791 = vmul.f32 %v701, 1.442695
  %v792 = vpow.pop %v791
  %v793 = vmul.f32 %v702, 1.442695
  %v794 = vpow.pop %v793
  %v795 = vmul.f32 %v703, 1.442695
  %v796 = vpow.pop %v795
  %v797 = vmul.f32 %v704, 1.442695
  %v798 = vpow.pop %v797
  %v799 = vmul.f32 %v705, 1.442695
  %v800 = vpow.pop %v799
  %v801 = vmul.f32 %v706, 1.442695
  %v802 = vpow.pop %v801
  %v803 = vmul.f32 %v707, 1.442695
  %v804 = vpow.pop %v803
  %v805 = vmul.f32 %v708, 1.442695
  %v806 = vpow.pop %v805
  %v807 = vmul.f32 %v709, 1.442695
  %v808 = vpow.pop %v807
  %v809 = vmul.f32 %v710, 1.442695
  %v810 = vpow.pop %v809
  %v811 = vmul.f32 %v711, 1.442695
  %v812 = vpow.pop %v811
  %v813 = vmul.f32 %v712, 1.442695
  %v814 = vpow.pop %v813
  %v815 = vmul.f32 %v713, 1.442695
  %v816 = vpow.pop %v815
  %v817 = vmul.f32 %v714, 1.442695
  %v818 = vpow.pop %v817
  %v819 = vmul.f32 %v715, 1.442695
  %v820 = vpow.pop %v819
  %v821 = vmul.f32 %v716, 1.442695
  %v822 = vpow.pop %v821
  %v823 = vmul.f32 %v717, 1.442695
  %v824 = vpow.pop %v823
  %v825 = vmul.f32 %v718, 1.442695
  %v826 = vpow.pop %v825
  %v827 = vmul.f32 %v719, 1.442695
  %v828 = vpow.pop %v827
  %v829 = vmul.f32 %v720, 1.442695
  %v830 = vpow.pop %v829
  %v831 = vmul.f32 %v721, 1.442695
  %v832 = vpow.pop %v831
  %v833 = vmul.f32 %v722, 1.442695
  %v834 = vpow.pop %v833
  %v835 = vmul.f32 %v723, 1.442695
  %v836 = vpow.pop %v835
  %v837 = vmul.f32 %v724, 1.442695
  %v838 = vpow.pop %v837
  %v839 = vmul.f32 %v725, 1.442695
  %v840 = vpow.pop %v839
  %v841 = vmul.f32 %v726, 1.442695
  %v842 = vpow.pop %v841
  %v843 = vmul.f32 %v727, 1.442695
  %v844 = vpow.pop %v843
  %v845 = vmul.f32 %v728, 1.442695
  %v846 = vpow.pop %v845
  %v847 = vmul.f32 %v729, 1.442695
  %v848 = vpow.pop %v847
  %v849 = vmul.f32 %v730, 1.442695
  %v850 = vpow.pop %v849
  %v851 = vmul.f32 %v731, 1.442695
  %v852 = vpow.pop %v851
  %v853 = vmul.f32 %v732, 1.442695
  %v854 = vpow.pop %v853
  %v855 = vmul.f32 %v733, 1.442695
  %v856 = vpow.pop %v855
  %v857 = vmul.f32 %v734, 1.442695
  %v858 = vpow.pop %v857
  %v859 = vmul.f32 %v735, 1.442695
  %v860 = vpow.pop %v859
  %v861 = vmul.f32 %v736, 1.442695
  %v862 = vpow.pop %v861
  %v863 = vmul.f32 %v737, 1.442695
  %v864 = vpow.pop %v863
  %v865 = vmul.f32 %v738, 1.442695
  %v866 = vpow.pop %v865
  %v867 = vadd.f32 %v740, 1.0
  %v868 = vadd.f32 %v742, 1.0
  %v869 = vadd.f32 %v744, 1.0
  %v870 = vadd.f32 %v746, 1.0
  %v871 = vadd.f32 %v748, 1.0
  %v872 = vadd.f32 %v750, 1.0
  %v873 = vadd.f32 %v752, 1.0
  %v874 = vadd.f32 %v754, 1.0
  %v875 = vadd.f32 %v756, 1.0
  %v876 = vadd.f32 %v758, 1.0
  %v877 = vadd.f32 %v760, 1.0
  %v878 = vadd.f32 %v762, 1.0
  %v879 = vadd.f32 %v764, 1.0
  %v880 = vadd.f32 %v766, 1.0
  %v881 = vadd.f32 %v768, 1.0
  %v882 = vadd.f32 %v770, 1.0
  %v883 = vadd.f32 %v772, 1.0
  %v884 = vadd.f32 %v774, 1.0
  %v885 = vadd.f32 %v776, 1.0
  %v886 = vadd.f32 %v778, 1.0
  %v887 = vadd.f32 %v780, 1.0
  %v888 = vadd.f32 %v782, 1.0
  %v889 = vadd.f32 %v784, 1.0
  %v890 = vadd.f32 %v786, 1.0
  %v891 = vadd.f32 %v788, 1.0
  %v892 = vadd.f32 %v790, 1.0
  %v893 = vadd.f32 %v792, 1.0
  %v894 = vadd.f32 %v794, 1.0
  %v895 = vadd.f32 %v796, 1.0
  %v896 = vadd.f32 %v798, 1.0
  %v897 = vadd.f32 %v800, 1.0
  %v898 = vadd.f32 %v802, 1.0
  %v899 = vadd.f32 %v804, 1.0
  %v900 = vadd.f32 %v806, 1.0
  %v901 = vadd.f32 %v808, 1.0
  %v902 = vadd.f32 %v810, 1.0
  %v903 = vadd.f32 %v812, 1.0
  %v904 = vadd.f32 %v814, 1.0
  %v905 = vadd.f32 %v816, 1.0
  %v906 = vadd.f32 %v818, 1.0
  %v907 = vadd.f32 %v820, 1.0
  %v908 = vadd.f32 %v822, 1.0
  %v909 = vadd.f32 %v824, 1.0
  %v910 = vadd.f32 %v826, 1.0
  %v911 = vadd.f32 %v828, 1.0
  %v912 = vadd.f32 %v830, 1.0
  %v913 = vadd.f32 %v832, 1.0
  %v914 = vadd.f32 %v834, 1.0
  %v915 = vadd.f32 %v836, 1.0
  %v916 = vadd.f32 %v838, 1.0
  %v917 = vadd.f32 %v840, 1.0
  %v918 = vadd.f32 %v842, 1.0
  %v919 = vadd.f32 %v844, 1.0
  %v920 = vadd.f32 %v846, 1.0
  %v921 = vadd.f32 %v848, 1.0
  %v922 = vadd.f32 %v850, 1.0
  %v923 = vadd.f32 %v852, 1.0
  %v924 = vadd.f32 %v854, 1.0
  %v925 = vadd.f32 %v856, 1.0
  %v926 = vadd.f32 %v858, 1.0
  %v927 = vadd.f32 %v860, 1.0
  %v928 = vadd.f32 %v862, 1.0
  %v929 = vadd.f32 %v864, 1.0
  %v930 = vadd.f32 %v866, 1.0
  %v931 = vrcp.pop %v867
  %v932 = vmul.f32 1.0, %v931
  %v933 = vrcp.pop %v868
  %v934 = vmul.f32 1.0, %v933
  %v935 = vrcp.pop %v869
  %v936 = vmul.f32 1.0, %v935
  %v937 = vrcp.pop %v870
  %v938 = vmul.f32 1.0, %v937
  %v939 = vrcp.pop %v871
  %v940 = vmul.f32 1.0, %v939
  %v941 = vrcp.pop %v872
  %v942 = vmul.f32 1.0, %v941
  %v943 = vrcp.pop %v873
  %v944 = vmul.f32 1.0, %v943
  %v945 = vrcp.pop %v874
  %v946 = vmul.f32 1.0, %v945
  %v947 = vrcp.pop %v875
  %v948 = vmul.f32 1.0, %v947
  %v949 = vrcp.pop %v876
  %v950 = vmul.f32 1.0, %v949
  %v951 = vrcp.pop %v877
  %v952 = vmul.f32 1.0, %v951
  %v953 = vrcp.pop %v878
  %v954 = vmul.f32 1.0, %v953
  %v955 = vrcp.pop %v879
  %v956 = vmul.f32 1.0, %v955
  %v957 = vrcp.pop %v880
  %v958 = vmul.f32 1.0, %v957
  %v959 = vrcp.pop %v881
  %v960 = vmul.f32 1.0, %v959
  %v961 = vrcp.pop %v882
  %v962 = vmul.f32 1.0, %v961
  %v963 = vrcp.pop %v883
  %v964 = vmul.f32 1.0, %v963
  %v965 = vrcp.pop %v884
  %v966 = vmul.f32 1.0, %v965
  %v967 = vrcp.pop %v885
  %v968 = vmul.f32 1.0, %v967
  %v969 = vrcp.pop %v886
  %v970 = vmul.f32 1.0, %v969
  %v971 = vrcp.pop %v887
  %v972 = vmul.f32 1.0, %v971
  %v973 = vrcp.pop %v888
  %v974 = vmul.f32 1.0, %v973
  %v975 = vrcp.pop %v889
  %v976 = vmul.f32 1.0, %v975
  %v977 = vrcp.pop %v890
  %v978 = vmul.f32 1.0, %v977
  %v979 = vrcp.pop %v891
  %v980 = vmul.f32 1.0, %v979
  %v981 = vrcp.pop %v892
  %v982 = vmul.f32 1.0, %v981
  %v983 = vrcp.pop %v893
  %v984 = vmul.f32 1.0, %v983
  %v985 = vrcp.pop %v894
  %v986 = vmul.f32 1.0, %v985
  %v987 = vrcp.pop %v895
  %v988 = vmul.f32 1.0, %v987
  %v989 = vrcp.pop %v896
  %v990 = vmul.f32 1.0, %v989
  %v991 = vrcp.pop %v897
  %v992 = vmul.f32 1.0, %v991
  %v993 = vrcp.pop %v898
  %v994 = vmul.f32 1.0, %v993
  %v995 = vrcp.pop %v899
  %v996 = vmul.f32 1.0, %v995
  %v997 = vrcp.pop %v900
  %v998 = vmul.f32 1.0, %v997
  %v999 = vrcp.pop %v901
  %v1000 = vmul.f32 1.0, %v999
  %v1001 = vrcp.pop %v902
  %v1002 = vmul.f32 1.0, %v1001
  %v1003 = vrcp.pop %v903
  %v1004 = vmul.f32 1.0, %v1003
  %v1005 = vrcp.pop %v904
  %v1006 = vmul.f32 1.0, %v1005
  %v1007 = vrcp.pop %v905
  %v1008 = vmul.f32 1.0, %v1007
  %v1009 = vrcp.pop %v906
  %v1010 = vmul.f32 1.0, %v1009
  %v1011 = vrcp.pop %v907
  %v1012 = vmul.f32 1.0, %v1011
  %v1013 = vrcp.pop %v908
  %v1014 = vmul.f32 1.0, %v1013
  %v1015 = vrcp.pop %v909
  %v1016 = vmul.f32 1.0, %v1015
  %v1017 = vrcp.pop %v910
  %v1018 = vmul.f32 1.0, %v1017
  %v1019 = vrcp.pop %v911
  %v1020 = vmul.f32 1.0, %v1019
  %v1021 = vrcp.pop %v912
  %v1022 = vmul.f32 1.0, %v1021
  %v1023 = vrcp.pop %v913
  %v1024 = vmul.f32 1.0, %v1023
  %v1025 = vrcp.pop %v914
  %v1026 = vmul.f32 1.0, %v1025
  %v1027 = vrcp.pop %v915
  %v1028 = vmul.f32 1.0, %v1027
  %v1029 = vrcp.pop %v916
  %v1030 = vmul.f32 1.0, %v1029
  %v1031 = vrcp.pop %v917
  %v1032 = vmul.f32 1.0, %v1031
  %v1033 = vrcp.pop %v918
  %v1034 = vmul.f32 1.0, %v1033
  %v1035 = vrcp.pop %v919
  %v1036 = vmul.f32 1.0, %v1035
  %v1037 = vrcp.pop %v920
  %v1038 = vmul.f32 1.0, %v1037
  %v1039 = vrcp.pop %v921
  %v1040 = vmul.f32 1.0, %v1039
  %v1041 = vrcp.pop %v922
  %v1042 = vmul.f32 1.0, %v1041
  %v1043 = vrcp.pop %v923
  %v1044 = vmul.f32 1.0, %v1043
  %v1045 = vrcp.pop %v924
  %v1046 = vmul.f32 1.0, %v1045
  %v1047 = vrcp.pop %v925
  %v1048 = vmul.f32 1.0, %v1047
  %v1049 = vrcp.pop %v926
  %v1050 = vmul.f32 1.0, %v1049
  %v1051 = vrcp.pop %v927
  %v1052 = vmul.f32 1.0, %v1051
  %v1053 = vrcp.pop %v928
  %v1054 = vmul.f32 1.0, %v1053
  %v1055 = vrcp.pop %v929
  %v1056 = vmul.f32 1.0, %v1055
  %v1057 = vrcp.pop %v930
  %v1058 = vmul.f32 1.0, %v1057
  %v1059 = vmul.f32 %v161, %v932
  %v1060 = vmul.f32 %v162, %v934
  %v1061 = vmul.f32 %v163, %v936
  %v1062 = vmul.f32 %v164, %v938
  %v1063 = vmul.f32 %v165, %v940
  %v1064 = vmul.f32 %v166, %v942
  %v1065 = vmul.f32 %v167, %v944
  %v1066 = vmul.f32 %v168, %v946
  %v1067 = vmul.f32 %v169, %v948
  %v1068 = vmul.f32 %v170, %v950
  %v1069 = vmul.f32 %v171, %v952
  %v1070 = vmul.f32 %v172, %v954
  %v1071 = vmul.f32 %v173, %v956
  %v1072 = vmul.f32 %v174, %v958
  %v1073 = vmul.f32 %v175, %v960
  %v1074 = vmul.f32 %v176, %v962
  %v1075 = vmul.f32 %v177, %v964
  %v1076 = vmul.f32 %v178, %v966
  %v1077 = vmul.f32 %v179, %v968
  %v1078 = vmul.f32 %v180, %v970
  %v1079 = vmul.f32 %v181, %v972
  %v1080 = vmul.f32 %v182, %v974
  %v1081 = vmul.f32 %v183, %v976
  %v1082 = vmul.f32 %v184, %v978
  %v1083 = vmul.f32 %v185, %v980
  %v1084 = vmul.f32 %v186, %v982
  %v1085 = vmul.f32 %v187, %v984
  %v1086 = vmul.f32 %v188, %v986
  %v1087 = vmul.f32 %v189, %v988
  %v1088 = vmul.f32 %v190, %v990
  %v1089 = vmul.f32 %v191, %v992
  %v1090 = vmul.f32 %v192, %v994
  %v1091 = vmul.f32 %v193, %v996
  %v1092 = vmul.f32 %v194, %v998
  %v1093 = vmul.f32 %v195, %v1000
  %v1094 = vmul.f32 %v196, %v1002
  %v1095 = vmul.f32 %v197, %v1004
  %v1096 = vmul.f32 %v198, %v1006
  %v1097 = vmul.f32 %v199, %v1008
  %v1098 = vmul.f32 %v200, %v1010
  %v1099 = vmul.f32 %v201, %v1012
  %v1100 = vmul.f32 %v202, %v1014
  %v1101 = vmul.f32 %v203, %v1016
  %v1102 = vmul.f32 %v204, %v1018
  %v1103 = vmul.f32 %v205, %v1020
  %v1104 = vmul.f32 %v206, %v1022
  %v1105 = vmul.f32 %v207, %v1024
  %v1106 = vmul.f32 %v208, %v1026
  %v1107 = vmul.f32 %v209, %v1028
  %v1108 = vmul.f32 %v210, %v1030
  %v1109 = vmul.f32 %v211, %v1032
  %v1110 = vmul.f32 %v212, %v1034
  %v1111 = vmul.f32 %v213, %v1036
  %v1112 = vmul.f32 %v214, %v1038
  %v1113 = vmul.f32 %v215, %v1040
  %v1114 = vmul.f32 %v216, %v1042
  %v1115 = vmul.f32 %v217, %v1044
  %v1116 = vmul.f32 %v218, %v1046
  %v1117 = vmul.f32 %v219, %v1048
  %v1118 = vmul.f32 %v220, %v1050
  %v1119 = vmul.f32 %v221, %v1052
  %v1120 = vmul.f32 %v222, %v1054
  %v1121 = vmul.f32 %v223, %v1056
  %v1122 = vmul.f32 %v224, %v1058
  %v1123 = vpack.c.bf16 %v1060, %v1059
  %v1124 = vpack.c.bf16 %v1062, %v1061
  %v1125 = vpack.c.bf16 %v1064, %v1063
  %v1126 = vpack.c.bf16 %v1066, %v1065
  %v1127 = vpack.c.bf16 %v1068, %v1067
  %v1128 = vpack.c.bf16 %v1070, %v1069
  %v1129 = vpack.c.bf16 %v1072, %v1071
  %v1130 = vpack.c.bf16 %v1074, %v1073
  %v1131 = vpack.c.bf16 %v1076, %v1075
  %v1132 = vpack.c.bf16 %v1078, %v1077
  %v1133 = vpack.c.bf16 %v1080, %v1079
  %v1134 = vpack.c.bf16 %v1082, %v1081
  %v1135 = vpack.c.bf16 %v1084, %v1083
  %v1136 = vpack.c.bf16 %v1086, %v1085
  %v1137 = vpack.c.bf16 %v1088, %v1087
  %v1138 = vpack.c.bf16 %v1090, %v1089
  %v1139 = vpack.c.bf16 %v1092, %v1091
  %v1140 = vpack.c.bf16 %v1094, %v1093
  %v1141 = vpack.c.bf16 %v1096, %v1095
  %v1142 = vpack.c.bf16 %v1098, %v1097
  %v1143 = vpack.c.bf16 %v1100, %v1099
  %v1144 = vpack.c.bf16 %v1102, %v1101
  %v1145 = vpack.c.bf16 %v1104, %v1103
  %v1146 = vpack.c.bf16 %v1106, %v1105
  %v1147 = vpack.c.bf16 %v1108, %v1107
  %v1148 = vpack.c.bf16 %v1110, %v1109
  %v1149 = vpack.c.bf16 %v1112, %v1111
  %v1150 = vpack.c.bf16 %v1114, %v1113
  %v1151 = vpack.c.bf16 %v1116, %v1115
  %v1152 = vpack.c.bf16 %v1118, %v1117
  %v1153 = vpack.c.bf16 %v1120, %v1119
  %v1154 = vpack.c.bf16 %v1122, %v1121
  %v1155 = vmul.f32 %v225, %v932
  %v1156 = vmul.f32 %v226, %v934
  %v1157 = vmul.f32 %v227, %v936
  %v1158 = vmul.f32 %v228, %v938
  %v1159 = vmul.f32 %v229, %v940
  %v1160 = vmul.f32 %v230, %v942
  %v1161 = vmul.f32 %v231, %v944
  %v1162 = vmul.f32 %v232, %v946
  %v1163 = vmul.f32 %v233, %v948
  %v1164 = vmul.f32 %v234, %v950
  %v1165 = vmul.f32 %v235, %v952
  %v1166 = vmul.f32 %v236, %v954
  %v1167 = vmul.f32 %v237, %v956
  %v1168 = vmul.f32 %v238, %v958
  %v1169 = vmul.f32 %v239, %v960
  %v1170 = vmul.f32 %v240, %v962
  %v1171 = vmul.f32 %v241, %v964
  %v1172 = vmul.f32 %v242, %v966
  %v1173 = vmul.f32 %v243, %v968
  %v1174 = vmul.f32 %v244, %v970
  %v1175 = vmul.f32 %v245, %v972
  %v1176 = vmul.f32 %v246, %v974
  %v1177 = vmul.f32 %v247, %v976
  %v1178 = vmul.f32 %v248, %v978
  %v1179 = vmul.f32 %v249, %v980
  %v1180 = vmul.f32 %v250, %v982
  %v1181 = vmul.f32 %v251, %v984
  %v1182 = vmul.f32 %v252, %v986
  %v1183 = vmul.f32 %v253, %v988
  %v1184 = vmul.f32 %v254, %v990
  %v1185 = vmul.f32 %v255, %v992
  %v1186 = vmul.f32 %v256, %v994
  %v1187 = vmul.f32 %v257, %v996
  %v1188 = vmul.f32 %v258, %v998
  %v1189 = vmul.f32 %v259, %v1000
  %v1190 = vmul.f32 %v260, %v1002
  %v1191 = vmul.f32 %v261, %v1004
  %v1192 = vmul.f32 %v262, %v1006
  %v1193 = vmul.f32 %v263, %v1008
  %v1194 = vmul.f32 %v264, %v1010
  %v1195 = vmul.f32 %v265, %v1012
  %v1196 = vmul.f32 %v266, %v1014
  %v1197 = vmul.f32 %v267, %v1016
  %v1198 = vmul.f32 %v268, %v1018
  %v1199 = vmul.f32 %v269, %v1020
  %v1200 = vmul.f32 %v270, %v1022
  %v1201 = vmul.f32 %v271, %v1024
  %v1202 = vmul.f32 %v272, %v1026
  %v1203 = vmul.f32 %v273, %v1028
  %v1204 = vmul.f32 %v274, %v1030
  %v1205 = vmul.f32 %v275, %v1032
  %v1206 = vmul.f32 %v276, %v1034
  %v1207 = vmul.f32 %v277, %v1036
  %v1208 = vmul.f32 %v278, %v1038
  %v1209 = vmul.f32 %v279, %v1040
  %v1210 = vmul.f32 %v280, %v1042
  %v1211 = vmul.f32 %v281, %v1044
  %v1212 = vmul.f32 %v282, %v1046
  %v1213 = vmul.f32 %v283, %v1048
  %v1214 = vmul.f32 %v284, %v1050
  %v1215 = vmul.f32 %v285, %v1052
  %v1216 = vmul.f32 %v286, %v1054
  %v1217 = vmul.f32 %v287, %v1056
  %v1218 = vmul.f32 %v288, %v1058
  %v1219 = vpack.c.bf16 %v1156, %v1155
  %v1220 = vpack.c.bf16 %v1158, %v1157
  %v1221 = vpack.c.bf16 %v1160, %v1159
  %v1222 = vpack.c.bf16 %v1162, %v1161
  %v1223 = vpack.c.bf16 %v1164, %v1163
  %v1224 = vpack.c.bf16 %v1166, %v1165
  %v1225 = vpack.c.bf16 %v1168, %v1167
  %v1226 = vpack.c.bf16 %v1170, %v1169
  %v1227 = vpack.c.bf16 %v1172, %v1171
  %v1228 = vpack.c.bf16 %v1174, %v1173
  %v1229 = vpack.c.bf16 %v1176, %v1175
  %v1230 = vpack.c.bf16 %v1178, %v1177
  %v1231 = vpack.c.bf16 %v1180, %v1179
  %v1232 = vpack.c.bf16 %v1182, %v1181
  %v1233 = vpack.c.bf16 %v1184, %v1183
  %v1234 = vpack.c.bf16 %v1186, %v1185
  %v1235 = vpack.c.bf16 %v1188, %v1187
  %v1236 = vpack.c.bf16 %v1190, %v1189
  %v1237 = vpack.c.bf16 %v1192, %v1191
  %v1238 = vpack.c.bf16 %v1194, %v1193
  %v1239 = vpack.c.bf16 %v1196, %v1195
  %v1240 = vpack.c.bf16 %v1198, %v1197
  %v1241 = vpack.c.bf16 %v1200, %v1199
  %v1242 = vpack.c.bf16 %v1202, %v1201
  %v1243 = vpack.c.bf16 %v1204, %v1203
  %v1244 = vpack.c.bf16 %v1206, %v1205
  %v1245 = vpack.c.bf16 %v1208, %v1207
  %v1246 = vpack.c.bf16 %v1210, %v1209
  %v1247 = vpack.c.bf16 %v1212, %v1211
  %v1248 = vpack.c.bf16 %v1214, %v1213
  %v1249 = vpack.c.bf16 %v1216, %v1215
  %v1250 = vpack.c.bf16 %v1218, %v1217
  %v1283 = vunpack.c.l.b16 %v1123
  %v1284 = vunpack.c.h.b16 %v1123
  %v1285 = vunpack.c.l.b16 %v1124
  %v1286 = vunpack.c.h.b16 %v1124
  %v1287 = vunpack.c.l.b16 %v1125
  %v1288 = vunpack.c.h.b16 %v1125
  %v1289 = vunpack.c.l.b16 %v1126
  %v1290 = vunpack.c.h.b16 %v1126
  %v1291 = vunpack.c.l.b16 %v1127
  %v1292 = vunpack.c.h.b16 %v1127
  %v1293 = vunpack.c.l.b16 %v1128
  %v1294 = vunpack.c.h.b16 %v1128
  %v1295 = vunpack.c.l.b16 %v1129
  %v1296 = vunpack.c.h.b16 %v1129
  %v1297 = vunpack.c.l.b16 %v1130
  %v1298 = vunpack.c.h.b16 %v1130
  %v1299 = vunpack.c.l.b16 %v1131
  %v1300 = vunpack.c.h.b16 %v1131
  %v1301 = vunpack.c.l.b16 %v1132
  %v1302 = vunpack.c.h.b16 %v1132
  %v1303 = vunpack.c.l.b16 %v1133
  %v1304 = vunpack.c.h.b16 %v1133
  %v1305 = vunpack.c.l.b16 %v1134
  %v1306 = vunpack.c.h.b16 %v1134
  %v1307 = vunpack.c.l.b16 %v1135
  %v1308 = vunpack.c.h.b16 %v1135
  %v1309 = vunpack.c.l.b16 %v1136
  %v1310 = vunpack.c.h.b16 %v1136
  %v1311 = vunpack.c.l.b16 %v1137
  %v1312 = vunpack.c.h.b16 %v1137
  %v1313 = vunpack.c.l.b16 %v1138
  %v1314 = vunpack.c.h.b16 %v1138
  %v1315 = vunpack.c.l.b16 %v1139
  %v1316 = vunpack.c.h.b16 %v1139
  %v1317 = vunpack.c.l.b16 %v1140
  %v1318 = vunpack.c.h.b16 %v1140
  %v1319 = vunpack.c.l.b16 %v1141
  %v1320 = vunpack.c.h.b16 %v1141
  %v1321 = vunpack.c.l.b16 %v1142
  %v1322 = vunpack.c.h.b16 %v1142
  %v1323 = vunpack.c.l.b16 %v1143
  %v1324 = vunpack.c.h.b16 %v1143
  %v1325 = vunpack.c.l.b16 %v1144
  %v1326 = vunpack.c.h.b16 %v1144
  %v1327 = vunpack.c.l.b16 %v1145
  %v1328 = vunpack.c.h.b16 %v1145
  %v1329 = vunpack.c.l.b16 %v1146
  %v1330 = vunpack.c.h.b16 %v1146
  %v1331 = vunpack.c.l.b16 %v1147
  %v1332 = vunpack.c.h.b16 %v1147
  %v1333 = vunpack.c.l.b16 %v1148
  %v1334 = vunpack.c.h.b16 %v1148
  %v1335 = vunpack.c.l.b16 %v1149
  %v1336 = vunpack.c.h.b16 %v1149
  %v1337 = vunpack.c.l.b16 %v1150
  %v1338 = vunpack.c.h.b16 %v1150
  %v1339 = vunpack.c.l.b16 %v1151
  %v1340 = vunpack.c.h.b16 %v1151
  %v1341 = vunpack.c.l.b16 %v1152
  %v1342 = vunpack.c.h.b16 %v1152
  %v1343 = vunpack.c.l.b16 %v1153
  %v1344 = vunpack.c.h.b16 %v1153
  %v1345 = vunpack.c.l.b16 %v1154
  %v1346 = vunpack.c.h.b16 %v1154
  %v1347 = vpack.c.b16 %v1283, %v1283
  %v1348 = vpack.c.b16 %v1284, %v1284
  %v1349 = vpack.c.b16 %v1285, %v1285
  %v1350 = vpack.c.b16 %v1286, %v1286
  %v1351 = vpack.c.b16 %v1287, %v1287
  %v1352 = vpack.c.b16 %v1288, %v1288
  %v1353 = vpack.c.b16 %v1289, %v1289
  %v1354 = vpack.c.b16 %v1290, %v1290
  %v1355 = vpack.c.b16 %v1291, %v1291
  %v1356 = vpack.c.b16 %v1292, %v1292
  %v1357 = vpack.c.b16 %v1293, %v1293
  %v1358 = vpack.c.b16 %v1294, %v1294
  %v1359 = vpack.c.b16 %v1295, %v1295
  %v1360 = vpack.c.b16 %v1296, %v1296
  %v1361 = vpack.c.b16 %v1297, %v1297
  %v1362 = vpack.c.b16 %v1298, %v1298
  %v1363 = vpack.c.b16 %v1299, %v1299
  %v1364 = vpack.c.b16 %v1300, %v1300
  %v1365 = vpack.c.b16 %v1301, %v1301
  %v1366 = vpack.c.b16 %v1302, %v1302
  %v1367 = vpack.c.b16 %v1303, %v1303
  %v1368 = vpack.c.b16 %v1304, %v1304
  %v1369 = vpack.c.b16 %v1305, %v1305
  %v1370 = vpack.c.b16 %v1306, %v1306
  %v1371 = vpack.c.b16 %v1307, %v1307
  %v1372 = vpack.c.b16 %v1308, %v1308
  %v1373 = vpack.c.b16 %v1309, %v1309
  %v1374 = vpack.c.b16 %v1310, %v1310
  %v1375 = vpack.c.b16 %v1311, %v1311
  %v1376 = vpack.c.b16 %v1312, %v1312
  %v1377 = vpack.c.b16 %v1313, %v1313
  %v1378 = vpack.c.b16 %v1314, %v1314
  %v1379 = vpack.c.b16 %v1315, %v1315
  %v1380 = vpack.c.b16 %v1316, %v1316
  %v1381 = vpack.c.b16 %v1317, %v1317
  %v1382 = vpack.c.b16 %v1318, %v1318
  %v1383 = vpack.c.b16 %v1319, %v1319
  %v1384 = vpack.c.b16 %v1320, %v1320
  %v1385 = vpack.c.b16 %v1321, %v1321
  %v1386 = vpack.c.b16 %v1322, %v1322
  %v1387 = vpack.c.b16 %v1323, %v1323
  %v1388 = vpack.c.b16 %v1324, %v1324
  %v1389 = vpack.c.b16 %v1325, %v1325
  %v1390 = vpack.c.b16 %v1326, %v1326
  %v1391 = vpack.c.b16 %v1327, %v1327
  %v1392 = vpack.c.b16 %v1328, %v1328
  %v1393 = vpack.c.b16 %v1329, %v1329
  %v1394 = vpack.c.b16 %v1330, %v1330
  %v1395 = vpack.c.b16 %v1331, %v1331
  %v1396 = vpack.c.b16 %v1332, %v1332
  %v1397 = vpack.c.b16 %v1333, %v1333
  %v1398 = vpack.c.b16 %v1334, %v1334
  %v1399 = vpack.c.b16 %v1335, %v1335
  %v1400 = vpack.c.b16 %v1336, %v1336
  %v1401 = vpack.c.b16 %v1337, %v1337
  %v1402 = vpack.c.b16 %v1338, %v1338
  %v1403 = vpack.c.b16 %v1339, %v1339
  %v1404 = vpack.c.b16 %v1340, %v1340
  %v1405 = vpack.c.b16 %v1341, %v1341
  %v1406 = vpack.c.b16 %v1342, %v1342
  %v1407 = vpack.c.b16 %v1343, %v1343
  %v1408 = vpack.c.b16 %v1344, %v1344
  %v1409 = vpack.c.b16 %v1345, %v1345
  %v1410 = vpack.c.b16 %v1346, %v1346
  %vm1475 = vcmask 191488
  %1476 = vst.msk [vmem:[%s9] sm:$0xf] %vm1475, %v1347
  %1477 = vst.msk [vmem:[%s9 + $0x4] sm:$0xf] %vm1475, %v1348
  %1478 = vst.msk [vmem:[%s9 + $0x8] sm:$0xf] %vm1475, %v1349
  %1479 = vst.msk [vmem:[%s9 + $0xc] sm:$0xf] %vm1475, %v1350
  %1480 = vst.msk [vmem:[%s9 + $0x10] sm:$0xf] %vm1475, %v1351
  %1481 = vst.msk [vmem:[%s9 + $0x14] sm:$0xf] %vm1475, %v1352
  %1482 = vst.msk [vmem:[%s9 + $0x18] sm:$0xf] %vm1475, %v1353
  %1483 = vst.msk [vmem:[%s9 + $0x1c] sm:$0xf] %vm1475, %v1354
  %1484 = vst.msk [vmem:[%s9 + $0x20] sm:$0xf] %vm1475, %v1355
  %1485 = vst.msk [vmem:[%s9 + $0x24] sm:$0xf] %vm1475, %v1356
  %1486 = vst.msk [vmem:[%s9 + $0x28] sm:$0xf] %vm1475, %v1357
  %1487 = vst.msk [vmem:[%s9 + $0x2c] sm:$0xf] %vm1475, %v1358
  %1488 = vst.msk [vmem:[%s9 + $0x30] sm:$0xf] %vm1475, %v1359
  %1489 = vst.msk [vmem:[%s9 + $0x34] sm:$0xf] %vm1475, %v1360
  %1490 = vst.msk [vmem:[%s9 + $0x38] sm:$0xf] %vm1475, %v1361
  %1491 = vst.msk [vmem:[%s9 + $0x3c] sm:$0xf] %vm1475, %v1362
  %1492 = vst.msk [vmem:[%s9 + $0x40] sm:$0xf] %vm1475, %v1363
  %1493 = vst.msk [vmem:[%s9 + $0x44] sm:$0xf] %vm1475, %v1364
  %1494 = vst.msk [vmem:[%s9 + $0x48] sm:$0xf] %vm1475, %v1365
  %1495 = vst.msk [vmem:[%s9 + $0x4c] sm:$0xf] %vm1475, %v1366
  %1496 = vst.msk [vmem:[%s9 + $0x50] sm:$0xf] %vm1475, %v1367
  %1497 = vst.msk [vmem:[%s9 + $0x54] sm:$0xf] %vm1475, %v1368
  %1498 = vst.msk [vmem:[%s9 + $0x58] sm:$0xf] %vm1475, %v1369
  %1499 = vst.msk [vmem:[%s9 + $0x5c] sm:$0xf] %vm1475, %v1370
  %1500 = vst.msk [vmem:[%s9 + $0x60] sm:$0xf] %vm1475, %v1371
  %1501 = vst.msk [vmem:[%s9 + $0x64] sm:$0xf] %vm1475, %v1372
  %1502 = vst.msk [vmem:[%s9 + $0x68] sm:$0xf] %vm1475, %v1373
  %1503 = vst.msk [vmem:[%s9 + $0x6c] sm:$0xf] %vm1475, %v1374
  %1504 = vst.msk [vmem:[%s9 + $0x70] sm:$0xf] %vm1475, %v1375
  %1505 = vst.msk [vmem:[%s9 + $0x74] sm:$0xf] %vm1475, %v1376
  %1506 = vst.msk [vmem:[%s9 + $0x78] sm:$0xf] %vm1475, %v1377
  %1507 = vst.msk [vmem:[%s9 + $0x7c] sm:$0xf] %vm1475, %v1378
  %1508 = vst.msk [vmem:[%s9 + $0x80] sm:$0xf] %vm1475, %v1379
  %1509 = vst.msk [vmem:[%s9 + $0x84] sm:$0xf] %vm1475, %v1380
  %1510 = vst.msk [vmem:[%s9 + $0x88] sm:$0xf] %vm1475, %v1381
  %1511 = vst.msk [vmem:[%s9 + $0x8c] sm:$0xf] %vm1475, %v1382
  %1512 = vst.msk [vmem:[%s9 + $0x90] sm:$0xf] %vm1475, %v1383
  %1513 = vst.msk [vmem:[%s9 + $0x94] sm:$0xf] %vm1475, %v1384
  %1514 = vst.msk [vmem:[%s9 + $0x98] sm:$0xf] %vm1475, %v1385
  %1515 = vst.msk [vmem:[%s9 + $0x9c] sm:$0xf] %vm1475, %v1386
  %1516 = vst.msk [vmem:[%s9 + $0xa0] sm:$0xf] %vm1475, %v1387
  %1517 = vst.msk [vmem:[%s9 + $0xa4] sm:$0xf] %vm1475, %v1388
  %1518 = vst.msk [vmem:[%s9 + $0xa8] sm:$0xf] %vm1475, %v1389
  %1519 = vst.msk [vmem:[%s9 + $0xac] sm:$0xf] %vm1475, %v1390
  %1520 = vst.msk [vmem:[%s9 + $0xb0] sm:$0xf] %vm1475, %v1391
  %1521 = vst.msk [vmem:[%s9 + $0xb4] sm:$0xf] %vm1475, %v1392
  %1522 = vst.msk [vmem:[%s9 + $0xb8] sm:$0xf] %vm1475, %v1393
  %1523 = vst.msk [vmem:[%s9 + $0xbc] sm:$0xf] %vm1475, %v1394
  %1524 = vst.msk [vmem:[%s9 + $0xc0] sm:$0xf] %vm1475, %v1395
  %1525 = vst.msk [vmem:[%s9 + $0xc4] sm:$0xf] %vm1475, %v1396
  %1526 = vst.msk [vmem:[%s9 + $0xc8] sm:$0xf] %vm1475, %v1397
  %1527 = vst.msk [vmem:[%s9 + $0xcc] sm:$0xf] %vm1475, %v1398
  %1528 = vst.msk [vmem:[%s9 + $0xd0] sm:$0xf] %vm1475, %v1399
  %1529 = vst.msk [vmem:[%s9 + $0xd4] sm:$0xf] %vm1475, %v1400
  %1530 = vst.msk [vmem:[%s9 + $0xd8] sm:$0xf] %vm1475, %v1401
  %1531 = vst.msk [vmem:[%s9 + $0xdc] sm:$0xf] %vm1475, %v1402
  %1532 = vst.msk [vmem:[%s9 + $0xe0] sm:$0xf] %vm1475, %v1403
  %1533 = vst.msk [vmem:[%s9 + $0xe4] sm:$0xf] %vm1475, %v1404
  %1534 = vst.msk [vmem:[%s9 + $0xe8] sm:$0xf] %vm1475, %v1405
  %1535 = vst.msk [vmem:[%s9 + $0xec] sm:$0xf] %vm1475, %v1406
  %1536 = vst.msk [vmem:[%s9 + $0xf0] sm:$0xf] %vm1475, %v1407
  %1537 = vst.msk [vmem:[%s9 + $0xf4] sm:$0xf] %vm1475, %v1408
  %1538 = vst.msk [vmem:[%s9 + $0xf8] sm:$0xf] %vm1475, %v1409
  %1539 = vst.msk [vmem:[%s9 + $0xfc] sm:$0xf] %vm1475, %v1410
  %v1572 = vunpack.c.l.b16 %v1219
  %v1573 = vunpack.c.h.b16 %v1219
  %v1574 = vunpack.c.l.b16 %v1220
  %v1575 = vunpack.c.h.b16 %v1220
  %v1576 = vunpack.c.l.b16 %v1221
  %v1577 = vunpack.c.h.b16 %v1221
  %v1578 = vunpack.c.l.b16 %v1222
  %v1579 = vunpack.c.h.b16 %v1222
  %v1580 = vunpack.c.l.b16 %v1223
  %v1581 = vunpack.c.h.b16 %v1223
  %v1582 = vunpack.c.l.b16 %v1224
  %v1583 = vunpack.c.h.b16 %v1224
  %v1584 = vunpack.c.l.b16 %v1225
  %v1585 = vunpack.c.h.b16 %v1225
  %v1586 = vunpack.c.l.b16 %v1226
  %v1587 = vunpack.c.h.b16 %v1226
  %v1588 = vunpack.c.l.b16 %v1227
  %v1589 = vunpack.c.h.b16 %v1227
  %v1590 = vunpack.c.l.b16 %v1228
  %v1591 = vunpack.c.h.b16 %v1228
  %v1592 = vunpack.c.l.b16 %v1229
  %v1593 = vunpack.c.h.b16 %v1229
  %v1594 = vunpack.c.l.b16 %v1230
  %v1595 = vunpack.c.h.b16 %v1230
  %v1596 = vunpack.c.l.b16 %v1231
  %v1597 = vunpack.c.h.b16 %v1231
  %v1598 = vunpack.c.l.b16 %v1232
  %v1599 = vunpack.c.h.b16 %v1232
  %v1600 = vunpack.c.l.b16 %v1233
  %v1601 = vunpack.c.h.b16 %v1233
  %v1602 = vunpack.c.l.b16 %v1234
  %v1603 = vunpack.c.h.b16 %v1234
  %v1604 = vunpack.c.l.b16 %v1235
  %v1605 = vunpack.c.h.b16 %v1235
  %v1606 = vunpack.c.l.b16 %v1236
  %v1607 = vunpack.c.h.b16 %v1236
  %v1608 = vunpack.c.l.b16 %v1237
  %v1609 = vunpack.c.h.b16 %v1237
  %v1610 = vunpack.c.l.b16 %v1238
  %v1611 = vunpack.c.h.b16 %v1238
  %v1612 = vunpack.c.l.b16 %v1239
  %v1613 = vunpack.c.h.b16 %v1239
  %v1614 = vunpack.c.l.b16 %v1240
  %v1615 = vunpack.c.h.b16 %v1240
  %v1616 = vunpack.c.l.b16 %v1241
  %v1617 = vunpack.c.h.b16 %v1241
  %v1618 = vunpack.c.l.b16 %v1242
  %v1619 = vunpack.c.h.b16 %v1242
  %v1620 = vunpack.c.l.b16 %v1243
  %v1621 = vunpack.c.h.b16 %v1243
  %v1622 = vunpack.c.l.b16 %v1244
  %v1623 = vunpack.c.h.b16 %v1244
  %v1624 = vunpack.c.l.b16 %v1245
  %v1625 = vunpack.c.h.b16 %v1245
  %v1626 = vunpack.c.l.b16 %v1246
  %v1627 = vunpack.c.h.b16 %v1246
  %v1628 = vunpack.c.l.b16 %v1247
  %v1629 = vunpack.c.h.b16 %v1247
  %v1630 = vunpack.c.l.b16 %v1248
  %v1631 = vunpack.c.h.b16 %v1248
  %v1632 = vunpack.c.l.b16 %v1249
  %v1633 = vunpack.c.h.b16 %v1249
  %v1634 = vunpack.c.l.b16 %v1250
  %v1635 = vunpack.c.h.b16 %v1250
  %v1636 = vpack.c.b16 %v1572, %v1572
  %v1637 = vpack.c.b16 %v1573, %v1573
  %v1638 = vpack.c.b16 %v1574, %v1574
  %v1639 = vpack.c.b16 %v1575, %v1575
  %v1640 = vpack.c.b16 %v1576, %v1576
  %v1641 = vpack.c.b16 %v1577, %v1577
  %v1642 = vpack.c.b16 %v1578, %v1578
  %v1643 = vpack.c.b16 %v1579, %v1579
  %v1644 = vpack.c.b16 %v1580, %v1580
  %v1645 = vpack.c.b16 %v1581, %v1581
  %v1646 = vpack.c.b16 %v1582, %v1582
  %v1647 = vpack.c.b16 %v1583, %v1583
  %v1648 = vpack.c.b16 %v1584, %v1584
  %v1649 = vpack.c.b16 %v1585, %v1585
  %v1650 = vpack.c.b16 %v1586, %v1586
  %v1651 = vpack.c.b16 %v1587, %v1587
  %v1652 = vpack.c.b16 %v1588, %v1588
  %v1653 = vpack.c.b16 %v1589, %v1589
  %v1654 = vpack.c.b16 %v1590, %v1590
  %v1655 = vpack.c.b16 %v1591, %v1591
  %v1656 = vpack.c.b16 %v1592, %v1592
  %v1657 = vpack.c.b16 %v1593, %v1593
  %v1658 = vpack.c.b16 %v1594, %v1594
  %v1659 = vpack.c.b16 %v1595, %v1595
  %v1660 = vpack.c.b16 %v1596, %v1596
  %v1661 = vpack.c.b16 %v1597, %v1597
  %v1662 = vpack.c.b16 %v1598, %v1598
  %v1663 = vpack.c.b16 %v1599, %v1599
  %v1664 = vpack.c.b16 %v1600, %v1600
  %v1665 = vpack.c.b16 %v1601, %v1601
  %v1666 = vpack.c.b16 %v1602, %v1602
  %v1667 = vpack.c.b16 %v1603, %v1603
  %v1668 = vpack.c.b16 %v1604, %v1604
  %v1669 = vpack.c.b16 %v1605, %v1605
  %v1670 = vpack.c.b16 %v1606, %v1606
  %v1671 = vpack.c.b16 %v1607, %v1607
  %v1672 = vpack.c.b16 %v1608, %v1608
  %v1673 = vpack.c.b16 %v1609, %v1609
  %v1674 = vpack.c.b16 %v1610, %v1610
  %v1675 = vpack.c.b16 %v1611, %v1611
  %v1676 = vpack.c.b16 %v1612, %v1612
  %v1677 = vpack.c.b16 %v1613, %v1613
  %v1678 = vpack.c.b16 %v1614, %v1614
  %v1679 = vpack.c.b16 %v1615, %v1615
  %v1680 = vpack.c.b16 %v1616, %v1616
  %v1681 = vpack.c.b16 %v1617, %v1617
  %v1682 = vpack.c.b16 %v1618, %v1618
  %v1683 = vpack.c.b16 %v1619, %v1619
  %v1684 = vpack.c.b16 %v1620, %v1620
  %v1685 = vpack.c.b16 %v1621, %v1621
  %v1686 = vpack.c.b16 %v1622, %v1622
  %v1687 = vpack.c.b16 %v1623, %v1623
  %v1688 = vpack.c.b16 %v1624, %v1624
  %v1689 = vpack.c.b16 %v1625, %v1625
  %v1690 = vpack.c.b16 %v1626, %v1626
  %v1691 = vpack.c.b16 %v1627, %v1627
  %v1692 = vpack.c.b16 %v1628, %v1628
  %v1693 = vpack.c.b16 %v1629, %v1629
  %v1694 = vpack.c.b16 %v1630, %v1630
  %v1695 = vpack.c.b16 %v1631, %v1631
  %v1696 = vpack.c.b16 %v1632, %v1632
  %v1697 = vpack.c.b16 %v1633, %v1633
  %v1698 = vpack.c.b16 %v1634, %v1634
  %v1699 = vpack.c.b16 %v1635, %v1635
  %1764 = vst.msk [vmem:[%s10] sm:$0xf] %vm1475, %v1636
  %1765 = vst.msk [vmem:[%s10 + $0x4] sm:$0xf] %vm1475, %v1637
  %1766 = vst.msk [vmem:[%s10 + $0x8] sm:$0xf] %vm1475, %v1638
  %1767 = vst.msk [vmem:[%s10 + $0xc] sm:$0xf] %vm1475, %v1639
  %1768 = vst.msk [vmem:[%s10 + $0x10] sm:$0xf] %vm1475, %v1640
  %1769 = vst.msk [vmem:[%s10 + $0x14] sm:$0xf] %vm1475, %v1641
  %1770 = vst.msk [vmem:[%s10 + $0x18] sm:$0xf] %vm1475, %v1642
  %1771 = vst.msk [vmem:[%s10 + $0x1c] sm:$0xf] %vm1475, %v1643
  %1772 = vst.msk [vmem:[%s10 + $0x20] sm:$0xf] %vm1475, %v1644
  %1773 = vst.msk [vmem:[%s10 + $0x24] sm:$0xf] %vm1475, %v1645
  %1774 = vst.msk [vmem:[%s10 + $0x28] sm:$0xf] %vm1475, %v1646
  %1775 = vst.msk [vmem:[%s10 + $0x2c] sm:$0xf] %vm1475, %v1647
  %1776 = vst.msk [vmem:[%s10 + $0x30] sm:$0xf] %vm1475, %v1648
  %1777 = vst.msk [vmem:[%s10 + $0x34] sm:$0xf] %vm1475, %v1649
  %1778 = vst.msk [vmem:[%s10 + $0x38] sm:$0xf] %vm1475, %v1650
  %1779 = vst.msk [vmem:[%s10 + $0x3c] sm:$0xf] %vm1475, %v1651
  %1780 = vst.msk [vmem:[%s10 + $0x40] sm:$0xf] %vm1475, %v1652
  %1781 = vst.msk [vmem:[%s10 + $0x44] sm:$0xf] %vm1475, %v1653
  %1782 = vst.msk [vmem:[%s10 + $0x48] sm:$0xf] %vm1475, %v1654
  %1783 = vst.msk [vmem:[%s10 + $0x4c] sm:$0xf] %vm1475, %v1655
  %1784 = vst.msk [vmem:[%s10 + $0x50] sm:$0xf] %vm1475, %v1656
  %1785 = vst.msk [vmem:[%s10 + $0x54] sm:$0xf] %vm1475, %v1657
  %1786 = vst.msk [vmem:[%s10 + $0x58] sm:$0xf] %vm1475, %v1658
  %1787 = vst.msk [vmem:[%s10 + $0x5c] sm:$0xf] %vm1475, %v1659
  %1788 = vst.msk [vmem:[%s10 + $0x60] sm:$0xf] %vm1475, %v1660
  %1789 = vst.msk [vmem:[%s10 + $0x64] sm:$0xf] %vm1475, %v1661
  %1790 = vst.msk [vmem:[%s10 + $0x68] sm:$0xf] %vm1475, %v1662
  %1791 = vst.msk [vmem:[%s10 + $0x6c] sm:$0xf] %vm1475, %v1663
  %1792 = vst.msk [vmem:[%s10 + $0x70] sm:$0xf] %vm1475, %v1664
  %1793 = vst.msk [vmem:[%s10 + $0x74] sm:$0xf] %vm1475, %v1665
  %1794 = vst.msk [vmem:[%s10 + $0x78] sm:$0xf] %vm1475, %v1666
  %1795 = vst.msk [vmem:[%s10 + $0x7c] sm:$0xf] %vm1475, %v1667
  %1796 = vst.msk [vmem:[%s10 + $0x80] sm:$0xf] %vm1475, %v1668
  %1797 = vst.msk [vmem:[%s10 + $0x84] sm:$0xf] %vm1475, %v1669
  %1798 = vst.msk [vmem:[%s10 + $0x88] sm:$0xf] %vm1475, %v1670
  %1799 = vst.msk [vmem:[%s10 + $0x8c] sm:$0xf] %vm1475, %v1671
  %1800 = vst.msk [vmem:[%s10 + $0x90] sm:$0xf] %vm1475, %v1672
  %1801 = vst.msk [vmem:[%s10 + $0x94] sm:$0xf] %vm1475, %v1673
  %1802 = vst.msk [vmem:[%s10 + $0x98] sm:$0xf] %vm1475, %v1674
  %1803 = vst.msk [vmem:[%s10 + $0x9c] sm:$0xf] %vm1475, %v1675
  %1804 = vst.msk [vmem:[%s10 + $0xa0] sm:$0xf] %vm1475, %v1676
  %1805 = vst.msk [vmem:[%s10 + $0xa4] sm:$0xf] %vm1475, %v1677
  %1806 = vst.msk [vmem:[%s10 + $0xa8] sm:$0xf] %vm1475, %v1678
  %1807 = vst.msk [vmem:[%s10 + $0xac] sm:$0xf] %vm1475, %v1679
  %1808 = vst.msk [vmem:[%s10 + $0xb0] sm:$0xf] %vm1475, %v1680
  %1809 = vst.msk [vmem:[%s10 + $0xb4] sm:$0xf] %vm1475, %v1681
  %1810 = vst.msk [vmem:[%s10 + $0xb8] sm:$0xf] %vm1475, %v1682
  %1811 = vst.msk [vmem:[%s10 + $0xbc] sm:$0xf] %vm1475, %v1683
  %1812 = vst.msk [vmem:[%s10 + $0xc0] sm:$0xf] %vm1475, %v1684
  %1813 = vst.msk [vmem:[%s10 + $0xc4] sm:$0xf] %vm1475, %v1685
  %1814 = vst.msk [vmem:[%s10 + $0xc8] sm:$0xf] %vm1475, %v1686
  %1815 = vst.msk [vmem:[%s10 + $0xcc] sm:$0xf] %vm1475, %v1687
  %1816 = vst.msk [vmem:[%s10 + $0xd0] sm:$0xf] %vm1475, %v1688
  %1817 = vst.msk [vmem:[%s10 + $0xd4] sm:$0xf] %vm1475, %v1689
  %1818 = vst.msk [vmem:[%s10 + $0xd8] sm:$0xf] %vm1475, %v1690
  %1819 = vst.msk [vmem:[%s10 + $0xdc] sm:$0xf] %vm1475, %v1691
  %1820 = vst.msk [vmem:[%s10 + $0xe0] sm:$0xf] %vm1475, %v1692
  %1821 = vst.msk [vmem:[%s10 + $0xe4] sm:$0xf] %vm1475, %v1693
  %1822 = vst.msk [vmem:[%s10 + $0xe8] sm:$0xf] %vm1475, %v1694
  %1823 = vst.msk [vmem:[%s10 + $0xec] sm:$0xf] %vm1475, %v1695
  %1824 = vst.msk [vmem:[%s10 + $0xf0] sm:$0xf] %vm1475, %v1696
  %1825 = vst.msk [vmem:[%s10 + $0xf4] sm:$0xf] %vm1475, %v1697
  %1826 = vst.msk [vmem:[%s10 + $0xf8] sm:$0xf] %vm1475, %v1698
  %1827 = vst.msk [vmem:[%s10 + $0xfc] sm:$0xf] %vm1475, %v1699
  %v1828 = vand.u32 2147483647, %v289
  %v1829 = vand.u32 2147483647, %v290
  %v1830 = vand.u32 2147483647, %v291
  %v1831 = vand.u32 2147483647, %v292
  %v1832 = vand.u32 2147483647, %v293
  %v1833 = vand.u32 2147483647, %v294
  %v1834 = vand.u32 2147483647, %v295
  %v1835 = vand.u32 2147483647, %v296
  %v1836 = vand.u32 2147483647, %v297
  %v1837 = vand.u32 2147483647, %v298
  %v1838 = vand.u32 2147483647, %v299
  %v1839 = vand.u32 2147483647, %v300
  %v1840 = vand.u32 2147483647, %v301
  %v1841 = vand.u32 2147483647, %v302
  %v1842 = vand.u32 2147483647, %v303
  %v1843 = vand.u32 2147483647, %v304
  %v1844 = vand.u32 2147483647, %v305
  %v1845 = vand.u32 2147483647, %v306
  %v1846 = vand.u32 2147483647, %v307
  %v1847 = vand.u32 2147483647, %v308
  %v1848 = vand.u32 2147483647, %v309
  %v1849 = vand.u32 2147483647, %v310
  %v1850 = vand.u32 2147483647, %v311
  %v1851 = vand.u32 2147483647, %v312
  %v1852 = vand.u32 2147483647, %v313
  %v1853 = vand.u32 2147483647, %v314
  %v1854 = vand.u32 2147483647, %v315
  %v1855 = vand.u32 2147483647, %v316
  %v1856 = vand.u32 2147483647, %v317
  %v1857 = vand.u32 2147483647, %v318
  %v1858 = vand.u32 2147483647, %v319
  %v1859 = vand.u32 2147483647, %v320
  %v1860 = vand.u32 2147483647, %v321
  %v1861 = vand.u32 2147483647, %v322
  %v1862 = vand.u32 2147483647, %v323
  %v1863 = vand.u32 2147483647, %v324
  %v1864 = vand.u32 2147483647, %v325
  %v1865 = vand.u32 2147483647, %v326
  %v1866 = vand.u32 2147483647, %v327
  %v1867 = vand.u32 2147483647, %v328
  %v1868 = vand.u32 2147483647, %v329
  %v1869 = vand.u32 2147483647, %v330
  %v1870 = vand.u32 2147483647, %v331
  %v1871 = vand.u32 2147483647, %v332
  %v1872 = vand.u32 2147483647, %v333
  %v1873 = vand.u32 2147483647, %v334
  %v1874 = vand.u32 2147483647, %v335
  %v1875 = vand.u32 2147483647, %v336
  %v1876 = vand.u32 2147483647, %v337
  %v1877 = vand.u32 2147483647, %v338
  %v1878 = vand.u32 2147483647, %v339
  %v1879 = vand.u32 2147483647, %v340
  %v1880 = vand.u32 2147483647, %v341
  %v1881 = vand.u32 2147483647, %v342
  %v1882 = vand.u32 2147483647, %v343
  %v1883 = vand.u32 2147483647, %v344
  %v1884 = vand.u32 2147483647, %v345
  %v1885 = vand.u32 2147483647, %v346
  %v1886 = vand.u32 2147483647, %v347
  %v1887 = vand.u32 2147483647, %v348
  %v1888 = vand.u32 2147483647, %v349
  %v1889 = vand.u32 2147483647, %v350
  %v1890 = vand.u32 2147483647, %v351
  %v1891 = vand.u32 2147483647, %v352
  %v1892 = vpack.c.bf16 %v1829, %v1828
  %v1893 = vpack.c.bf16 %v1831, %v1830
  %v1894 = vpack.c.bf16 %v1833, %v1832
  %v1895 = vpack.c.bf16 %v1835, %v1834
  %v1896 = vpack.c.bf16 %v1837, %v1836
  %v1897 = vpack.c.bf16 %v1839, %v1838
  %v1898 = vpack.c.bf16 %v1841, %v1840
  %v1899 = vpack.c.bf16 %v1843, %v1842
  %v1900 = vpack.c.bf16 %v1845, %v1844
  %v1901 = vpack.c.bf16 %v1847, %v1846
  %v1902 = vpack.c.bf16 %v1849, %v1848
  %v1903 = vpack.c.bf16 %v1851, %v1850
  %v1904 = vpack.c.bf16 %v1853, %v1852
  %v1905 = vpack.c.bf16 %v1855, %v1854
  %v1906 = vpack.c.bf16 %v1857, %v1856
  %v1907 = vpack.c.bf16 %v1859, %v1858
  %v1908 = vpack.c.bf16 %v1861, %v1860
  %v1909 = vpack.c.bf16 %v1863, %v1862
  %v1910 = vpack.c.bf16 %v1865, %v1864
  %v1911 = vpack.c.bf16 %v1867, %v1866
  %v1912 = vpack.c.bf16 %v1869, %v1868
  %v1913 = vpack.c.bf16 %v1871, %v1870
  %v1914 = vpack.c.bf16 %v1873, %v1872
  %v1915 = vpack.c.bf16 %v1875, %v1874
  %v1916 = vpack.c.bf16 %v1877, %v1876
  %v1917 = vpack.c.bf16 %v1879, %v1878
  %v1918 = vpack.c.bf16 %v1881, %v1880
  %v1919 = vpack.c.bf16 %v1883, %v1882
  %v1920 = vpack.c.bf16 %v1885, %v1884
  %v1921 = vpack.c.bf16 %v1887, %v1886
  %v1922 = vpack.c.bf16 %v1889, %v1888
  %v1923 = vpack.c.bf16 %v1891, %v1890
  %v1924 = vld [vmem:[%s2] sm:$0xf]
  %v1925 = vld [vmem:[%s2 + $0x4] sm:$0xf]
  %v1926 = vld [vmem:[%s2 + $0x8] sm:$0xf]
  %v1927 = vld [vmem:[%s3] sm:$0xf]
  %v1928 = vld [vmem:[%s3 + $0x4] sm:$0xf]
  %v1929 = vld [vmem:[%s3 + $0x8] sm:$0xf]
  %v1933 = vunpack.c.l.b16 %v1927
  %v1934 = vunpack.c.l.b16 %v1928
  %v1935 = vunpack.c.l.b16 %v1929
  %v1936 = vpack.c.b16 %v1934, %v1933
  %v1937 = vpack.c.b16 %v1935, %v1935
  %v1940 = vsel %vm417, %v1219, 0
  %v1943 = vsel %vm417, %v1220, 0
  %v1946 = vsel %vm417, %v1221, 0
  %v1949 = vsel %vm417, %v1222, 0
  %v1952 = vsel %vm417, %v1223, 0
  %v1955 = vsel %vm417, %v1224, 0
  %v1958 = vsel %vm417, %v1225, 0
  %v1961 = vsel %vm417, %v1226, 0
  %v1964 = vsel %vm417, %v1227, 0
  %v1967 = vsel %vm417, %v1228, 0
  %v1970 = vsel %vm417, %v1229, 0
  %v1973 = vsel %vm417, %v1230, 0
  %v1976 = vsel %vm417, %v1231, 0
  %v1979 = vsel %vm417, %v1232, 0
  %v1982 = vsel %vm417, %v1233, 0
  %v1985 = vsel %vm417, %v1234, 0
  %v1988 = vsel %vm417, %v1235, 0
  %v1991 = vsel %vm417, %v1236, 0
  %v1994 = vsel %vm417, %v1237, 0
  %v1997 = vsel %vm417, %v1238, 0
  %v2000 = vsel %vm417, %v1239, 0
  %v2003 = vsel %vm417, %v1240, 0
  %v2006 = vsel %vm417, %v1241, 0
  %v2009 = vsel %vm417, %v1242, 0
  %v2012 = vsel %vm417, %v1243, 0
  %v2015 = vsel %vm417, %v1244, 0
  %v2018 = vsel %vm417, %v1245, 0
  %v2021 = vsel %vm417, %v1246, 0
  %v2024 = vsel %vm417, %v1247, 0
  %v2027 = vsel %vm417, %v1248, 0
  %v2030 = vsel %vm417, %v1249, 0
  %v2033 = vsel %vm417, %v1250, 0
  %vm2035 = vcmask 1043456
  %v2037 = vsel %vm2035, %v1937, 0
  %2039 = vmatprep.subr.bf16.mxu0 0
  %2040 = vmatpush1.bf16.msra.mxu0 %v1936
  %2041 = vmatprep.subr.bf16.mxu0 0
  %2042 = vmatpush1.bf16.msra.mxu0 %v2037
  %2043 = vmatprep.subr.bf16.mxu0 0
  %2044 = vmatpush1.bf16.msra.mxu0 0
  %2045 = vmatprep.subr.bf16.mxu0 0
  %2046 = vmatpush1.bf16.msra.mxu0 0
  %2047 = vmatprep.subr.bf16.mxu0 0
  %2048 = vmatpush1.bf16.msra.mxu0 0
  %2049 = vmatprep.subr.bf16.mxu0 0
  %2050 = vmatpush1.bf16.msra.mxu0 0
  %2051 = vmatprep.subr.bf16.mxu0 0
  %2052 = vmatpush1.bf16.msra.mxu0 0
  %2053 = vmatprep.subr.bf16.mxu0 0
  %2054 = vmatpush1.bf16.msra.mxu0 0
  %2055 = vmatprep.subr.bf16.mxu0 0
  %2056 = vmatpush1.bf16.msra.mxu0 0
  %2057 = vmatprep.subr.bf16.mxu0 0
  %2058 = vmatpush1.bf16.msra.mxu0 0
  %2059 = vmatprep.subr.bf16.mxu0 0
  %2060 = vmatpush1.bf16.msra.mxu0 0
  %2061 = vmatprep.subr.bf16.mxu0 0
  %2062 = vmatpush1.bf16.msra.mxu0 0
  %2063 = vmatprep.subr.bf16.mxu0 0
  %2064 = vmatpush1.bf16.msra.mxu0 0
  %2065 = vmatprep.subr.bf16.mxu0 0
  %2066 = vmatpush1.bf16.msra.mxu0 0
  %2067 = vmatprep.subr.bf16.mxu0 0
  %2068 = vmatpush1.bf16.msra.mxu0 0
  %2069 = vmatprep.subr.bf16.mxu0 0
  %2070 = vmatpush1.bf16.msra.mxu0 0
  %2071 = vmatprep.mubr.bf16.mxu0 0
  %2072 = vmatmul.mubr.bf16.gmra.mrb[0].mxu0 %v1940
  %v2073 = vpop.f32.mrb[0].mxu0
  %v2074 = vadd.f32 0.0, %v2073
  %v2075 = vpop.f32.mrb[0].mxu0
  %v2076 = vpop.f32.mrb[0].mxu0
  %v2077 = vadd.f32 0.0, %v2076
  %v2078 = vpop.f32.mrb[0].mxu0
  %2079 = vmatprep.mubr.bf16.mxu0 0
  %2080 = vmatmul.mubr.bf16.gmra.mrb[0].mxu0 %v1943
  %v2081 = vpop.f32.mrb[0].mxu0
  %v2082 = vadd.f32 0.0, %v2081
  %v2083 = vpop.f32.mrb[0].mxu0
  %v2084 = vpop.f32.mrb[0].mxu0
  %v2085 = vadd.f32 0.0, %v2084
  %v2086 = vpop.f32.mrb[0].mxu0
  %2087 = vmatprep.mubr.bf16.mxu0 0
  %2088 = vmatmul.mubr.bf16.gmra.mrb[0].mxu0 %v1946
  %v2089 = vpop.f32.mrb[0].mxu0
  %v2090 = vadd.f32 0.0, %v2089
  %v2091 = vpop.f32.mrb[0].mxu0
  %v2092 = vpop.f32.mrb[0].mxu0
  %v2093 = vadd.f32 0.0, %v2092
  %v2094 = vpop.f32.mrb[0].mxu0
  %2095 = vmatprep.mubr.bf16.mxu0 0
  %2096 = vmatmul.mubr.bf16.gmra.mrb[0].mxu0 %v1949
  %v2097 = vpop.f32.mrb[0].mxu0
  %v2098 = vadd.f32 0.0, %v2097
  %v2099 = vpop.f32.mrb[0].mxu0
  %v2100 = vpop.f32.mrb[0].mxu0
  %v2101 = vadd.f32 0.0, %v2100
  %v2102 = vpop.f32.mrb[0].mxu0
  %2103 = vmatprep.mubr.bf16.mxu0 0
  %2104 = vmatmul.mubr.bf16.gmra.mrb[0].mxu0 %v1952
  %v2105 = vpop.f32.mrb[0].mxu0
  %v2106 = vadd.f32 0.0, %v2105
  %v2107 = vpop.f32.mrb[0].mxu0
  %v2108 = vpop.f32.mrb[0].mxu0
  %v2109 = vadd.f32 0.0, %v2108
  %v2110 = vpop.f32.mrb[0].mxu0
  %2111 = vmatprep.mubr.bf16.mxu0 0
  %2112 = vmatmul.mubr.bf16.gmra.mrb[0].mxu0 %v1955
  %v2113 = vpop.f32.mrb[0].mxu0
  %v2114 = vadd.f32 0.0, %v2113
  %v2115 = vpop.f32.mrb[0].mxu0
  %v2116 = vpop.f32.mrb[0].mxu0
  %v2117 = vadd.f32 0.0, %v2116
  %v2118 = vpop.f32.mrb[0].mxu0
  %2119 = vmatprep.mubr.bf16.mxu0 0
  %2120 = vmatmul.mubr.bf16.gmra.mrb[0].mxu0 %v1958
  %v2121 = vpop.f32.mrb[0].mxu0
  %v2122 = vadd.f32 0.0, %v2121
  %v2123 = vpop.f32.mrb[0].mxu0
  %v2124 = vpop.f32.mrb[0].mxu0
  %v2125 = vadd.f32 0.0, %v2124
  %v2126 = vpop.f32.mrb[0].mxu0
  %2127 = vmatprep.mubr.bf16.mxu0 0
  %2128 = vmatmul.mubr.bf16.gmra.mrb[0].mxu0 %v1961
  %v2129 = vpop.f32.mrb[0].mxu0
  %v2130 = vadd.f32 0.0, %v2129
  %v2131 = vpop.f32.mrb[0].mxu0
  %v2132 = vpop.f32.mrb[0].mxu0
  %v2133 = vadd.f32 0.0, %v2132
  %v2134 = vpop.f32.mrb[0].mxu0
  %2135 = vmatprep.mubr.bf16.mxu0 0
  %2136 = vmatmul.mubr.bf16.gmra.mrb[0].mxu0 %v1964
  %v2137 = vpop.f32.mrb[0].mxu0
  %v2138 = vadd.f32 0.0, %v2137
  %v2139 = vpop.f32.mrb[0].mxu0
  %v2140 = vpop.f32.mrb[0].mxu0
  %v2141 = vadd.f32 0.0, %v2140
  %v2142 = vpop.f32.mrb[0].mxu0
  %2143 = vmatprep.mubr.bf16.mxu0 0
  %2144 = vmatmul.mubr.bf16.gmra.mrb[0].mxu0 %v1967
  %v2145 = vpop.f32.mrb[0].mxu0
  %v2146 = vadd.f32 0.0, %v2145
  %v2147 = vpop.f32.mrb[0].mxu0
  %v2148 = vpop.f32.mrb[0].mxu0
  %v2149 = vadd.f32 0.0, %v2148
  %v2150 = vpop.f32.mrb[0].mxu0
  %2151 = vmatprep.mubr.bf16.mxu0 0
  %2152 = vmatmul.mubr.bf16.gmra.mrb[0].mxu0 %v1970
  %v2153 = vpop.f32.mrb[0].mxu0
  %v2154 = vadd.f32 0.0, %v2153
  %v2155 = vpop.f32.mrb[0].mxu0
  %v2156 = vpop.f32.mrb[0].mxu0
  %v2157 = vadd.f32 0.0, %v2156
  %v2158 = vpop.f32.mrb[0].mxu0
  %2159 = vmatprep.mubr.bf16.mxu0 0
  %2160 = vmatmul.mubr.bf16.gmra.mrb[0].mxu0 %v1973
  %v2161 = vpop.f32.mrb[0].mxu0
  %v2162 = vadd.f32 0.0, %v2161
  %v2163 = vpop.f32.mrb[0].mxu0
  %v2164 = vpop.f32.mrb[0].mxu0
  %v2165 = vadd.f32 0.0, %v2164
  %v2166 = vpop.f32.mrb[0].mxu0
  %2167 = vmatprep.mubr.bf16.mxu0 0
  %2168 = vmatmul.mubr.bf16.gmra.mrb[0].mxu0 %v1976
  %v2169 = vpop.f32.mrb[0].mxu0
  %v2170 = vadd.f32 0.0, %v2169
  %v2171 = vpop.f32.mrb[0].mxu0
  %v2172 = vpop.f32.mrb[0].mxu0
  %v2173 = vadd.f32 0.0, %v2172
  %v2174 = vpop.f32.mrb[0].mxu0
  %2175 = vmatprep.mubr.bf16.mxu0 0
  %2176 = vmatmul.mubr.bf16.gmra.mrb[0].mxu0 %v1979
  %v2177 = vpop.f32.mrb[0].mxu0
  %v2178 = vadd.f32 0.0, %v2177
  %v2179 = vpop.f32.mrb[0].mxu0
  %v2180 = vpop.f32.mrb[0].mxu0
  %v2181 = vadd.f32 0.0, %v2180
  %v2182 = vpop.f32.mrb[0].mxu0
  %2183 = vmatprep.mubr.bf16.mxu0 0
  %2184 = vmatmul.mubr.bf16.gmra.mrb[0].mxu0 %v1982
  %v2185 = vpop.f32.mrb[0].mxu0
  %v2186 = vadd.f32 0.0, %v2185
  %v2187 = vpop.f32.mrb[0].mxu0
  %v2188 = vpop.f32.mrb[0].mxu0
  %v2189 = vadd.f32 0.0, %v2188
  %v2190 = vpop.f32.mrb[0].mxu0
  %2191 = vmatprep.mubr.bf16.mxu0 0
  %2192 = vmatmul.mubr.bf16.gmra.mrb[0].mxu0 %v1985
  %v2193 = vpop.f32.mrb[0].mxu0
  %v2194 = vadd.f32 0.0, %v2193
  %v2195 = vpop.f32.mrb[0].mxu0
  %v2196 = vpop.f32.mrb[0].mxu0
  %v2197 = vadd.f32 0.0, %v2196
  %v2198 = vpop.f32.mrb[0].mxu0
  %2199 = vmatprep.mubr.bf16.mxu0 0
  %2200 = vmatmul.mubr.bf16.gmra.mrb[0].mxu0 %v1988
  %v2201 = vpop.f32.mrb[0].mxu0
  %v2202 = vadd.f32 0.0, %v2201
  %v2203 = vpop.f32.mrb[0].mxu0
  %v2204 = vpop.f32.mrb[0].mxu0
  %v2205 = vadd.f32 0.0, %v2204
  %v2206 = vpop.f32.mrb[0].mxu0
  %2207 = vmatprep.mubr.bf16.mxu0 0
  %2208 = vmatmul.mubr.bf16.gmra.mrb[0].mxu0 %v1991
  %v2209 = vpop.f32.mrb[0].mxu0
  %v2210 = vadd.f32 0.0, %v2209
  %v2211 = vpop.f32.mrb[0].mxu0
  %v2212 = vpop.f32.mrb[0].mxu0
  %v2213 = vadd.f32 0.0, %v2212
  %v2214 = vpop.f32.mrb[0].mxu0
  %2215 = vmatprep.mubr.bf16.mxu0 0
  %2216 = vmatmul.mubr.bf16.gmra.mrb[0].mxu0 %v1994
  %v2217 = vpop.f32.mrb[0].mxu0
  %v2218 = vadd.f32 0.0, %v2217
  %v2219 = vpop.f32.mrb[0].mxu0
  %v2220 = vpop.f32.mrb[0].mxu0
  %v2221 = vadd.f32 0.0, %v2220
  %v2222 = vpop.f32.mrb[0].mxu0
  %2223 = vmatprep.mubr.bf16.mxu0 0
  %2224 = vmatmul.mubr.bf16.gmra.mrb[0].mxu0 %v1997
  %v2225 = vpop.f32.mrb[0].mxu0
  %v2226 = vadd.f32 0.0, %v2225
  %v2227 = vpop.f32.mrb[0].mxu0
  %v2228 = vpop.f32.mrb[0].mxu0
  %v2229 = vadd.f32 0.0, %v2228
  %v2230 = vpop.f32.mrb[0].mxu0
  %2231 = vmatprep.mubr.bf16.mxu0 0
  %2232 = vmatmul.mubr.bf16.gmra.mrb[0].mxu0 %v2000
  %v2233 = vpop.f32.mrb[0].mxu0
  %v2234 = vadd.f32 0.0, %v2233
  %v2235 = vpop.f32.mrb[0].mxu0
  %v2236 = vpop.f32.mrb[0].mxu0
  %v2237 = vadd.f32 0.0, %v2236
  %v2238 = vpop.f32.mrb[0].mxu0
  %2239 = vmatprep.mubr.bf16.mxu0 0
  %2240 = vmatmul.mubr.bf16.gmra.mrb[0].mxu0 %v2003
  %v2241 = vpop.f32.mrb[0].mxu0
  %v2242 = vadd.f32 0.0, %v2241
  %v2243 = vpop.f32.mrb[0].mxu0
  %v2244 = vpop.f32.mrb[0].mxu0
  %v2245 = vadd.f32 0.0, %v2244
  %v2246 = vpop.f32.mrb[0].mxu0
  %2247 = vmatprep.mubr.bf16.mxu0 0
  %2248 = vmatmul.mubr.bf16.gmra.mrb[0].mxu0 %v2006
  %v2249 = vpop.f32.mrb[0].mxu0
  %v2250 = vadd.f32 0.0, %v2249
  %v2251 = vpop.f32.mrb[0].mxu0
  %v2252 = vpop.f32.mrb[0].mxu0
  %v2253 = vadd.f32 0.0, %v2252
  %v2254 = vpop.f32.mrb[0].mxu0
  %2255 = vmatprep.mubr.bf16.mxu0 0
  %2256 = vmatmul.mubr.bf16.gmra.mrb[0].mxu0 %v2009
  %v2257 = vpop.f32.mrb[0].mxu0
  %v2258 = vadd.f32 0.0, %v2257
  %v2259 = vpop.f32.mrb[0].mxu0
  %v2260 = vpop.f32.mrb[0].mxu0
  %v2261 = vadd.f32 0.0, %v2260
  %v2262 = vpop.f32.mrb[0].mxu0
  %2263 = vmatprep.mubr.bf16.mxu0 0
  %2264 = vmatmul.mubr.bf16.gmra.mrb[0].mxu0 %v2012
  %v2265 = vpop.f32.mrb[0].mxu0
  %v2266 = vadd.f32 0.0, %v2265
  %v2267 = vpop.f32.mrb[0].mxu0
  %v2268 = vpop.f32.mrb[0].mxu0
  %v2269 = vadd.f32 0.0, %v2268
  %v2270 = vpop.f32.mrb[0].mxu0
  %2271 = vmatprep.mubr.bf16.mxu0 0
  %2272 = vmatmul.mubr.bf16.gmra.mrb[0].mxu0 %v2015
  %v2273 = vpop.f32.mrb[0].mxu0
  %v2274 = vadd.f32 0.0, %v2273
  %v2275 = vpop.f32.mrb[0].mxu0
  %v2276 = vpop.f32.mrb[0].mxu0
  %v2277 = vadd.f32 0.0, %v2276
  %v2278 = vpop.f32.mrb[0].mxu0
  %2279 = vmatprep.mubr.bf16.mxu0 0
  %2280 = vmatmul.mubr.bf16.gmra.mrb[0].mxu0 %v2018
  %v2281 = vpop.f32.mrb[0].mxu0
  %v2282 = vadd.f32 0.0, %v2281
  %v2283 = vpop.f32.mrb[0].mxu0
  %v2284 = vpop.f32.mrb[0].mxu0
  %v2285 = vadd.f32 0.0, %v2284
  %v2286 = vpop.f32.mrb[0].mxu0
  %2287 = vmatprep.mubr.bf16.mxu0 0
  %2288 = vmatmul.mubr.bf16.gmra.mrb[0].mxu0 %v2021
  %v2289 = vpop.f32.mrb[0].mxu0
  %v2290 = vadd.f32 0.0, %v2289
  %v2291 = vpop.f32.mrb[0].mxu0
  %v2292 = vpop.f32.mrb[0].mxu0
  %v2293 = vadd.f32 0.0, %v2292
  %v2294 = vpop.f32.mrb[0].mxu0
  %2295 = vmatprep.mubr.bf16.mxu0 0
  %2296 = vmatmul.mubr.bf16.gmra.mrb[0].mxu0 %v2024
  %v2297 = vpop.f32.mrb[0].mxu0
  %v2298 = vadd.f32 0.0, %v2297
  %v2299 = vpop.f32.mrb[0].mxu0
  %v2300 = vpop.f32.mrb[0].mxu0
  %v2301 = vadd.f32 0.0, %v2300
  %v2302 = vpop.f32.mrb[0].mxu0
  %2303 = vmatprep.mubr.bf16.mxu0 0
  %2304 = vmatmul.mubr.bf16.gmra.mrb[0].mxu0 %v2027
  %v2305 = vpop.f32.mrb[0].mxu0
  %v2306 = vadd.f32 0.0, %v2305
  %v2307 = vpop.f32.mrb[0].mxu0
  %v2308 = vpop.f32.mrb[0].mxu0
  %v2309 = vadd.f32 0.0, %v2308
  %v2310 = vpop.f32.mrb[0].mxu0
  %2311 = vmatprep.mubr.bf16.mxu0 0
  %2312 = vmatmul.mubr.bf16.gmra.mrb[0].mxu0 %v2030
  %v2313 = vpop.f32.mrb[0].mxu0
  %v2314 = vadd.f32 0.0, %v2313
  %v2315 = vpop.f32.mrb[0].mxu0
  %v2316 = vpop.f32.mrb[0].mxu0
  %v2317 = vadd.f32 0.0, %v2316
  %v2318 = vpop.f32.mrb[0].mxu0
  %2319 = vmatprep.mubr.bf16.mxu0 0
  %2320 = vmatmul.mubr.bf16.gmra.mrb[0].mxu0 %v2033
  %v2321 = vpop.f32.mrb[0].mxu0
  %v2322 = vadd.f32 0.0, %v2321
  %v2323 = vpop.f32.mrb[0].mxu0
  %v2324 = vpop.f32.mrb[0].mxu0
  %v2325 = vadd.f32 0.0, %v2324
  %v2326 = vpop.f32.mrb[0].mxu0
  %2327 = vdwg.mxu0
  %v2331 = vunpack.c.l.b16 %v1924
  %v2332 = vunpack.c.l.b16 %v1925
  %v2333 = vunpack.c.l.b16 %v1926
  %v2334 = vpack.c.b16 %v2332, %v2331
  %v2335 = vpack.c.b16 %v2333, %v2333
  %v2338 = vsel %vm417, %v1123, 0
  %v2341 = vsel %vm417, %v1124, 0
  %v2344 = vsel %vm417, %v1125, 0
  %v2347 = vsel %vm417, %v1126, 0
  %v2350 = vsel %vm417, %v1127, 0
  %v2353 = vsel %vm417, %v1128, 0
  %v2356 = vsel %vm417, %v1129, 0
  %v2359 = vsel %vm417, %v1130, 0
  %v2362 = vsel %vm417, %v1131, 0
  %v2365 = vsel %vm417, %v1132, 0
  %v2368 = vsel %vm417, %v1133, 0
  %v2371 = vsel %vm417, %v1134, 0
  %v2374 = vsel %vm417, %v1135, 0
  %v2377 = vsel %vm417, %v1136, 0
  %v2380 = vsel %vm417, %v1137, 0
  %v2383 = vsel %vm417, %v1138, 0
  %v2386 = vsel %vm417, %v1139, 0
  %v2389 = vsel %vm417, %v1140, 0
  %v2392 = vsel %vm417, %v1141, 0
  %v2395 = vsel %vm417, %v1142, 0
  %v2398 = vsel %vm417, %v1143, 0
  %v2401 = vsel %vm417, %v1144, 0
  %v2404 = vsel %vm417, %v1145, 0
  %v2407 = vsel %vm417, %v1146, 0
  %v2410 = vsel %vm417, %v1147, 0
  %v2413 = vsel %vm417, %v1148, 0
  %v2416 = vsel %vm417, %v1149, 0
  %v2419 = vsel %vm417, %v1150, 0
  %v2422 = vsel %vm417, %v1151, 0
  %v2425 = vsel %vm417, %v1152, 0
  %v2428 = vsel %vm417, %v1153, 0
  %v2431 = vsel %vm417, %v1154, 0
  %v2434 = vsel %vm2035, %v2335, 0
  %2436 = vmatprep.subr.bf16.mxu0 0
  %2437 = vmatpush1.bf16.msra.mxu0 %v2334
  %2438 = vmatprep.subr.bf16.mxu0 0
  %2439 = vmatpush1.bf16.msra.mxu0 %v2434
  %2440 = vmatprep.subr.bf16.mxu0 0
  %2441 = vmatpush1.bf16.msra.mxu0 0
  %2442 = vmatprep.subr.bf16.mxu0 0
  %2443 = vmatpush1.bf16.msra.mxu0 0
  %2444 = vmatprep.subr.bf16.mxu0 0
  %2445 = vmatpush1.bf16.msra.mxu0 0
  %2446 = vmatprep.subr.bf16.mxu0 0
  %2447 = vmatpush1.bf16.msra.mxu0 0
  %2448 = vmatprep.subr.bf16.mxu0 0
  %2449 = vmatpush1.bf16.msra.mxu0 0
  %2450 = vmatprep.subr.bf16.mxu0 0
  %2451 = vmatpush1.bf16.msra.mxu0 0
  %2452 = vmatprep.subr.bf16.mxu0 0
  %2453 = vmatpush1.bf16.msra.mxu0 0
  %2454 = vmatprep.subr.bf16.mxu0 0
  %2455 = vmatpush1.bf16.msra.mxu0 0
  %2456 = vmatprep.subr.bf16.mxu0 0
  %2457 = vmatpush1.bf16.msra.mxu0 0
  %2458 = vmatprep.subr.bf16.mxu0 0
  %2459 = vmatpush1.bf16.msra.mxu0 0
  %2460 = vmatprep.subr.bf16.mxu0 0
  %2461 = vmatpush1.bf16.msra.mxu0 0
  %2462 = vmatprep.subr.bf16.mxu0 0
  %2463 = vmatpush1.bf16.msra.mxu0 0
  %2464 = vmatprep.subr.bf16.mxu0 0
  %2465 = vmatpush1.bf16.msra.mxu0 0
  %2466 = vmatprep.subr.bf16.mxu0 0
  %2467 = vmatpush1.bf16.msra.mxu0 0
  %2468 = vmatprep.mubr.bf16.mxu0 0
  %2469 = vmatmul.mubr.bf16.gmra.mrb[0].mxu0 %v2338
  %v2470 = vpop.f32.mrb[0].mxu0
  %v2471 = vadd.f32 %v2074, %v2470
  %v2472 = vpop.f32.mrb[0].mxu0
  %v2473 = vpop.f32.mrb[0].mxu0
  %v2474 = vadd.f32 %v2077, %v2473
  %v2475 = vpop.f32.mrb[0].mxu0
  %2476 = vmatprep.mubr.bf16.mxu0 0
  %2477 = vmatmul.mubr.bf16.gmra.mrb[0].mxu0 %v2341
  %v2478 = vpop.f32.mrb[0].mxu0
  %v2479 = vadd.f32 %v2082, %v2478
  %v2480 = vpop.f32.mrb[0].mxu0
  %v2481 = vpop.f32.mrb[0].mxu0
  %v2482 = vadd.f32 %v2085, %v2481
  %v2483 = vpop.f32.mrb[0].mxu0
  %2484 = vmatprep.mubr.bf16.mxu0 0
  %2485 = vmatmul.mubr.bf16.gmra.mrb[0].mxu0 %v2344
  %v2486 = vpop.f32.mrb[0].mxu0
  %v2487 = vadd.f32 %v2090, %v2486
  %v2488 = vpop.f32.mrb[0].mxu0
  %v2489 = vpop.f32.mrb[0].mxu0
  %v2490 = vadd.f32 %v2093, %v2489
  %v2491 = vpop.f32.mrb[0].mxu0
  %2492 = vmatprep.mubr.bf16.mxu0 0
  %2493 = vmatmul.mubr.bf16.gmra.mrb[0].mxu0 %v2347
  %v2494 = vpop.f32.mrb[0].mxu0
  %v2495 = vadd.f32 %v2098, %v2494
  %v2496 = vpop.f32.mrb[0].mxu0
  %v2497 = vpop.f32.mrb[0].mxu0
  %v2498 = vadd.f32 %v2101, %v2497
  %v2499 = vpop.f32.mrb[0].mxu0
  %2500 = vmatprep.mubr.bf16.mxu0 0
  %2501 = vmatmul.mubr.bf16.gmra.mrb[0].mxu0 %v2350
  %v2502 = vpop.f32.mrb[0].mxu0
  %v2503 = vadd.f32 %v2106, %v2502
  %v2504 = vpop.f32.mrb[0].mxu0
  %v2505 = vpop.f32.mrb[0].mxu0
  %v2506 = vadd.f32 %v2109, %v2505
  %v2507 = vpop.f32.mrb[0].mxu0
  %2508 = vmatprep.mubr.bf16.mxu0 0
  %2509 = vmatmul.mubr.bf16.gmra.mrb[0].mxu0 %v2353
  %v2510 = vpop.f32.mrb[0].mxu0
  %v2511 = vadd.f32 %v2114, %v2510
  %v2512 = vpop.f32.mrb[0].mxu0
  %v2513 = vpop.f32.mrb[0].mxu0
  %v2514 = vadd.f32 %v2117, %v2513
  %v2515 = vpop.f32.mrb[0].mxu0
  %2516 = vmatprep.mubr.bf16.mxu0 0
  %2517 = vmatmul.mubr.bf16.gmra.mrb[0].mxu0 %v2356
  %v2518 = vpop.f32.mrb[0].mxu0
  %v2519 = vadd.f32 %v2122, %v2518
  %v2520 = vpop.f32.mrb[0].mxu0
  %v2521 = vpop.f32.mrb[0].mxu0
  %v2522 = vadd.f32 %v2125, %v2521
  %v2523 = vpop.f32.mrb[0].mxu0
  %2524 = vmatprep.mubr.bf16.mxu0 0
  %2525 = vmatmul.mubr.bf16.gmra.mrb[0].mxu0 %v2359
  %v2526 = vpop.f32.mrb[0].mxu0
  %v2527 = vadd.f32 %v2130, %v2526
  %v2528 = vpop.f32.mrb[0].mxu0
  %v2529 = vpop.f32.mrb[0].mxu0
  %v2530 = vadd.f32 %v2133, %v2529
  %v2531 = vpop.f32.mrb[0].mxu0
  %2532 = vmatprep.mubr.bf16.mxu0 0
  %2533 = vmatmul.mubr.bf16.gmra.mrb[0].mxu0 %v2362
  %v2534 = vpop.f32.mrb[0].mxu0
  %v2535 = vadd.f32 %v2138, %v2534
  %v2536 = vpop.f32.mrb[0].mxu0
  %v2537 = vpop.f32.mrb[0].mxu0
  %v2538 = vadd.f32 %v2141, %v2537
  %v2539 = vpop.f32.mrb[0].mxu0
  %2540 = vmatprep.mubr.bf16.mxu0 0
  %2541 = vmatmul.mubr.bf16.gmra.mrb[0].mxu0 %v2365
  %v2542 = vpop.f32.mrb[0].mxu0
  %v2543 = vadd.f32 %v2146, %v2542
  %v2544 = vpop.f32.mrb[0].mxu0
  %v2545 = vpop.f32.mrb[0].mxu0
  %v2546 = vadd.f32 %v2149, %v2545
  %v2547 = vpop.f32.mrb[0].mxu0
  %2548 = vmatprep.mubr.bf16.mxu0 0
  %2549 = vmatmul.mubr.bf16.gmra.mrb[0].mxu0 %v2368
  %v2550 = vpop.f32.mrb[0].mxu0
  %v2551 = vadd.f32 %v2154, %v2550
  %v2552 = vpop.f32.mrb[0].mxu0
  %v2553 = vpop.f32.mrb[0].mxu0
  %v2554 = vadd.f32 %v2157, %v2553
  %v2555 = vpop.f32.mrb[0].mxu0
  %2556 = vmatprep.mubr.bf16.mxu0 0
  %2557 = vmatmul.mubr.bf16.gmra.mrb[0].mxu0 %v2371
  %v2558 = vpop.f32.mrb[0].mxu0
  %v2559 = vadd.f32 %v2162, %v2558
  %v2560 = vpop.f32.mrb[0].mxu0
  %v2561 = vpop.f32.mrb[0].mxu0
  %v2562 = vadd.f32 %v2165, %v2561
  %v2563 = vpop.f32.mrb[0].mxu0
  %2564 = vmatprep.mubr.bf16.mxu0 0
  %2565 = vmatmul.mubr.bf16.gmra.mrb[0].mxu0 %v2374
  %v2566 = vpop.f32.mrb[0].mxu0
  %v2567 = vadd.f32 %v2170, %v2566
  %v2568 = vpop.f32.mrb[0].mxu0
  %v2569 = vpop.f32.mrb[0].mxu0
  %v2570 = vadd.f32 %v2173, %v2569
  %v2571 = vpop.f32.mrb[0].mxu0
  %2572 = vmatprep.mubr.bf16.mxu0 0
  %2573 = vmatmul.mubr.bf16.gmra.mrb[0].mxu0 %v2377
  %v2574 = vpop.f32.mrb[0].mxu0
  %v2575 = vadd.f32 %v2178, %v2574
  %v2576 = vpop.f32.mrb[0].mxu0
  %v2577 = vpop.f32.mrb[0].mxu0
  %v2578 = vadd.f32 %v2181, %v2577
  %v2579 = vpop.f32.mrb[0].mxu0
  %2580 = vmatprep.mubr.bf16.mxu0 0
  %2581 = vmatmul.mubr.bf16.gmra.mrb[0].mxu0 %v2380
  %v2582 = vpop.f32.mrb[0].mxu0
  %v2583 = vadd.f32 %v2186, %v2582
  %v2584 = vpop.f32.mrb[0].mxu0
  %v2585 = vpop.f32.mrb[0].mxu0
  %v2586 = vadd.f32 %v2189, %v2585
  %v2587 = vpop.f32.mrb[0].mxu0
  %2588 = vmatprep.mubr.bf16.mxu0 0
  %2589 = vmatmul.mubr.bf16.gmra.mrb[0].mxu0 %v2383
  %v2590 = vpop.f32.mrb[0].mxu0
  %v2591 = vadd.f32 %v2194, %v2590
  %v2592 = vpop.f32.mrb[0].mxu0
  %v2593 = vpop.f32.mrb[0].mxu0
  %v2594 = vadd.f32 %v2197, %v2593
  %v2595 = vpop.f32.mrb[0].mxu0
  %2596 = vmatprep.mubr.bf16.mxu0 0
  %2597 = vmatmul.mubr.bf16.gmra.mrb[0].mxu0 %v2386
  %v2598 = vpop.f32.mrb[0].mxu0
  %v2599 = vadd.f32 %v2202, %v2598
  %v2600 = vpop.f32.mrb[0].mxu0
  %v2601 = vpop.f32.mrb[0].mxu0
  %v2602 = vadd.f32 %v2205, %v2601
  %v2603 = vpop.f32.mrb[0].mxu0
  %2604 = vmatprep.mubr.bf16.mxu0 0
  %2605 = vmatmul.mubr.bf16.gmra.mrb[0].mxu0 %v2389
  %v2606 = vpop.f32.mrb[0].mxu0
  %v2607 = vadd.f32 %v2210, %v2606
  %v2608 = vpop.f32.mrb[0].mxu0
  %v2609 = vpop.f32.mrb[0].mxu0
  %v2610 = vadd.f32 %v2213, %v2609
  %v2611 = vpop.f32.mrb[0].mxu0
  %2612 = vmatprep.mubr.bf16.mxu0 0
  %2613 = vmatmul.mubr.bf16.gmra.mrb[0].mxu0 %v2392
  %v2614 = vpop.f32.mrb[0].mxu0
  %v2615 = vadd.f32 %v2218, %v2614
  %v2616 = vpop.f32.mrb[0].mxu0
  %v2617 = vpop.f32.mrb[0].mxu0
  %v2618 = vadd.f32 %v2221, %v2617
  %v2619 = vpop.f32.mrb[0].mxu0
  %2620 = vmatprep.mubr.bf16.mxu0 0
  %2621 = vmatmul.mubr.bf16.gmra.mrb[0].mxu0 %v2395
  %v2622 = vpop.f32.mrb[0].mxu0
  %v2623 = vadd.f32 %v2226, %v2622
  %v2624 = vpop.f32.mrb[0].mxu0
  %v2625 = vpop.f32.mrb[0].mxu0
  %v2626 = vadd.f32 %v2229, %v2625
  %v2627 = vpop.f32.mrb[0].mxu0
  %2628 = vmatprep.mubr.bf16.mxu0 0
  %2629 = vmatmul.mubr.bf16.gmra.mrb[0].mxu0 %v2398
  %v2630 = vpop.f32.mrb[0].mxu0
  %v2631 = vadd.f32 %v2234, %v2630
  %v2632 = vpop.f32.mrb[0].mxu0
  %v2633 = vpop.f32.mrb[0].mxu0
  %v2634 = vadd.f32 %v2237, %v2633
  %v2635 = vpop.f32.mrb[0].mxu0
  %2636 = vmatprep.mubr.bf16.mxu0 0
  %2637 = vmatmul.mubr.bf16.gmra.mrb[0].mxu0 %v2401
  %v2638 = vpop.f32.mrb[0].mxu0
  %v2639 = vadd.f32 %v2242, %v2638
  %v2640 = vpop.f32.mrb[0].mxu0
  %v2641 = vpop.f32.mrb[0].mxu0
  %v2642 = vadd.f32 %v2245, %v2641
  %v2643 = vpop.f32.mrb[0].mxu0
  %2644 = vmatprep.mubr.bf16.mxu0 0
  %2645 = vmatmul.mubr.bf16.gmra.mrb[0].mxu0 %v2404
  %v2646 = vpop.f32.mrb[0].mxu0
  %v2647 = vadd.f32 %v2250, %v2646
  %v2648 = vpop.f32.mrb[0].mxu0
  %v2649 = vpop.f32.mrb[0].mxu0
  %v2650 = vadd.f32 %v2253, %v2649
  %v2651 = vpop.f32.mrb[0].mxu0
  %2652 = vmatprep.mubr.bf16.mxu0 0
  %2653 = vmatmul.mubr.bf16.gmra.mrb[0].mxu0 %v2407
  %v2654 = vpop.f32.mrb[0].mxu0
  %v2655 = vadd.f32 %v2258, %v2654
  %v2656 = vpop.f32.mrb[0].mxu0
  %v2657 = vpop.f32.mrb[0].mxu0
  %v2658 = vadd.f32 %v2261, %v2657
  %v2659 = vpop.f32.mrb[0].mxu0
  %2660 = vmatprep.mubr.bf16.mxu0 0
  %2661 = vmatmul.mubr.bf16.gmra.mrb[0].mxu0 %v2410
  %v2662 = vpop.f32.mrb[0].mxu0
  %v2663 = vadd.f32 %v2266, %v2662
  %v2664 = vpop.f32.mrb[0].mxu0
  %v2665 = vpop.f32.mrb[0].mxu0
  %v2666 = vadd.f32 %v2269, %v2665
  %v2667 = vpop.f32.mrb[0].mxu0
  %2668 = vmatprep.mubr.bf16.mxu0 0
  %2669 = vmatmul.mubr.bf16.gmra.mrb[0].mxu0 %v2413
  %v2670 = vpop.f32.mrb[0].mxu0
  %v2671 = vadd.f32 %v2274, %v2670
  %v2672 = vpop.f32.mrb[0].mxu0
  %v2673 = vpop.f32.mrb[0].mxu0
  %v2674 = vadd.f32 %v2277, %v2673
  %v2675 = vpop.f32.mrb[0].mxu0
  %2676 = vmatprep.mubr.bf16.mxu0 0
  %2677 = vmatmul.mubr.bf16.gmra.mrb[0].mxu0 %v2416
  %v2678 = vpop.f32.mrb[0].mxu0
  %v2679 = vadd.f32 %v2282, %v2678
  %v2680 = vpop.f32.mrb[0].mxu0
  %v2681 = vpop.f32.mrb[0].mxu0
  %v2682 = vadd.f32 %v2285, %v2681
  %v2683 = vpop.f32.mrb[0].mxu0
  %2684 = vmatprep.mubr.bf16.mxu0 0
  %2685 = vmatmul.mubr.bf16.gmra.mrb[0].mxu0 %v2419
  %v2686 = vpop.f32.mrb[0].mxu0
  %v2687 = vadd.f32 %v2290, %v2686
  %v2688 = vpop.f32.mrb[0].mxu0
  %v2689 = vpop.f32.mrb[0].mxu0
  %v2690 = vadd.f32 %v2293, %v2689
  %v2691 = vpop.f32.mrb[0].mxu0
  %2692 = vmatprep.mubr.bf16.mxu0 0
  %2693 = vmatmul.mubr.bf16.gmra.mrb[0].mxu0 %v2422
  %v2694 = vpop.f32.mrb[0].mxu0
  %v2695 = vadd.f32 %v2298, %v2694
  %v2696 = vpop.f32.mrb[0].mxu0
  %v2697 = vpop.f32.mrb[0].mxu0
  %v2698 = vadd.f32 %v2301, %v2697
  %v2699 = vpop.f32.mrb[0].mxu0
  %2700 = vmatprep.mubr.bf16.mxu0 0
  %2701 = vmatmul.mubr.bf16.gmra.mrb[0].mxu0 %v2425
  %v2702 = vpop.f32.mrb[0].mxu0
  %v2703 = vadd.f32 %v2306, %v2702
  %v2704 = vpop.f32.mrb[0].mxu0
  %v2705 = vpop.f32.mrb[0].mxu0
  %v2706 = vadd.f32 %v2309, %v2705
  %v2707 = vpop.f32.mrb[0].mxu0
  %2708 = vmatprep.mubr.bf16.mxu0 0
  %2709 = vmatmul.mubr.bf16.gmra.mrb[0].mxu0 %v2428
  %v2710 = vpop.f32.mrb[0].mxu0
  %v2711 = vadd.f32 %v2314, %v2710
  %v2712 = vpop.f32.mrb[0].mxu0
  %v2713 = vpop.f32.mrb[0].mxu0
  %v2714 = vadd.f32 %v2317, %v2713
  %v2715 = vpop.f32.mrb[0].mxu0
  %2716 = vmatprep.mubr.bf16.mxu0 0
  %2717 = vmatmul.mubr.bf16.gmra.mrb[0].mxu0 %v2431
  %v2718 = vpop.f32.mrb[0].mxu0
  %v2719 = vadd.f32 %v2322, %v2718
  %v2720 = vpop.f32.mrb[0].mxu0
  %v2721 = vpop.f32.mrb[0].mxu0
  %v2722 = vadd.f32 %v2325, %v2721
  %v2723 = vpop.f32.mrb[0].mxu0
  %2724 = vdwg.mxu0
  %v2725 = vld [vmem:[%s4] sm:$0xf]
  %v2726 = vld [vmem:[%s4 + $0x4] sm:$0xf]
  %v2727 = vld [vmem:[%s4 + $0x8] sm:$0xf]
  %v2731 = vunpack.c.l.b16 %v2725
  %v2732 = vunpack.c.l.b16 %v2726
  %v2733 = vunpack.c.l.b16 %v2727
  %v2734 = vpack.c.b16 %v2732, %v2731
  %v2735 = vpack.c.b16 %v2733, %v2733
  %v2738 = vsel %vm417, %v1892, 0
  %v2741 = vsel %vm417, %v1893, 0
  %v2744 = vsel %vm417, %v1894, 0
  %v2747 = vsel %vm417, %v1895, 0
  %v2750 = vsel %vm417, %v1896, 0
  %v2753 = vsel %vm417, %v1897, 0
  %v2756 = vsel %vm417, %v1898, 0
  %v2759 = vsel %vm417, %v1899, 0
  %v2762 = vsel %vm417, %v1900, 0
  %v2765 = vsel %vm417, %v1901, 0
  %v2768 = vsel %vm417, %v1902, 0
  %v2771 = vsel %vm417, %v1903, 0
  %v2774 = vsel %vm417, %v1904, 0
  %v2777 = vsel %vm417, %v1905, 0
  %v2780 = vsel %vm417, %v1906, 0
  %v2783 = vsel %vm417, %v1907, 0
  %v2786 = vsel %vm417, %v1908, 0
  %v2789 = vsel %vm417, %v1909, 0
  %v2792 = vsel %vm417, %v1910, 0
  %v2795 = vsel %vm417, %v1911, 0
  %v2798 = vsel %vm417, %v1912, 0
  %v2801 = vsel %vm417, %v1913, 0
  %v2804 = vsel %vm417, %v1914, 0
  %v2807 = vsel %vm417, %v1915, 0
  %v2810 = vsel %vm417, %v1916, 0
  %v2813 = vsel %vm417, %v1917, 0
  %v2816 = vsel %vm417, %v1918, 0
  %v2819 = vsel %vm417, %v1919, 0
  %v2822 = vsel %vm417, %v1920, 0
  %v2825 = vsel %vm417, %v1921, 0
  %v2828 = vsel %vm417, %v1922, 0
  %v2831 = vsel %vm417, %v1923, 0
  %v2834 = vsel %vm2035, %v2735, 0
  %2836 = vmatprep.subr.bf16.mxu0 0
  %2837 = vmatpush1.bf16.msra.mxu0 %v2734
  %2838 = vmatprep.subr.bf16.mxu0 0
  %2839 = vmatpush1.bf16.msra.mxu0 %v2834
  %2840 = vmatprep.subr.bf16.mxu0 0
  %2841 = vmatpush1.bf16.msra.mxu0 0
  %2842 = vmatprep.subr.bf16.mxu0 0
  %2843 = vmatpush1.bf16.msra.mxu0 0
  %2844 = vmatprep.subr.bf16.mxu0 0
  %2845 = vmatpush1.bf16.msra.mxu0 0
  %2846 = vmatprep.subr.bf16.mxu0 0
  %2847 = vmatpush1.bf16.msra.mxu0 0
  %2848 = vmatprep.subr.bf16.mxu0 0
  %2849 = vmatpush1.bf16.msra.mxu0 0
  %2850 = vmatprep.subr.bf16.mxu0 0
  %2851 = vmatpush1.bf16.msra.mxu0 0
  %2852 = vmatprep.subr.bf16.mxu0 0
  %2853 = vmatpush1.bf16.msra.mxu0 0
  %2854 = vmatprep.subr.bf16.mxu0 0
  %2855 = vmatpush1.bf16.msra.mxu0 0
  %2856 = vmatprep.subr.bf16.mxu0 0
  %2857 = vmatpush1.bf16.msra.mxu0 0
  %2858 = vmatprep.subr.bf16.mxu0 0
  %2859 = vmatpush1.bf16.msra.mxu0 0
  %2860 = vmatprep.subr.bf16.mxu0 0
  %2861 = vmatpush1.bf16.msra.mxu0 0
  %2862 = vmatprep.subr.bf16.mxu0 0
  %2863 = vmatpush1.bf16.msra.mxu0 0
  %2864 = vmatprep.subr.bf16.mxu0 0
  %2865 = vmatpush1.bf16.msra.mxu0 0
  %2866 = vmatprep.subr.bf16.mxu0 0
  %2867 = vmatpush1.bf16.msra.mxu0 0
  %2868 = vmatprep.mubr.bf16.mxu0 0
  %2869 = vmatmul.mubr.bf16.gmra.mrb[0].mxu0 %v2738
  %v2870 = vpop.f32.mrb[0].mxu0
  %v2871 = vadd.f32 0.0, %v2870
  %v2872 = vpop.f32.mrb[0].mxu0
  %v2873 = vpop.f32.mrb[0].mxu0
  %v2874 = vadd.f32 0.0, %v2873
  %v2875 = vpop.f32.mrb[0].mxu0
  %2876 = vmatprep.mubr.bf16.mxu0 0
  %2877 = vmatmul.mubr.bf16.gmra.mrb[0].mxu0 %v2741
  %v2878 = vpop.f32.mrb[0].mxu0
  %v2879 = vadd.f32 0.0, %v2878
  %v2880 = vpop.f32.mrb[0].mxu0
  %v2881 = vpop.f32.mrb[0].mxu0
  %v2882 = vadd.f32 0.0, %v2881
  %v2883 = vpop.f32.mrb[0].mxu0
  %2884 = vmatprep.mubr.bf16.mxu0 0
  %2885 = vmatmul.mubr.bf16.gmra.mrb[0].mxu0 %v2744
  %v2886 = vpop.f32.mrb[0].mxu0
  %v2887 = vadd.f32 0.0, %v2886
  %v2888 = vpop.f32.mrb[0].mxu0
  %v2889 = vpop.f32.mrb[0].mxu0
  %v2890 = vadd.f32 0.0, %v2889
  %v2891 = vpop.f32.mrb[0].mxu0
  %2892 = vmatprep.mubr.bf16.mxu0 0
  %2893 = vmatmul.mubr.bf16.gmra.mrb[0].mxu0 %v2747
  %v2894 = vpop.f32.mrb[0].mxu0
  %v2895 = vadd.f32 0.0, %v2894
  %v2896 = vpop.f32.mrb[0].mxu0
  %v2897 = vpop.f32.mrb[0].mxu0
  %v2898 = vadd.f32 0.0, %v2897
  %v2899 = vpop.f32.mrb[0].mxu0
  %2900 = vmatprep.mubr.bf16.mxu0 0
  %2901 = vmatmul.mubr.bf16.gmra.mrb[0].mxu0 %v2750
  %v2902 = vpop.f32.mrb[0].mxu0
  %v2903 = vadd.f32 0.0, %v2902
  %v2904 = vpop.f32.mrb[0].mxu0
  %v2905 = vpop.f32.mrb[0].mxu0
  %v2906 = vadd.f32 0.0, %v2905
  %v2907 = vpop.f32.mrb[0].mxu0
  %2908 = vmatprep.mubr.bf16.mxu0 0
  %2909 = vmatmul.mubr.bf16.gmra.mrb[0].mxu0 %v2753
  %v2910 = vpop.f32.mrb[0].mxu0
  %v2911 = vadd.f32 0.0, %v2910
  %v2912 = vpop.f32.mrb[0].mxu0
  %v2913 = vpop.f32.mrb[0].mxu0
  %v2914 = vadd.f32 0.0, %v2913
  %v2915 = vpop.f32.mrb[0].mxu0
  %2916 = vmatprep.mubr.bf16.mxu0 0
  %2917 = vmatmul.mubr.bf16.gmra.mrb[0].mxu0 %v2756
  %v2918 = vpop.f32.mrb[0].mxu0
  %v2919 = vadd.f32 0.0, %v2918
  %v2920 = vpop.f32.mrb[0].mxu0
  %v2921 = vpop.f32.mrb[0].mxu0
  %v2922 = vadd.f32 0.0, %v2921
  %v2923 = vpop.f32.mrb[0].mxu0
  %2924 = vmatprep.mubr.bf16.mxu0 0
  %2925 = vmatmul.mubr.bf16.gmra.mrb[0].mxu0 %v2759
  %v2926 = vpop.f32.mrb[0].mxu0
  %v2927 = vadd.f32 0.0, %v2926
  %v2928 = vpop.f32.mrb[0].mxu0
  %v2929 = vpop.f32.mrb[0].mxu0
  %v2930 = vadd.f32 0.0, %v2929
  %v2931 = vpop.f32.mrb[0].mxu0
  %2932 = vmatprep.mubr.bf16.mxu0 0
  %2933 = vmatmul.mubr.bf16.gmra.mrb[0].mxu0 %v2762
  %v2934 = vpop.f32.mrb[0].mxu0
  %v2935 = vadd.f32 0.0, %v2934
  %v2936 = vpop.f32.mrb[0].mxu0
  %v2937 = vpop.f32.mrb[0].mxu0
  %v2938 = vadd.f32 0.0, %v2937
  %v2939 = vpop.f32.mrb[0].mxu0
  %2940 = vmatprep.mubr.bf16.mxu0 0
  %2941 = vmatmul.mubr.bf16.gmra.mrb[0].mxu0 %v2765
  %v2942 = vpop.f32.mrb[0].mxu0
  %v2943 = vadd.f32 0.0, %v2942
  %v2944 = vpop.f32.mrb[0].mxu0
  %v2945 = vpop.f32.mrb[0].mxu0
  %v2946 = vadd.f32 0.0, %v2945
  %v2947 = vpop.f32.mrb[0].mxu0
  %2948 = vmatprep.mubr.bf16.mxu0 0
  %2949 = vmatmul.mubr.bf16.gmra.mrb[0].mxu0 %v2768
  %v2950 = vpop.f32.mrb[0].mxu0
  %v2951 = vadd.f32 0.0, %v2950
  %v2952 = vpop.f32.mrb[0].mxu0
  %v2953 = vpop.f32.mrb[0].mxu0
  %v2954 = vadd.f32 0.0, %v2953
  %v2955 = vpop.f32.mrb[0].mxu0
  %2956 = vmatprep.mubr.bf16.mxu0 0
  %2957 = vmatmul.mubr.bf16.gmra.mrb[0].mxu0 %v2771
  %v2958 = vpop.f32.mrb[0].mxu0
  %v2959 = vadd.f32 0.0, %v2958
  %v2960 = vpop.f32.mrb[0].mxu0
  %v2961 = vpop.f32.mrb[0].mxu0
  %v2962 = vadd.f32 0.0, %v2961
  %v2963 = vpop.f32.mrb[0].mxu0
  %2964 = vmatprep.mubr.bf16.mxu0 0
  %2965 = vmatmul.mubr.bf16.gmra.mrb[0].mxu0 %v2774
  %v2966 = vpop.f32.mrb[0].mxu0
  %v2967 = vadd.f32 0.0, %v2966
  %v2968 = vpop.f32.mrb[0].mxu0
  %v2969 = vpop.f32.mrb[0].mxu0
  %v2970 = vadd.f32 0.0, %v2969
  %v2971 = vpop.f32.mrb[0].mxu0
  %2972 = vmatprep.mubr.bf16.mxu0 0
  %2973 = vmatmul.mubr.bf16.gmra.mrb[0].mxu0 %v2777
  %v2974 = vpop.f32.mrb[0].mxu0
  %v2975 = vadd.f32 0.0, %v2974
  %v2976 = vpop.f32.mrb[0].mxu0
  %v2977 = vpop.f32.mrb[0].mxu0
  %v2978 = vadd.f32 0.0, %v2977
  %v2979 = vpop.f32.mrb[0].mxu0
  %2980 = vmatprep.mubr.bf16.mxu0 0
  %2981 = vmatmul.mubr.bf16.gmra.mrb[0].mxu0 %v2780
  %v2982 = vpop.f32.mrb[0].mxu0
  %v2983 = vadd.f32 0.0, %v2982
  %v2984 = vpop.f32.mrb[0].mxu0
  %v2985 = vpop.f32.mrb[0].mxu0
  %v2986 = vadd.f32 0.0, %v2985
  %v2987 = vpop.f32.mrb[0].mxu0
  %2988 = vmatprep.mubr.bf16.mxu0 0
  %2989 = vmatmul.mubr.bf16.gmra.mrb[0].mxu0 %v2783
  %v2990 = vpop.f32.mrb[0].mxu0
  %v2991 = vadd.f32 0.0, %v2990
  %v2992 = vpop.f32.mrb[0].mxu0
  %v2993 = vpop.f32.mrb[0].mxu0
  %v2994 = vadd.f32 0.0, %v2993
  %v2995 = vpop.f32.mrb[0].mxu0
  %2996 = vmatprep.mubr.bf16.mxu0 0
  %2997 = vmatmul.mubr.bf16.gmra.mrb[0].mxu0 %v2786
  %v2998 = vpop.f32.mrb[0].mxu0
  %v2999 = vadd.f32 0.0, %v2998
  %v3000 = vpop.f32.mrb[0].mxu0
  %v3001 = vpop.f32.mrb[0].mxu0
  %v3002 = vadd.f32 0.0, %v3001
  %v3003 = vpop.f32.mrb[0].mxu0
  %3004 = vmatprep.mubr.bf16.mxu0 0
  %3005 = vmatmul.mubr.bf16.gmra.mrb[0].mxu0 %v2789
  %v3006 = vpop.f32.mrb[0].mxu0
  %v3007 = vadd.f32 0.0, %v3006
  %v3008 = vpop.f32.mrb[0].mxu0
  %v3009 = vpop.f32.mrb[0].mxu0
  %v3010 = vadd.f32 0.0, %v3009
  %v3011 = vpop.f32.mrb[0].mxu0
  %3012 = vmatprep.mubr.bf16.mxu0 0
  %3013 = vmatmul.mubr.bf16.gmra.mrb[0].mxu0 %v2792
  %v3014 = vpop.f32.mrb[0].mxu0
  %v3015 = vadd.f32 0.0, %v3014
  %v3016 = vpop.f32.mrb[0].mxu0
  %v3017 = vpop.f32.mrb[0].mxu0
  %v3018 = vadd.f32 0.0, %v3017
  %v3019 = vpop.f32.mrb[0].mxu0
  %3020 = vmatprep.mubr.bf16.mxu0 0
  %3021 = vmatmul.mubr.bf16.gmra.mrb[0].mxu0 %v2795
  %v3022 = vpop.f32.mrb[0].mxu0
  %v3023 = vadd.f32 0.0, %v3022
  %v3024 = vpop.f32.mrb[0].mxu0
  %v3025 = vpop.f32.mrb[0].mxu0
  %v3026 = vadd.f32 0.0, %v3025
  %v3027 = vpop.f32.mrb[0].mxu0
  %3028 = vmatprep.mubr.bf16.mxu0 0
  %3029 = vmatmul.mubr.bf16.gmra.mrb[0].mxu0 %v2798
  %v3030 = vpop.f32.mrb[0].mxu0
  %v3031 = vadd.f32 0.0, %v3030
  %v3032 = vpop.f32.mrb[0].mxu0
  %v3033 = vpop.f32.mrb[0].mxu0
  %v3034 = vadd.f32 0.0, %v3033
  %v3035 = vpop.f32.mrb[0].mxu0
  %3036 = vmatprep.mubr.bf16.mxu0 0
  %3037 = vmatmul.mubr.bf16.gmra.mrb[0].mxu0 %v2801
  %v3038 = vpop.f32.mrb[0].mxu0
  %v3039 = vadd.f32 0.0, %v3038
  %v3040 = vpop.f32.mrb[0].mxu0
  %v3041 = vpop.f32.mrb[0].mxu0
  %v3042 = vadd.f32 0.0, %v3041
  %v3043 = vpop.f32.mrb[0].mxu0
  %3044 = vmatprep.mubr.bf16.mxu0 0
  %3045 = vmatmul.mubr.bf16.gmra.mrb[0].mxu0 %v2804
  %v3046 = vpop.f32.mrb[0].mxu0
  %v3047 = vadd.f32 0.0, %v3046
  %v3048 = vpop.f32.mrb[0].mxu0
  %v3049 = vpop.f32.mrb[0].mxu0
  %v3050 = vadd.f32 0.0, %v3049
  %v3051 = vpop.f32.mrb[0].mxu0
  %3052 = vmatprep.mubr.bf16.mxu0 0
  %3053 = vmatmul.mubr.bf16.gmra.mrb[0].mxu0 %v2807
  %v3054 = vpop.f32.mrb[0].mxu0
  %v3055 = vadd.f32 0.0, %v3054
  %v3056 = vpop.f32.mrb[0].mxu0
  %v3057 = vpop.f32.mrb[0].mxu0
  %v3058 = vadd.f32 0.0, %v3057
  %v3059 = vpop.f32.mrb[0].mxu0
  %3060 = vmatprep.mubr.bf16.mxu0 0
  %3061 = vmatmul.mubr.bf16.gmra.mrb[0].mxu0 %v2810
  %v3062 = vpop.f32.mrb[0].mxu0
  %v3063 = vadd.f32 0.0, %v3062
  %v3064 = vpop.f32.mrb[0].mxu0
  %v3065 = vpop.f32.mrb[0].mxu0
  %v3066 = vadd.f32 0.0, %v3065
  %v3067 = vpop.f32.mrb[0].mxu0
  %3068 = vmatprep.mubr.bf16.mxu0 0
  %3069 = vmatmul.mubr.bf16.gmra.mrb[0].mxu0 %v2813
  %v3070 = vpop.f32.mrb[0].mxu0
  %v3071 = vadd.f32 0.0, %v3070
  %v3072 = vpop.f32.mrb[0].mxu0
  %v3073 = vpop.f32.mrb[0].mxu0
  %v3074 = vadd.f32 0.0, %v3073
  %v3075 = vpop.f32.mrb[0].mxu0
  %3076 = vmatprep.mubr.bf16.mxu0 0
  %3077 = vmatmul.mubr.bf16.gmra.mrb[0].mxu0 %v2816
  %v3078 = vpop.f32.mrb[0].mxu0
  %v3079 = vadd.f32 0.0, %v3078
  %v3080 = vpop.f32.mrb[0].mxu0
  %v3081 = vpop.f32.mrb[0].mxu0
  %v3082 = vadd.f32 0.0, %v3081
  %v3083 = vpop.f32.mrb[0].mxu0
  %3084 = vmatprep.mubr.bf16.mxu0 0
  %3085 = vmatmul.mubr.bf16.gmra.mrb[0].mxu0 %v2819
  %v3086 = vpop.f32.mrb[0].mxu0
  %v3087 = vadd.f32 0.0, %v3086
  %v3088 = vpop.f32.mrb[0].mxu0
  %v3089 = vpop.f32.mrb[0].mxu0
  %v3090 = vadd.f32 0.0, %v3089
  %v3091 = vpop.f32.mrb[0].mxu0
  %3092 = vmatprep.mubr.bf16.mxu0 0
  %3093 = vmatmul.mubr.bf16.gmra.mrb[0].mxu0 %v2822
  %v3094 = vpop.f32.mrb[0].mxu0
  %v3095 = vadd.f32 0.0, %v3094
  %v3096 = vpop.f32.mrb[0].mxu0
  %v3097 = vpop.f32.mrb[0].mxu0
  %v3098 = vadd.f32 0.0, %v3097
  %v3099 = vpop.f32.mrb[0].mxu0
  %3100 = vmatprep.mubr.bf16.mxu0 0
  %3101 = vmatmul.mubr.bf16.gmra.mrb[0].mxu0 %v2825
  %v3102 = vpop.f32.mrb[0].mxu0
  %v3103 = vadd.f32 0.0, %v3102
  %v3104 = vpop.f32.mrb[0].mxu0
  %v3105 = vpop.f32.mrb[0].mxu0
  %v3106 = vadd.f32 0.0, %v3105
  %v3107 = vpop.f32.mrb[0].mxu0
  %3108 = vmatprep.mubr.bf16.mxu0 0
  %3109 = vmatmul.mubr.bf16.gmra.mrb[0].mxu0 %v2828
  %v3110 = vpop.f32.mrb[0].mxu0
  %v3111 = vadd.f32 0.0, %v3110
  %v3112 = vpop.f32.mrb[0].mxu0
  %v3113 = vpop.f32.mrb[0].mxu0
  %v3114 = vadd.f32 0.0, %v3113
  %v3115 = vpop.f32.mrb[0].mxu0
  %3116 = vmatprep.mubr.bf16.mxu0 0
  %3117 = vmatmul.mubr.bf16.gmra.mrb[0].mxu0 %v2831
  %v3118 = vpop.f32.mrb[0].mxu0
  %v3119 = vadd.f32 0.0, %v3118
  %v3120 = vpop.f32.mrb[0].mxu0
  %v3121 = vpop.f32.mrb[0].mxu0
  %v3122 = vadd.f32 0.0, %v3121
  %v3123 = vpop.f32.mrb[0].mxu0
  %3124 = vdwg.mxu0
  %v3125 = vadd.f32 %v2471, %v2871
  %v3126 = vadd.f32 %v2474, %v2874
  %v3127 = vadd.f32 %v2479, %v2879
  %v3128 = vadd.f32 %v2482, %v2882
  %v3129 = vadd.f32 %v2487, %v2887
  %v3130 = vadd.f32 %v2490, %v2890
  %v3131 = vadd.f32 %v2495, %v2895
  %v3132 = vadd.f32 %v2498, %v2898
  %v3133 = vadd.f32 %v2503, %v2903
  %v3134 = vadd.f32 %v2506, %v2906
  %v3135 = vadd.f32 %v2511, %v2911
  %v3136 = vadd.f32 %v2514, %v2914
  %v3137 = vadd.f32 %v2519, %v2919
  %v3138 = vadd.f32 %v2522, %v2922
  %v3139 = vadd.f32 %v2527, %v2927
  %v3140 = vadd.f32 %v2530, %v2930
  %v3141 = vadd.f32 %v2535, %v2935
  %v3142 = vadd.f32 %v2538, %v2938
  %v3143 = vadd.f32 %v2543, %v2943
  %v3144 = vadd.f32 %v2546, %v2946
  %v3145 = vadd.f32 %v2551, %v2951
  %v3146 = vadd.f32 %v2554, %v2954
  %v3147 = vadd.f32 %v2559, %v2959
  %v3148 = vadd.f32 %v2562, %v2962
  %v3149 = vadd.f32 %v2567, %v2967
  %v3150 = vadd.f32 %v2570, %v2970
  %v3151 = vadd.f32 %v2575, %v2975
  %v3152 = vadd.f32 %v2578, %v2978
  %v3153 = vadd.f32 %v2583, %v2983
  %v3154 = vadd.f32 %v2586, %v2986
  %v3155 = vadd.f32 %v2591, %v2991
  %v3156 = vadd.f32 %v2594, %v2994
  %v3157 = vadd.f32 %v2599, %v2999
  %v3158 = vadd.f32 %v2602, %v3002
  %v3159 = vadd.f32 %v2607, %v3007
  %v3160 = vadd.f32 %v2610, %v3010
  %v3161 = vadd.f32 %v2615, %v3015
  %v3162 = vadd.f32 %v2618, %v3018
  %v3163 = vadd.f32 %v2623, %v3023
  %v3164 = vadd.f32 %v2626, %v3026
  %v3165 = vadd.f32 %v2631, %v3031
  %v3166 = vadd.f32 %v2634, %v3034
  %v3167 = vadd.f32 %v2639, %v3039
  %v3168 = vadd.f32 %v2642, %v3042
  %v3169 = vadd.f32 %v2647, %v3047
  %v3170 = vadd.f32 %v2650, %v3050
  %v3171 = vadd.f32 %v2655, %v3055
  %v3172 = vadd.f32 %v2658, %v3058
  %v3173 = vadd.f32 %v2663, %v3063
  %v3174 = vadd.f32 %v2666, %v3066
  %v3175 = vadd.f32 %v2671, %v3071
  %v3176 = vadd.f32 %v2674, %v3074
  %v3177 = vadd.f32 %v2679, %v3079
  %v3178 = vadd.f32 %v2682, %v3082
  %v3179 = vadd.f32 %v2687, %v3087
  %v3180 = vadd.f32 %v2690, %v3090
  %v3181 = vadd.f32 %v2695, %v3095
  %v3182 = vadd.f32 %v2698, %v3098
  %v3183 = vadd.f32 %v2703, %v3103
  %v3184 = vadd.f32 %v2706, %v3106
  %v3185 = vadd.f32 %v2711, %v3111
  %v3186 = vadd.f32 %v2714, %v3114
  %v3187 = vadd.f32 %v2719, %v3119
  %v3188 = vadd.f32 %v2722, %v3122
  %v3189 = vld [vmem:[%s5] sm:$0x1]
  %v3191 = vlaneseq
  %v3192 = vshrl.u32 %v3191, 7
  %v3193 = vsub.s32 0, %v3192
  %v3194 = vrot.slane %v3189, %v3193
  %v3196 = vadd.f32 %v3125, %v3194
  %v3197 = vadd.f32 %v3126, %v3194
  %v3198 = vadd.f32 %v3127, %v3194
  %v3199 = vadd.f32 %v3128, %v3194
  %v3200 = vadd.f32 %v3129, %v3194
  %v3201 = vadd.f32 %v3130, %v3194
  %v3202 = vadd.f32 %v3131, %v3194
  %v3203 = vadd.f32 %v3132, %v3194
  %v3204 = vadd.f32 %v3133, %v3194
  %v3205 = vadd.f32 %v3134, %v3194
  %v3206 = vadd.f32 %v3135, %v3194
  %v3207 = vadd.f32 %v3136, %v3194
  %v3208 = vadd.f32 %v3137, %v3194
  %v3209 = vadd.f32 %v3138, %v3194
  %v3210 = vadd.f32 %v3139, %v3194
  %v3211 = vadd.f32 %v3140, %v3194
  %v3212 = vadd.f32 %v3141, %v3194
  %v3213 = vadd.f32 %v3142, %v3194
  %v3214 = vadd.f32 %v3143, %v3194
  %v3215 = vadd.f32 %v3144, %v3194
  %v3216 = vadd.f32 %v3145, %v3194
  %v3217 = vadd.f32 %v3146, %v3194
  %v3218 = vadd.f32 %v3147, %v3194
  %v3219 = vadd.f32 %v3148, %v3194
  %v3220 = vadd.f32 %v3149, %v3194
  %v3221 = vadd.f32 %v3150, %v3194
  %v3222 = vadd.f32 %v3151, %v3194
  %v3223 = vadd.f32 %v3152, %v3194
  %v3224 = vadd.f32 %v3153, %v3194
  %v3225 = vadd.f32 %v3154, %v3194
  %v3226 = vadd.f32 %v3155, %v3194
  %v3227 = vadd.f32 %v3156, %v3194
  %v3228 = vadd.f32 %v3157, %v3194
  %v3229 = vadd.f32 %v3158, %v3194
  %v3230 = vadd.f32 %v3159, %v3194
  %v3231 = vadd.f32 %v3160, %v3194
  %v3232 = vadd.f32 %v3161, %v3194
  %v3233 = vadd.f32 %v3162, %v3194
  %v3234 = vadd.f32 %v3163, %v3194
  %v3235 = vadd.f32 %v3164, %v3194
  %v3236 = vadd.f32 %v3165, %v3194
  %v3237 = vadd.f32 %v3166, %v3194
  %v3238 = vadd.f32 %v3167, %v3194
  %v3239 = vadd.f32 %v3168, %v3194
  %v3240 = vadd.f32 %v3169, %v3194
  %v3241 = vadd.f32 %v3170, %v3194
  %v3242 = vadd.f32 %v3171, %v3194
  %v3243 = vadd.f32 %v3172, %v3194
  %v3244 = vadd.f32 %v3173, %v3194
  %v3245 = vadd.f32 %v3174, %v3194
  %v3246 = vadd.f32 %v3175, %v3194
  %v3247 = vadd.f32 %v3176, %v3194
  %v3248 = vadd.f32 %v3177, %v3194
  %v3249 = vadd.f32 %v3178, %v3194
  %v3250 = vadd.f32 %v3179, %v3194
  %v3251 = vadd.f32 %v3180, %v3194
  %v3252 = vadd.f32 %v3181, %v3194
  %v3253 = vadd.f32 %v3182, %v3194
  %v3254 = vadd.f32 %v3183, %v3194
  %v3255 = vadd.f32 %v3184, %v3194
  %v3256 = vadd.f32 %v3185, %v3194
  %v3257 = vadd.f32 %v3186, %v3194
  %v3258 = vadd.f32 %v3187, %v3194
  %v3259 = vadd.f32 %v3188, %v3194
  %v3260 = vmax.f32 %v3196, 0.0
  %v3261 = vmax.f32 %v3197, 0.0
  %v3262 = vmax.f32 %v3198, 0.0
  %v3263 = vmax.f32 %v3199, 0.0
  %v3264 = vmax.f32 %v3200, 0.0
  %v3265 = vmax.f32 %v3201, 0.0
  %v3266 = vmax.f32 %v3202, 0.0
  %v3267 = vmax.f32 %v3203, 0.0
  %v3268 = vmax.f32 %v3204, 0.0
  %v3269 = vmax.f32 %v3205, 0.0
  %v3270 = vmax.f32 %v3206, 0.0
  %v3271 = vmax.f32 %v3207, 0.0
  %v3272 = vmax.f32 %v3208, 0.0
  %v3273 = vmax.f32 %v3209, 0.0
  %v3274 = vmax.f32 %v3210, 0.0
  %v3275 = vmax.f32 %v3211, 0.0
  %v3276 = vmax.f32 %v3212, 0.0
  %v3277 = vmax.f32 %v3213, 0.0
  %v3278 = vmax.f32 %v3214, 0.0
  %v3279 = vmax.f32 %v3215, 0.0
  %v3280 = vmax.f32 %v3216, 0.0
  %v3281 = vmax.f32 %v3217, 0.0
  %v3282 = vmax.f32 %v3218, 0.0
  %v3283 = vmax.f32 %v3219, 0.0
  %v3284 = vmax.f32 %v3220, 0.0
  %v3285 = vmax.f32 %v3221, 0.0
  %v3286 = vmax.f32 %v3222, 0.0
  %v3287 = vmax.f32 %v3223, 0.0
  %v3288 = vmax.f32 %v3224, 0.0
  %v3289 = vmax.f32 %v3225, 0.0
  %v3290 = vmax.f32 %v3226, 0.0
  %v3291 = vmax.f32 %v3227, 0.0
  %v3292 = vmax.f32 %v3228, 0.0
  %v3293 = vmax.f32 %v3229, 0.0
  %v3294 = vmax.f32 %v3230, 0.0
  %v3295 = vmax.f32 %v3231, 0.0
  %v3296 = vmax.f32 %v3232, 0.0
  %v3297 = vmax.f32 %v3233, 0.0
  %v3298 = vmax.f32 %v3234, 0.0
  %v3299 = vmax.f32 %v3235, 0.0
  %v3300 = vmax.f32 %v3236, 0.0
  %v3301 = vmax.f32 %v3237, 0.0
  %v3302 = vmax.f32 %v3238, 0.0
  %v3303 = vmax.f32 %v3239, 0.0
  %v3304 = vmax.f32 %v3240, 0.0
  %v3305 = vmax.f32 %v3241, 0.0
  %v3306 = vmax.f32 %v3242, 0.0
  %v3307 = vmax.f32 %v3243, 0.0
  %v3308 = vmax.f32 %v3244, 0.0
  %v3309 = vmax.f32 %v3245, 0.0
  %v3310 = vmax.f32 %v3246, 0.0
  %v3311 = vmax.f32 %v3247, 0.0
  %v3312 = vmax.f32 %v3248, 0.0
  %v3313 = vmax.f32 %v3249, 0.0
  %v3314 = vmax.f32 %v3250, 0.0
  %v3315 = vmax.f32 %v3251, 0.0
  %v3316 = vmax.f32 %v3252, 0.0
  %v3317 = vmax.f32 %v3253, 0.0
  %v3318 = vmax.f32 %v3254, 0.0
  %v3319 = vmax.f32 %v3255, 0.0
  %v3320 = vmax.f32 %v3256, 0.0
  %v3321 = vmax.f32 %v3257, 0.0
  %v3322 = vmax.f32 %v3258, 0.0
  %v3323 = vmax.f32 %v3259, 0.0
  %v3324 = vpack.c.bf16 %v3261, %v3260
  %v3325 = vpack.c.bf16 %v3263, %v3262
  %v3326 = vpack.c.bf16 %v3265, %v3264
  %v3327 = vpack.c.bf16 %v3267, %v3266
  %v3328 = vpack.c.bf16 %v3269, %v3268
  %v3329 = vpack.c.bf16 %v3271, %v3270
  %v3330 = vpack.c.bf16 %v3273, %v3272
  %v3331 = vpack.c.bf16 %v3275, %v3274
  %v3332 = vpack.c.bf16 %v3277, %v3276
  %v3333 = vpack.c.bf16 %v3279, %v3278
  %v3334 = vpack.c.bf16 %v3281, %v3280
  %v3335 = vpack.c.bf16 %v3283, %v3282
  %v3336 = vpack.c.bf16 %v3285, %v3284
  %v3337 = vpack.c.bf16 %v3287, %v3286
  %v3338 = vpack.c.bf16 %v3289, %v3288
  %v3339 = vpack.c.bf16 %v3291, %v3290
  %v3340 = vpack.c.bf16 %v3293, %v3292
  %v3341 = vpack.c.bf16 %v3295, %v3294
  %v3342 = vpack.c.bf16 %v3297, %v3296
  %v3343 = vpack.c.bf16 %v3299, %v3298
  %v3344 = vpack.c.bf16 %v3301, %v3300
  %v3345 = vpack.c.bf16 %v3303, %v3302
  %v3346 = vpack.c.bf16 %v3305, %v3304
  %v3347 = vpack.c.bf16 %v3307, %v3306
  %v3348 = vpack.c.bf16 %v3309, %v3308
  %v3349 = vpack.c.bf16 %v3311, %v3310
  %v3350 = vpack.c.bf16 %v3313, %v3312
  %v3351 = vpack.c.bf16 %v3315, %v3314
  %v3352 = vpack.c.bf16 %v3317, %v3316
  %v3353 = vpack.c.bf16 %v3319, %v3318
  %v3354 = vpack.c.bf16 %v3321, %v3320
  %v3355 = vpack.c.bf16 %v3323, %v3322
  %v3356 = vld [vmem:[%s6] sm:$0xf]
  %v3357 = vld [vmem:[%s6 + $0x4] sm:$0xf]
  %v3358 = vld [vmem:[%s6 + $0x8] sm:$0xf]
  %v3359 = vld [vmem:[%s6 + $0xc] sm:$0xf]
  %v3360 = vld [vmem:[%s7] sm:$0x1]
  %v3362 = vlaneseq
  %v3363 = vshrl.u32 %v3362, 7
  %v3364 = vsub.s32 0, %v3363
  %v3365 = vrot.slane %v3360, %v3364
  %v3371 = vunpack.c.l.b16 %v3356
  %v3372 = vunpack.c.l.b16 %v3357
  %v3373 = vunpack.c.l.b16 %v3358
  %v3374 = vunpack.c.l.b16 %v3359
  %v3375 = vpack.c.b16 %v3372, %v3371
  %v3376 = vpack.c.b16 %v3374, %v3373
  %vm3379 = vcmask 261120
  %v3381 = vsel %vm3379, %v3324, 0
  %v3384 = vsel %vm3379, %v3325, 0
  %v3387 = vsel %vm3379, %v3326, 0
  %v3390 = vsel %vm3379, %v3327, 0
  %v3393 = vsel %vm3379, %v3328, 0
  %v3396 = vsel %vm3379, %v3329, 0
  %v3399 = vsel %vm3379, %v3330, 0
  %v3402 = vsel %vm3379, %v3331, 0
  %v3405 = vsel %vm3379, %v3332, 0
  %v3408 = vsel %vm3379, %v3333, 0
  %v3411 = vsel %vm3379, %v3334, 0
  %v3414 = vsel %vm3379, %v3335, 0
  %v3417 = vsel %vm3379, %v3336, 0
  %v3420 = vsel %vm3379, %v3337, 0
  %v3423 = vsel %vm3379, %v3338, 0
  %v3426 = vsel %vm3379, %v3339, 0
  %v3429 = vsel %vm3379, %v3340, 0
  %v3432 = vsel %vm3379, %v3341, 0
  %v3435 = vsel %vm3379, %v3342, 0
  %v3438 = vsel %vm3379, %v3343, 0
  %v3441 = vsel %vm3379, %v3344, 0
  %v3444 = vsel %vm3379, %v3345, 0
  %v3447 = vsel %vm3379, %v3346, 0
  %v3450 = vsel %vm3379, %v3347, 0
  %v3453 = vsel %vm3379, %v3348, 0
  %v3456 = vsel %vm3379, %v3349, 0
  %v3459 = vsel %vm3379, %v3350, 0
  %v3462 = vsel %vm3379, %v3351, 0
  %v3465 = vsel %vm3379, %v3352, 0
  %v3468 = vsel %vm3379, %v3353, 0
  %v3471 = vsel %vm3379, %v3354, 0
  %v3474 = vsel %vm3379, %v3355, 0
  %3476 = vmatprep.subr.bf16.mxu0 0
  %3477 = vmatpush1.bf16.msra.mxu0 %v3375
  %3478 = vmatprep.subr.bf16.mxu0 0
  %3479 = vmatpush1.bf16.msra.mxu0 %v3376
  %3480 = vmatprep.subr.bf16.mxu0 0
  %3481 = vmatpush1.bf16.msra.mxu0 0
  %3482 = vmatprep.subr.bf16.mxu0 0
  %3483 = vmatpush1.bf16.msra.mxu0 0
  %3484 = vmatprep.subr.bf16.mxu0 0
  %3485 = vmatpush1.bf16.msra.mxu0 0
  %3486 = vmatprep.subr.bf16.mxu0 0
  %3487 = vmatpush1.bf16.msra.mxu0 0
  %3488 = vmatprep.subr.bf16.mxu0 0
  %3489 = vmatpush1.bf16.msra.mxu0 0
  %3490 = vmatprep.subr.bf16.mxu0 0
  %3491 = vmatpush1.bf16.msra.mxu0 0
  %3492 = vmatprep.subr.bf16.mxu0 0
  %3493 = vmatpush1.bf16.msra.mxu0 0
  %3494 = vmatprep.subr.bf16.mxu0 0
  %3495 = vmatpush1.bf16.msra.mxu0 0
  %3496 = vmatprep.subr.bf16.mxu0 0
  %3497 = vmatpush1.bf16.msra.mxu0 0
  %3498 = vmatprep.subr.bf16.mxu0 0
  %3499 = vmatpush1.bf16.msra.mxu0 0
  %3500 = vmatprep.subr.bf16.mxu0 0
  %3501 = vmatpush1.bf16.msra.mxu0 0
  %3502 = vmatprep.subr.bf16.mxu0 0
  %3503 = vmatpush1.bf16.msra.mxu0 0
  %3504 = vmatprep.subr.bf16.mxu0 0
  %3505 = vmatpush1.bf16.msra.mxu0 0
  %3506 = vmatprep.subr.bf16.mxu0 0
  %3507 = vmatpush1.bf16.msra.mxu0 0
  %3508 = vmatprep.mubr.bf16.mxu0 0
  %3509 = vmatmul.mubr.bf16.gmra.mrb[0].mxu0 %v3381
  %v3510 = vpop.f32.mrb[0].mxu0
  %v3511 = vadd.f32 %v3365, %v3510
  %v3512 = vpop.f32.mrb[0].mxu0
  %v3513 = vpop.f32.mrb[0].mxu0
  %v3514 = vadd.f32 %v3365, %v3513
  %v3515 = vpop.f32.mrb[0].mxu0
  %3516 = vmatprep.mubr.bf16.mxu0 0
  %3517 = vmatmul.mubr.bf16.gmra.mrb[0].mxu0 %v3384
  %v3518 = vpop.f32.mrb[0].mxu0
  %v3519 = vadd.f32 %v3365, %v3518
  %v3520 = vpop.f32.mrb[0].mxu0
  %v3521 = vpop.f32.mrb[0].mxu0
  %v3522 = vadd.f32 %v3365, %v3521
  %v3523 = vpop.f32.mrb[0].mxu0
  %3524 = vmatprep.mubr.bf16.mxu0 0
  %3525 = vmatmul.mubr.bf16.gmra.mrb[0].mxu0 %v3387
  %v3526 = vpop.f32.mrb[0].mxu0
  %v3527 = vadd.f32 %v3365, %v3526
  %v3528 = vpop.f32.mrb[0].mxu0
  %v3529 = vpop.f32.mrb[0].mxu0
  %v3530 = vadd.f32 %v3365, %v3529
  %v3531 = vpop.f32.mrb[0].mxu0
  %3532 = vmatprep.mubr.bf16.mxu0 0
  %3533 = vmatmul.mubr.bf16.gmra.mrb[0].mxu0 %v3390
  %v3534 = vpop.f32.mrb[0].mxu0
  %v3535 = vadd.f32 %v3365, %v3534
  %v3536 = vpop.f32.mrb[0].mxu0
  %v3537 = vpop.f32.mrb[0].mxu0
  %v3538 = vadd.f32 %v3365, %v3537
  %v3539 = vpop.f32.mrb[0].mxu0
  %3540 = vmatprep.mubr.bf16.mxu0 0
  %3541 = vmatmul.mubr.bf16.gmra.mrb[0].mxu0 %v3393
  %v3542 = vpop.f32.mrb[0].mxu0
  %v3543 = vadd.f32 %v3365, %v3542
  %v3544 = vpop.f32.mrb[0].mxu0
  %v3545 = vpop.f32.mrb[0].mxu0
  %v3546 = vadd.f32 %v3365, %v3545
  %v3547 = vpop.f32.mrb[0].mxu0
  %3548 = vmatprep.mubr.bf16.mxu0 0
  %3549 = vmatmul.mubr.bf16.gmra.mrb[0].mxu0 %v3396
  %v3550 = vpop.f32.mrb[0].mxu0
  %v3551 = vadd.f32 %v3365, %v3550
  %v3552 = vpop.f32.mrb[0].mxu0
  %v3553 = vpop.f32.mrb[0].mxu0
  %v3554 = vadd.f32 %v3365, %v3553
  %v3555 = vpop.f32.mrb[0].mxu0
  %3556 = vmatprep.mubr.bf16.mxu0 0
  %3557 = vmatmul.mubr.bf16.gmra.mrb[0].mxu0 %v3399
  %v3558 = vpop.f32.mrb[0].mxu0
  %v3559 = vadd.f32 %v3365, %v3558
  %v3560 = vpop.f32.mrb[0].mxu0
  %v3561 = vpop.f32.mrb[0].mxu0
  %v3562 = vadd.f32 %v3365, %v3561
  %v3563 = vpop.f32.mrb[0].mxu0
  %3564 = vmatprep.mubr.bf16.mxu0 0
  %3565 = vmatmul.mubr.bf16.gmra.mrb[0].mxu0 %v3402
  %v3566 = vpop.f32.mrb[0].mxu0
  %v3567 = vadd.f32 %v3365, %v3566
  %v3568 = vpop.f32.mrb[0].mxu0
  %v3569 = vpop.f32.mrb[0].mxu0
  %v3570 = vadd.f32 %v3365, %v3569
  %v3571 = vpop.f32.mrb[0].mxu0
  %3572 = vmatprep.mubr.bf16.mxu0 0
  %3573 = vmatmul.mubr.bf16.gmra.mrb[0].mxu0 %v3405
  %v3574 = vpop.f32.mrb[0].mxu0
  %v3575 = vadd.f32 %v3365, %v3574
  %v3576 = vpop.f32.mrb[0].mxu0
  %v3577 = vpop.f32.mrb[0].mxu0
  %v3578 = vadd.f32 %v3365, %v3577
  %v3579 = vpop.f32.mrb[0].mxu0
  %3580 = vmatprep.mubr.bf16.mxu0 0
  %3581 = vmatmul.mubr.bf16.gmra.mrb[0].mxu0 %v3408
  %v3582 = vpop.f32.mrb[0].mxu0
  %v3583 = vadd.f32 %v3365, %v3582
  %v3584 = vpop.f32.mrb[0].mxu0
  %v3585 = vpop.f32.mrb[0].mxu0
  %v3586 = vadd.f32 %v3365, %v3585
  %v3587 = vpop.f32.mrb[0].mxu0
  %3588 = vmatprep.mubr.bf16.mxu0 0
  %3589 = vmatmul.mubr.bf16.gmra.mrb[0].mxu0 %v3411
  %v3590 = vpop.f32.mrb[0].mxu0
  %v3591 = vadd.f32 %v3365, %v3590
  %v3592 = vpop.f32.mrb[0].mxu0
  %v3593 = vpop.f32.mrb[0].mxu0
  %v3594 = vadd.f32 %v3365, %v3593
  %v3595 = vpop.f32.mrb[0].mxu0
  %3596 = vmatprep.mubr.bf16.mxu0 0
  %3597 = vmatmul.mubr.bf16.gmra.mrb[0].mxu0 %v3414
  %v3598 = vpop.f32.mrb[0].mxu0
  %v3599 = vadd.f32 %v3365, %v3598
  %v3600 = vpop.f32.mrb[0].mxu0
  %v3601 = vpop.f32.mrb[0].mxu0
  %v3602 = vadd.f32 %v3365, %v3601
  %v3603 = vpop.f32.mrb[0].mxu0
  %3604 = vmatprep.mubr.bf16.mxu0 0
  %3605 = vmatmul.mubr.bf16.gmra.mrb[0].mxu0 %v3417
  %v3606 = vpop.f32.mrb[0].mxu0
  %v3607 = vadd.f32 %v3365, %v3606
  %v3608 = vpop.f32.mrb[0].mxu0
  %v3609 = vpop.f32.mrb[0].mxu0
  %v3610 = vadd.f32 %v3365, %v3609
  %v3611 = vpop.f32.mrb[0].mxu0
  %3612 = vmatprep.mubr.bf16.mxu0 0
  %3613 = vmatmul.mubr.bf16.gmra.mrb[0].mxu0 %v3420
  %v3614 = vpop.f32.mrb[0].mxu0
  %v3615 = vadd.f32 %v3365, %v3614
  %v3616 = vpop.f32.mrb[0].mxu0
  %v3617 = vpop.f32.mrb[0].mxu0
  %v3618 = vadd.f32 %v3365, %v3617
  %v3619 = vpop.f32.mrb[0].mxu0
  %3620 = vmatprep.mubr.bf16.mxu0 0
  %3621 = vmatmul.mubr.bf16.gmra.mrb[0].mxu0 %v3423
  %v3622 = vpop.f32.mrb[0].mxu0
  %v3623 = vadd.f32 %v3365, %v3622
  %v3624 = vpop.f32.mrb[0].mxu0
  %v3625 = vpop.f32.mrb[0].mxu0
  %v3626 = vadd.f32 %v3365, %v3625
  %v3627 = vpop.f32.mrb[0].mxu0
  %3628 = vmatprep.mubr.bf16.mxu0 0
  %3629 = vmatmul.mubr.bf16.gmra.mrb[0].mxu0 %v3426
  %v3630 = vpop.f32.mrb[0].mxu0
  %v3631 = vadd.f32 %v3365, %v3630
  %v3632 = vpop.f32.mrb[0].mxu0
  %v3633 = vpop.f32.mrb[0].mxu0
  %v3634 = vadd.f32 %v3365, %v3633
  %v3635 = vpop.f32.mrb[0].mxu0
  %3636 = vmatprep.mubr.bf16.mxu0 0
  %3637 = vmatmul.mubr.bf16.gmra.mrb[0].mxu0 %v3429
  %v3638 = vpop.f32.mrb[0].mxu0
  %v3639 = vadd.f32 %v3365, %v3638
  %v3640 = vpop.f32.mrb[0].mxu0
  %v3641 = vpop.f32.mrb[0].mxu0
  %v3642 = vadd.f32 %v3365, %v3641
  %v3643 = vpop.f32.mrb[0].mxu0
  %3644 = vmatprep.mubr.bf16.mxu0 0
  %3645 = vmatmul.mubr.bf16.gmra.mrb[0].mxu0 %v3432
  %v3646 = vpop.f32.mrb[0].mxu0
  %v3647 = vadd.f32 %v3365, %v3646
  %v3648 = vpop.f32.mrb[0].mxu0
  %v3649 = vpop.f32.mrb[0].mxu0
  %v3650 = vadd.f32 %v3365, %v3649
  %v3651 = vpop.f32.mrb[0].mxu0
  %3652 = vmatprep.mubr.bf16.mxu0 0
  %3653 = vmatmul.mubr.bf16.gmra.mrb[0].mxu0 %v3435
  %v3654 = vpop.f32.mrb[0].mxu0
  %v3655 = vadd.f32 %v3365, %v3654
  %v3656 = vpop.f32.mrb[0].mxu0
  %v3657 = vpop.f32.mrb[0].mxu0
  %v3658 = vadd.f32 %v3365, %v3657
  %v3659 = vpop.f32.mrb[0].mxu0
  %3660 = vmatprep.mubr.bf16.mxu0 0
  %3661 = vmatmul.mubr.bf16.gmra.mrb[0].mxu0 %v3438
  %v3662 = vpop.f32.mrb[0].mxu0
  %v3663 = vadd.f32 %v3365, %v3662
  %v3664 = vpop.f32.mrb[0].mxu0
  %v3665 = vpop.f32.mrb[0].mxu0
  %v3666 = vadd.f32 %v3365, %v3665
  %v3667 = vpop.f32.mrb[0].mxu0
  %3668 = vmatprep.mubr.bf16.mxu0 0
  %3669 = vmatmul.mubr.bf16.gmra.mrb[0].mxu0 %v3441
  %v3670 = vpop.f32.mrb[0].mxu0
  %v3671 = vadd.f32 %v3365, %v3670
  %v3672 = vpop.f32.mrb[0].mxu0
  %v3673 = vpop.f32.mrb[0].mxu0
  %v3674 = vadd.f32 %v3365, %v3673
  %v3675 = vpop.f32.mrb[0].mxu0
  %3676 = vmatprep.mubr.bf16.mxu0 0
  %3677 = vmatmul.mubr.bf16.gmra.mrb[0].mxu0 %v3444
  %v3678 = vpop.f32.mrb[0].mxu0
  %v3679 = vadd.f32 %v3365, %v3678
  %v3680 = vpop.f32.mrb[0].mxu0
  %v3681 = vpop.f32.mrb[0].mxu0
  %v3682 = vadd.f32 %v3365, %v3681
  %v3683 = vpop.f32.mrb[0].mxu0
  %3684 = vmatprep.mubr.bf16.mxu0 0
  %3685 = vmatmul.mubr.bf16.gmra.mrb[0].mxu0 %v3447
  %v3686 = vpop.f32.mrb[0].mxu0
  %v3687 = vadd.f32 %v3365, %v3686
  %v3688 = vpop.f32.mrb[0].mxu0
  %v3689 = vpop.f32.mrb[0].mxu0
  %v3690 = vadd.f32 %v3365, %v3689
  %v3691 = vpop.f32.mrb[0].mxu0
  %3692 = vmatprep.mubr.bf16.mxu0 0
  %3693 = vmatmul.mubr.bf16.gmra.mrb[0].mxu0 %v3450
  %v3694 = vpop.f32.mrb[0].mxu0
  %v3695 = vadd.f32 %v3365, %v3694
  %v3696 = vpop.f32.mrb[0].mxu0
  %v3697 = vpop.f32.mrb[0].mxu0
  %v3698 = vadd.f32 %v3365, %v3697
  %v3699 = vpop.f32.mrb[0].mxu0
  %3700 = vmatprep.mubr.bf16.mxu0 0
  %3701 = vmatmul.mubr.bf16.gmra.mrb[0].mxu0 %v3453
  %v3702 = vpop.f32.mrb[0].mxu0
  %v3703 = vadd.f32 %v3365, %v3702
  %v3704 = vpop.f32.mrb[0].mxu0
  %v3705 = vpop.f32.mrb[0].mxu0
  %v3706 = vadd.f32 %v3365, %v3705
  %v3707 = vpop.f32.mrb[0].mxu0
  %3708 = vmatprep.mubr.bf16.mxu0 0
  %3709 = vmatmul.mubr.bf16.gmra.mrb[0].mxu0 %v3456
  %v3710 = vpop.f32.mrb[0].mxu0
  %v3711 = vadd.f32 %v3365, %v3710
  %v3712 = vpop.f32.mrb[0].mxu0
  %v3713 = vpop.f32.mrb[0].mxu0
  %v3714 = vadd.f32 %v3365, %v3713
  %v3715 = vpop.f32.mrb[0].mxu0
  %3716 = vmatprep.mubr.bf16.mxu0 0
  %3717 = vmatmul.mubr.bf16.gmra.mrb[0].mxu0 %v3459
  %v3718 = vpop.f32.mrb[0].mxu0
  %v3719 = vadd.f32 %v3365, %v3718
  %v3720 = vpop.f32.mrb[0].mxu0
  %v3721 = vpop.f32.mrb[0].mxu0
  %v3722 = vadd.f32 %v3365, %v3721
  %v3723 = vpop.f32.mrb[0].mxu0
  %3724 = vmatprep.mubr.bf16.mxu0 0
  %3725 = vmatmul.mubr.bf16.gmra.mrb[0].mxu0 %v3462
  %v3726 = vpop.f32.mrb[0].mxu0
  %v3727 = vadd.f32 %v3365, %v3726
  %v3728 = vpop.f32.mrb[0].mxu0
  %v3729 = vpop.f32.mrb[0].mxu0
  %v3730 = vadd.f32 %v3365, %v3729
  %v3731 = vpop.f32.mrb[0].mxu0
  %3732 = vmatprep.mubr.bf16.mxu0 0
  %3733 = vmatmul.mubr.bf16.gmra.mrb[0].mxu0 %v3465
  %v3734 = vpop.f32.mrb[0].mxu0
  %v3735 = vadd.f32 %v3365, %v3734
  %v3736 = vpop.f32.mrb[0].mxu0
  %v3737 = vpop.f32.mrb[0].mxu0
  %v3738 = vadd.f32 %v3365, %v3737
  %v3739 = vpop.f32.mrb[0].mxu0
  %3740 = vmatprep.mubr.bf16.mxu0 0
  %3741 = vmatmul.mubr.bf16.gmra.mrb[0].mxu0 %v3468
  %v3742 = vpop.f32.mrb[0].mxu0
  %v3743 = vadd.f32 %v3365, %v3742
  %v3744 = vpop.f32.mrb[0].mxu0
  %v3745 = vpop.f32.mrb[0].mxu0
  %v3746 = vadd.f32 %v3365, %v3745
  %v3747 = vpop.f32.mrb[0].mxu0
  %3748 = vmatprep.mubr.bf16.mxu0 0
  %3749 = vmatmul.mubr.bf16.gmra.mrb[0].mxu0 %v3471
  %v3750 = vpop.f32.mrb[0].mxu0
  %v3751 = vadd.f32 %v3365, %v3750
  %v3752 = vpop.f32.mrb[0].mxu0
  %v3753 = vpop.f32.mrb[0].mxu0
  %v3754 = vadd.f32 %v3365, %v3753
  %v3755 = vpop.f32.mrb[0].mxu0
  %3756 = vmatprep.mubr.bf16.mxu0 0
  %3757 = vmatmul.mubr.bf16.gmra.mrb[0].mxu0 %v3474
  %v3758 = vpop.f32.mrb[0].mxu0
  %v3759 = vadd.f32 %v3365, %v3758
  %v3760 = vpop.f32.mrb[0].mxu0
  %v3761 = vpop.f32.mrb[0].mxu0
  %v3762 = vadd.f32 %v3365, %v3761
  %v3763 = vpop.f32.mrb[0].mxu0
  %3764 = vdwg.mxu0
  %v3765 = vxor.u32 %v3511, 2147483648
  %v3766 = vxor.u32 %v3514, 2147483648
  %v3767 = vxor.u32 %v3519, 2147483648
  %v3768 = vxor.u32 %v3522, 2147483648
  %v3769 = vxor.u32 %v3527, 2147483648
  %v3770 = vxor.u32 %v3530, 2147483648
  %v3771 = vxor.u32 %v3535, 2147483648
  %v3772 = vxor.u32 %v3538, 2147483648
  %v3773 = vxor.u32 %v3543, 2147483648
  %v3774 = vxor.u32 %v3546, 2147483648
  %v3775 = vxor.u32 %v3551, 2147483648
  %v3776 = vxor.u32 %v3554, 2147483648
  %v3777 = vxor.u32 %v3559, 2147483648
  %v3778 = vxor.u32 %v3562, 2147483648
  %v3779 = vxor.u32 %v3567, 2147483648
  %v3780 = vxor.u32 %v3570, 2147483648
  %v3781 = vxor.u32 %v3575, 2147483648
  %v3782 = vxor.u32 %v3578, 2147483648
  %v3783 = vxor.u32 %v3583, 2147483648
  %v3784 = vxor.u32 %v3586, 2147483648
  %v3785 = vxor.u32 %v3591, 2147483648
  %v3786 = vxor.u32 %v3594, 2147483648
  %v3787 = vxor.u32 %v3599, 2147483648
  %v3788 = vxor.u32 %v3602, 2147483648
  %v3789 = vxor.u32 %v3607, 2147483648
  %v3790 = vxor.u32 %v3610, 2147483648
  %v3791 = vxor.u32 %v3615, 2147483648
  %v3792 = vxor.u32 %v3618, 2147483648
  %v3793 = vxor.u32 %v3623, 2147483648
  %v3794 = vxor.u32 %v3626, 2147483648
  %v3795 = vxor.u32 %v3631, 2147483648
  %v3796 = vxor.u32 %v3634, 2147483648
  %v3797 = vxor.u32 %v3639, 2147483648
  %v3798 = vxor.u32 %v3642, 2147483648
  %v3799 = vxor.u32 %v3647, 2147483648
  %v3800 = vxor.u32 %v3650, 2147483648
  %v3801 = vxor.u32 %v3655, 2147483648
  %v3802 = vxor.u32 %v3658, 2147483648
  %v3803 = vxor.u32 %v3663, 2147483648
  %v3804 = vxor.u32 %v3666, 2147483648
  %v3805 = vxor.u32 %v3671, 2147483648
  %v3806 = vxor.u32 %v3674, 2147483648
  %v3807 = vxor.u32 %v3679, 2147483648
  %v3808 = vxor.u32 %v3682, 2147483648
  %v3809 = vxor.u32 %v3687, 2147483648
  %v3810 = vxor.u32 %v3690, 2147483648
  %v3811 = vxor.u32 %v3695, 2147483648
  %v3812 = vxor.u32 %v3698, 2147483648
  %v3813 = vxor.u32 %v3703, 2147483648
  %v3814 = vxor.u32 %v3706, 2147483648
  %v3815 = vxor.u32 %v3711, 2147483648
  %v3816 = vxor.u32 %v3714, 2147483648
  %v3817 = vxor.u32 %v3719, 2147483648
  %v3818 = vxor.u32 %v3722, 2147483648
  %v3819 = vxor.u32 %v3727, 2147483648
  %v3820 = vxor.u32 %v3730, 2147483648
  %v3821 = vxor.u32 %v3735, 2147483648
  %v3822 = vxor.u32 %v3738, 2147483648
  %v3823 = vxor.u32 %v3743, 2147483648
  %v3824 = vxor.u32 %v3746, 2147483648
  %v3825 = vxor.u32 %v3751, 2147483648
  %v3826 = vxor.u32 %v3754, 2147483648
  %v3827 = vxor.u32 %v3759, 2147483648
  %v3828 = vxor.u32 %v3762, 2147483648
  %v3829 = vmul.f32 %v3765, 1.442695
  %v3830 = vpow.pop %v3829
  %v3831 = vmul.f32 %v3766, 1.442695
  %v3832 = vpow.pop %v3831
  %v3833 = vmul.f32 %v3767, 1.442695
  %v3834 = vpow.pop %v3833
  %v3835 = vmul.f32 %v3768, 1.442695
  %v3836 = vpow.pop %v3835
  %v3837 = vmul.f32 %v3769, 1.442695
  %v3838 = vpow.pop %v3837
  %v3839 = vmul.f32 %v3770, 1.442695
  %v3840 = vpow.pop %v3839
  %v3841 = vmul.f32 %v3771, 1.442695
  %v3842 = vpow.pop %v3841
  %v3843 = vmul.f32 %v3772, 1.442695
  %v3844 = vpow.pop %v3843
  %v3845 = vmul.f32 %v3773, 1.442695
  %v3846 = vpow.pop %v3845
  %v3847 = vmul.f32 %v3774, 1.442695
  %v3848 = vpow.pop %v3847
  %v3849 = vmul.f32 %v3775, 1.442695
  %v3850 = vpow.pop %v3849
  %v3851 = vmul.f32 %v3776, 1.442695
  %v3852 = vpow.pop %v3851
  %v3853 = vmul.f32 %v3777, 1.442695
  %v3854 = vpow.pop %v3853
  %v3855 = vmul.f32 %v3778, 1.442695
  %v3856 = vpow.pop %v3855
  %v3857 = vmul.f32 %v3779, 1.442695
  %v3858 = vpow.pop %v3857
  %v3859 = vmul.f32 %v3780, 1.442695
  %v3860 = vpow.pop %v3859
  %v3861 = vmul.f32 %v3781, 1.442695
  %v3862 = vpow.pop %v3861
  %v3863 = vmul.f32 %v3782, 1.442695
  %v3864 = vpow.pop %v3863
  %v3865 = vmul.f32 %v3783, 1.442695
  %v3866 = vpow.pop %v3865
  %v3867 = vmul.f32 %v3784, 1.442695
  %v3868 = vpow.pop %v3867
  %v3869 = vmul.f32 %v3785, 1.442695
  %v3870 = vpow.pop %v3869
  %v3871 = vmul.f32 %v3786, 1.442695
  %v3872 = vpow.pop %v3871
  %v3873 = vmul.f32 %v3787, 1.442695
  %v3874 = vpow.pop %v3873
  %v3875 = vmul.f32 %v3788, 1.442695
  %v3876 = vpow.pop %v3875
  %v3877 = vmul.f32 %v3789, 1.442695
  %v3878 = vpow.pop %v3877
  %v3879 = vmul.f32 %v3790, 1.442695
  %v3880 = vpow.pop %v3879
  %v3881 = vmul.f32 %v3791, 1.442695
  %v3882 = vpow.pop %v3881
  %v3883 = vmul.f32 %v3792, 1.442695
  %v3884 = vpow.pop %v3883
  %v3885 = vmul.f32 %v3793, 1.442695
  %v3886 = vpow.pop %v3885
  %v3887 = vmul.f32 %v3794, 1.442695
  %v3888 = vpow.pop %v3887
  %v3889 = vmul.f32 %v3795, 1.442695
  %v3890 = vpow.pop %v3889
  %v3891 = vmul.f32 %v3796, 1.442695
  %v3892 = vpow.pop %v3891
  %v3893 = vmul.f32 %v3797, 1.442695
  %v3894 = vpow.pop %v3893
  %v3895 = vmul.f32 %v3798, 1.442695
  %v3896 = vpow.pop %v3895
  %v3897 = vmul.f32 %v3799, 1.442695
  %v3898 = vpow.pop %v3897
  %v3899 = vmul.f32 %v3800, 1.442695
  %v3900 = vpow.pop %v3899
  %v3901 = vmul.f32 %v3801, 1.442695
  %v3902 = vpow.pop %v3901
  %v3903 = vmul.f32 %v3802, 1.442695
  %v3904 = vpow.pop %v3903
  %v3905 = vmul.f32 %v3803, 1.442695
  %v3906 = vpow.pop %v3905
  %v3907 = vmul.f32 %v3804, 1.442695
  %v3908 = vpow.pop %v3907
  %v3909 = vmul.f32 %v3805, 1.442695
  %v3910 = vpow.pop %v3909
  %v3911 = vmul.f32 %v3806, 1.442695
  %v3912 = vpow.pop %v3911
  %v3913 = vmul.f32 %v3807, 1.442695
  %v3914 = vpow.pop %v3913
  %v3915 = vmul.f32 %v3808, 1.442695
  %v3916 = vpow.pop %v3915
  %v3917 = vmul.f32 %v3809, 1.442695
  %v3918 = vpow.pop %v3917
  %v3919 = vmul.f32 %v3810, 1.442695
  %v3920 = vpow.pop %v3919
  %v3921 = vmul.f32 %v3811, 1.442695
  %v3922 = vpow.pop %v3921
  %v3923 = vmul.f32 %v3812, 1.442695
  %v3924 = vpow.pop %v3923
  %v3925 = vmul.f32 %v3813, 1.442695
  %v3926 = vpow.pop %v3925
  %v3927 = vmul.f32 %v3814, 1.442695
  %v3928 = vpow.pop %v3927
  %v3929 = vmul.f32 %v3815, 1.442695
  %v3930 = vpow.pop %v3929
  %v3931 = vmul.f32 %v3816, 1.442695
  %v3932 = vpow.pop %v3931
  %v3933 = vmul.f32 %v3817, 1.442695
  %v3934 = vpow.pop %v3933
  %v3935 = vmul.f32 %v3818, 1.442695
  %v3936 = vpow.pop %v3935
  %v3937 = vmul.f32 %v3819, 1.442695
  %v3938 = vpow.pop %v3937
  %v3939 = vmul.f32 %v3820, 1.442695
  %v3940 = vpow.pop %v3939
  %v3941 = vmul.f32 %v3821, 1.442695
  %v3942 = vpow.pop %v3941
  %v3943 = vmul.f32 %v3822, 1.442695
  %v3944 = vpow.pop %v3943
  %v3945 = vmul.f32 %v3823, 1.442695
  %v3946 = vpow.pop %v3945
  %v3947 = vmul.f32 %v3824, 1.442695
  %v3948 = vpow.pop %v3947
  %v3949 = vmul.f32 %v3825, 1.442695
  %v3950 = vpow.pop %v3949
  %v3951 = vmul.f32 %v3826, 1.442695
  %v3952 = vpow.pop %v3951
  %v3953 = vmul.f32 %v3827, 1.442695
  %v3954 = vpow.pop %v3953
  %v3955 = vmul.f32 %v3828, 1.442695
  %v3956 = vpow.pop %v3955
  %v3957 = vadd.f32 %v3830, 1.0
  %v3958 = vadd.f32 %v3832, 1.0
  %v3959 = vadd.f32 %v3834, 1.0
  %v3960 = vadd.f32 %v3836, 1.0
  %v3961 = vadd.f32 %v3838, 1.0
  %v3962 = vadd.f32 %v3840, 1.0
  %v3963 = vadd.f32 %v3842, 1.0
  %v3964 = vadd.f32 %v3844, 1.0
  %v3965 = vadd.f32 %v3846, 1.0
  %v3966 = vadd.f32 %v3848, 1.0
  %v3967 = vadd.f32 %v3850, 1.0
  %v3968 = vadd.f32 %v3852, 1.0
  %v3969 = vadd.f32 %v3854, 1.0
  %v3970 = vadd.f32 %v3856, 1.0
  %v3971 = vadd.f32 %v3858, 1.0
  %v3972 = vadd.f32 %v3860, 1.0
  %v3973 = vadd.f32 %v3862, 1.0
  %v3974 = vadd.f32 %v3864, 1.0
  %v3975 = vadd.f32 %v3866, 1.0
  %v3976 = vadd.f32 %v3868, 1.0
  %v3977 = vadd.f32 %v3870, 1.0
  %v3978 = vadd.f32 %v3872, 1.0
  %v3979 = vadd.f32 %v3874, 1.0
  %v3980 = vadd.f32 %v3876, 1.0
  %v3981 = vadd.f32 %v3878, 1.0
  %v3982 = vadd.f32 %v3880, 1.0
  %v3983 = vadd.f32 %v3882, 1.0
  %v3984 = vadd.f32 %v3884, 1.0
  %v3985 = vadd.f32 %v3886, 1.0
  %v3986 = vadd.f32 %v3888, 1.0
  %v3987 = vadd.f32 %v3890, 1.0
  %v3988 = vadd.f32 %v3892, 1.0
  %v3989 = vadd.f32 %v3894, 1.0
  %v3990 = vadd.f32 %v3896, 1.0
  %v3991 = vadd.f32 %v3898, 1.0
  %v3992 = vadd.f32 %v3900, 1.0
  %v3993 = vadd.f32 %v3902, 1.0
  %v3994 = vadd.f32 %v3904, 1.0
  %v3995 = vadd.f32 %v3906, 1.0
  %v3996 = vadd.f32 %v3908, 1.0
  %v3997 = vadd.f32 %v3910, 1.0
  %v3998 = vadd.f32 %v3912, 1.0
  %v3999 = vadd.f32 %v3914, 1.0
  %v4000 = vadd.f32 %v3916, 1.0
  %v4001 = vadd.f32 %v3918, 1.0
  %v4002 = vadd.f32 %v3920, 1.0
  %v4003 = vadd.f32 %v3922, 1.0
  %v4004 = vadd.f32 %v3924, 1.0
  %v4005 = vadd.f32 %v3926, 1.0
  %v4006 = vadd.f32 %v3928, 1.0
  %v4007 = vadd.f32 %v3930, 1.0
  %v4008 = vadd.f32 %v3932, 1.0
  %v4009 = vadd.f32 %v3934, 1.0
  %v4010 = vadd.f32 %v3936, 1.0
  %v4011 = vadd.f32 %v3938, 1.0
  %v4012 = vadd.f32 %v3940, 1.0
  %v4013 = vadd.f32 %v3942, 1.0
  %v4014 = vadd.f32 %v3944, 1.0
  %v4015 = vadd.f32 %v3946, 1.0
  %v4016 = vadd.f32 %v3948, 1.0
  %v4017 = vadd.f32 %v3950, 1.0
  %v4018 = vadd.f32 %v3952, 1.0
  %v4019 = vadd.f32 %v3954, 1.0
  %v4020 = vadd.f32 %v3956, 1.0
  %v4021 = vrcp.pop %v3957
  %v4022 = vmul.f32 1.0, %v4021
  %v4023 = vrcp.pop %v3958
  %v4024 = vmul.f32 1.0, %v4023
  %v4025 = vrcp.pop %v3959
  %v4026 = vmul.f32 1.0, %v4025
  %v4027 = vrcp.pop %v3960
  %v4028 = vmul.f32 1.0, %v4027
  %v4029 = vrcp.pop %v3961
  %v4030 = vmul.f32 1.0, %v4029
  %v4031 = vrcp.pop %v3962
  %v4032 = vmul.f32 1.0, %v4031
  %v4033 = vrcp.pop %v3963
  %v4034 = vmul.f32 1.0, %v4033
  %v4035 = vrcp.pop %v3964
  %v4036 = vmul.f32 1.0, %v4035
  %v4037 = vrcp.pop %v3965
  %v4038 = vmul.f32 1.0, %v4037
  %v4039 = vrcp.pop %v3966
  %v4040 = vmul.f32 1.0, %v4039
  %v4041 = vrcp.pop %v3967
  %v4042 = vmul.f32 1.0, %v4041
  %v4043 = vrcp.pop %v3968
  %v4044 = vmul.f32 1.0, %v4043
  %v4045 = vrcp.pop %v3969
  %v4046 = vmul.f32 1.0, %v4045
  %v4047 = vrcp.pop %v3970
  %v4048 = vmul.f32 1.0, %v4047
  %v4049 = vrcp.pop %v3971
  %v4050 = vmul.f32 1.0, %v4049
  %v4051 = vrcp.pop %v3972
  %v4052 = vmul.f32 1.0, %v4051
  %v4053 = vrcp.pop %v3973
  %v4054 = vmul.f32 1.0, %v4053
  %v4055 = vrcp.pop %v3974
  %v4056 = vmul.f32 1.0, %v4055
  %v4057 = vrcp.pop %v3975
  %v4058 = vmul.f32 1.0, %v4057
  %v4059 = vrcp.pop %v3976
  %v4060 = vmul.f32 1.0, %v4059
  %v4061 = vrcp.pop %v3977
  %v4062 = vmul.f32 1.0, %v4061
  %v4063 = vrcp.pop %v3978
  %v4064 = vmul.f32 1.0, %v4063
  %v4065 = vrcp.pop %v3979
  %v4066 = vmul.f32 1.0, %v4065
  %v4067 = vrcp.pop %v3980
  %v4068 = vmul.f32 1.0, %v4067
  %v4069 = vrcp.pop %v3981
  %v4070 = vmul.f32 1.0, %v4069
  %v4071 = vrcp.pop %v3982
  %v4072 = vmul.f32 1.0, %v4071
  %v4073 = vrcp.pop %v3983
  %v4074 = vmul.f32 1.0, %v4073
  %v4075 = vrcp.pop %v3984
  %v4076 = vmul.f32 1.0, %v4075
  %v4077 = vrcp.pop %v3985
  %v4078 = vmul.f32 1.0, %v4077
  %v4079 = vrcp.pop %v3986
  %v4080 = vmul.f32 1.0, %v4079
  %v4081 = vrcp.pop %v3987
  %v4082 = vmul.f32 1.0, %v4081
  %v4083 = vrcp.pop %v3988
  %v4084 = vmul.f32 1.0, %v4083
  %v4085 = vrcp.pop %v3989
  %v4086 = vmul.f32 1.0, %v4085
  %v4087 = vrcp.pop %v3990
  %v4088 = vmul.f32 1.0, %v4087
  %v4089 = vrcp.pop %v3991
  %v4090 = vmul.f32 1.0, %v4089
  %v4091 = vrcp.pop %v3992
  %v4092 = vmul.f32 1.0, %v4091
  %v4093 = vrcp.pop %v3993
  %v4094 = vmul.f32 1.0, %v4093
  %v4095 = vrcp.pop %v3994
  %v4096 = vmul.f32 1.0, %v4095
  %v4097 = vrcp.pop %v3995
  %v4098 = vmul.f32 1.0, %v4097
  %v4099 = vrcp.pop %v3996
  %v4100 = vmul.f32 1.0, %v4099
  %v4101 = vrcp.pop %v3997
  %v4102 = vmul.f32 1.0, %v4101
  %v4103 = vrcp.pop %v3998
  %v4104 = vmul.f32 1.0, %v4103
  %v4105 = vrcp.pop %v3999
  %v4106 = vmul.f32 1.0, %v4105
  %v4107 = vrcp.pop %v4000
  %v4108 = vmul.f32 1.0, %v4107
  %v4109 = vrcp.pop %v4001
  %v4110 = vmul.f32 1.0, %v4109
  %v4111 = vrcp.pop %v4002
  %v4112 = vmul.f32 1.0, %v4111
  %v4113 = vrcp.pop %v4003
  %v4114 = vmul.f32 1.0, %v4113
  %v4115 = vrcp.pop %v4004
  %v4116 = vmul.f32 1.0, %v4115
  %v4117 = vrcp.pop %v4005
  %v4118 = vmul.f32 1.0, %v4117
  %v4119 = vrcp.pop %v4006
  %v4120 = vmul.f32 1.0, %v4119
  %v4121 = vrcp.pop %v4007
  %v4122 = vmul.f32 1.0, %v4121
  %v4123 = vrcp.pop %v4008
  %v4124 = vmul.f32 1.0, %v4123
  %v4125 = vrcp.pop %v4009
  %v4126 = vmul.f32 1.0, %v4125
  %v4127 = vrcp.pop %v4010
  %v4128 = vmul.f32 1.0, %v4127
  %v4129 = vrcp.pop %v4011
  %v4130 = vmul.f32 1.0, %v4129
  %v4131 = vrcp.pop %v4012
  %v4132 = vmul.f32 1.0, %v4131
  %v4133 = vrcp.pop %v4013
  %v4134 = vmul.f32 1.0, %v4133
  %v4135 = vrcp.pop %v4014
  %v4136 = vmul.f32 1.0, %v4135
  %v4137 = vrcp.pop %v4015
  %v4138 = vmul.f32 1.0, %v4137
  %v4139 = vrcp.pop %v4016
  %v4140 = vmul.f32 1.0, %v4139
  %v4141 = vrcp.pop %v4017
  %v4142 = vmul.f32 1.0, %v4141
  %v4143 = vrcp.pop %v4018
  %v4144 = vmul.f32 1.0, %v4143
  %v4145 = vrcp.pop %v4019
  %v4146 = vmul.f32 1.0, %v4145
  %v4147 = vrcp.pop %v4020
  %v4148 = vmul.f32 1.0, %v4147
  %4149 = vst [vmem:[%s8] sm:$0xff] %v4022
  %4150 = vst [vmem:[%s8 + $0x8] sm:$0xff] %v4024
  %4151 = vst [vmem:[%s8 + $0x10] sm:$0xff] %v4026
  %4152 = vst [vmem:[%s8 + $0x18] sm:$0xff] %v4028
  %4153 = vst [vmem:[%s8 + $0x20] sm:$0xff] %v4030
  %4154 = vst [vmem:[%s8 + $0x28] sm:$0xff] %v4032
  %4155 = vst [vmem:[%s8 + $0x30] sm:$0xff] %v4034
  %4156 = vst [vmem:[%s8 + $0x38] sm:$0xff] %v4036
  %4157 = vst [vmem:[%s8 + $0x40] sm:$0xff] %v4038
  %4158 = vst [vmem:[%s8 + $0x48] sm:$0xff] %v4040
  %4159 = vst [vmem:[%s8 + $0x50] sm:$0xff] %v4042
  %4160 = vst [vmem:[%s8 + $0x58] sm:$0xff] %v4044
  %4161 = vst [vmem:[%s8 + $0x60] sm:$0xff] %v4046
  %4162 = vst [vmem:[%s8 + $0x68] sm:$0xff] %v4048
  %4163 = vst [vmem:[%s8 + $0x70] sm:$0xff] %v4050
  %4164 = vst [vmem:[%s8 + $0x78] sm:$0xff] %v4052
  %4165 = vst [vmem:[%s8 + $0x80] sm:$0xff] %v4054
  %4166 = vst [vmem:[%s8 + $0x88] sm:$0xff] %v4056
  %4167 = vst [vmem:[%s8 + $0x90] sm:$0xff] %v4058
  %4168 = vst [vmem:[%s8 + $0x98] sm:$0xff] %v4060
  %4169 = vst [vmem:[%s8 + $0xa0] sm:$0xff] %v4062
  %4170 = vst [vmem:[%s8 + $0xa8] sm:$0xff] %v4064
  %4171 = vst [vmem:[%s8 + $0xb0] sm:$0xff] %v4066
  %4172 = vst [vmem:[%s8 + $0xb8] sm:$0xff] %v4068
  %4173 = vst [vmem:[%s8 + $0xc0] sm:$0xff] %v4070
  %4174 = vst [vmem:[%s8 + $0xc8] sm:$0xff] %v4072
  %4175 = vst [vmem:[%s8 + $0xd0] sm:$0xff] %v4074
  %4176 = vst [vmem:[%s8 + $0xd8] sm:$0xff] %v4076
  %4177 = vst [vmem:[%s8 + $0xe0] sm:$0xff] %v4078
  %4178 = vst [vmem:[%s8 + $0xe8] sm:$0xff] %v4080
  %4179 = vst [vmem:[%s8 + $0xf0] sm:$0xff] %v4082
  %4180 = vst [vmem:[%s8 + $0xf8] sm:$0xff] %v4084
  %4181 = vst [vmem:[%s8 + $0x100] sm:$0xff] %v4086
  %4182 = vst [vmem:[%s8 + $0x108] sm:$0xff] %v4088
  %4183 = vst [vmem:[%s8 + $0x110] sm:$0xff] %v4090
  %4184 = vst [vmem:[%s8 + $0x118] sm:$0xff] %v4092
  %4185 = vst [vmem:[%s8 + $0x120] sm:$0xff] %v4094
  %4186 = vst [vmem:[%s8 + $0x128] sm:$0xff] %v4096
  %4187 = vst [vmem:[%s8 + $0x130] sm:$0xff] %v4098
  %4188 = vst [vmem:[%s8 + $0x138] sm:$0xff] %v4100
  %4189 = vst [vmem:[%s8 + $0x140] sm:$0xff] %v4102
  %4190 = vst [vmem:[%s8 + $0x148] sm:$0xff] %v4104
  %4191 = vst [vmem:[%s8 + $0x150] sm:$0xff] %v4106
  %4192 = vst [vmem:[%s8 + $0x158] sm:$0xff] %v4108
  %4193 = vst [vmem:[%s8 + $0x160] sm:$0xff] %v4110
  %4194 = vst [vmem:[%s8 + $0x168] sm:$0xff] %v4112
  %4195 = vst [vmem:[%s8 + $0x170] sm:$0xff] %v4114
  %4196 = vst [vmem:[%s8 + $0x178] sm:$0xff] %v4116
  %4197 = vst [vmem:[%s8 + $0x180] sm:$0xff] %v4118
  %4198 = vst [vmem:[%s8 + $0x188] sm:$0xff] %v4120
  %4199 = vst [vmem:[%s8 + $0x190] sm:$0xff] %v4122
  %4200 = vst [vmem:[%s8 + $0x198] sm:$0xff] %v4124
  %4201 = vst [vmem:[%s8 + $0x1a0] sm:$0xff] %v4126
  %4202 = vst [vmem:[%s8 + $0x1a8] sm:$0xff] %v4128
  %4203 = vst [vmem:[%s8 + $0x1b0] sm:$0xff] %v4130
  %4204 = vst [vmem:[%s8 + $0x1b8] sm:$0xff] %v4132
  %4205 = vst [vmem:[%s8 + $0x1c0] sm:$0xff] %v4134
  %4206 = vst [vmem:[%s8 + $0x1c8] sm:$0xff] %v4136
  %4207 = vst [vmem:[%s8 + $0x1d0] sm:$0xff] %v4138
  %4208 = vst [vmem:[%s8 + $0x1d8] sm:$0xff] %v4140
  %4209 = vst [vmem:[%s8 + $0x1e0] sm:$0xff] %v4142
  %4210 = vst [vmem:[%s8 + $0x1e8] sm:$0xff] %v4144
  %4211 = vst [vmem:[%s8 + $0x1f0] sm:$0xff] %v4146
  %4212 = vst [vmem:[%s8 + $0x1f8] sm:$0xff] %v4148
  // Predicated region
  $region34: #{cfnet_forward.25} parent=0 // pred_check
    _
  $region35: #{cfnet_forward.25} parent=0 // pred_check_branch
    %4214 = sbr.rel (0) target = $region37
  $region36: #{cfnet_forward.25} parent=0 // pred_region
    _
  $region37: #{cfnet_forward.25} parent=0 // pred_fallthru
    _
  // Predicated region
  $region38: #{cfnet_forward.25} parent=0 // pred_check
    _
  $region39: #{cfnet_forward.25} parent=0 // pred_check_branch
    %4216 = sbr.rel (0) target = $region41
  $region40: #{cfnet_forward.25} parent=0 // pred_region
    _
  $region41: #{cfnet_forward.25} parent=0 // pred_fallthru
    _
  // Predicated region
  $region42: #{cfnet_forward.25} parent=0 // pred_check
    _
  $region43: #{cfnet_forward.25} parent=0 // pred_check_branch
    %4218 = sbr.rel (0) target = $region45
  $region44: #{cfnet_forward.25} parent=0 // pred_region
    _
  $region45: #{cfnet_forward.25} parent=0 // pred_fallthru
    _
  // Predicated region
  $region46: #{cfnet_forward.25} parent=0 // pred_check
    _
  $region47: #{cfnet_forward.25} parent=0 // pred_check_branch
    %4220 = sbr.rel (0) target = $region49
  $region48: #{cfnet_forward.25} parent=0 // pred_region
    _
  $region49: #{cfnet_forward.25} parent=0 // pred_fallthru
    _
  // Predicated region
  $region50: #{cfnet_forward.25} parent=0 // pred_check
    _
  $region51: #{cfnet_forward.25} parent=0 // pred_check_branch
    %4222 = sbr.rel (0) target = $region53
  $region52: #{cfnet_forward.25} parent=0 // pred_region
    _
  $region53: #{cfnet_forward.25} parent=0 // pred_fallthru
    _
  // Predicated region
  $region54: #{cfnet_forward.25} parent=0 // pred_check
    _
  $region55: #{cfnet_forward.25} parent=0 // pred_check_branch
    %4224 = sbr.rel (0) target = $region57
  $region56: #{cfnet_forward.25} parent=0 // pred_region
    _
  $region57: #{cfnet_forward.25} parent=0 // pred_fallthru
    _

</llo_original>
